<compile_context>
chip_gen: v5e
topology: v5e:2x2
jax: 0.10.0
libtpu: 0.0.40
codegen_flags: <defaults>
</compile_context>

<pallas_src>
import functools

import jax
import jax.numpy as jnp
from jax.experimental import pallas as pl
from jax.experimental.pallas import tpu as pltpu


def _round_up(n: int, m: int) -> int:
    return ((n + m - 1) // m) * m


def _double_linear_kernel(training, keep_threshold, inv_keep,
                          x_ref, w1_ref, b1_ref, w2_ref, b2_ref, *refs):
    if training:
        bits_ref, o_ref = refs
    else:
        (o_ref,) = refs

    # Linear 1 + ReLU (MXU matmul, f32 accumulate).
    h = jnp.dot(x_ref[...], w1_ref[...], preferred_element_type=jnp.float32)
    h = jnp.maximum(h + b1_ref[...], 0.0)

    # Linear 2 + ReLU.
    y = jnp.dot(h, w2_ref[...], preferred_element_type=jnp.float32)
    y = jnp.maximum(y + b2_ref[...], 0.0)

    if training:
        # Inverted dropout (p = 0.4): integer threshold compare on 24 uniform
        # bits -> one VPU compare + one select, no int->float convert/multiply.
        # P(keep) = keep_threshold / 2^24 = 1 - p.
        keep = bits_ref[...] < jnp.int32(keep_threshold)
        y = jnp.where(keep, y * inv_keep, 0.0)

    o_ref[...] = y.astype(o_ref.dtype)


def double_linear(x, w1, b1, w2, b2, *, training=False, p=0.4, rng_key=None,
                  tile_b=256):
    """y = dropout(relu(relu(x @ w1 + b1) @ w2 + b2)).

    x: (B, in_f) f32; w1: (in_f, mid); b1: (1, mid); w2: (mid, out); b2: (1, out).
    Weights are stored pre-transposed relative to torch.nn.Linear.weight.
    """
    B, in_f = x.shape
    mid_f = w1.shape[1]
    out_f = w2.shape[1]

    # --- lane-dense output: pad out_f up to a multiple of 128 lanes ------------
    out_p = _round_up(out_f, 128)
    if out_p != out_f:
        w2 = jnp.pad(w2, ((0, 0), (0, out_p - out_f)))
        b2 = jnp.pad(b2, ((0, 0), (0, out_p - out_f)))

    # --- batch tiling: biggest tile that fits VMEM, multiple of 8 sublanes -----
    tile_b = _round_up(max(8, min(int(tile_b), _round_up(B, 8))), 8)
    B_p = _round_up(B, tile_b)
    if B_p != B:
        x = jnp.pad(x, ((0, B_p - B), (0, 0)))
    grid = (pl.cdiv(B_p, tile_b),)

    keep_prob = 1.0 - p
    keep_threshold = int(round(keep_prob * (1 << 24)))
    inv_keep = 1.0 / keep_prob

    kernel = functools.partial(_double_linear_kernel, training, keep_threshold,
                               inv_keep)

    # x / bits / out stream per batch tile; weights & biases stay VMEM-resident.
    x_spec = pl.BlockSpec((tile_b, in_f), lambda i: (i, 0))
    o_spec = pl.BlockSpec((tile_b, out_p), lambda i: (i, 0))
    w1_spec = pl.BlockSpec((in_f, mid_f), lambda i: (0, 0))
    b1_spec = pl.BlockSpec((1, mid_f), lambda i: (0, 0))
    w2_spec = pl.BlockSpec((mid_f, out_p), lambda i: (0, 0))
    b2_spec = pl.BlockSpec((1, out_p), lambda i: (0, 0))

    in_specs = [x_spec, w1_spec, b1_spec, w2_spec, b2_spec]
    inputs = [x, w1, b1, w2, b2]

    if training:
        if rng_key is None:
            rng_key = jax.random.PRNGKey(0)
        # 24 uniform bits per output element, kept in int32 (signed-safe compare).
        bits = (jax.random.bits(rng_key, (B_p, out_p), dtype=jnp.uint32)
                >> 8).astype(jnp.int32)
        in_specs.append(pl.BlockSpec((tile_b, out_p), lambda i: (i, 0)))
        inputs.append(bits)

    out = pl.pallas_call(
        kernel,
        grid=grid,
        in_specs=in_specs,
        out_specs=o_spec,
        out_shape=jax.ShapeDtypeStruct((B_p, out_p), jnp.float32),
        compiler_params=pltpu.CompilerParams(
            dimension_semantics=("parallel",),
            vmem_limit_bytes=48 * 1024 * 1024,
        ),
    )(*inputs)

    return out[:B, :out_f]


def double_linear_ref(x, w1, b1, w2, b2):
    """Pure-JAX reference (eval mode: dropout is identity)."""
    h = jnp.maximum(x @ w1 + b1, 0.0)
    y = jnp.maximum(h @ w2 + b2, 0.0)
    return y


if __name__ == "__main__":
    # Decoder32.linear_out = DoubleLinear(encoded_size, 2048)
    #   mid_features = (encoded_size + 2048) // 2
    B = 16
    encoded_size = 32
    out_f = 2048
    mid_f = (encoded_size + out_f) // 2  # 1040

    key = jax.random.PRNGKey(0)
    kx, kw1, kb1, kw2, kb2, kdrop = jax.random.split(key, 6)

    x = jax.random.normal(kx, (B, encoded_size), dtype=jnp.float32)

    # PyTorch-style uniform init bounds 1/sqrt(fan_in).
    bound1 = 1.0 / (encoded_size ** 0.5)
    bound2 = 1.0 / (mid_f ** 0.5)
    w1 = jax.random.uniform(kw1, (encoded_size, mid_f), jnp.float32, -bound1, bound1)
    b1 = jax.random.uniform(kb1, (1, mid_f), jnp.float32, -bound1, bound1)
    w2 = jax.random.uniform(kw2, (mid_f, out_f), jnp.float32, -bound2, bound2)
    b2 = jax.random.uniform(kb2, (1, out_f), jnp.float32, -bound2, bound2)

    # Eval mode (dropout = identity): check against the pure-JAX reference.
    # Loose-ish tolerance accommodates MXU multi-pass f32 accumulation order.
    y_eval = jax.block_until_ready(
        double_linear(x, w1, b1, w2, b2, training=False))
    y_ref = double_linear_ref(x, w1, b1, w2, b2)
    assert y_eval.shape == (B, out_f)
    assert jnp.allclose(y_eval, y_ref, atol=2e-3, rtol=2e-3), "mismatch vs reference"

    # Training mode: inverted dropout with streamed random bits.
    y_train = jax.block_until_ready(
        double_linear(x, w1, b1, w2, b2, training=True, rng_key=kdrop))
    assert y_train.shape == (B, out_f)
    assert bool(jnp.all(jnp.isfinite(y_train)))
    # Every kept (nonzero) element must equal y_eval / (1 - p).
    kept = y_train != 0.0
    assert bool(jnp.allclose(jnp.where(kept, y_train * 0.6, 0.0),
                             jnp.where(kept, y_eval, 0.0),
                             atol=2e-3, rtol=2e-3))

    print("KERNEL_OK")
</pallas_src>

<mosaic_0001>
module attributes {stable_mosaic.version = 11 : i64} {
  func.func @_double_linear_kernel(%arg0: i32, %arg1: memref<16x32xf32, #tpu.memory_space<vmem>>, %arg2: memref<32x1040xf32, #tpu.memory_space<vmem>>, %arg3: memref<1x1040xf32, #tpu.memory_space<vmem>>, %arg4: memref<1040x2048xf32, #tpu.memory_space<vmem>>, %arg5: memref<1x2048xf32, #tpu.memory_space<vmem>>, %arg6: memref<16x2048xf32, #tpu.memory_space<vmem>>) attributes {dimension_semantics = [#tpu.dimension_semantics<parallel>], iteration_bounds = array<i64: 1>, scalar_prefetch = 0 : i64, scratch_operands = 0 : i64, tpu.core_type = #tpu.core_type<tc>, window_params = [{transform_indices = @transform_0, window_bounds = array<i64: 16, 32>}, {pipeline_mode = #tpu.pipeline_mode<synchronous>, transform_indices = @transform_1, window_bounds = array<i64: 32, 1040>}, {pipeline_mode = #tpu.pipeline_mode<synchronous>, transform_indices = @transform_2, window_bounds = array<i64: 1, 1040>}, {pipeline_mode = #tpu.pipeline_mode<synchronous>, transform_indices = @transform_3, window_bounds = array<i64: 1040, 2048>}, {pipeline_mode = #tpu.pipeline_mode<synchronous>, transform_indices = @transform_4, window_bounds = array<i64: 1, 2048>}, {transform_indices = @transform_5, window_bounds = array<i64: 16, 2048>}]} {
    %c0 = arith.constant 0 : index
    %c0_0 = arith.constant 0 : index
    %0 = vector.load %arg1[%c0, %c0_0] : memref<16x32xf32, #tpu.memory_space<vmem>>, vector<16x32xf32>
    %c0_1 = arith.constant 0 : index
    %c0_2 = arith.constant 0 : index
    %1 = vector.load %arg2[%c0_1, %c0_2] : memref<32x1040xf32, #tpu.memory_space<vmem>>, vector<32x1040xf32>
    %cst = arith.constant dense<0.000000e+00> : vector<16x1040xf32>
    %2 = tpu.matmul %0, %1, %cst {dimension_numbers = #tpu.dot_dimension_numbers<[1], [0], [0], [1], [0, 0, 1, 1], [], []>} : vector<16x32xf32>, vector<32x1040xf32>, vector<16x1040xf32> -> vector<16x1040xf32>
    %c0_3 = arith.constant 0 : index
    %c0_4 = arith.constant 0 : index
    %3 = vector.load %arg3[%c0_3, %c0_4] : memref<1x1040xf32, #tpu.memory_space<vmem>>, vector<1x1040xf32>
    %4 = vector.broadcast %3 : vector<1x1040xf32> to vector<16x1040xf32>
    %5 = arith.addf %2, %4 : vector<16x1040xf32>
    %cst_5 = arith.constant 0.000000e+00 : f32
    %6 = vector.broadcast %cst_5 : f32 to vector<16x1040xf32>
    %7 = arith.maximumf %5, %6 : vector<16x1040xf32>
    %c0_6 = arith.constant 0 : index
    %c0_7 = arith.constant 0 : index
    %8 = vector.load %arg4[%c0_6, %c0_7] : memref<1040x2048xf32, #tpu.memory_space<vmem>>, vector<1040x2048xf32>
    %cst_8 = arith.constant dense<0.000000e+00> : vector<16x2048xf32>
    %9 = tpu.matmul %7, %8, %cst_8 {dimension_numbers = #tpu.dot_dimension_numbers<[1], [0], [0], [1], [0, 0, 1, 1], [], []>} : vector<16x1040xf32>, vector<1040x2048xf32>, vector<16x2048xf32> -> vector<16x2048xf32>
    %c0_9 = arith.constant 0 : index
    %c0_10 = arith.constant 0 : index
    %10 = vector.load %arg5[%c0_9, %c0_10] : memref<1x2048xf32, #tpu.memory_space<vmem>>, vector<1x2048xf32>
    %11 = vector.broadcast %10 : vector<1x2048xf32> to vector<16x2048xf32>
    %12 = arith.addf %9, %11 : vector<16x2048xf32>
    %cst_11 = arith.constant 0.000000e+00 : f32
    %13 = vector.broadcast %cst_11 : f32 to vector<16x2048xf32>
    %14 = arith.maximumf %12, %13 : vector<16x2048xf32>
    %c0_12 = arith.constant 0 : index
    %c0_13 = arith.constant 0 : index
    %15 = vector.load %arg6[%c0_12, %c0_13] : memref<16x2048xf32, #tpu.memory_space<vmem>>, vector<16x2048xf32>
    tpu.vector_store %arg6[%c0_12, %c0_13], %14 {strides = array<i32>} : memref<16x2048xf32, #tpu.memory_space<vmem>>, vector<16x2048xf32>,
    return
  }
  func.func @transform_0(%arg0: i32) -> (i32, i32) {
    %c0_i32 = arith.constant 0 : i32
    %c0_i32_0 = arith.constant 0 : i32
    return %arg0, %c0_i32 : i32, i32
  }
  func.func @transform_1(%arg0: i32) -> (i32, i32) {
    %c0_i32 = arith.constant 0 : i32
    %c0_i32_0 = arith.constant 0 : i32
    %c0_i32_1 = arith.constant 0 : i32
    return %c0_i32, %c0_i32_0 : i32, i32
  }
  func.func @transform_2(%arg0: i32) -> (i32, i32) {
    %c0_i32 = arith.constant 0 : i32
    %c0_i32_0 = arith.constant 0 : i32
    %c0_i32_1 = arith.constant 0 : i32
    return %c0_i32, %c0_i32_0 : i32, i32
  }
  func.func @transform_3(%arg0: i32) -> (i32, i32) {
    %c0_i32 = arith.constant 0 : i32
    %c0_i32_0 = arith.constant 0 : i32
    %c0_i32_1 = arith.constant 0 : i32
    return %c0_i32, %c0_i32_0 : i32, i32
  }
  func.func @transform_4(%arg0: i32) -> (i32, i32) {
    %c0_i32 = arith.constant 0 : i32
    %c0_i32_0 = arith.constant 0 : i32
    %c0_i32_1 = arith.constant 0 : i32
    return %c0_i32, %c0_i32_0 : i32, i32
  }
  func.func @transform_5(%arg0: i32) -> (i32, i32) {
    %c0_i32 = arith.constant 0 : i32
    %c0_i32_0 = arith.constant 0 : i32
    return %arg0, %c0_i32 : i32, i32
  }
}

</mosaic_0001>

<llo_original>
// kernel: tpu_custom_call.1
$region0: #{tpu_custom_call.1}
  #allocation0 [shape = 'u32[]', space=smem, size = 0x4, offset = 0x4, fixed_abs, tag = 'smem constant byte address 0x4 - core index']
  #allocation1 [shape = 'u32[72,128]{1,0:T(1,128)}', space=vmem, size = 0x9000, scoped, tag = 'internal scratch']
  %s0 = inlined_call_operand.hbm [shape: f32[16,32], index: 0, kind: input, shape index: {}]
  %s1 = inlined_call_operand.hbm [shape: f32[32,1040], index: 1, kind: input, shape index: {}]
  %s2 = inlined_call_operand.hbm [shape: f32[1,1040], index: 2, kind: input, shape index: {}]
  %s3 = inlined_call_operand.hbm [shape: f32[1040,2048], index: 3, kind: input, shape index: {}]
  %s4 = inlined_call_operand.hbm [shape: f32[1,2048], index: 4, kind: input, shape index: {}]
  %s5 = inlined_call_operand.hbm [shape: f32[16,2048], index: 5, kind: output, shape index: {}]
  %s6 = sld [smem:[#allocation0]]
  $region50: #{tpu_custom_call.1} parent=0
    _
  %s8 = ssub.s32 1, %s6
  %s9 = scalar_select 0, %s8, %s6
  $region1: #{tpu_custom_call.1} parent=0
    #allocation2 [shape = 'u8[8192]{0}', space=vmem, size = 0x2000, scoped, tag = 'input window, operand 0, single buffered']
    #allocation3 [shape = 's32[1]{0}', space=sflag, size = 0x4, scoped, tag = 'scoped memory for tpu_custom_call.1']
    #allocation4 [shape = 's32[1]{0}', space=sflag, size = 0x4, scoped, tag = 'scoped memory for tpu_custom_call.1']
    #allocation5 [shape = 'u8[147456]{0}', space=vmem, size = 0x24000, scoped, tag = 'input window, operand 1, single buffered']
    #allocation6 [shape = 's32[1]{0}', space=sflag, size = 0x4, scoped, tag = 'scoped memory for tpu_custom_call.1']
    #allocation7 [shape = 'u8[4608]{0}', space=vmem, size = 0x1400, scoped, tag = 'input window, operand 2, single buffered']
    #allocation8 [shape = 'u8[8519680]{0}', space=vmem, size = 0x820000, scoped, tag = 'input window, operand 3, single buffered']
    #allocation9 [shape = 's32[1]{0}', space=sflag, size = 0x4, scoped, tag = 'scoped memory for tpu_custom_call.1']
    #allocation10 [shape = 'u8[8192]{0}', space=vmem, size = 0x2000, scoped, tag = 'input window, operand 4, single buffered']
    #allocation11 [shape = 'u8[131072]{0}', space=vmem, size = 0x20000, scoped, tag = 'output window, operand 0, single buffered']
    %10 = vsyncpa [#allocation3], 0
    %11 = vsyncpa [#allocation6], 0
    %12 = vsyncpa [#allocation9], 0
    %13 = vsyncpa [#allocation4], 0
    // Predicated region
    $region2: #{tpu_custom_call.1} parent=1 // pred_check
      _
    $region3: #{tpu_custom_call.1} parent=1 // pred_check_branch
      %15 = sbr.rel (0) target = $region5
    $region4: #{tpu_custom_call.1} parent=1 // pred_region
      %17 = vsyncadd [#allocation3], 0
      %s18 = sshll.u32 %s0, 4
      %s19 = int_to_ptr.hbm [resolvable:$true] %s18
      %s20 = sshll.u32 [#allocation2], 4
      %s21 = int_to_ptr.vmem [resolvable:$true] %s20
      %26 = dma.hbm_to_vmem [thread:$0]  %s19, 256, %s21, [#allocation3], 128, 128, 8
    $region5: #{tpu_custom_call.1} parent=1 // pred_fallthru
      _
    // Predicated region
    $region6: #{tpu_custom_call.1} parent=1 // pred_check
      _
    $region7: #{tpu_custom_call.1} parent=1 // pred_check_branch
      %28 = sbr.rel (0) target = $region9
    $region8: #{tpu_custom_call.1} parent=1 // pred_region
      %30 = vsyncadd [#allocation6], 0
      %s31 = sshll.u32 %s1, 4
      %s32 = int_to_ptr.hbm [resolvable:$true] %s31
      %s33 = sshll.u32 [#allocation5], 4
      %s34 = int_to_ptr.vmem [resolvable:$true] %s33
      %39 = dma.hbm_to_vmem [thread:$0]  %s32, 4608, %s34, [#allocation6], 1152, 1152, 72
    $region9: #{tpu_custom_call.1} parent=1 // pred_fallthru
      _
    // Predicated region
    $region10: #{tpu_custom_call.1} parent=1 // pred_check
      _
    $region11: #{tpu_custom_call.1} parent=1 // pred_check_branch
      %41 = sbr.rel (0) target = $region13
    $region12: #{tpu_custom_call.1} parent=1 // pred_region
      %43 = vsyncadd [#allocation6], 0
      %s45 = sshll.u32 %s2, 4
      %s46 = int_to_ptr.hbm [resolvable:$true] %s45
      %s47 = sshll.u32 [#allocation7], 4
      %s48 = int_to_ptr.vmem [resolvable:$true] %s47
      %50 = dma.hbm_to_vmem [thread:$0]  %s46, 144, %s48, [#allocation6]
    $region13: #{tpu_custom_call.1} parent=1 // pred_fallthru
      _
    // Predicated region
    $region14: #{tpu_custom_call.1} parent=1 // pred_check
      _
    $region15: #{tpu_custom_call.1} parent=1 // pred_check_branch
      %52 = sbr.rel (0) target = $region17
    $region16: #{tpu_custom_call.1} parent=1 // pred_region
      %54 = vsyncadd [#allocation9], 0
      %s55 = sshll.u32 %s3, 4
      %s56 = int_to_ptr.hbm [resolvable:$true] %s55
      %s57 = sshll.u32 [#allocation8], 4
      %s58 = int_to_ptr.vmem [resolvable:$true] %s57
      %63 = dma.hbm_to_vmem [thread:$0]  %s56, 266240, %s58, [#allocation9], 2048, 2048, 128
    $region17: #{tpu_custom_call.1} parent=1 // pred_fallthru
      _
    // Predicated region
    $region18: #{tpu_custom_call.1} parent=1 // pred_check
      _
    $region19: #{tpu_custom_call.1} parent=1 // pred_check_branch
      %65 = sbr.rel (0) target = $region21
    $region20: #{tpu_custom_call.1} parent=1 // pred_region
      %67 = vsyncadd [#allocation9], 0
      %s69 = sshll.u32 %s4, 4
      %s70 = int_to_ptr.hbm [resolvable:$true] %s69
      %s71 = sshll.u32 [#allocation10], 4
      %s72 = int_to_ptr.vmem [resolvable:$true] %s71
      %74 = dma.hbm_to_vmem [thread:$0]  %s70, 256, %s72, [#allocation9]
    $region21: #{tpu_custom_call.1} parent=1 // pred_fallthru
      _
    // Predicated region
    $region22: #{tpu_custom_call.1} parent=1 // pred_check
      _
    $region23: #{tpu_custom_call.1} parent=1 // pred_check_branch
      %76 = sbr.rel (0) target = $region25
    $region24: #{tpu_custom_call.1} parent=1 // pred_region
      %78 = dma.done [#allocation3], 256
    $region25: #{tpu_custom_call.1} parent=1 // pred_fallthru
      _
    // Predicated region
    $region26: #{tpu_custom_call.1} parent=1 // pred_check
      _
    $region27: #{tpu_custom_call.1} parent=1 // pred_check_branch
      %80 = sbr.rel (0) target = $region29
    $region28: #{tpu_custom_call.1} parent=1 // pred_region
      %82 = dma.done [#allocation6], 4608
    $region29: #{tpu_custom_call.1} parent=1 // pred_fallthru
      _
    // Predicated region
    $region30: #{tpu_custom_call.1} parent=1 // pred_check
      _
    $region31: #{tpu_custom_call.1} parent=1 // pred_check_branch
      %84 = sbr.rel (0) target = $region33
    $region32: #{tpu_custom_call.1} parent=1 // pred_region
      %86 = dma.done [#allocation6], 144
    $region33: #{tpu_custom_call.1} parent=1 // pred_fallthru
      _
    // Predicated region
    $region34: #{tpu_custom_call.1} parent=1 // pred_check
      _
    $region35: #{tpu_custom_call.1} parent=1 // pred_check_branch
      %88 = sbr.rel (0) target = $region37
    $region36: #{tpu_custom_call.1} parent=1 // pred_region
      %90 = dma.done [#allocation9], 266240
    $region37: #{tpu_custom_call.1} parent=1 // pred_fallthru
      _
    // Predicated region
    $region38: #{tpu_custom_call.1} parent=1 // pred_check
      _
    $region39: #{tpu_custom_call.1} parent=1 // pred_check_branch
      %92 = sbr.rel (0) target = $region41
    $region40: #{tpu_custom_call.1} parent=1 // pred_region
      %94 = dma.done [#allocation9], 256
    $region41: #{tpu_custom_call.1} parent=1 // pred_fallthru
      _
    %v95 = vld [vmem:[#allocation2] sm:$0xff]
    %v96 = vld [vmem:[#allocation2 + $0x8] sm:$0xff]
    %v97 = vld [vmem:[#allocation5] sm:$0xff]
    %v98 = vld [vmem:[#allocation5 + $0x8] sm:$0xff]
    %v99 = vld [vmem:[#allocation5 + $0x10] sm:$0xff]
    %v100 = vld [vmem:[#allocation5 + $0x18] sm:$0xff]
    %v101 = vld [vmem:[#allocation5 + $0x20] sm:$0xff]
    %v102 = vld [vmem:[#allocation5 + $0x28] sm:$0xff]
    %v103 = vld [vmem:[#allocation5 + $0x30] sm:$0xff]
    %v104 = vld [vmem:[#allocation5 + $0x38] sm:$0xff]
    %v105 = vld [vmem:[#allocation5 + $0x40] sm:$0xff]
    %v106 = vld [vmem:[#allocation5 + $0x48] sm:$0xff]
    %v107 = vld [vmem:[#allocation5 + $0x50] sm:$0xff]
    %v108 = vld [vmem:[#allocation5 + $0x58] sm:$0xff]
    %v109 = vld [vmem:[#allocation5 + $0x60] sm:$0xff]
    %v110 = vld [vmem:[#allocation5 + $0x68] sm:$0xff]
    %v111 = vld [vmem:[#allocation5 + $0x70] sm:$0xff]
    %v112 = vld [vmem:[#allocation5 + $0x78] sm:$0xff]
    %v113 = vld [vmem:[#allocation5 + $0x80] sm:$0xff]
    %v114 = vld [vmem:[#allocation5 + $0x88] sm:$0xff]
    %v115 = vld [vmem:[#allocation5 + $0x90] sm:$0xff]
    %v116 = vld [vmem:[#allocation5 + $0x98] sm:$0xff]
    %v117 = vld [vmem:[#allocation5 + $0xa0] sm:$0xff]
    %v118 = vld [vmem:[#allocation5 + $0xa8] sm:$0xff]
    %v119 = vld [vmem:[#allocation5 + $0xb0] sm:$0xff]
    %v120 = vld [vmem:[#allocation5 + $0xb8] sm:$0xff]
    %v121 = vld [vmem:[#allocation5 + $0xc0] sm:$0xff]
    %v122 = vld [vmem:[#allocation5 + $0xc8] sm:$0xff]
    %v123 = vld [vmem:[#allocation5 + $0xd0] sm:$0xff]
    %v124 = vld [vmem:[#allocation5 + $0xd8] sm:$0xff]
    %v125 = vld [vmem:[#allocation5 + $0xe0] sm:$0xff]
    %v126 = vld [vmem:[#allocation5 + $0xe8] sm:$0xff]
    %v127 = vld [vmem:[#allocation5 + $0xf0] sm:$0xff]
    %v128 = vld [vmem:[#allocation5 + $0xf8] sm:$0xff]
    %v129 = vld [vmem:[#allocation5 + $0x100] sm:$0xff]
    %v130 = vld [vmem:[#allocation5 + $0x108] sm:$0xff]
    %v131 = vld [vmem:[#allocation5 + $0x110] sm:$0xff]
    %v132 = vld [vmem:[#allocation5 + $0x118] sm:$0xff]
    %v133 = vld [vmem:[#allocation7] sm:$0xff]
    %v134 = vld [vmem:[#allocation7 + $0x8] sm:$0x1]
    %v137 = vperm.slane %v133, 0
    %v138 = vperm.slane %v133, 1
    %v139 = vperm.slane %v133, 2
    %v140 = vperm.slane %v133, 3
    %v141 = vperm.slane %v133, 4
    %v142 = vperm.slane %v133, 5
    %v143 = vperm.slane %v133, 6
    %v144 = vperm.slane %v133, 7
    %v145 = vperm.slane %v134, 0
    %vm155 = vcmask 261120
    %v157 = vsel %vm155, %v95, 0
    %v160 = vsel %vm155, %v96, 0
    %162 = vmatpush.msra.mxu0 0.0
    %163 = vmatpush.msra.mxu0 0.0
    %164 = vmatpush.msra.mxu0 0.0
    %165 = vmatpush.msra.mxu0 0.0
    %166 = vmatpush.msra.mxu0 0.0
    %167 = vmatpush.msra.mxu0 0.0
    %168 = vmatpush.msra.mxu0 0.0
    %169 = vmatpush.msra.mxu0 0.0
    %170 = vmatpush.msra.mxu0 0.0
    %171 = vmatpush.msra.mxu0 0.0
    %172 = vmatpush.msra.mxu0 0.0
    %173 = vmatpush.msra.mxu0 0.0
    %174 = vmatpush.msra.mxu0 %v124
    %175 = vmatpush.msra.mxu0 %v115
    %176 = vmatpush.msra.mxu0 %v106
    %177 = vmatpush.msra.mxu0 %v97
    %178 = vmatmul.f32.gmra.mxu0 %v157
    %v179 = vpop.f32.mrf.mxu0
    %v180 = vadd.f32 %v137, %v179
    %181 = vmatmul.f32.gmra.mxu0 %v160
    %v182 = vpop.f32.mrf.mxu0
    %v183 = vadd.f32 %v137, %v182
    %184 = vdwg.mxu0
    %185 = vmatpush.msra.mxu0 0.0
    %186 = vmatpush.msra.mxu0 0.0
    %187 = vmatpush.msra.mxu0 0.0
    %188 = vmatpush.msra.mxu0 0.0
    %189 = vmatpush.msra.mxu0 0.0
    %190 = vmatpush.msra.mxu0 0.0
    %191 = vmatpush.msra.mxu0 0.0
    %192 = vmatpush.msra.mxu0 0.0
    %193 = vmatpush.msra.mxu0 0.0
    %194 = vmatpush.msra.mxu0 0.0
    %195 = vmatpush.msra.mxu0 0.0
    %196 = vmatpush.msra.mxu0 0.0
    %197 = vmatpush.msra.mxu0 %v125
    %198 = vmatpush.msra.mxu0 %v116
    %199 = vmatpush.msra.mxu0 %v107
    %200 = vmatpush.msra.mxu0 %v98
    %201 = vmatmul.f32.gmra.mxu0 %v157
    %v202 = vpop.f32.mrf.mxu0
    %v203 = vadd.f32 %v138, %v202
    %204 = vmatmul.f32.gmra.mxu0 %v160
    %v205 = vpop.f32.mrf.mxu0
    %v206 = vadd.f32 %v138, %v205
    %207 = vdwg.mxu0
    %208 = vmatpush.msra.mxu0 0.0
    %209 = vmatpush.msra.mxu0 0.0
    %210 = vmatpush.msra.mxu0 0.0
    %211 = vmatpush.msra.mxu0 0.0
    %212 = vmatpush.msra.mxu0 0.0
    %213 = vmatpush.msra.mxu0 0.0
    %214 = vmatpush.msra.mxu0 0.0
    %215 = vmatpush.msra.mxu0 0.0
    %216 = vmatpush.msra.mxu0 0.0
    %217 = vmatpush.msra.mxu0 0.0
    %218 = vmatpush.msra.mxu0 0.0
    %219 = vmatpush.msra.mxu0 0.0
    %220 = vmatpush.msra.mxu0 %v126
    %221 = vmatpush.msra.mxu0 %v117
    %222 = vmatpush.msra.mxu0 %v108
    %223 = vmatpush.msra.mxu0 %v99
    %224 = vmatmul.f32.gmra.mxu0 %v157
    %v225 = vpop.f32.mrf.mxu0
    %v226 = vadd.f32 %v139, %v225
    %227 = vmatmul.f32.gmra.mxu0 %v160
    %v228 = vpop.f32.mrf.mxu0
    %v229 = vadd.f32 %v139, %v228
    %230 = vdwg.mxu0
    %231 = vmatpush.msra.mxu0 0.0
    %232 = vmatpush.msra.mxu0 0.0
    %233 = vmatpush.msra.mxu0 0.0
    %234 = vmatpush.msra.mxu0 0.0
    %235 = vmatpush.msra.mxu0 0.0
    %236 = vmatpush.msra.mxu0 0.0
    %237 = vmatpush.msra.mxu0 0.0
    %238 = vmatpush.msra.mxu0 0.0
    %239 = vmatpush.msra.mxu0 0.0
    %240 = vmatpush.msra.mxu0 0.0
    %241 = vmatpush.msra.mxu0 0.0
    %242 = vmatpush.msra.mxu0 0.0
    %243 = vmatpush.msra.mxu0 %v127
    %244 = vmatpush.msra.mxu0 %v118
    %245 = vmatpush.msra.mxu0 %v109
    %246 = vmatpush.msra.mxu0 %v100
    %247 = vmatmul.f32.gmra.mxu0 %v157
    %v248 = vpop.f32.mrf.mxu0
    %v249 = vadd.f32 %v140, %v248
    %250 = vmatmul.f32.gmra.mxu0 %v160
    %v251 = vpop.f32.mrf.mxu0
    %v252 = vadd.f32 %v140, %v251
    %253 = vdwg.mxu0
    %254 = vmatpush.msra.mxu0 0.0
    %255 = vmatpush.msra.mxu0 0.0
    %256 = vmatpush.msra.mxu0 0.0
    %257 = vmatpush.msra.mxu0 0.0
    %258 = vmatpush.msra.mxu0 0.0
    %259 = vmatpush.msra.mxu0 0.0
    %260 = vmatpush.msra.mxu0 0.0
    %261 = vmatpush.msra.mxu0 0.0
    %262 = vmatpush.msra.mxu0 0.0
    %263 = vmatpush.msra.mxu0 0.0
    %264 = vmatpush.msra.mxu0 0.0
    %265 = vmatpush.msra.mxu0 0.0
    %266 = vmatpush.msra.mxu0 %v128
    %267 = vmatpush.msra.mxu0 %v119
    %268 = vmatpush.msra.mxu0 %v110
    %269 = vmatpush.msra.mxu0 %v101
    %270 = vmatmul.f32.gmra.mxu0 %v157
    %v271 = vpop.f32.mrf.mxu0
    %v272 = vadd.f32 %v141, %v271
    %273 = vmatmul.f32.gmra.mxu0 %v160
    %v274 = vpop.f32.mrf.mxu0
    %v275 = vadd.f32 %v141, %v274
    %276 = vdwg.mxu0
    %277 = vmatpush.msra.mxu0 0.0
    %278 = vmatpush.msra.mxu0 0.0
    %279 = vmatpush.msra.mxu0 0.0
    %280 = vmatpush.msra.mxu0 0.0
    %281 = vmatpush.msra.mxu0 0.0
    %282 = vmatpush.msra.mxu0 0.0
    %283 = vmatpush.msra.mxu0 0.0
    %284 = vmatpush.msra.mxu0 0.0
    %285 = vmatpush.msra.mxu0 0.0
    %286 = vmatpush.msra.mxu0 0.0
    %287 = vmatpush.msra.mxu0 0.0
    %288 = vmatpush.msra.mxu0 0.0
    %289 = vmatpush.msra.mxu0 %v129
    %290 = vmatpush.msra.mxu0 %v120
    %291 = vmatpush.msra.mxu0 %v111
    %292 = vmatpush.msra.mxu0 %v102
    %293 = vmatmul.f32.gmra.mxu0 %v157
    %v294 = vpop.f32.mrf.mxu0
    %v295 = vadd.f32 %v142, %v294
    %296 = vmatmul.f32.gmra.mxu0 %v160
    %v297 = vpop.f32.mrf.mxu0
    %v298 = vadd.f32 %v142, %v297
    %299 = vdwg.mxu0
    %300 = vmatpush.msra.mxu0 0.0
    %301 = vmatpush.msra.mxu0 0.0
    %302 = vmatpush.msra.mxu0 0.0
    %303 = vmatpush.msra.mxu0 0.0
    %304 = vmatpush.msra.mxu0 0.0
    %305 = vmatpush.msra.mxu0 0.0
    %306 = vmatpush.msra.mxu0 0.0
    %307 = vmatpush.msra.mxu0 0.0
    %308 = vmatpush.msra.mxu0 0.0
    %309 = vmatpush.msra.mxu0 0.0
    %310 = vmatpush.msra.mxu0 0.0
    %311 = vmatpush.msra.mxu0 0.0
    %312 = vmatpush.msra.mxu0 %v130
    %313 = vmatpush.msra.mxu0 %v121
    %314 = vmatpush.msra.mxu0 %v112
    %315 = vmatpush.msra.mxu0 %v103
    %316 = vmatmul.f32.gmra.mxu0 %v157
    %v317 = vpop.f32.mrf.mxu0
    %v318 = vadd.f32 %v143, %v317
    %319 = vmatmul.f32.gmra.mxu0 %v160
    %v320 = vpop.f32.mrf.mxu0
    %v321 = vadd.f32 %v143, %v320
    %322 = vdwg.mxu0
    %323 = vmatpush.msra.mxu0 0.0
    %324 = vmatpush.msra.mxu0 0.0
    %325 = vmatpush.msra.mxu0 0.0
    %326 = vmatpush.msra.mxu0 0.0
    %327 = vmatpush.msra.mxu0 0.0
    %328 = vmatpush.msra.mxu0 0.0
    %329 = vmatpush.msra.mxu0 0.0
    %330 = vmatpush.msra.mxu0 0.0
    %331 = vmatpush.msra.mxu0 0.0
    %332 = vmatpush.msra.mxu0 0.0
    %333 = vmatpush.msra.mxu0 0.0
    %334 = vmatpush.msra.mxu0 0.0
    %335 = vmatpush.msra.mxu0 %v131
    %336 = vmatpush.msra.mxu0 %v122
    %337 = vmatpush.msra.mxu0 %v113
    %338 = vmatpush.msra.mxu0 %v104
    %339 = vmatmul.f32.gmra.mxu0 %v157
    %v340 = vpop.f32.mrf.mxu0
    %v341 = vadd.f32 %v144, %v340
    %342 = vmatmul.f32.gmra.mxu0 %v160
    %v343 = vpop.f32.mrf.mxu0
    %v344 = vadd.f32 %v144, %v343
    %345 = vdwg.mxu0
    %346 = vmatpush.msra.mxu0 0.0
    %347 = vmatpush.msra.mxu0 0.0
    %348 = vmatpush.msra.mxu0 0.0
    %349 = vmatpush.msra.mxu0 0.0
    %350 = vmatpush.msra.mxu0 0.0
    %351 = vmatpush.msra.mxu0 0.0
    %352 = vmatpush.msra.mxu0 0.0
    %353 = vmatpush.msra.mxu0 0.0
    %354 = vmatpush.msra.mxu0 0.0
    %355 = vmatpush.msra.mxu0 0.0
    %356 = vmatpush.msra.mxu0 0.0
    %357 = vmatpush.msra.mxu0 0.0
    %358 = vmatpush.msra.mxu0 %v132
    %359 = vmatpush.msra.mxu0 %v123
    %360 = vmatpush.msra.mxu0 %v114
    %361 = vmatpush.msra.mxu0 %v105
    %362 = vmatmul.f32.gmra.mxu0 %v157
    %v363 = vpop.f32.mrf.mxu0
    %v364 = vadd.f32 %v145, %v363
    %365 = vmatmul.f32.gmra.mxu0 %v160
    %v366 = vpop.f32.mrf.mxu0
    %v367 = vadd.f32 %v145, %v366
    %368 = vdwg.mxu0
    %v369 = vmax.f32 %v180, 0.0
    %v370 = vmax.f32 %v203, 0.0
    %v371 = vmax.f32 %v226, 0.0
    %v372 = vmax.f32 %v249, 0.0
    %v373 = vmax.f32 %v272, 0.0
    %v374 = vmax.f32 %v295, 0.0
    %v375 = vmax.f32 %v318, 0.0
    %v376 = vmax.f32 %v341, 0.0
    %v377 = vmax.f32 %v364, 0.0
    %v378 = vmax.f32 %v183, 0.0
    %v379 = vmax.f32 %v206, 0.0
    %v380 = vmax.f32 %v229, 0.0
    %v381 = vmax.f32 %v252, 0.0
    %v382 = vmax.f32 %v275, 0.0
    %v383 = vmax.f32 %v298, 0.0
    %v384 = vmax.f32 %v321, 0.0
    %v385 = vmax.f32 %v344, 0.0
    %v386 = vmax.f32 %v367, 0.0
    %v387 = vld [vmem:[#allocation8] sm:$0xff]
    %v388 = vld [vmem:[#allocation8 + $0x8] sm:$0xff]
    %v389 = vld [vmem:[#allocation8 + $0x10] sm:$0xff]
    %v390 = vld [vmem:[#allocation8 + $0x18] sm:$0xff]
    %v391 = vld [vmem:[#allocation8 + $0x20] sm:$0xff]
    %v392 = vld [vmem:[#allocation8 + $0x28] sm:$0xff]
    %v393 = vld [vmem:[#allocation8 + $0x30] sm:$0xff]
    %v394 = vld [vmem:[#allocation8 + $0x38] sm:$0xff]
    %v395 = vld [vmem:[#allocation8 + $0x40] sm:$0xff]
    %v396 = vld [vmem:[#allocation8 + $0x48] sm:$0xff]
    %v397 = vld [vmem:[#allocation8 + $0x50] sm:$0xff]
    %v398 = vld [vmem:[#allocation8 + $0x58] sm:$0xff]
    %v399 = vld [vmem:[#allocation8 + $0x60] sm:$0xff]
    %v400 = vld [vmem:[#allocation8 + $0x68] sm:$0xff]
    %v401 = vld [vmem:[#allocation8 + $0x70] sm:$0xff]
    %v402 = vld [vmem:[#allocation8 + $0x78] sm:$0xff]
    %v403 = vld [vmem:[#allocation8 + $0x80] sm:$0xff]
    %v404 = vld [vmem:[#allocation8 + $0x88] sm:$0xff]
    %v405 = vld [vmem:[#allocation8 + $0x90] sm:$0xff]
    %v406 = vld [vmem:[#allocation8 + $0x98] sm:$0xff]
    %v407 = vld [vmem:[#allocation8 + $0xa0] sm:$0xff]
    %v408 = vld [vmem:[#allocation8 + $0xa8] sm:$0xff]
    %v409 = vld [vmem:[#allocation8 + $0xb0] sm:$0xff]
    %v410 = vld [vmem:[#allocation8 + $0xb8] sm:$0xff]
    %v411 = vld [vmem:[#allocation8 + $0xc0] sm:$0xff]
    %v412 = vld [vmem:[#allocation8 + $0xc8] sm:$0xff]
    %v413 = vld [vmem:[#allocation8 + $0xd0] sm:$0xff]
    %v414 = vld [vmem:[#allocation8 + $0xd8] sm:$0xff]
    %v415 = vld [vmem:[#allocation8 + $0xe0] sm:$0xff]
    %v416 = vld [vmem:[#allocation8 + $0xe8] sm:$0xff]
    %v417 = vld [vmem:[#allocation8 + $0xf0] sm:$0xff]
    %v418 = vld [vmem:[#allocation8 + $0xf8] sm:$0xff]
    %v419 = vld [vmem:[#allocation8 + $0x100] sm:$0xff]
    %v420 = vld [vmem:[#allocation8 + $0x108] sm:$0xff]
    %v421 = vld [vmem:[#allocation8 + $0x110] sm:$0xff]
    %v422 = vld [vmem:[#allocation8 + $0x118] sm:$0xff]
    %v423 = vld [vmem:[#allocation8 + $0x120] sm:$0xff]
    %v424 = vld [vmem:[#allocation8 + $0x128] sm:$0xff]
    %v425 = vld [vmem:[#allocation8 + $0x130] sm:$0xff]
    %v426 = vld [vmem:[#allocation8 + $0x138] sm:$0xff]
    %v427 = vld [vmem:[#allocation8 + $0x140] sm:$0xff]
    %v428 = vld [vmem:[#allocation8 + $0x148] sm:$0xff]
    %v429 = vld [vmem:[#allocation8 + $0x150] sm:$0xff]
    %v430 = vld [vmem:[#allocation8 + $0x158] sm:$0xff]
    %v431 = vld [vmem:[#allocation8 + $0x160] sm:$0xff]
    %v432 = vld [vmem:[#allocation8 + $0x168] sm:$0xff]
    %v433 = vld [vmem:[#allocation8 + $0x170] sm:$0xff]
    %v434 = vld [vmem:[#allocation8 + $0x178] sm:$0xff]
    %v435 = vld [vmem:[#allocation8 + $0x180] sm:$0xff]
    %v436 = vld [vmem:[#allocation8 + $0x188] sm:$0xff]
    %v437 = vld [vmem:[#allocation8 + $0x190] sm:$0xff]
    %v438 = vld [vmem:[#allocation8 + $0x198] sm:$0xff]
    %v439 = vld [vmem:[#allocation8 + $0x1a0] sm:$0xff]
    %v440 = vld [vmem:[#allocation8 + $0x1a8] sm:$0xff]
    %v441 = vld [vmem:[#allocation8 + $0x1b0] sm:$0xff]
    %v442 = vld [vmem:[#allocation8 + $0x1b8] sm:$0xff]
    %v443 = vld [vmem:[#allocation8 + $0x1c0] sm:$0xff]
    %v444 = vld [vmem:[#allocation8 + $0x1c8] sm:$0xff]
    %v445 = vld [vmem:[#allocation8 + $0x1d0] sm:$0xff]
    %v446 = vld [vmem:[#allocation8 + $0x1d8] sm:$0xff]
    %v447 = vld [vmem:[#allocation8 + $0x1e0] sm:$0xff]
    %v448 = vld [vmem:[#allocation8 + $0x1e8] sm:$0xff]
    %v449 = vld [vmem:[#allocation8 + $0x1f0] sm:$0xff]
    %v450 = vld [vmem:[#allocation8 + $0x1f8] sm:$0xff]
    %v451 = vld [vmem:[#allocation8 + $0x200] sm:$0xff]
    %v452 = vld [vmem:[#allocation8 + $0x208] sm:$0xff]
    %v453 = vld [vmem:[#allocation8 + $0x210] sm:$0xff]
    %v454 = vld [vmem:[#allocation8 + $0x218] sm:$0xff]
    %v455 = vld [vmem:[#allocation8 + $0x220] sm:$0xff]
    %v456 = vld [vmem:[#allocation8 + $0x228] sm:$0xff]
    %v457 = vld [vmem:[#allocation8 + $0x230] sm:$0xff]
    %v458 = vld [vmem:[#allocation8 + $0x238] sm:$0xff]
    %v459 = vld [vmem:[#allocation8 + $0x240] sm:$0xff]
    %v460 = vld [vmem:[#allocation8 + $0x248] sm:$0xff]
    %v461 = vld [vmem:[#allocation8 + $0x250] sm:$0xff]
    %v462 = vld [vmem:[#allocation8 + $0x258] sm:$0xff]
    %v463 = vld [vmem:[#allocation8 + $0x260] sm:$0xff]
    %v464 = vld [vmem:[#allocation8 + $0x268] sm:$0xff]
    %v465 = vld [vmem:[#allocation8 + $0x270] sm:$0xff]
    %v466 = vld [vmem:[#allocation8 + $0x278] sm:$0xff]
    %v467 = vld [vmem:[#allocation8 + $0x280] sm:$0xff]
    %v468 = vld [vmem:[#allocation8 + $0x288] sm:$0xff]
    %v469 = vld [vmem:[#allocation8 + $0x290] sm:$0xff]
    %v470 = vld [vmem:[#allocation8 + $0x298] sm:$0xff]
    %v471 = vld [vmem:[#allocation8 + $0x2a0] sm:$0xff]
    %v472 = vld [vmem:[#allocation8 + $0x2a8] sm:$0xff]
    %v473 = vld [vmem:[#allocation8 + $0x2b0] sm:$0xff]
    %v474 = vld [vmem:[#allocation8 + $0x2b8] sm:$0xff]
    %v475 = vld [vmem:[#allocation8 + $0x2c0] sm:$0xff]
    %v476 = vld [vmem:[#allocation8 + $0x2c8] sm:$0xff]
    %v477 = vld [vmem:[#allocation8 + $0x2d0] sm:$0xff]
    %v478 = vld [vmem:[#allocation8 + $0x2d8] sm:$0xff]
    %v479 = vld [vmem:[#allocation8 + $0x2e0] sm:$0xff]
    %v480 = vld [vmem:[#allocation8 + $0x2e8] sm:$0xff]
    %v481 = vld [vmem:[#allocation8 + $0x2f0] sm:$0xff]
    %v482 = vld [vmem:[#allocation8 + $0x2f8] sm:$0xff]
    %v483 = vld [vmem:[#allocation8 + $0x300] sm:$0xff]
    %v484 = vld [vmem:[#allocation8 + $0x308] sm:$0xff]
    %v485 = vld [vmem:[#allocation8 + $0x310] sm:$0xff]
    %v486 = vld [vmem:[#allocation8 + $0x318] sm:$0xff]
    %v487 = vld [vmem:[#allocation8 + $0x320] sm:$0xff]
    %v488 = vld [vmem:[#allocation8 + $0x328] sm:$0xff]
    %v489 = vld [vmem:[#allocation8 + $0x330] sm:$0xff]
    %v490 = vld [vmem:[#allocation8 + $0x338] sm:$0xff]
    %v491 = vld [vmem:[#allocation8 + $0x340] sm:$0xff]
    %v492 = vld [vmem:[#allocation8 + $0x348] sm:$0xff]
    %v493 = vld [vmem:[#allocation8 + $0x350] sm:$0xff]
    %v494 = vld [vmem:[#allocation8 + $0x358] sm:$0xff]
    %v495 = vld [vmem:[#allocation8 + $0x360] sm:$0xff]
    %v496 = vld [vmem:[#allocation8 + $0x368] sm:$0xff]
    %v497 = vld [vmem:[#allocation8 + $0x370] sm:$0xff]
    %v498 = vld [vmem:[#allocation8 + $0x378] sm:$0xff]
    %v499 = vld [vmem:[#allocation8 + $0x380] sm:$0xff]
    %v500 = vld [vmem:[#allocation8 + $0x388] sm:$0xff]
    %v501 = vld [vmem:[#allocation8 + $0x390] sm:$0xff]
    %v502 = vld [vmem:[#allocation8 + $0x398] sm:$0xff]
    %v503 = vld [vmem:[#allocation8 + $0x3a0] sm:$0xff]
    %v504 = vld [vmem:[#allocation8 + $0x3a8] sm:$0xff]
    %v505 = vld [vmem:[#allocation8 + $0x3b0] sm:$0xff]
    %v506 = vld [vmem:[#allocation8 + $0x3b8] sm:$0xff]
    %v507 = vld [vmem:[#allocation8 + $0x3c0] sm:$0xff]
    %v508 = vld [vmem:[#allocation8 + $0x3c8] sm:$0xff]
    %v509 = vld [vmem:[#allocation8 + $0x3d0] sm:$0xff]
    %v510 = vld [vmem:[#allocation8 + $0x3d8] sm:$0xff]
    %v511 = vld [vmem:[#allocation8 + $0x3e0] sm:$0xff]
    %v512 = vld [vmem:[#allocation8 + $0x3e8] sm:$0xff]
    %v513 = vld [vmem:[#allocation8 + $0x3f0] sm:$0xff]
    %v514 = vld [vmem:[#allocation8 + $0x3f8] sm:$0xff]
    %v515 = vld [vmem:[#allocation8 + $0x400] sm:$0xff]
    %v516 = vld [vmem:[#allocation8 + $0x408] sm:$0xff]
    %v517 = vld [vmem:[#allocation8 + $0x410] sm:$0xff]
    %v518 = vld [vmem:[#allocation8 + $0x418] sm:$0xff]
    %v519 = vld [vmem:[#allocation8 + $0x420] sm:$0xff]
    %v520 = vld [vmem:[#allocation8 + $0x428] sm:$0xff]
    %v521 = vld [vmem:[#allocation8 + $0x430] sm:$0xff]
    %v522 = vld [vmem:[#allocation8 + $0x438] sm:$0xff]
    %v523 = vld [vmem:[#allocation8 + $0x440] sm:$0xff]
    %v524 = vld [vmem:[#allocation8 + $0x448] sm:$0xff]
    %v525 = vld [vmem:[#allocation8 + $0x450] sm:$0xff]
    %v526 = vld [vmem:[#allocation8 + $0x458] sm:$0xff]
    %v527 = vld [vmem:[#allocation8 + $0x460] sm:$0xff]
    %v528 = vld [vmem:[#allocation8 + $0x468] sm:$0xff]
    %v529 = vld [vmem:[#allocation8 + $0x470] sm:$0xff]
    %v530 = vld [vmem:[#allocation8 + $0x478] sm:$0xff]
    %v531 = vld [vmem:[#allocation8 + $0x480] sm:$0xff]
    %v532 = vld [vmem:[#allocation8 + $0x488] sm:$0xff]
    %v533 = vld [vmem:[#allocation8 + $0x490] sm:$0xff]
    %v534 = vld [vmem:[#allocation8 + $0x498] sm:$0xff]
    %v535 = vld [vmem:[#allocation8 + $0x4a0] sm:$0xff]
    %v536 = vld [vmem:[#allocation8 + $0x4a8] sm:$0xff]
    %v537 = vld [vmem:[#allocation8 + $0x4b0] sm:$0xff]
    %v538 = vld [vmem:[#allocation8 + $0x4b8] sm:$0xff]
    %v539 = vld [vmem:[#allocation8 + $0x4c0] sm:$0xff]
    %v540 = vld [vmem:[#allocation8 + $0x4c8] sm:$0xff]
    %v541 = vld [vmem:[#allocation8 + $0x4d0] sm:$0xff]
    %v542 = vld [vmem:[#allocation8 + $0x4d8] sm:$0xff]
    %v543 = vld [vmem:[#allocation8 + $0x4e0] sm:$0xff]
    %v544 = vld [vmem:[#allocation8 + $0x4e8] sm:$0xff]
    %v545 = vld [vmem:[#allocation8 + $0x4f0] sm:$0xff]
    %v546 = vld [vmem:[#allocation8 + $0x4f8] sm:$0xff]
    %v547 = vld [vmem:[#allocation8 + $0x500] sm:$0xff]
    %v548 = vld [vmem:[#allocation8 + $0x508] sm:$0xff]
    %v549 = vld [vmem:[#allocation8 + $0x510] sm:$0xff]
    %v550 = vld [vmem:[#allocation8 + $0x518] sm:$0xff]
    %v551 = vld [vmem:[#allocation8 + $0x520] sm:$0xff]
    %v552 = vld [vmem:[#allocation8 + $0x528] sm:$0xff]
    %v553 = vld [vmem:[#allocation8 + $0x530] sm:$0xff]
    %v554 = vld [vmem:[#allocation8 + $0x538] sm:$0xff]
    %v555 = vld [vmem:[#allocation8 + $0x540] sm:$0xff]
    %v556 = vld [vmem:[#allocation8 + $0x548] sm:$0xff]
    %v557 = vld [vmem:[#allocation8 + $0x550] sm:$0xff]
    %v558 = vld [vmem:[#allocation8 + $0x558] sm:$0xff]
    %v559 = vld [vmem:[#allocation8 + $0x560] sm:$0xff]
    %v560 = vld [vmem:[#allocation8 + $0x568] sm:$0xff]
    %v561 = vld [vmem:[#allocation8 + $0x570] sm:$0xff]
    %v562 = vld [vmem:[#allocation8 + $0x578] sm:$0xff]
    %v563 = vld [vmem:[#allocation8 + $0x580] sm:$0xff]
    %v564 = vld [vmem:[#allocation8 + $0x588] sm:$0xff]
    %v565 = vld [vmem:[#allocation8 + $0x590] sm:$0xff]
    %v566 = vld [vmem:[#allocation8 + $0x598] sm:$0xff]
    %v567 = vld [vmem:[#allocation8 + $0x5a0] sm:$0xff]
    %v568 = vld [vmem:[#allocation8 + $0x5a8] sm:$0xff]
    %v569 = vld [vmem:[#allocation8 + $0x5b0] sm:$0xff]
    %v570 = vld [vmem:[#allocation8 + $0x5b8] sm:$0xff]
    %v571 = vld [vmem:[#allocation8 + $0x5c0] sm:$0xff]
    %v572 = vld [vmem:[#allocation8 + $0x5c8] sm:$0xff]
    %v573 = vld [vmem:[#allocation8 + $0x5d0] sm:$0xff]
    %v574 = vld [vmem:[#allocation8 + $0x5d8] sm:$0xff]
    %v575 = vld [vmem:[#allocation8 + $0x5e0] sm:$0xff]
    %v576 = vld [vmem:[#allocation8 + $0x5e8] sm:$0xff]
    %v577 = vld [vmem:[#allocation8 + $0x5f0] sm:$0xff]
    %v578 = vld [vmem:[#allocation8 + $0x5f8] sm:$0xff]
    %v579 = vld [vmem:[#allocation8 + $0x600] sm:$0xff]
    %v580 = vld [vmem:[#allocation8 + $0x608] sm:$0xff]
    %v581 = vld [vmem:[#allocation8 + $0x610] sm:$0xff]
    %v582 = vld [vmem:[#allocation8 + $0x618] sm:$0xff]
    %v583 = vld [vmem:[#allocation8 + $0x620] sm:$0xff]
    %v584 = vld [vmem:[#allocation8 + $0x628] sm:$0xff]
    %v585 = vld [vmem:[#allocation8 + $0x630] sm:$0xff]
    %v586 = vld [vmem:[#allocation8 + $0x638] sm:$0xff]
    %v587 = vld [vmem:[#allocation8 + $0x640] sm:$0xff]
    %v588 = vld [vmem:[#allocation8 + $0x648] sm:$0xff]
    %v589 = vld [vmem:[#allocation8 + $0x650] sm:$0xff]
    %v590 = vld [vmem:[#allocation8 + $0x658] sm:$0xff]
    %v591 = vld [vmem:[#allocation8 + $0x660] sm:$0xff]
    %v592 = vld [vmem:[#allocation8 + $0x668] sm:$0xff]
    %v593 = vld [vmem:[#allocation8 + $0x670] sm:$0xff]
    %v594 = vld [vmem:[#allocation8 + $0x678] sm:$0xff]
    %v595 = vld [vmem:[#allocation8 + $0x680] sm:$0xff]
    %v596 = vld [vmem:[#allocation8 + $0x688] sm:$0xff]
    %v597 = vld [vmem:[#allocation8 + $0x690] sm:$0xff]
    %v598 = vld [vmem:[#allocation8 + $0x698] sm:$0xff]
    %v599 = vld [vmem:[#allocation8 + $0x6a0] sm:$0xff]
    %v600 = vld [vmem:[#allocation8 + $0x6a8] sm:$0xff]
    %v601 = vld [vmem:[#allocation8 + $0x6b0] sm:$0xff]
    %v602 = vld [vmem:[#allocation8 + $0x6b8] sm:$0xff]
    %v603 = vld [vmem:[#allocation8 + $0x6c0] sm:$0xff]
    %v604 = vld [vmem:[#allocation8 + $0x6c8] sm:$0xff]
    %v605 = vld [vmem:[#allocation8 + $0x6d0] sm:$0xff]
    %v606 = vld [vmem:[#allocation8 + $0x6d8] sm:$0xff]
    %v607 = vld [vmem:[#allocation8 + $0x6e0] sm:$0xff]
    %v608 = vld [vmem:[#allocation8 + $0x6e8] sm:$0xff]
    %v609 = vld [vmem:[#allocation8 + $0x6f0] sm:$0xff]
    %v610 = vld [vmem:[#allocation8 + $0x6f8] sm:$0xff]
    %v611 = vld [vmem:[#allocation8 + $0x700] sm:$0xff]
    %v612 = vld [vmem:[#allocation8 + $0x708] sm:$0xff]
    %v613 = vld [vmem:[#allocation8 + $0x710] sm:$0xff]
    %v614 = vld [vmem:[#allocation8 + $0x718] sm:$0xff]
    %v615 = vld [vmem:[#allocation8 + $0x720] sm:$0xff]
    %v616 = vld [vmem:[#allocation8 + $0x728] sm:$0xff]
    %v617 = vld [vmem:[#allocation8 + $0x730] sm:$0xff]
    %v618 = vld [vmem:[#allocation8 + $0x738] sm:$0xff]
    %v619 = vld [vmem:[#allocation8 + $0x740] sm:$0xff]
    %v620 = vld [vmem:[#allocation8 + $0x748] sm:$0xff]
    %v621 = vld [vmem:[#allocation8 + $0x750] sm:$0xff]
    %v622 = vld [vmem:[#allocation8 + $0x758] sm:$0xff]
    %v623 = vld [vmem:[#allocation8 + $0x760] sm:$0xff]
    %v624 = vld [vmem:[#allocation8 + $0x768] sm:$0xff]
    %v625 = vld [vmem:[#allocation8 + $0x770] sm:$0xff]
    %v626 = vld [vmem:[#allocation8 + $0x778] sm:$0xff]
    %v627 = vld [vmem:[#allocation8 + $0x780] sm:$0xff]
    %v628 = vld [vmem:[#allocation8 + $0x788] sm:$0xff]
    %v629 = vld [vmem:[#allocation8 + $0x790] sm:$0xff]
    %v630 = vld [vmem:[#allocation8 + $0x798] sm:$0xff]
    %v631 = vld [vmem:[#allocation8 + $0x7a0] sm:$0xff]
    %v632 = vld [vmem:[#allocation8 + $0x7a8] sm:$0xff]
    %v633 = vld [vmem:[#allocation8 + $0x7b0] sm:$0xff]
    %v634 = vld [vmem:[#allocation8 + $0x7b8] sm:$0xff]
    %v635 = vld [vmem:[#allocation8 + $0x7c0] sm:$0xff]
    %v636 = vld [vmem:[#allocation8 + $0x7c8] sm:$0xff]
    %v637 = vld [vmem:[#allocation8 + $0x7d0] sm:$0xff]
    %v638 = vld [vmem:[#allocation8 + $0x7d8] sm:$0xff]
    %v639 = vld [vmem:[#allocation8 + $0x7e0] sm:$0xff]
    %v640 = vld [vmem:[#allocation8 + $0x7e8] sm:$0xff]
    %v641 = vld [vmem:[#allocation8 + $0x7f0] sm:$0xff]
    %v642 = vld [vmem:[#allocation8 + $0x7f8] sm:$0xff]
    %v643 = vld [vmem:[#allocation8 + $0x800] sm:$0xff]
    %v644 = vld [vmem:[#allocation8 + $0x808] sm:$0xff]
    %v645 = vld [vmem:[#allocation8 + $0x810] sm:$0xff]
    %v646 = vld [vmem:[#allocation8 + $0x818] sm:$0xff]
    %v647 = vld [vmem:[#allocation8 + $0x820] sm:$0xff]
    %v648 = vld [vmem:[#allocation8 + $0x828] sm:$0xff]
    %v649 = vld [vmem:[#allocation8 + $0x830] sm:$0xff]
    %v650 = vld [vmem:[#allocation8 + $0x838] sm:$0xff]
    %v651 = vld [vmem:[#allocation8 + $0x840] sm:$0xff]
    %v652 = vld [vmem:[#allocation8 + $0x848] sm:$0xff]
    %v653 = vld [vmem:[#allocation8 + $0x850] sm:$0xff]
    %v654 = vld [vmem:[#allocation8 + $0x858] sm:$0xff]
    %v655 = vld [vmem:[#allocation8 + $0x860] sm:$0xff]
    %v656 = vld [vmem:[#allocation8 + $0x868] sm:$0xff]
    %v657 = vld [vmem:[#allocation8 + $0x870] sm:$0xff]
    %v658 = vld [vmem:[#allocation8 + $0x878] sm:$0xff]
    %v659 = vld [vmem:[#allocation8 + $0x880] sm:$0xff]
    %v660 = vld [vmem:[#allocation8 + $0x888] sm:$0xff]
    %v661 = vld [vmem:[#allocation8 + $0x890] sm:$0xff]
    %v662 = vld [vmem:[#allocation8 + $0x898] sm:$0xff]
    %v663 = vld [vmem:[#allocation8 + $0x8a0] sm:$0xff]
    %v664 = vld [vmem:[#allocation8 + $0x8a8] sm:$0xff]
    %v665 = vld [vmem:[#allocation8 + $0x8b0] sm:$0xff]
    %v666 = vld [vmem:[#allocation8 + $0x8b8] sm:$0xff]
    %v667 = vld [vmem:[#allocation8 + $0x8c0] sm:$0xff]
    %v668 = vld [vmem:[#allocation8 + $0x8c8] sm:$0xff]
    %v669 = vld [vmem:[#allocation8 + $0x8d0] sm:$0xff]
    %v670 = vld [vmem:[#allocation8 + $0x8d8] sm:$0xff]
    %v671 = vld [vmem:[#allocation8 + $0x8e0] sm:$0xff]
    %v672 = vld [vmem:[#allocation8 + $0x8e8] sm:$0xff]
    %v673 = vld [vmem:[#allocation8 + $0x8f0] sm:$0xff]
    %v674 = vld [vmem:[#allocation8 + $0x8f8] sm:$0xff]
    %v675 = vld [vmem:[#allocation8 + $0x900] sm:$0xff]
    %v676 = vld [vmem:[#allocation8 + $0x908] sm:$0xff]
    %v677 = vld [vmem:[#allocation8 + $0x910] sm:$0xff]
    %v678 = vld [vmem:[#allocation8 + $0x918] sm:$0xff]
    %v679 = vld [vmem:[#allocation8 + $0x920] sm:$0xff]
    %v680 = vld [vmem:[#allocation8 + $0x928] sm:$0xff]
    %v681 = vld [vmem:[#allocation8 + $0x930] sm:$0xff]
    %v682 = vld [vmem:[#allocation8 + $0x938] sm:$0xff]
    %v683 = vld [vmem:[#allocation8 + $0x940] sm:$0xff]
    %v684 = vld [vmem:[#allocation8 + $0x948] sm:$0xff]
    %v685 = vld [vmem:[#allocation8 + $0x950] sm:$0xff]
    %v686 = vld [vmem:[#allocation8 + $0x958] sm:$0xff]
    %v687 = vld [vmem:[#allocation8 + $0x960] sm:$0xff]
    %v688 = vld [vmem:[#allocation8 + $0x968] sm:$0xff]
    %v689 = vld [vmem:[#allocation8 + $0x970] sm:$0xff]
    %v690 = vld [vmem:[#allocation8 + $0x978] sm:$0xff]
    %v691 = vld [vmem:[#allocation8 + $0x980] sm:$0xff]
    %v692 = vld [vmem:[#allocation8 + $0x988] sm:$0xff]
    %v693 = vld [vmem:[#allocation8 + $0x990] sm:$0xff]
    %v694 = vld [vmem:[#allocation8 + $0x998] sm:$0xff]
    %v695 = vld [vmem:[#allocation8 + $0x9a0] sm:$0xff]
    %v696 = vld [vmem:[#allocation8 + $0x9a8] sm:$0xff]
    %v697 = vld [vmem:[#allocation8 + $0x9b0] sm:$0xff]
    %v698 = vld [vmem:[#allocation8 + $0x9b8] sm:$0xff]
    %v699 = vld [vmem:[#allocation8 + $0x9c0] sm:$0xff]
    %v700 = vld [vmem:[#allocation8 + $0x9c8] sm:$0xff]
    %v701 = vld [vmem:[#allocation8 + $0x9d0] sm:$0xff]
    %v702 = vld [vmem:[#allocation8 + $0x9d8] sm:$0xff]
    %v703 = vld [vmem:[#allocation8 + $0x9e0] sm:$0xff]
    %v704 = vld [vmem:[#allocation8 + $0x9e8] sm:$0xff]
    %v705 = vld [vmem:[#allocation8 + $0x9f0] sm:$0xff]
    %v706 = vld [vmem:[#allocation8 + $0x9f8] sm:$0xff]
    %v707 = vld [vmem:[#allocation8 + $0xa00] sm:$0xff]
    %v708 = vld [vmem:[#allocation8 + $0xa08] sm:$0xff]
    %v709 = vld [vmem:[#allocation8 + $0xa10] sm:$0xff]
    %v710 = vld [vmem:[#allocation8 + $0xa18] sm:$0xff]
    %v711 = vld [vmem:[#allocation8 + $0xa20] sm:$0xff]
    %v712 = vld [vmem:[#allocation8 + $0xa28] sm:$0xff]
    %v713 = vld [vmem:[#allocation8 + $0xa30] sm:$0xff]
    %v714 = vld [vmem:[#allocation8 + $0xa38] sm:$0xff]
    %v715 = vld [vmem:[#allocation8 + $0xa40] sm:$0xff]
    %v716 = vld [vmem:[#allocation8 + $0xa48] sm:$0xff]
    %v717 = vld [vmem:[#allocation8 + $0xa50] sm:$0xff]
    %v718 = vld [vmem:[#allocation8 + $0xa58] sm:$0xff]
    %v719 = vld [vmem:[#allocation8 + $0xa60] sm:$0xff]
    %v720 = vld [vmem:[#allocation8 + $0xa68] sm:$0xff]
    %v721 = vld [vmem:[#allocation8 + $0xa70] sm:$0xff]
    %v722 = vld [vmem:[#allocation8 + $0xa78] sm:$0xff]
    %v723 = vld [vmem:[#allocation8 + $0xa80] sm:$0xff]
    %v724 = vld [vmem:[#allocation8 + $0xa88] sm:$0xff]
    %v725 = vld [vmem:[#allocation8 + $0xa90] sm:$0xff]
    %v726 = vld [vmem:[#allocation8 + $0xa98] sm:$0xff]
    %v727 = vld [vmem:[#allocation8 + $0xaa0] sm:$0xff]
    %v728 = vld [vmem:[#allocation8 + $0xaa8] sm:$0xff]
    %v729 = vld [vmem:[#allocation8 + $0xab0] sm:$0xff]
    %v730 = vld [vmem:[#allocation8 + $0xab8] sm:$0xff]
    %v731 = vld [vmem:[#allocation8 + $0xac0] sm:$0xff]
    %v732 = vld [vmem:[#allocation8 + $0xac8] sm:$0xff]
    %v733 = vld [vmem:[#allocation8 + $0xad0] sm:$0xff]
    %v734 = vld [vmem:[#allocation8 + $0xad8] sm:$0xff]
    %v735 = vld [vmem:[#allocation8 + $0xae0] sm:$0xff]
    %v736 = vld [vmem:[#allocation8 + $0xae8] sm:$0xff]
    %v737 = vld [vmem:[#allocation8 + $0xaf0] sm:$0xff]
    %v738 = vld [vmem:[#allocation8 + $0xaf8] sm:$0xff]
    %v739 = vld [vmem:[#allocation8 + $0xb00] sm:$0xff]
    %v740 = vld [vmem:[#allocation8 + $0xb08] sm:$0xff]
    %v741 = vld [vmem:[#allocation8 + $0xb10] sm:$0xff]
    %v742 = vld [vmem:[#allocation8 + $0xb18] sm:$0xff]
    %v743 = vld [vmem:[#allocation8 + $0xb20] sm:$0xff]
    %v744 = vld [vmem:[#allocation8 + $0xb28] sm:$0xff]
    %v745 = vld [vmem:[#allocation8 + $0xb30] sm:$0xff]
    %v746 = vld [vmem:[#allocation8 + $0xb38] sm:$0xff]
    %v747 = vld [vmem:[#allocation8 + $0xb40] sm:$0xff]
    %v748 = vld [vmem:[#allocation8 + $0xb48] sm:$0xff]
    %v749 = vld [vmem:[#allocation8 + $0xb50] sm:$0xff]
    %v750 = vld [vmem:[#allocation8 + $0xb58] sm:$0xff]
    %v751 = vld [vmem:[#allocation8 + $0xb60] sm:$0xff]
    %v752 = vld [vmem:[#allocation8 + $0xb68] sm:$0xff]
    %v753 = vld [vmem:[#allocation8 + $0xb70] sm:$0xff]
    %v754 = vld [vmem:[#allocation8 + $0xb78] sm:$0xff]
    %v755 = vld [vmem:[#allocation8 + $0xb80] sm:$0xff]
    %v756 = vld [vmem:[#allocation8 + $0xb88] sm:$0xff]
    %v757 = vld [vmem:[#allocation8 + $0xb90] sm:$0xff]
    %v758 = vld [vmem:[#allocation8 + $0xb98] sm:$0xff]
    %v759 = vld [vmem:[#allocation8 + $0xba0] sm:$0xff]
    %v760 = vld [vmem:[#allocation8 + $0xba8] sm:$0xff]
    %v761 = vld [vmem:[#allocation8 + $0xbb0] sm:$0xff]
    %v762 = vld [vmem:[#allocation8 + $0xbb8] sm:$0xff]
    %v763 = vld [vmem:[#allocation8 + $0xbc0] sm:$0xff]
    %v764 = vld [vmem:[#allocation8 + $0xbc8] sm:$0xff]
    %v765 = vld [vmem:[#allocation8 + $0xbd0] sm:$0xff]
    %v766 = vld [vmem:[#allocation8 + $0xbd8] sm:$0xff]
    %v767 = vld [vmem:[#allocation8 + $0xbe0] sm:$0xff]
    %v768 = vld [vmem:[#allocation8 + $0xbe8] sm:$0xff]
    %v769 = vld [vmem:[#allocation8 + $0xbf0] sm:$0xff]
    %v770 = vld [vmem:[#allocation8 + $0xbf8] sm:$0xff]
    %v771 = vld [vmem:[#allocation8 + $0xc00] sm:$0xff]
    %v772 = vld [vmem:[#allocation8 + $0xc08] sm:$0xff]
    %v773 = vld [vmem:[#allocation8 + $0xc10] sm:$0xff]
    %v774 = vld [vmem:[#allocation8 + $0xc18] sm:$0xff]
    %v775 = vld [vmem:[#allocation8 + $0xc20] sm:$0xff]
    %v776 = vld [vmem:[#allocation8 + $0xc28] sm:$0xff]
    %v777 = vld [vmem:[#allocation8 + $0xc30] sm:$0xff]
    %v778 = vld [vmem:[#allocation8 + $0xc38] sm:$0xff]
    %v779 = vld [vmem:[#allocation8 + $0xc40] sm:$0xff]
    %v780 = vld [vmem:[#allocation8 + $0xc48] sm:$0xff]
    %v781 = vld [vmem:[#allocation8 + $0xc50] sm:$0xff]
    %v782 = vld [vmem:[#allocation8 + $0xc58] sm:$0xff]
    %v783 = vld [vmem:[#allocation8 + $0xc60] sm:$0xff]
    %v784 = vld [vmem:[#allocation8 + $0xc68] sm:$0xff]
    %v785 = vld [vmem:[#allocation8 + $0xc70] sm:$0xff]
    %v786 = vld [vmem:[#allocation8 + $0xc78] sm:$0xff]
    %v787 = vld [vmem:[#allocation8 + $0xc80] sm:$0xff]
    %v788 = vld [vmem:[#allocation8 + $0xc88] sm:$0xff]
    %v789 = vld [vmem:[#allocation8 + $0xc90] sm:$0xff]
    %v790 = vld [vmem:[#allocation8 + $0xc98] sm:$0xff]
    %v791 = vld [vmem:[#allocation8 + $0xca0] sm:$0xff]
    %v792 = vld [vmem:[#allocation8 + $0xca8] sm:$0xff]
    %v793 = vld [vmem:[#allocation8 + $0xcb0] sm:$0xff]
    %v794 = vld [vmem:[#allocation8 + $0xcb8] sm:$0xff]
    %v795 = vld [vmem:[#allocation8 + $0xcc0] sm:$0xff]
    %v796 = vld [vmem:[#allocation8 + $0xcc8] sm:$0xff]
    %v797 = vld [vmem:[#allocation8 + $0xcd0] sm:$0xff]
    %v798 = vld [vmem:[#allocation8 + $0xcd8] sm:$0xff]
    %v799 = vld [vmem:[#allocation8 + $0xce0] sm:$0xff]
    %v800 = vld [vmem:[#allocation8 + $0xce8] sm:$0xff]
    %v801 = vld [vmem:[#allocation8 + $0xcf0] sm:$0xff]
    %v802 = vld [vmem:[#allocation8 + $0xcf8] sm:$0xff]
    %v803 = vld [vmem:[#allocation8 + $0xd00] sm:$0xff]
    %v804 = vld [vmem:[#allocation8 + $0xd08] sm:$0xff]
    %v805 = vld [vmem:[#allocation8 + $0xd10] sm:$0xff]
    %v806 = vld [vmem:[#allocation8 + $0xd18] sm:$0xff]
    %v807 = vld [vmem:[#allocation8 + $0xd20] sm:$0xff]
    %v808 = vld [vmem:[#allocation8 + $0xd28] sm:$0xff]
    %v809 = vld [vmem:[#allocation8 + $0xd30] sm:$0xff]
    %v810 = vld [vmem:[#allocation8 + $0xd38] sm:$0xff]
    %v811 = vld [vmem:[#allocation8 + $0xd40] sm:$0xff]
    %v812 = vld [vmem:[#allocation8 + $0xd48] sm:$0xff]
    %v813 = vld [vmem:[#allocation8 + $0xd50] sm:$0xff]
    %v814 = vld [vmem:[#allocation8 + $0xd58] sm:$0xff]
    %v815 = vld [vmem:[#allocation8 + $0xd60] sm:$0xff]
    %v816 = vld [vmem:[#allocation8 + $0xd68] sm:$0xff]
    %v817 = vld [vmem:[#allocation8 + $0xd70] sm:$0xff]
    %v818 = vld [vmem:[#allocation8 + $0xd78] sm:$0xff]
    %v819 = vld [vmem:[#allocation8 + $0xd80] sm:$0xff]
    %v820 = vld [vmem:[#allocation8 + $0xd88] sm:$0xff]
    %v821 = vld [vmem:[#allocation8 + $0xd90] sm:$0xff]
    %v822 = vld [vmem:[#allocation8 + $0xd98] sm:$0xff]
    %v823 = vld [vmem:[#allocation8 + $0xda0] sm:$0xff]
    %v824 = vld [vmem:[#allocation8 + $0xda8] sm:$0xff]
    %v825 = vld [vmem:[#allocation8 + $0xdb0] sm:$0xff]
    %v826 = vld [vmem:[#allocation8 + $0xdb8] sm:$0xff]
    %v827 = vld [vmem:[#allocation8 + $0xdc0] sm:$0xff]
    %v828 = vld [vmem:[#allocation8 + $0xdc8] sm:$0xff]
    %v829 = vld [vmem:[#allocation8 + $0xdd0] sm:$0xff]
    %v830 = vld [vmem:[#allocation8 + $0xdd8] sm:$0xff]
    %v831 = vld [vmem:[#allocation8 + $0xde0] sm:$0xff]
    %v832 = vld [vmem:[#allocation8 + $0xde8] sm:$0xff]
    %v833 = vld [vmem:[#allocation8 + $0xdf0] sm:$0xff]
    %v834 = vld [vmem:[#allocation8 + $0xdf8] sm:$0xff]
    %v835 = vld [vmem:[#allocation8 + $0xe00] sm:$0xff]
    %v836 = vld [vmem:[#allocation8 + $0xe08] sm:$0xff]
    %v837 = vld [vmem:[#allocation8 + $0xe10] sm:$0xff]
    %v838 = vld [vmem:[#allocation8 + $0xe18] sm:$0xff]
    %v839 = vld [vmem:[#allocation8 + $0xe20] sm:$0xff]
    %v840 = vld [vmem:[#allocation8 + $0xe28] sm:$0xff]
    %v841 = vld [vmem:[#allocation8 + $0xe30] sm:$0xff]
    %v842 = vld [vmem:[#allocation8 + $0xe38] sm:$0xff]
    %v843 = vld [vmem:[#allocation8 + $0xe40] sm:$0xff]
    %v844 = vld [vmem:[#allocation8 + $0xe48] sm:$0xff]
    %v845 = vld [vmem:[#allocation8 + $0xe50] sm:$0xff]
    %v846 = vld [vmem:[#allocation8 + $0xe58] sm:$0xff]
    %v847 = vld [vmem:[#allocation8 + $0xe60] sm:$0xff]
    %v848 = vld [vmem:[#allocation8 + $0xe68] sm:$0xff]
    %v849 = vld [vmem:[#allocation8 + $0xe70] sm:$0xff]
    %v850 = vld [vmem:[#allocation8 + $0xe78] sm:$0xff]
    %v851 = vld [vmem:[#allocation8 + $0xe80] sm:$0xff]
    %v852 = vld [vmem:[#allocation8 + $0xe88] sm:$0xff]
    %v853 = vld [vmem:[#allocation8 + $0xe90] sm:$0xff]
    %v854 = vld [vmem:[#allocation8 + $0xe98] sm:$0xff]
    %v855 = vld [vmem:[#allocation8 + $0xea0] sm:$0xff]
    %v856 = vld [vmem:[#allocation8 + $0xea8] sm:$0xff]
    %v857 = vld [vmem:[#allocation8 + $0xeb0] sm:$0xff]
    %v858 = vld [vmem:[#allocation8 + $0xeb8] sm:$0xff]
    %v859 = vld [vmem:[#allocation8 + $0xec0] sm:$0xff]
    %v860 = vld [vmem:[#allocation8 + $0xec8] sm:$0xff]
    %v861 = vld [vmem:[#allocation8 + $0xed0] sm:$0xff]
    %v862 = vld [vmem:[#allocation8 + $0xed8] sm:$0xff]
    %v863 = vld [vmem:[#allocation8 + $0xee0] sm:$0xff]
    %v864 = vld [vmem:[#allocation8 + $0xee8] sm:$0xff]
    %v865 = vld [vmem:[#allocation8 + $0xef0] sm:$0xff]
    %v866 = vld [vmem:[#allocation8 + $0xef8] sm:$0xff]
    %v867 = vld [vmem:[#allocation8 + $0xf00] sm:$0xff]
    %v868 = vld [vmem:[#allocation8 + $0xf08] sm:$0xff]
    %v869 = vld [vmem:[#allocation8 + $0xf10] sm:$0xff]
    %v870 = vld [vmem:[#allocation8 + $0xf18] sm:$0xff]
    %v871 = vld [vmem:[#allocation8 + $0xf20] sm:$0xff]
    %v872 = vld [vmem:[#allocation8 + $0xf28] sm:$0xff]
    %v873 = vld [vmem:[#allocation8 + $0xf30] sm:$0xff]
    %v874 = vld [vmem:[#allocation8 + $0xf38] sm:$0xff]
    %v875 = vld [vmem:[#allocation8 + $0xf40] sm:$0xff]
    %v876 = vld [vmem:[#allocation8 + $0xf48] sm:$0xff]
    %v877 = vld [vmem:[#allocation8 + $0xf50] sm:$0xff]
    %v878 = vld [vmem:[#allocation8 + $0xf58] sm:$0xff]
    %v879 = vld [vmem:[#allocation8 + $0xf60] sm:$0xff]
    %v880 = vld [vmem:[#allocation8 + $0xf68] sm:$0xff]
    %v881 = vld [vmem:[#allocation8 + $0xf70] sm:$0xff]
    %v882 = vld [vmem:[#allocation8 + $0xf78] sm:$0xff]
    %v883 = vld [vmem:[#allocation8 + $0xf80] sm:$0xff]
    %v884 = vld [vmem:[#allocation8 + $0xf88] sm:$0xff]
    %v885 = vld [vmem:[#allocation8 + $0xf90] sm:$0xff]
    %v886 = vld [vmem:[#allocation8 + $0xf98] sm:$0xff]
    %v887 = vld [vmem:[#allocation8 + $0xfa0] sm:$0xff]
    %v888 = vld [vmem:[#allocation8 + $0xfa8] sm:$0xff]
    %v889 = vld [vmem:[#allocation8 + $0xfb0] sm:$0xff]
    %v890 = vld [vmem:[#allocation8 + $0xfb8] sm:$0xff]
    %v891 = vld [vmem:[#allocation8 + $0xfc0] sm:$0xff]
    %v892 = vld [vmem:[#allocation8 + $0xfc8] sm:$0xff]
    %v893 = vld [vmem:[#allocation8 + $0xfd0] sm:$0xff]
    %v894 = vld [vmem:[#allocation8 + $0xfd8] sm:$0xff]
    %v895 = vld [vmem:[#allocation8 + $0xfe0] sm:$0xff]
    %v896 = vld [vmem:[#allocation8 + $0xfe8] sm:$0xff]
    %v897 = vld [vmem:[#allocation8 + $0xff0] sm:$0xff]
    %v898 = vld [vmem:[#allocation8 + $0xff8] sm:$0xff]
    %v899 = vld [vmem:[#allocation8 + $0x1000] sm:$0xff]
    %v900 = vld [vmem:[#allocation8 + $0x1008] sm:$0xff]
    %v901 = vld [vmem:[#allocation8 + $0x1010] sm:$0xff]
    %v902 = vld [vmem:[#allocation8 + $0x1018] sm:$0xff]
    %v903 = vld [vmem:[#allocation8 + $0x1020] sm:$0xff]
    %v904 = vld [vmem:[#allocation8 + $0x1028] sm:$0xff]
    %v905 = vld [vmem:[#allocation8 + $0x1030] sm:$0xff]
    %v906 = vld [vmem:[#allocation8 + $0x1038] sm:$0xff]
    %v907 = vld [vmem:[#allocation8 + $0x1040] sm:$0xff]
    %v908 = vld [vmem:[#allocation8 + $0x1048] sm:$0xff]
    %v909 = vld [vmem:[#allocation8 + $0x1050] sm:$0xff]
    %v910 = vld [vmem:[#allocation8 + $0x1058] sm:$0xff]
    %v911 = vld [vmem:[#allocation8 + $0x1060] sm:$0xff]
    %v912 = vld [vmem:[#allocation8 + $0x1068] sm:$0xff]
    %v913 = vld [vmem:[#allocation8 + $0x1070] sm:$0xff]
    %v914 = vld [vmem:[#allocation8 + $0x1078] sm:$0xff]
    %v915 = vld [vmem:[#allocation8 + $0x1080] sm:$0xff]
    %v916 = vld [vmem:[#allocation8 + $0x1088] sm:$0xff]
    %v917 = vld [vmem:[#allocation8 + $0x1090] sm:$0xff]
    %v918 = vld [vmem:[#allocation8 + $0x1098] sm:$0xff]
    %v919 = vld [vmem:[#allocation8 + $0x10a0] sm:$0xff]
    %v920 = vld [vmem:[#allocation8 + $0x10a8] sm:$0xff]
    %v921 = vld [vmem:[#allocation8 + $0x10b0] sm:$0xff]
    %v922 = vld [vmem:[#allocation8 + $0x10b8] sm:$0xff]
    %v923 = vld [vmem:[#allocation8 + $0x10c0] sm:$0xff]
    %v924 = vld [vmem:[#allocation8 + $0x10c8] sm:$0xff]
    %v925 = vld [vmem:[#allocation8 + $0x10d0] sm:$0xff]
    %v926 = vld [vmem:[#allocation8 + $0x10d8] sm:$0xff]
    %v927 = vld [vmem:[#allocation8 + $0x10e0] sm:$0xff]
    %v928 = vld [vmem:[#allocation8 + $0x10e8] sm:$0xff]
    %v929 = vld [vmem:[#allocation8 + $0x10f0] sm:$0xff]
    %v930 = vld [vmem:[#allocation8 + $0x10f8] sm:$0xff]
    %v931 = vld [vmem:[#allocation8 + $0x1100] sm:$0xff]
    %v932 = vld [vmem:[#allocation8 + $0x1108] sm:$0xff]
    %v933 = vld [vmem:[#allocation8 + $0x1110] sm:$0xff]
    %v934 = vld [vmem:[#allocation8 + $0x1118] sm:$0xff]
    %v935 = vld [vmem:[#allocation8 + $0x1120] sm:$0xff]
    %v936 = vld [vmem:[#allocation8 + $0x1128] sm:$0xff]
    %v937 = vld [vmem:[#allocation8 + $0x1130] sm:$0xff]
    %v938 = vld [vmem:[#allocation8 + $0x1138] sm:$0xff]
    %v939 = vld [vmem:[#allocation8 + $0x1140] sm:$0xff]
    %v940 = vld [vmem:[#allocation8 + $0x1148] sm:$0xff]
    %v941 = vld [vmem:[#allocation8 + $0x1150] sm:$0xff]
    %v942 = vld [vmem:[#allocation8 + $0x1158] sm:$0xff]
    %v943 = vld [vmem:[#allocation8 + $0x1160] sm:$0xff]
    %v944 = vld [vmem:[#allocation8 + $0x1168] sm:$0xff]
    %v945 = vld [vmem:[#allocation8 + $0x1170] sm:$0xff]
    %v946 = vld [vmem:[#allocation8 + $0x1178] sm:$0xff]
    %v947 = vld [vmem:[#allocation8 + $0x1180] sm:$0xff]
    %v948 = vld [vmem:[#allocation8 + $0x1188] sm:$0xff]
    %v949 = vld [vmem:[#allocation8 + $0x1190] sm:$0xff]
    %v950 = vld [vmem:[#allocation8 + $0x1198] sm:$0xff]
    %v951 = vld [vmem:[#allocation8 + $0x11a0] sm:$0xff]
    %v952 = vld [vmem:[#allocation8 + $0x11a8] sm:$0xff]
    %v953 = vld [vmem:[#allocation8 + $0x11b0] sm:$0xff]
    %v954 = vld [vmem:[#allocation8 + $0x11b8] sm:$0xff]
    %v955 = vld [vmem:[#allocation8 + $0x11c0] sm:$0xff]
    %v956 = vld [vmem:[#allocation8 + $0x11c8] sm:$0xff]
    %v957 = vld [vmem:[#allocation8 + $0x11d0] sm:$0xff]
    %v958 = vld [vmem:[#allocation8 + $0x11d8] sm:$0xff]
    %v959 = vld [vmem:[#allocation8 + $0x11e0] sm:$0xff]
    %v960 = vld [vmem:[#allocation8 + $0x11e8] sm:$0xff]
    %v961 = vld [vmem:[#allocation8 + $0x11f0] sm:$0xff]
    %v962 = vld [vmem:[#allocation8 + $0x11f8] sm:$0xff]
    %v963 = vld [vmem:[#allocation8 + $0x1200] sm:$0xff]
    %v964 = vld [vmem:[#allocation8 + $0x1208] sm:$0xff]
    %v965 = vld [vmem:[#allocation8 + $0x1210] sm:$0xff]
    %v966 = vld [vmem:[#allocation8 + $0x1218] sm:$0xff]
    %v967 = vld [vmem:[#allocation8 + $0x1220] sm:$0xff]
    %v968 = vld [vmem:[#allocation8 + $0x1228] sm:$0xff]
    %v969 = vld [vmem:[#allocation8 + $0x1230] sm:$0xff]
    %v970 = vld [vmem:[#allocation8 + $0x1238] sm:$0xff]
    %v971 = vld [vmem:[#allocation8 + $0x1240] sm:$0xff]
    %v972 = vld [vmem:[#allocation8 + $0x1248] sm:$0xff]
    %v973 = vld [vmem:[#allocation8 + $0x1250] sm:$0xff]
    %v974 = vld [vmem:[#allocation8 + $0x1258] sm:$0xff]
    %v975 = vld [vmem:[#allocation8 + $0x1260] sm:$0xff]
    %v976 = vld [vmem:[#allocation8 + $0x1268] sm:$0xff]
    %v977 = vld [vmem:[#allocation8 + $0x1270] sm:$0xff]
    %v978 = vld [vmem:[#allocation8 + $0x1278] sm:$0xff]
    %v979 = vld [vmem:[#allocation8 + $0x1280] sm:$0xff]
    %v980 = vld [vmem:[#allocation8 + $0x1288] sm:$0xff]
    %v981 = vld [vmem:[#allocation8 + $0x1290] sm:$0xff]
    %v982 = vld [vmem:[#allocation8 + $0x1298] sm:$0xff]
    %v983 = vld [vmem:[#allocation8 + $0x12a0] sm:$0xff]
    %v984 = vld [vmem:[#allocation8 + $0x12a8] sm:$0xff]
    %v985 = vld [vmem:[#allocation8 + $0x12b0] sm:$0xff]
    %v986 = vld [vmem:[#allocation8 + $0x12b8] sm:$0xff]
    %v987 = vld [vmem:[#allocation8 + $0x12c0] sm:$0xff]
    %v988 = vld [vmem:[#allocation8 + $0x12c8] sm:$0xff]
    %v989 = vld [vmem:[#allocation8 + $0x12d0] sm:$0xff]
    %v990 = vld [vmem:[#allocation8 + $0x12d8] sm:$0xff]
    %v991 = vld [vmem:[#allocation8 + $0x12e0] sm:$0xff]
    %v992 = vld [vmem:[#allocation8 + $0x12e8] sm:$0xff]
    %v993 = vld [vmem:[#allocation8 + $0x12f0] sm:$0xff]
    %v994 = vld [vmem:[#allocation8 + $0x12f8] sm:$0xff]
    %v995 = vld [vmem:[#allocation8 + $0x1300] sm:$0xff]
    %v996 = vld [vmem:[#allocation8 + $0x1308] sm:$0xff]
    %v997 = vld [vmem:[#allocation8 + $0x1310] sm:$0xff]
    %v998 = vld [vmem:[#allocation8 + $0x1318] sm:$0xff]
    %v999 = vld [vmem:[#allocation8 + $0x1320] sm:$0xff]
    %v1000 = vld [vmem:[#allocation8 + $0x1328] sm:$0xff]
    %v1001 = vld [vmem:[#allocation8 + $0x1330] sm:$0xff]
    %v1002 = vld [vmem:[#allocation8 + $0x1338] sm:$0xff]
    %v1003 = vld [vmem:[#allocation8 + $0x1340] sm:$0xff]
    %v1004 = vld [vmem:[#allocation8 + $0x1348] sm:$0xff]
    %v1005 = vld [vmem:[#allocation8 + $0x1350] sm:$0xff]
    %v1006 = vld [vmem:[#allocation8 + $0x1358] sm:$0xff]
    %v1007 = vld [vmem:[#allocation8 + $0x1360] sm:$0xff]
    %v1008 = vld [vmem:[#allocation8 + $0x1368] sm:$0xff]
    %v1009 = vld [vmem:[#allocation8 + $0x1370] sm:$0xff]
    %v1010 = vld [vmem:[#allocation8 + $0x1378] sm:$0xff]
    %v1011 = vld [vmem:[#allocation8 + $0x1380] sm:$0xff]
    %v1012 = vld [vmem:[#allocation8 + $0x1388] sm:$0xff]
    %v1013 = vld [vmem:[#allocation8 + $0x1390] sm:$0xff]
    %v1014 = vld [vmem:[#allocation8 + $0x1398] sm:$0xff]
    %v1015 = vld [vmem:[#allocation8 + $0x13a0] sm:$0xff]
    %v1016 = vld [vmem:[#allocation8 + $0x13a8] sm:$0xff]
    %v1017 = vld [vmem:[#allocation8 + $0x13b0] sm:$0xff]
    %v1018 = vld [vmem:[#allocation8 + $0x13b8] sm:$0xff]
    %v1019 = vld [vmem:[#allocation8 + $0x13c0] sm:$0xff]
    %v1020 = vld [vmem:[#allocation8 + $0x13c8] sm:$0xff]
    %v1021 = vld [vmem:[#allocation8 + $0x13d0] sm:$0xff]
    %v1022 = vld [vmem:[#allocation8 + $0x13d8] sm:$0xff]
    %v1023 = vld [vmem:[#allocation8 + $0x13e0] sm:$0xff]
    %v1024 = vld [vmem:[#allocation8 + $0x13e8] sm:$0xff]
    %v1025 = vld [vmem:[#allocation8 + $0x13f0] sm:$0xff]
    %v1026 = vld [vmem:[#allocation8 + $0x13f8] sm:$0xff]
    %v1027 = vld [vmem:[#allocation8 + $0x1400] sm:$0xff]
    %v1028 = vld [vmem:[#allocation8 + $0x1408] sm:$0xff]
    %v1029 = vld [vmem:[#allocation8 + $0x1410] sm:$0xff]
    %v1030 = vld [vmem:[#allocation8 + $0x1418] sm:$0xff]
    %v1031 = vld [vmem:[#allocation8 + $0x1420] sm:$0xff]
    %v1032 = vld [vmem:[#allocation8 + $0x1428] sm:$0xff]
    %v1033 = vld [vmem:[#allocation8 + $0x1430] sm:$0xff]
    %v1034 = vld [vmem:[#allocation8 + $0x1438] sm:$0xff]
    %v1035 = vld [vmem:[#allocation8 + $0x1440] sm:$0xff]
    %v1036 = vld [vmem:[#allocation8 + $0x1448] sm:$0xff]
    %v1037 = vld [vmem:[#allocation8 + $0x1450] sm:$0xff]
    %v1038 = vld [vmem:[#allocation8 + $0x1458] sm:$0xff]
    %v1039 = vld [vmem:[#allocation8 + $0x1460] sm:$0xff]
    %v1040 = vld [vmem:[#allocation8 + $0x1468] sm:$0xff]
    %v1041 = vld [vmem:[#allocation8 + $0x1470] sm:$0xff]
    %v1042 = vld [vmem:[#allocation8 + $0x1478] sm:$0xff]
    %v1043 = vld [vmem:[#allocation8 + $0x1480] sm:$0xff]
    %v1044 = vld [vmem:[#allocation8 + $0x1488] sm:$0xff]
    %v1045 = vld [vmem:[#allocation8 + $0x1490] sm:$0xff]
    %v1046 = vld [vmem:[#allocation8 + $0x1498] sm:$0xff]
    %v1047 = vld [vmem:[#allocation8 + $0x14a0] sm:$0xff]
    %v1048 = vld [vmem:[#allocation8 + $0x14a8] sm:$0xff]
    %v1049 = vld [vmem:[#allocation8 + $0x14b0] sm:$0xff]
    %v1050 = vld [vmem:[#allocation8 + $0x14b8] sm:$0xff]
    %v1051 = vld [vmem:[#allocation8 + $0x14c0] sm:$0xff]
    %v1052 = vld [vmem:[#allocation8 + $0x14c8] sm:$0xff]
    %v1053 = vld [vmem:[#allocation8 + $0x14d0] sm:$0xff]
    %v1054 = vld [vmem:[#allocation8 + $0x14d8] sm:$0xff]
    %v1055 = vld [vmem:[#allocation8 + $0x14e0] sm:$0xff]
    %v1056 = vld [vmem:[#allocation8 + $0x14e8] sm:$0xff]
    %v1057 = vld [vmem:[#allocation8 + $0x14f0] sm:$0xff]
    %v1058 = vld [vmem:[#allocation8 + $0x14f8] sm:$0xff]
    %v1059 = vld [vmem:[#allocation8 + $0x1500] sm:$0xff]
    %v1060 = vld [vmem:[#allocation8 + $0x1508] sm:$0xff]
    %v1061 = vld [vmem:[#allocation8 + $0x1510] sm:$0xff]
    %v1062 = vld [vmem:[#allocation8 + $0x1518] sm:$0xff]
    %v1063 = vld [vmem:[#allocation8 + $0x1520] sm:$0xff]
    %v1064 = vld [vmem:[#allocation8 + $0x1528] sm:$0xff]
    %v1065 = vld [vmem:[#allocation8 + $0x1530] sm:$0xff]
    %v1066 = vld [vmem:[#allocation8 + $0x1538] sm:$0xff]
    %v1067 = vld [vmem:[#allocation8 + $0x1540] sm:$0xff]
    %v1068 = vld [vmem:[#allocation8 + $0x1548] sm:$0xff]
    %v1069 = vld [vmem:[#allocation8 + $0x1550] sm:$0xff]
    %v1070 = vld [vmem:[#allocation8 + $0x1558] sm:$0xff]
    %v1071 = vld [vmem:[#allocation8 + $0x1560] sm:$0xff]
    %v1072 = vld [vmem:[#allocation8 + $0x1568] sm:$0xff]
    %v1073 = vld [vmem:[#allocation8 + $0x1570] sm:$0xff]
    %v1074 = vld [vmem:[#allocation8 + $0x1578] sm:$0xff]
    %v1075 = vld [vmem:[#allocation8 + $0x1580] sm:$0xff]
    %v1076 = vld [vmem:[#allocation8 + $0x1588] sm:$0xff]
    %v1077 = vld [vmem:[#allocation8 + $0x1590] sm:$0xff]
    %v1078 = vld [vmem:[#allocation8 + $0x1598] sm:$0xff]
    %v1079 = vld [vmem:[#allocation8 + $0x15a0] sm:$0xff]
    %v1080 = vld [vmem:[#allocation8 + $0x15a8] sm:$0xff]
    %v1081 = vld [vmem:[#allocation8 + $0x15b0] sm:$0xff]
    %v1082 = vld [vmem:[#allocation8 + $0x15b8] sm:$0xff]
    %v1083 = vld [vmem:[#allocation8 + $0x15c0] sm:$0xff]
    %v1084 = vld [vmem:[#allocation8 + $0x15c8] sm:$0xff]
    %v1085 = vld [vmem:[#allocation8 + $0x15d0] sm:$0xff]
    %v1086 = vld [vmem:[#allocation8 + $0x15d8] sm:$0xff]
    %v1087 = vld [vmem:[#allocation8 + $0x15e0] sm:$0xff]
    %v1088 = vld [vmem:[#allocation8 + $0x15e8] sm:$0xff]
    %v1089 = vld [vmem:[#allocation8 + $0x15f0] sm:$0xff]
    %v1090 = vld [vmem:[#allocation8 + $0x15f8] sm:$0xff]
    %v1091 = vld [vmem:[#allocation8 + $0x1600] sm:$0xff]
    %v1092 = vld [vmem:[#allocation8 + $0x1608] sm:$0xff]
    %v1093 = vld [vmem:[#allocation8 + $0x1610] sm:$0xff]
    %v1094 = vld [vmem:[#allocation8 + $0x1618] sm:$0xff]
    %v1095 = vld [vmem:[#allocation8 + $0x1620] sm:$0xff]
    %v1096 = vld [vmem:[#allocation8 + $0x1628] sm:$0xff]
    %v1097 = vld [vmem:[#allocation8 + $0x1630] sm:$0xff]
    %v1098 = vld [vmem:[#allocation8 + $0x1638] sm:$0xff]
    %v1099 = vld [vmem:[#allocation8 + $0x1640] sm:$0xff]
    %v1100 = vld [vmem:[#allocation8 + $0x1648] sm:$0xff]
    %v1101 = vld [vmem:[#allocation8 + $0x1650] sm:$0xff]
    %v1102 = vld [vmem:[#allocation8 + $0x1658] sm:$0xff]
    %v1103 = vld [vmem:[#allocation8 + $0x1660] sm:$0xff]
    %v1104 = vld [vmem:[#allocation8 + $0x1668] sm:$0xff]
    %v1105 = vld [vmem:[#allocation8 + $0x1670] sm:$0xff]
    %v1106 = vld [vmem:[#allocation8 + $0x1678] sm:$0xff]
    %v1107 = vld [vmem:[#allocation8 + $0x1680] sm:$0xff]
    %v1108 = vld [vmem:[#allocation8 + $0x1688] sm:$0xff]
    %v1109 = vld [vmem:[#allocation8 + $0x1690] sm:$0xff]
    %v1110 = vld [vmem:[#allocation8 + $0x1698] sm:$0xff]
    %v1111 = vld [vmem:[#allocation8 + $0x16a0] sm:$0xff]
    %v1112 = vld [vmem:[#allocation8 + $0x16a8] sm:$0xff]
    %v1113 = vld [vmem:[#allocation8 + $0x16b0] sm:$0xff]
    %v1114 = vld [vmem:[#allocation8 + $0x16b8] sm:$0xff]
    %v1115 = vld [vmem:[#allocation8 + $0x16c0] sm:$0xff]
    %v1116 = vld [vmem:[#allocation8 + $0x16c8] sm:$0xff]
    %v1117 = vld [vmem:[#allocation8 + $0x16d0] sm:$0xff]
    %v1118 = vld [vmem:[#allocation8 + $0x16d8] sm:$0xff]
    %v1119 = vld [vmem:[#allocation8 + $0x16e0] sm:$0xff]
    %v1120 = vld [vmem:[#allocation8 + $0x16e8] sm:$0xff]
    %v1121 = vld [vmem:[#allocation8 + $0x16f0] sm:$0xff]
    %v1122 = vld [vmem:[#allocation8 + $0x16f8] sm:$0xff]
    %v1123 = vld [vmem:[#allocation8 + $0x1700] sm:$0xff]
    %v1124 = vld [vmem:[#allocation8 + $0x1708] sm:$0xff]
    %v1125 = vld [vmem:[#allocation8 + $0x1710] sm:$0xff]
    %v1126 = vld [vmem:[#allocation8 + $0x1718] sm:$0xff]
    %v1127 = vld [vmem:[#allocation8 + $0x1720] sm:$0xff]
    %v1128 = vld [vmem:[#allocation8 + $0x1728] sm:$0xff]
    %v1129 = vld [vmem:[#allocation8 + $0x1730] sm:$0xff]
    %v1130 = vld [vmem:[#allocation8 + $0x1738] sm:$0xff]
    %v1131 = vld [vmem:[#allocation8 + $0x1740] sm:$0xff]
    %v1132 = vld [vmem:[#allocation8 + $0x1748] sm:$0xff]
    %v1133 = vld [vmem:[#allocation8 + $0x1750] sm:$0xff]
    %v1134 = vld [vmem:[#allocation8 + $0x1758] sm:$0xff]
    %v1135 = vld [vmem:[#allocation8 + $0x1760] sm:$0xff]
    %v1136 = vld [vmem:[#allocation8 + $0x1768] sm:$0xff]
    %v1137 = vld [vmem:[#allocation8 + $0x1770] sm:$0xff]
    %v1138 = vld [vmem:[#allocation8 + $0x1778] sm:$0xff]
    %v1139 = vld [vmem:[#allocation8 + $0x1780] sm:$0xff]
    %v1140 = vld [vmem:[#allocation8 + $0x1788] sm:$0xff]
    %v1141 = vld [vmem:[#allocation8 + $0x1790] sm:$0xff]
    %v1142 = vld [vmem:[#allocation8 + $0x1798] sm:$0xff]
    %v1143 = vld [vmem:[#allocation8 + $0x17a0] sm:$0xff]
    %v1144 = vld [vmem:[#allocation8 + $0x17a8] sm:$0xff]
    %v1145 = vld [vmem:[#allocation8 + $0x17b0] sm:$0xff]
    %v1146 = vld [vmem:[#allocation8 + $0x17b8] sm:$0xff]
    %v1147 = vld [vmem:[#allocation8 + $0x17c0] sm:$0xff]
    %v1148 = vld [vmem:[#allocation8 + $0x17c8] sm:$0xff]
    %v1149 = vld [vmem:[#allocation8 + $0x17d0] sm:$0xff]
    %v1150 = vld [vmem:[#allocation8 + $0x17d8] sm:$0xff]
    %v1151 = vld [vmem:[#allocation8 + $0x17e0] sm:$0xff]
    %v1152 = vld [vmem:[#allocation8 + $0x17e8] sm:$0xff]
    %v1153 = vld [vmem:[#allocation8 + $0x17f0] sm:$0xff]
    %v1154 = vld [vmem:[#allocation8 + $0x17f8] sm:$0xff]
    %v1155 = vld [vmem:[#allocation8 + $0x1800] sm:$0xff]
    %v1156 = vld [vmem:[#allocation8 + $0x1808] sm:$0xff]
    %v1157 = vld [vmem:[#allocation8 + $0x1810] sm:$0xff]
    %v1158 = vld [vmem:[#allocation8 + $0x1818] sm:$0xff]
    %v1159 = vld [vmem:[#allocation8 + $0x1820] sm:$0xff]
    %v1160 = vld [vmem:[#allocation8 + $0x1828] sm:$0xff]
    %v1161 = vld [vmem:[#allocation8 + $0x1830] sm:$0xff]
    %v1162 = vld [vmem:[#allocation8 + $0x1838] sm:$0xff]
    %v1163 = vld [vmem:[#allocation8 + $0x1840] sm:$0xff]
    %v1164 = vld [vmem:[#allocation8 + $0x1848] sm:$0xff]
    %v1165 = vld [vmem:[#allocation8 + $0x1850] sm:$0xff]
    %v1166 = vld [vmem:[#allocation8 + $0x1858] sm:$0xff]
    %v1167 = vld [vmem:[#allocation8 + $0x1860] sm:$0xff]
    %v1168 = vld [vmem:[#allocation8 + $0x1868] sm:$0xff]
    %v1169 = vld [vmem:[#allocation8 + $0x1870] sm:$0xff]
    %v1170 = vld [vmem:[#allocation8 + $0x1878] sm:$0xff]
    %v1171 = vld [vmem:[#allocation8 + $0x1880] sm:$0xff]
    %v1172 = vld [vmem:[#allocation8 + $0x1888] sm:$0xff]
    %v1173 = vld [vmem:[#allocation8 + $0x1890] sm:$0xff]
    %v1174 = vld [vmem:[#allocation8 + $0x1898] sm:$0xff]
    %v1175 = vld [vmem:[#allocation8 + $0x18a0] sm:$0xff]
    %v1176 = vld [vmem:[#allocation8 + $0x18a8] sm:$0xff]
    %v1177 = vld [vmem:[#allocation8 + $0x18b0] sm:$0xff]
    %v1178 = vld [vmem:[#allocation8 + $0x18b8] sm:$0xff]
    %v1179 = vld [vmem:[#allocation8 + $0x18c0] sm:$0xff]
    %v1180 = vld [vmem:[#allocation8 + $0x18c8] sm:$0xff]
    %v1181 = vld [vmem:[#allocation8 + $0x18d0] sm:$0xff]
    %v1182 = vld [vmem:[#allocation8 + $0x18d8] sm:$0xff]
    %v1183 = vld [vmem:[#allocation8 + $0x18e0] sm:$0xff]
    %v1184 = vld [vmem:[#allocation8 + $0x18e8] sm:$0xff]
    %v1185 = vld [vmem:[#allocation8 + $0x18f0] sm:$0xff]
    %v1186 = vld [vmem:[#allocation8 + $0x18f8] sm:$0xff]
    %v1187 = vld [vmem:[#allocation8 + $0x1900] sm:$0xff]
    %v1188 = vld [vmem:[#allocation8 + $0x1908] sm:$0xff]
    %v1189 = vld [vmem:[#allocation8 + $0x1910] sm:$0xff]
    %v1190 = vld [vmem:[#allocation8 + $0x1918] sm:$0xff]
    %v1191 = vld [vmem:[#allocation8 + $0x1920] sm:$0xff]
    %v1192 = vld [vmem:[#allocation8 + $0x1928] sm:$0xff]
    %v1193 = vld [vmem:[#allocation8 + $0x1930] sm:$0xff]
    %v1194 = vld [vmem:[#allocation8 + $0x1938] sm:$0xff]
    %v1195 = vld [vmem:[#allocation8 + $0x1940] sm:$0xff]
    %v1196 = vld [vmem:[#allocation8 + $0x1948] sm:$0xff]
    %v1197 = vld [vmem:[#allocation8 + $0x1950] sm:$0xff]
    %v1198 = vld [vmem:[#allocation8 + $0x1958] sm:$0xff]
    %v1199 = vld [vmem:[#allocation8 + $0x1960] sm:$0xff]
    %v1200 = vld [vmem:[#allocation8 + $0x1968] sm:$0xff]
    %v1201 = vld [vmem:[#allocation8 + $0x1970] sm:$0xff]
    %v1202 = vld [vmem:[#allocation8 + $0x1978] sm:$0xff]
    %v1203 = vld [vmem:[#allocation8 + $0x1980] sm:$0xff]
    %v1204 = vld [vmem:[#allocation8 + $0x1988] sm:$0xff]
    %v1205 = vld [vmem:[#allocation8 + $0x1990] sm:$0xff]
    %v1206 = vld [vmem:[#allocation8 + $0x1998] sm:$0xff]
    %v1207 = vld [vmem:[#allocation8 + $0x19a0] sm:$0xff]
    %v1208 = vld [vmem:[#allocation8 + $0x19a8] sm:$0xff]
    %v1209 = vld [vmem:[#allocation8 + $0x19b0] sm:$0xff]
    %v1210 = vld [vmem:[#allocation8 + $0x19b8] sm:$0xff]
    %v1211 = vld [vmem:[#allocation8 + $0x19c0] sm:$0xff]
    %v1212 = vld [vmem:[#allocation8 + $0x19c8] sm:$0xff]
    %v1213 = vld [vmem:[#allocation8 + $0x19d0] sm:$0xff]
    %v1214 = vld [vmem:[#allocation8 + $0x19d8] sm:$0xff]
    %v1215 = vld [vmem:[#allocation8 + $0x19e0] sm:$0xff]
    %v1216 = vld [vmem:[#allocation8 + $0x19e8] sm:$0xff]
    %v1217 = vld [vmem:[#allocation8 + $0x19f0] sm:$0xff]
    %v1218 = vld [vmem:[#allocation8 + $0x19f8] sm:$0xff]
    %v1219 = vld [vmem:[#allocation8 + $0x1a00] sm:$0xff]
    %v1220 = vld [vmem:[#allocation8 + $0x1a08] sm:$0xff]
    %v1221 = vld [vmem:[#allocation8 + $0x1a10] sm:$0xff]
    %v1222 = vld [vmem:[#allocation8 + $0x1a18] sm:$0xff]
    %v1223 = vld [vmem:[#allocation8 + $0x1a20] sm:$0xff]
    %v1224 = vld [vmem:[#allocation8 + $0x1a28] sm:$0xff]
    %v1225 = vld [vmem:[#allocation8 + $0x1a30] sm:$0xff]
    %v1226 = vld [vmem:[#allocation8 + $0x1a38] sm:$0xff]
    %v1227 = vld [vmem:[#allocation8 + $0x1a40] sm:$0xff]
    %v1228 = vld [vmem:[#allocation8 + $0x1a48] sm:$0xff]
    %v1229 = vld [vmem:[#allocation8 + $0x1a50] sm:$0xff]
    %v1230 = vld [vmem:[#allocation8 + $0x1a58] sm:$0xff]
    %v1231 = vld [vmem:[#allocation8 + $0x1a60] sm:$0xff]
    %v1232 = vld [vmem:[#allocation8 + $0x1a68] sm:$0xff]
    %v1233 = vld [vmem:[#allocation8 + $0x1a70] sm:$0xff]
    %v1234 = vld [vmem:[#allocation8 + $0x1a78] sm:$0xff]
    %v1235 = vld [vmem:[#allocation8 + $0x1a80] sm:$0xff]
    %v1236 = vld [vmem:[#allocation8 + $0x1a88] sm:$0xff]
    %v1237 = vld [vmem:[#allocation8 + $0x1a90] sm:$0xff]
    %v1238 = vld [vmem:[#allocation8 + $0x1a98] sm:$0xff]
    %v1239 = vld [vmem:[#allocation8 + $0x1aa0] sm:$0xff]
    %v1240 = vld [vmem:[#allocation8 + $0x1aa8] sm:$0xff]
    %v1241 = vld [vmem:[#allocation8 + $0x1ab0] sm:$0xff]
    %v1242 = vld [vmem:[#allocation8 + $0x1ab8] sm:$0xff]
    %v1243 = vld [vmem:[#allocation8 + $0x1ac0] sm:$0xff]
    %v1244 = vld [vmem:[#allocation8 + $0x1ac8] sm:$0xff]
    %v1245 = vld [vmem:[#allocation8 + $0x1ad0] sm:$0xff]
    %v1246 = vld [vmem:[#allocation8 + $0x1ad8] sm:$0xff]
    %v1247 = vld [vmem:[#allocation8 + $0x1ae0] sm:$0xff]
    %v1248 = vld [vmem:[#allocation8 + $0x1ae8] sm:$0xff]
    %v1249 = vld [vmem:[#allocation8 + $0x1af0] sm:$0xff]
    %v1250 = vld [vmem:[#allocation8 + $0x1af8] sm:$0xff]
    %v1251 = vld [vmem:[#allocation8 + $0x1b00] sm:$0xff]
    %v1252 = vld [vmem:[#allocation8 + $0x1b08] sm:$0xff]
    %v1253 = vld [vmem:[#allocation8 + $0x1b10] sm:$0xff]
    %v1254 = vld [vmem:[#allocation8 + $0x1b18] sm:$0xff]
    %v1255 = vld [vmem:[#allocation8 + $0x1b20] sm:$0xff]
    %v1256 = vld [vmem:[#allocation8 + $0x1b28] sm:$0xff]
    %v1257 = vld [vmem:[#allocation8 + $0x1b30] sm:$0xff]
    %v1258 = vld [vmem:[#allocation8 + $0x1b38] sm:$0xff]
    %v1259 = vld [vmem:[#allocation8 + $0x1b40] sm:$0xff]
    %v1260 = vld [vmem:[#allocation8 + $0x1b48] sm:$0xff]
    %v1261 = vld [vmem:[#allocation8 + $0x1b50] sm:$0xff]
    %v1262 = vld [vmem:[#allocation8 + $0x1b58] sm:$0xff]
    %v1263 = vld [vmem:[#allocation8 + $0x1b60] sm:$0xff]
    %v1264 = vld [vmem:[#allocation8 + $0x1b68] sm:$0xff]
    %v1265 = vld [vmem:[#allocation8 + $0x1b70] sm:$0xff]
    %v1266 = vld [vmem:[#allocation8 + $0x1b78] sm:$0xff]
    %v1267 = vld [vmem:[#allocation8 + $0x1b80] sm:$0xff]
    %v1268 = vld [vmem:[#allocation8 + $0x1b88] sm:$0xff]
    %v1269 = vld [vmem:[#allocation8 + $0x1b90] sm:$0xff]
    %v1270 = vld [vmem:[#allocation8 + $0x1b98] sm:$0xff]
    %v1271 = vld [vmem:[#allocation8 + $0x1ba0] sm:$0xff]
    %v1272 = vld [vmem:[#allocation8 + $0x1ba8] sm:$0xff]
    %v1273 = vld [vmem:[#allocation8 + $0x1bb0] sm:$0xff]
    %v1274 = vld [vmem:[#allocation8 + $0x1bb8] sm:$0xff]
    %v1275 = vld [vmem:[#allocation8 + $0x1bc0] sm:$0xff]
    %v1276 = vld [vmem:[#allocation8 + $0x1bc8] sm:$0xff]
    %v1277 = vld [vmem:[#allocation8 + $0x1bd0] sm:$0xff]
    %v1278 = vld [vmem:[#allocation8 + $0x1bd8] sm:$0xff]
    %v1279 = vld [vmem:[#allocation8 + $0x1be0] sm:$0xff]
    %v1280 = vld [vmem:[#allocation8 + $0x1be8] sm:$0xff]
    %v1281 = vld [vmem:[#allocation8 + $0x1bf0] sm:$0xff]
    %v1282 = vld [vmem:[#allocation8 + $0x1bf8] sm:$0xff]
    %v1283 = vld [vmem:[#allocation8 + $0x1c00] sm:$0xff]
    %v1284 = vld [vmem:[#allocation8 + $0x1c08] sm:$0xff]
    %v1285 = vld [vmem:[#allocation8 + $0x1c10] sm:$0xff]
    %v1286 = vld [vmem:[#allocation8 + $0x1c18] sm:$0xff]
    %v1287 = vld [vmem:[#allocation8 + $0x1c20] sm:$0xff]
    %v1288 = vld [vmem:[#allocation8 + $0x1c28] sm:$0xff]
    %v1289 = vld [vmem:[#allocation8 + $0x1c30] sm:$0xff]
    %v1290 = vld [vmem:[#allocation8 + $0x1c38] sm:$0xff]
    %v1291 = vld [vmem:[#allocation8 + $0x1c40] sm:$0xff]
    %v1292 = vld [vmem:[#allocation8 + $0x1c48] sm:$0xff]
    %v1293 = vld [vmem:[#allocation8 + $0x1c50] sm:$0xff]
    %v1294 = vld [vmem:[#allocation8 + $0x1c58] sm:$0xff]
    %v1295 = vld [vmem:[#allocation8 + $0x1c60] sm:$0xff]
    %v1296 = vld [vmem:[#allocation8 + $0x1c68] sm:$0xff]
    %v1297 = vld [vmem:[#allocation8 + $0x1c70] sm:$0xff]
    %v1298 = vld [vmem:[#allocation8 + $0x1c78] sm:$0xff]
    %v1299 = vld [vmem:[#allocation8 + $0x1c80] sm:$0xff]
    %v1300 = vld [vmem:[#allocation8 + $0x1c88] sm:$0xff]
    %v1301 = vld [vmem:[#allocation8 + $0x1c90] sm:$0xff]
    %v1302 = vld [vmem:[#allocation8 + $0x1c98] sm:$0xff]
    %v1303 = vld [vmem:[#allocation8 + $0x1ca0] sm:$0xff]
    %v1304 = vld [vmem:[#allocation8 + $0x1ca8] sm:$0xff]
    %v1305 = vld [vmem:[#allocation8 + $0x1cb0] sm:$0xff]
    %v1306 = vld [vmem:[#allocation8 + $0x1cb8] sm:$0xff]
    %v1307 = vld [vmem:[#allocation8 + $0x1cc0] sm:$0xff]
    %v1308 = vld [vmem:[#allocation8 + $0x1cc8] sm:$0xff]
    %v1309 = vld [vmem:[#allocation8 + $0x1cd0] sm:$0xff]
    %v1310 = vld [vmem:[#allocation8 + $0x1cd8] sm:$0xff]
    %v1311 = vld [vmem:[#allocation8 + $0x1ce0] sm:$0xff]
    %v1312 = vld [vmem:[#allocation8 + $0x1ce8] sm:$0xff]
    %v1313 = vld [vmem:[#allocation8 + $0x1cf0] sm:$0xff]
    %v1314 = vld [vmem:[#allocation8 + $0x1cf8] sm:$0xff]
    %v1315 = vld [vmem:[#allocation8 + $0x1d00] sm:$0xff]
    %v1316 = vld [vmem:[#allocation8 + $0x1d08] sm:$0xff]
    %v1317 = vld [vmem:[#allocation8 + $0x1d10] sm:$0xff]
    %v1318 = vld [vmem:[#allocation8 + $0x1d18] sm:$0xff]
    %v1319 = vld [vmem:[#allocation8 + $0x1d20] sm:$0xff]
    %v1320 = vld [vmem:[#allocation8 + $0x1d28] sm:$0xff]
    %v1321 = vld [vmem:[#allocation8 + $0x1d30] sm:$0xff]
    %v1322 = vld [vmem:[#allocation8 + $0x1d38] sm:$0xff]
    %v1323 = vld [vmem:[#allocation8 + $0x1d40] sm:$0xff]
    %v1324 = vld [vmem:[#allocation8 + $0x1d48] sm:$0xff]
    %v1325 = vld [vmem:[#allocation8 + $0x1d50] sm:$0xff]
    %v1326 = vld [vmem:[#allocation8 + $0x1d58] sm:$0xff]
    %v1327 = vld [vmem:[#allocation8 + $0x1d60] sm:$0xff]
    %v1328 = vld [vmem:[#allocation8 + $0x1d68] sm:$0xff]
    %v1329 = vld [vmem:[#allocation8 + $0x1d70] sm:$0xff]
    %v1330 = vld [vmem:[#allocation8 + $0x1d78] sm:$0xff]
    %v1331 = vld [vmem:[#allocation8 + $0x1d80] sm:$0xff]
    %v1332 = vld [vmem:[#allocation8 + $0x1d88] sm:$0xff]
    %v1333 = vld [vmem:[#allocation8 + $0x1d90] sm:$0xff]
    %v1334 = vld [vmem:[#allocation8 + $0x1d98] sm:$0xff]
    %v1335 = vld [vmem:[#allocation8 + $0x1da0] sm:$0xff]
    %v1336 = vld [vmem:[#allocation8 + $0x1da8] sm:$0xff]
    %v1337 = vld [vmem:[#allocation8 + $0x1db0] sm:$0xff]
    %v1338 = vld [vmem:[#allocation8 + $0x1db8] sm:$0xff]
    %v1339 = vld [vmem:[#allocation8 + $0x1dc0] sm:$0xff]
    %v1340 = vld [vmem:[#allocation8 + $0x1dc8] sm:$0xff]
    %v1341 = vld [vmem:[#allocation8 + $0x1dd0] sm:$0xff]
    %v1342 = vld [vmem:[#allocation8 + $0x1dd8] sm:$0xff]
    %v1343 = vld [vmem:[#allocation8 + $0x1de0] sm:$0xff]
    %v1344 = vld [vmem:[#allocation8 + $0x1de8] sm:$0xff]
    %v1345 = vld [vmem:[#allocation8 + $0x1df0] sm:$0xff]
    %v1346 = vld [vmem:[#allocation8 + $0x1df8] sm:$0xff]
    %v1347 = vld [vmem:[#allocation8 + $0x1e00] sm:$0xff]
    %v1348 = vld [vmem:[#allocation8 + $0x1e08] sm:$0xff]
    %v1349 = vld [vmem:[#allocation8 + $0x1e10] sm:$0xff]
    %v1350 = vld [vmem:[#allocation8 + $0x1e18] sm:$0xff]
    %v1351 = vld [vmem:[#allocation8 + $0x1e20] sm:$0xff]
    %v1352 = vld [vmem:[#allocation8 + $0x1e28] sm:$0xff]
    %v1353 = vld [vmem:[#allocation8 + $0x1e30] sm:$0xff]
    %v1354 = vld [vmem:[#allocation8 + $0x1e38] sm:$0xff]
    %v1355 = vld [vmem:[#allocation8 + $0x1e40] sm:$0xff]
    %v1356 = vld [vmem:[#allocation8 + $0x1e48] sm:$0xff]
    %v1357 = vld [vmem:[#allocation8 + $0x1e50] sm:$0xff]
    %v1358 = vld [vmem:[#allocation8 + $0x1e58] sm:$0xff]
    %v1359 = vld [vmem:[#allocation8 + $0x1e60] sm:$0xff]
    %v1360 = vld [vmem:[#allocation8 + $0x1e68] sm:$0xff]
    %v1361 = vld [vmem:[#allocation8 + $0x1e70] sm:$0xff]
    %v1362 = vld [vmem:[#allocation8 + $0x1e78] sm:$0xff]
    %v1363 = vld [vmem:[#allocation8 + $0x1e80] sm:$0xff]
    %v1364 = vld [vmem:[#allocation8 + $0x1e88] sm:$0xff]
    %v1365 = vld [vmem:[#allocation8 + $0x1e90] sm:$0xff]
    %v1366 = vld [vmem:[#allocation8 + $0x1e98] sm:$0xff]
    %v1367 = vld [vmem:[#allocation8 + $0x1ea0] sm:$0xff]
    %v1368 = vld [vmem:[#allocation8 + $0x1ea8] sm:$0xff]
    %v1369 = vld [vmem:[#allocation8 + $0x1eb0] sm:$0xff]
    %v1370 = vld [vmem:[#allocation8 + $0x1eb8] sm:$0xff]
    %v1371 = vld [vmem:[#allocation8 + $0x1ec0] sm:$0xff]
    %v1372 = vld [vmem:[#allocation8 + $0x1ec8] sm:$0xff]
    %v1373 = vld [vmem:[#allocation8 + $0x1ed0] sm:$0xff]
    %v1374 = vld [vmem:[#allocation8 + $0x1ed8] sm:$0xff]
    %v1375 = vld [vmem:[#allocation8 + $0x1ee0] sm:$0xff]
    %v1376 = vld [vmem:[#allocation8 + $0x1ee8] sm:$0xff]
    %v1377 = vld [vmem:[#allocation8 + $0x1ef0] sm:$0xff]
    %v1378 = vld [vmem:[#allocation8 + $0x1ef8] sm:$0xff]
    %v1379 = vld [vmem:[#allocation8 + $0x1f00] sm:$0xff]
    %v1380 = vld [vmem:[#allocation8 + $0x1f08] sm:$0xff]
    %v1381 = vld [vmem:[#allocation8 + $0x1f10] sm:$0xff]
    %v1382 = vld [vmem:[#allocation8 + $0x1f18] sm:$0xff]
    %v1383 = vld [vmem:[#allocation8 + $0x1f20] sm:$0xff]
    %v1384 = vld [vmem:[#allocation8 + $0x1f28] sm:$0xff]
    %v1385 = vld [vmem:[#allocation8 + $0x1f30] sm:$0xff]
    %v1386 = vld [vmem:[#allocation8 + $0x1f38] sm:$0xff]
    %v1387 = vld [vmem:[#allocation8 + $0x1f40] sm:$0xff]
    %v1388 = vld [vmem:[#allocation8 + $0x1f48] sm:$0xff]
    %v1389 = vld [vmem:[#allocation8 + $0x1f50] sm:$0xff]
    %v1390 = vld [vmem:[#allocation8 + $0x1f58] sm:$0xff]
    %v1391 = vld [vmem:[#allocation8 + $0x1f60] sm:$0xff]
    %v1392 = vld [vmem:[#allocation8 + $0x1f68] sm:$0xff]
    %v1393 = vld [vmem:[#allocation8 + $0x1f70] sm:$0xff]
    %v1394 = vld [vmem:[#allocation8 + $0x1f78] sm:$0xff]
    %v1395 = vld [vmem:[#allocation8 + $0x1f80] sm:$0xff]
    %v1396 = vld [vmem:[#allocation8 + $0x1f88] sm:$0xff]
    %v1397 = vld [vmem:[#allocation8 + $0x1f90] sm:$0xff]
    %v1398 = vld [vmem:[#allocation8 + $0x1f98] sm:$0xff]
    %v1399 = vld [vmem:[#allocation8 + $0x1fa0] sm:$0xff]
    %v1400 = vld [vmem:[#allocation8 + $0x1fa8] sm:$0xff]
    %v1401 = vld [vmem:[#allocation8 + $0x1fb0] sm:$0xff]
    %v1402 = vld [vmem:[#allocation8 + $0x1fb8] sm:$0xff]
    %v1403 = vld [vmem:[#allocation8 + $0x1fc0] sm:$0xff]
    %v1404 = vld [vmem:[#allocation8 + $0x1fc8] sm:$0xff]
    %v1405 = vld [vmem:[#allocation8 + $0x1fd0] sm:$0xff]
    %v1406 = vld [vmem:[#allocation8 + $0x1fd8] sm:$0xff]
    %v1407 = vld [vmem:[#allocation8 + $0x1fe0] sm:$0xff]
    %v1408 = vld [vmem:[#allocation8 + $0x1fe8] sm:$0xff]
    %v1409 = vld [vmem:[#allocation8 + $0x1ff0] sm:$0xff]
    %v1410 = vld [vmem:[#allocation8 + $0x1ff8] sm:$0xff]
    %v1411 = vld [vmem:[#allocation8 + $0x2000] sm:$0xff]
    %v1412 = vld [vmem:[#allocation8 + $0x2008] sm:$0xff]
    %v1413 = vld [vmem:[#allocation8 + $0x2010] sm:$0xff]
    %v1414 = vld [vmem:[#allocation8 + $0x2018] sm:$0xff]
    %v1415 = vld [vmem:[#allocation8 + $0x2020] sm:$0xff]
    %v1416 = vld [vmem:[#allocation8 + $0x2028] sm:$0xff]
    %v1417 = vld [vmem:[#allocation8 + $0x2030] sm:$0xff]
    %v1418 = vld [vmem:[#allocation8 + $0x2038] sm:$0xff]
    %v1419 = vld [vmem:[#allocation8 + $0x2040] sm:$0xff]
    %v1420 = vld [vmem:[#allocation8 + $0x2048] sm:$0xff]
    %v1421 = vld [vmem:[#allocation8 + $0x2050] sm:$0xff]
    %v1422 = vld [vmem:[#allocation8 + $0x2058] sm:$0xff]
    %v1423 = vld [vmem:[#allocation8 + $0x2060] sm:$0xff]
    %v1424 = vld [vmem:[#allocation8 + $0x2068] sm:$0xff]
    %v1425 = vld [vmem:[#allocation8 + $0x2070] sm:$0xff]
    %v1426 = vld [vmem:[#allocation8 + $0x2078] sm:$0xff]
    %v1427 = vld [vmem:[#allocation8 + $0x2080] sm:$0xff]
    %v1428 = vld [vmem:[#allocation8 + $0x2088] sm:$0xff]
    %v1429 = vld [vmem:[#allocation8 + $0x2090] sm:$0xff]
    %v1430 = vld [vmem:[#allocation8 + $0x2098] sm:$0xff]
    %v1431 = vld [vmem:[#allocation8 + $0x20a0] sm:$0xff]
    %v1432 = vld [vmem:[#allocation8 + $0x20a8] sm:$0xff]
    %v1433 = vld [vmem:[#allocation8 + $0x20b0] sm:$0xff]
    %v1434 = vld [vmem:[#allocation8 + $0x20b8] sm:$0xff]
    %v1435 = vld [vmem:[#allocation8 + $0x20c0] sm:$0xff]
    %v1436 = vld [vmem:[#allocation8 + $0x20c8] sm:$0xff]
    %v1437 = vld [vmem:[#allocation8 + $0x20d0] sm:$0xff]
    %v1438 = vld [vmem:[#allocation8 + $0x20d8] sm:$0xff]
    %v1439 = vld [vmem:[#allocation8 + $0x20e0] sm:$0xff]
    %v1440 = vld [vmem:[#allocation8 + $0x20e8] sm:$0xff]
    %v1441 = vld [vmem:[#allocation8 + $0x20f0] sm:$0xff]
    %v1442 = vld [vmem:[#allocation8 + $0x20f8] sm:$0xff]
    %v1443 = vld [vmem:[#allocation8 + $0x2100] sm:$0xff]
    %v1444 = vld [vmem:[#allocation8 + $0x2108] sm:$0xff]
    %v1445 = vld [vmem:[#allocation8 + $0x2110] sm:$0xff]
    %v1446 = vld [vmem:[#allocation8 + $0x2118] sm:$0xff]
    %v1447 = vld [vmem:[#allocation8 + $0x2120] sm:$0xff]
    %v1448 = vld [vmem:[#allocation8 + $0x2128] sm:$0xff]
    %v1449 = vld [vmem:[#allocation8 + $0x2130] sm:$0xff]
    %v1450 = vld [vmem:[#allocation8 + $0x2138] sm:$0xff]
    %v1451 = vld [vmem:[#allocation8 + $0x2140] sm:$0xff]
    %v1452 = vld [vmem:[#allocation8 + $0x2148] sm:$0xff]
    %v1453 = vld [vmem:[#allocation8 + $0x2150] sm:$0xff]
    %v1454 = vld [vmem:[#allocation8 + $0x2158] sm:$0xff]
    %v1455 = vld [vmem:[#allocation8 + $0x2160] sm:$0xff]
    %v1456 = vld [vmem:[#allocation8 + $0x2168] sm:$0xff]
    %v1457 = vld [vmem:[#allocation8 + $0x2170] sm:$0xff]
    %v1458 = vld [vmem:[#allocation8 + $0x2178] sm:$0xff]
    %v1459 = vld [vmem:[#allocation8 + $0x2180] sm:$0xff]
    %v1460 = vld [vmem:[#allocation8 + $0x2188] sm:$0xff]
    %v1461 = vld [vmem:[#allocation8 + $0x2190] sm:$0xff]
    %v1462 = vld [vmem:[#allocation8 + $0x2198] sm:$0xff]
    %v1463 = vld [vmem:[#allocation8 + $0x21a0] sm:$0xff]
    %v1464 = vld [vmem:[#allocation8 + $0x21a8] sm:$0xff]
    %v1465 = vld [vmem:[#allocation8 + $0x21b0] sm:$0xff]
    %v1466 = vld [vmem:[#allocation8 + $0x21b8] sm:$0xff]
    %v1467 = vld [vmem:[#allocation8 + $0x21c0] sm:$0xff]
    %v1468 = vld [vmem:[#allocation8 + $0x21c8] sm:$0xff]
    %v1469 = vld [vmem:[#allocation8 + $0x21d0] sm:$0xff]
    %v1470 = vld [vmem:[#allocation8 + $0x21d8] sm:$0xff]
    %v1471 = vld [vmem:[#allocation8 + $0x21e0] sm:$0xff]
    %v1472 = vld [vmem:[#allocation8 + $0x21e8] sm:$0xff]
    %v1473 = vld [vmem:[#allocation8 + $0x21f0] sm:$0xff]
    %v1474 = vld [vmem:[#allocation8 + $0x21f8] sm:$0xff]
    %v1475 = vld [vmem:[#allocation8 + $0x2200] sm:$0xff]
    %v1476 = vld [vmem:[#allocation8 + $0x2208] sm:$0xff]
    %v1477 = vld [vmem:[#allocation8 + $0x2210] sm:$0xff]
    %v1478 = vld [vmem:[#allocation8 + $0x2218] sm:$0xff]
    %v1479 = vld [vmem:[#allocation8 + $0x2220] sm:$0xff]
    %v1480 = vld [vmem:[#allocation8 + $0x2228] sm:$0xff]
    %v1481 = vld [vmem:[#allocation8 + $0x2230] sm:$0xff]
    %v1482 = vld [vmem:[#allocation8 + $0x2238] sm:$0xff]
    %v1483 = vld [vmem:[#allocation8 + $0x2240] sm:$0xff]
    %v1484 = vld [vmem:[#allocation8 + $0x2248] sm:$0xff]
    %v1485 = vld [vmem:[#allocation8 + $0x2250] sm:$0xff]
    %v1486 = vld [vmem:[#allocation8 + $0x2258] sm:$0xff]
    %v1487 = vld [vmem:[#allocation8 + $0x2260] sm:$0xff]
    %v1488 = vld [vmem:[#allocation8 + $0x2268] sm:$0xff]
    %v1489 = vld [vmem:[#allocation8 + $0x2270] sm:$0xff]
    %v1490 = vld [vmem:[#allocation8 + $0x2278] sm:$0xff]
    %v1491 = vld [vmem:[#allocation8 + $0x2280] sm:$0xff]
    %v1492 = vld [vmem:[#allocation8 + $0x2288] sm:$0xff]
    %v1493 = vld [vmem:[#allocation8 + $0x2290] sm:$0xff]
    %v1494 = vld [vmem:[#allocation8 + $0x2298] sm:$0xff]
    %v1495 = vld [vmem:[#allocation8 + $0x22a0] sm:$0xff]
    %v1496 = vld [vmem:[#allocation8 + $0x22a8] sm:$0xff]
    %v1497 = vld [vmem:[#allocation8 + $0x22b0] sm:$0xff]
    %v1498 = vld [vmem:[#allocation8 + $0x22b8] sm:$0xff]
    %v1499 = vld [vmem:[#allocation8 + $0x22c0] sm:$0xff]
    %v1500 = vld [vmem:[#allocation8 + $0x22c8] sm:$0xff]
    %v1501 = vld [vmem:[#allocation8 + $0x22d0] sm:$0xff]
    %v1502 = vld [vmem:[#allocation8 + $0x22d8] sm:$0xff]
    %v1503 = vld [vmem:[#allocation8 + $0x22e0] sm:$0xff]
    %v1504 = vld [vmem:[#allocation8 + $0x22e8] sm:$0xff]
    %v1505 = vld [vmem:[#allocation8 + $0x22f0] sm:$0xff]
    %v1506 = vld [vmem:[#allocation8 + $0x22f8] sm:$0xff]
    %v1507 = vld [vmem:[#allocation8 + $0x2300] sm:$0xff]
    %v1508 = vld [vmem:[#allocation8 + $0x2308] sm:$0xff]
    %v1509 = vld [vmem:[#allocation8 + $0x2310] sm:$0xff]
    %v1510 = vld [vmem:[#allocation8 + $0x2318] sm:$0xff]
    %v1511 = vld [vmem:[#allocation8 + $0x2320] sm:$0xff]
    %v1512 = vld [vmem:[#allocation8 + $0x2328] sm:$0xff]
    %v1513 = vld [vmem:[#allocation8 + $0x2330] sm:$0xff]
    %v1514 = vld [vmem:[#allocation8 + $0x2338] sm:$0xff]
    %v1515 = vld [vmem:[#allocation8 + $0x2340] sm:$0xff]
    %v1516 = vld [vmem:[#allocation8 + $0x2348] sm:$0xff]
    %v1517 = vld [vmem:[#allocation8 + $0x2350] sm:$0xff]
    %v1518 = vld [vmem:[#allocation8 + $0x2358] sm:$0xff]
    %v1519 = vld [vmem:[#allocation8 + $0x2360] sm:$0xff]
    %v1520 = vld [vmem:[#allocation8 + $0x2368] sm:$0xff]
    %v1521 = vld [vmem:[#allocation8 + $0x2370] sm:$0xff]
    %v1522 = vld [vmem:[#allocation8 + $0x2378] sm:$0xff]
    %v1523 = vld [vmem:[#allocation8 + $0x2380] sm:$0xff]
    %v1524 = vld [vmem:[#allocation8 + $0x2388] sm:$0xff]
    %v1525 = vld [vmem:[#allocation8 + $0x2390] sm:$0xff]
    %v1526 = vld [vmem:[#allocation8 + $0x2398] sm:$0xff]
    %v1527 = vld [vmem:[#allocation8 + $0x23a0] sm:$0xff]
    %v1528 = vld [vmem:[#allocation8 + $0x23a8] sm:$0xff]
    %v1529 = vld [vmem:[#allocation8 + $0x23b0] sm:$0xff]
    %v1530 = vld [vmem:[#allocation8 + $0x23b8] sm:$0xff]
    %v1531 = vld [vmem:[#allocation8 + $0x23c0] sm:$0xff]
    %v1532 = vld [vmem:[#allocation8 + $0x23c8] sm:$0xff]
    %v1533 = vld [vmem:[#allocation8 + $0x23d0] sm:$0xff]
    %v1534 = vld [vmem:[#allocation8 + $0x23d8] sm:$0xff]
    %v1535 = vld [vmem:[#allocation8 + $0x23e0] sm:$0xff]
    %v1536 = vld [vmem:[#allocation8 + $0x23e8] sm:$0xff]
    %v1537 = vld [vmem:[#allocation8 + $0x23f0] sm:$0xff]
    %v1538 = vld [vmem:[#allocation8 + $0x23f8] sm:$0xff]
    %v1539 = vld [vmem:[#allocation8 + $0x2400] sm:$0xff]
    %v1540 = vld [vmem:[#allocation8 + $0x2408] sm:$0xff]
    %v1541 = vld [vmem:[#allocation8 + $0x2410] sm:$0xff]
    %v1542 = vld [vmem:[#allocation8 + $0x2418] sm:$0xff]
    %v1543 = vld [vmem:[#allocation8 + $0x2420] sm:$0xff]
    %v1544 = vld [vmem:[#allocation8 + $0x2428] sm:$0xff]
    %v1545 = vld [vmem:[#allocation8 + $0x2430] sm:$0xff]
    %v1546 = vld [vmem:[#allocation8 + $0x2438] sm:$0xff]
    %v1547 = vld [vmem:[#allocation8 + $0x2440] sm:$0xff]
    %v1548 = vld [vmem:[#allocation8 + $0x2448] sm:$0xff]
    %v1549 = vld [vmem:[#allocation8 + $0x2450] sm:$0xff]
    %v1550 = vld [vmem:[#allocation8 + $0x2458] sm:$0xff]
    %v1551 = vld [vmem:[#allocation8 + $0x2460] sm:$0xff]
    %v1552 = vld [vmem:[#allocation8 + $0x2468] sm:$0xff]
    %v1553 = vld [vmem:[#allocation8 + $0x2470] sm:$0xff]
    %v1554 = vld [vmem:[#allocation8 + $0x2478] sm:$0xff]
    %v1555 = vld [vmem:[#allocation8 + $0x2480] sm:$0xff]
    %v1556 = vld [vmem:[#allocation8 + $0x2488] sm:$0xff]
    %v1557 = vld [vmem:[#allocation8 + $0x2490] sm:$0xff]
    %v1558 = vld [vmem:[#allocation8 + $0x2498] sm:$0xff]
    %v1559 = vld [vmem:[#allocation8 + $0x24a0] sm:$0xff]
    %v1560 = vld [vmem:[#allocation8 + $0x24a8] sm:$0xff]
    %v1561 = vld [vmem:[#allocation8 + $0x24b0] sm:$0xff]
    %v1562 = vld [vmem:[#allocation8 + $0x24b8] sm:$0xff]
    %v1563 = vld [vmem:[#allocation8 + $0x24c0] sm:$0xff]
    %v1564 = vld [vmem:[#allocation8 + $0x24c8] sm:$0xff]
    %v1565 = vld [vmem:[#allocation8 + $0x24d0] sm:$0xff]
    %v1566 = vld [vmem:[#allocation8 + $0x24d8] sm:$0xff]
    %v1567 = vld [vmem:[#allocation8 + $0x24e0] sm:$0xff]
    %v1568 = vld [vmem:[#allocation8 + $0x24e8] sm:$0xff]
    %v1569 = vld [vmem:[#allocation8 + $0x24f0] sm:$0xff]
    %v1570 = vld [vmem:[#allocation8 + $0x24f8] sm:$0xff]
    %v1571 = vld [vmem:[#allocation8 + $0x2500] sm:$0xff]
    %v1572 = vld [vmem:[#allocation8 + $0x2508] sm:$0xff]
    %v1573 = vld [vmem:[#allocation8 + $0x2510] sm:$0xff]
    %v1574 = vld [vmem:[#allocation8 + $0x2518] sm:$0xff]
    %v1575 = vld [vmem:[#allocation8 + $0x2520] sm:$0xff]
    %v1576 = vld [vmem:[#allocation8 + $0x2528] sm:$0xff]
    %v1577 = vld [vmem:[#allocation8 + $0x2530] sm:$0xff]
    %v1578 = vld [vmem:[#allocation8 + $0x2538] sm:$0xff]
    %v1579 = vld [vmem:[#allocation8 + $0x2540] sm:$0xff]
    %v1580 = vld [vmem:[#allocation8 + $0x2548] sm:$0xff]
    %v1581 = vld [vmem:[#allocation8 + $0x2550] sm:$0xff]
    %v1582 = vld [vmem:[#allocation8 + $0x2558] sm:$0xff]
    %v1583 = vld [vmem:[#allocation8 + $0x2560] sm:$0xff]
    %v1584 = vld [vmem:[#allocation8 + $0x2568] sm:$0xff]
    %v1585 = vld [vmem:[#allocation8 + $0x2570] sm:$0xff]
    %v1586 = vld [vmem:[#allocation8 + $0x2578] sm:$0xff]
    %v1587 = vld [vmem:[#allocation8 + $0x2580] sm:$0xff]
    %v1588 = vld [vmem:[#allocation8 + $0x2588] sm:$0xff]
    %v1589 = vld [vmem:[#allocation8 + $0x2590] sm:$0xff]
    %v1590 = vld [vmem:[#allocation8 + $0x2598] sm:$0xff]
    %v1591 = vld [vmem:[#allocation8 + $0x25a0] sm:$0xff]
    %v1592 = vld [vmem:[#allocation8 + $0x25a8] sm:$0xff]
    %v1593 = vld [vmem:[#allocation8 + $0x25b0] sm:$0xff]
    %v1594 = vld [vmem:[#allocation8 + $0x25b8] sm:$0xff]
    %v1595 = vld [vmem:[#allocation8 + $0x25c0] sm:$0xff]
    %v1596 = vld [vmem:[#allocation8 + $0x25c8] sm:$0xff]
    %v1597 = vld [vmem:[#allocation8 + $0x25d0] sm:$0xff]
    %v1598 = vld [vmem:[#allocation8 + $0x25d8] sm:$0xff]
    %v1599 = vld [vmem:[#allocation8 + $0x25e0] sm:$0xff]
    %v1600 = vld [vmem:[#allocation8 + $0x25e8] sm:$0xff]
    %v1601 = vld [vmem:[#allocation8 + $0x25f0] sm:$0xff]
    %v1602 = vld [vmem:[#allocation8 + $0x25f8] sm:$0xff]
    %v1603 = vld [vmem:[#allocation8 + $0x2600] sm:$0xff]
    %v1604 = vld [vmem:[#allocation8 + $0x2608] sm:$0xff]
    %v1605 = vld [vmem:[#allocation8 + $0x2610] sm:$0xff]
    %v1606 = vld [vmem:[#allocation8 + $0x2618] sm:$0xff]
    %v1607 = vld [vmem:[#allocation8 + $0x2620] sm:$0xff]
    %v1608 = vld [vmem:[#allocation8 + $0x2628] sm:$0xff]
    %v1609 = vld [vmem:[#allocation8 + $0x2630] sm:$0xff]
    %v1610 = vld [vmem:[#allocation8 + $0x2638] sm:$0xff]
    %v1611 = vld [vmem:[#allocation8 + $0x2640] sm:$0xff]
    %v1612 = vld [vmem:[#allocation8 + $0x2648] sm:$0xff]
    %v1613 = vld [vmem:[#allocation8 + $0x2650] sm:$0xff]
    %v1614 = vld [vmem:[#allocation8 + $0x2658] sm:$0xff]
    %v1615 = vld [vmem:[#allocation8 + $0x2660] sm:$0xff]
    %v1616 = vld [vmem:[#allocation8 + $0x2668] sm:$0xff]
    %v1617 = vld [vmem:[#allocation8 + $0x2670] sm:$0xff]
    %v1618 = vld [vmem:[#allocation8 + $0x2678] sm:$0xff]
    %v1619 = vld [vmem:[#allocation8 + $0x2680] sm:$0xff]
    %v1620 = vld [vmem:[#allocation8 + $0x2688] sm:$0xff]
    %v1621 = vld [vmem:[#allocation8 + $0x2690] sm:$0xff]
    %v1622 = vld [vmem:[#allocation8 + $0x2698] sm:$0xff]
    %v1623 = vld [vmem:[#allocation8 + $0x26a0] sm:$0xff]
    %v1624 = vld [vmem:[#allocation8 + $0x26a8] sm:$0xff]
    %v1625 = vld [vmem:[#allocation8 + $0x26b0] sm:$0xff]
    %v1626 = vld [vmem:[#allocation8 + $0x26b8] sm:$0xff]
    %v1627 = vld [vmem:[#allocation8 + $0x26c0] sm:$0xff]
    %v1628 = vld [vmem:[#allocation8 + $0x26c8] sm:$0xff]
    %v1629 = vld [vmem:[#allocation8 + $0x26d0] sm:$0xff]
    %v1630 = vld [vmem:[#allocation8 + $0x26d8] sm:$0xff]
    %v1631 = vld [vmem:[#allocation8 + $0x26e0] sm:$0xff]
    %v1632 = vld [vmem:[#allocation8 + $0x26e8] sm:$0xff]
    %v1633 = vld [vmem:[#allocation8 + $0x26f0] sm:$0xff]
    %v1634 = vld [vmem:[#allocation8 + $0x26f8] sm:$0xff]
    %v1635 = vld [vmem:[#allocation8 + $0x2700] sm:$0xff]
    %v1636 = vld [vmem:[#allocation8 + $0x2708] sm:$0xff]
    %v1637 = vld [vmem:[#allocation8 + $0x2710] sm:$0xff]
    %v1638 = vld [vmem:[#allocation8 + $0x2718] sm:$0xff]
    %v1639 = vld [vmem:[#allocation8 + $0x2720] sm:$0xff]
    %v1640 = vld [vmem:[#allocation8 + $0x2728] sm:$0xff]
    %v1641 = vld [vmem:[#allocation8 + $0x2730] sm:$0xff]
    %v1642 = vld [vmem:[#allocation8 + $0x2738] sm:$0xff]
    %v1643 = vld [vmem:[#allocation8 + $0x2740] sm:$0xff]
    %v1644 = vld [vmem:[#allocation8 + $0x2748] sm:$0xff]
    %v1645 = vld [vmem:[#allocation8 + $0x2750] sm:$0xff]
    %v1646 = vld [vmem:[#allocation8 + $0x2758] sm:$0xff]
    %v1647 = vld [vmem:[#allocation8 + $0x2760] sm:$0xff]
    %v1648 = vld [vmem:[#allocation8 + $0x2768] sm:$0xff]
    %v1649 = vld [vmem:[#allocation8 + $0x2770] sm:$0xff]
    %v1650 = vld [vmem:[#allocation8 + $0x2778] sm:$0xff]
    %v1651 = vld [vmem:[#allocation8 + $0x2780] sm:$0xff]
    %v1652 = vld [vmem:[#allocation8 + $0x2788] sm:$0xff]
    %v1653 = vld [vmem:[#allocation8 + $0x2790] sm:$0xff]
    %v1654 = vld [vmem:[#allocation8 + $0x2798] sm:$0xff]
    %v1655 = vld [vmem:[#allocation8 + $0x27a0] sm:$0xff]
    %v1656 = vld [vmem:[#allocation8 + $0x27a8] sm:$0xff]
    %v1657 = vld [vmem:[#allocation8 + $0x27b0] sm:$0xff]
    %v1658 = vld [vmem:[#allocation8 + $0x27b8] sm:$0xff]
    %v1659 = vld [vmem:[#allocation8 + $0x27c0] sm:$0xff]
    %v1660 = vld [vmem:[#allocation8 + $0x27c8] sm:$0xff]
    %v1661 = vld [vmem:[#allocation8 + $0x27d0] sm:$0xff]
    %v1662 = vld [vmem:[#allocation8 + $0x27d8] sm:$0xff]
    %v1663 = vld [vmem:[#allocation8 + $0x27e0] sm:$0xff]
    %v1664 = vld [vmem:[#allocation8 + $0x27e8] sm:$0xff]
    %v1665 = vld [vmem:[#allocation8 + $0x27f0] sm:$0xff]
    %v1666 = vld [vmem:[#allocation8 + $0x27f8] sm:$0xff]
    %v1667 = vld [vmem:[#allocation8 + $0x2800] sm:$0xff]
    %v1668 = vld [vmem:[#allocation8 + $0x2808] sm:$0xff]
    %v1669 = vld [vmem:[#allocation8 + $0x2810] sm:$0xff]
    %v1670 = vld [vmem:[#allocation8 + $0x2818] sm:$0xff]
    %v1671 = vld [vmem:[#allocation8 + $0x2820] sm:$0xff]
    %v1672 = vld [vmem:[#allocation8 + $0x2828] sm:$0xff]
    %v1673 = vld [vmem:[#allocation8 + $0x2830] sm:$0xff]
    %v1674 = vld [vmem:[#allocation8 + $0x2838] sm:$0xff]
    %v1675 = vld [vmem:[#allocation8 + $0x2840] sm:$0xff]
    %v1676 = vld [vmem:[#allocation8 + $0x2848] sm:$0xff]
    %v1677 = vld [vmem:[#allocation8 + $0x2850] sm:$0xff]
    %v1678 = vld [vmem:[#allocation8 + $0x2858] sm:$0xff]
    %v1679 = vld [vmem:[#allocation8 + $0x2860] sm:$0xff]
    %v1680 = vld [vmem:[#allocation8 + $0x2868] sm:$0xff]
    %v1681 = vld [vmem:[#allocation8 + $0x2870] sm:$0xff]
    %v1682 = vld [vmem:[#allocation8 + $0x2878] sm:$0xff]
    %v1683 = vld [vmem:[#allocation8 + $0x2880] sm:$0xff]
    %v1684 = vld [vmem:[#allocation8 + $0x2888] sm:$0xff]
    %v1685 = vld [vmem:[#allocation8 + $0x2890] sm:$0xff]
    %v1686 = vld [vmem:[#allocation8 + $0x2898] sm:$0xff]
    %v1687 = vld [vmem:[#allocation8 + $0x28a0] sm:$0xff]
    %v1688 = vld [vmem:[#allocation8 + $0x28a8] sm:$0xff]
    %v1689 = vld [vmem:[#allocation8 + $0x28b0] sm:$0xff]
    %v1690 = vld [vmem:[#allocation8 + $0x28b8] sm:$0xff]
    %v1691 = vld [vmem:[#allocation8 + $0x28c0] sm:$0xff]
    %v1692 = vld [vmem:[#allocation8 + $0x28c8] sm:$0xff]
    %v1693 = vld [vmem:[#allocation8 + $0x28d0] sm:$0xff]
    %v1694 = vld [vmem:[#allocation8 + $0x28d8] sm:$0xff]
    %v1695 = vld [vmem:[#allocation8 + $0x28e0] sm:$0xff]
    %v1696 = vld [vmem:[#allocation8 + $0x28e8] sm:$0xff]
    %v1697 = vld [vmem:[#allocation8 + $0x28f0] sm:$0xff]
    %v1698 = vld [vmem:[#allocation8 + $0x28f8] sm:$0xff]
    %v1699 = vld [vmem:[#allocation8 + $0x2900] sm:$0xff]
    %v1700 = vld [vmem:[#allocation8 + $0x2908] sm:$0xff]
    %v1701 = vld [vmem:[#allocation8 + $0x2910] sm:$0xff]
    %v1702 = vld [vmem:[#allocation8 + $0x2918] sm:$0xff]
    %v1703 = vld [vmem:[#allocation8 + $0x2920] sm:$0xff]
    %v1704 = vld [vmem:[#allocation8 + $0x2928] sm:$0xff]
    %v1705 = vld [vmem:[#allocation8 + $0x2930] sm:$0xff]
    %v1706 = vld [vmem:[#allocation8 + $0x2938] sm:$0xff]
    %v1707 = vld [vmem:[#allocation8 + $0x2940] sm:$0xff]
    %v1708 = vld [vmem:[#allocation8 + $0x2948] sm:$0xff]
    %v1709 = vld [vmem:[#allocation8 + $0x2950] sm:$0xff]
    %v1710 = vld [vmem:[#allocation8 + $0x2958] sm:$0xff]
    %v1711 = vld [vmem:[#allocation8 + $0x2960] sm:$0xff]
    %v1712 = vld [vmem:[#allocation8 + $0x2968] sm:$0xff]
    %v1713 = vld [vmem:[#allocation8 + $0x2970] sm:$0xff]
    %v1714 = vld [vmem:[#allocation8 + $0x2978] sm:$0xff]
    %v1715 = vld [vmem:[#allocation8 + $0x2980] sm:$0xff]
    %v1716 = vld [vmem:[#allocation8 + $0x2988] sm:$0xff]
    %v1717 = vld [vmem:[#allocation8 + $0x2990] sm:$0xff]
    %v1718 = vld [vmem:[#allocation8 + $0x2998] sm:$0xff]
    %v1719 = vld [vmem:[#allocation8 + $0x29a0] sm:$0xff]
    %v1720 = vld [vmem:[#allocation8 + $0x29a8] sm:$0xff]
    %v1721 = vld [vmem:[#allocation8 + $0x29b0] sm:$0xff]
    %v1722 = vld [vmem:[#allocation8 + $0x29b8] sm:$0xff]
    %v1723 = vld [vmem:[#allocation8 + $0x29c0] sm:$0xff]
    %v1724 = vld [vmem:[#allocation8 + $0x29c8] sm:$0xff]
    %v1725 = vld [vmem:[#allocation8 + $0x29d0] sm:$0xff]
    %v1726 = vld [vmem:[#allocation8 + $0x29d8] sm:$0xff]
    %v1727 = vld [vmem:[#allocation8 + $0x29e0] sm:$0xff]
    %v1728 = vld [vmem:[#allocation8 + $0x29e8] sm:$0xff]
    %v1729 = vld [vmem:[#allocation8 + $0x29f0] sm:$0xff]
    %v1730 = vld [vmem:[#allocation8 + $0x29f8] sm:$0xff]
    %v1731 = vld [vmem:[#allocation8 + $0x2a00] sm:$0xff]
    %v1732 = vld [vmem:[#allocation8 + $0x2a08] sm:$0xff]
    %v1733 = vld [vmem:[#allocation8 + $0x2a10] sm:$0xff]
    %v1734 = vld [vmem:[#allocation8 + $0x2a18] sm:$0xff]
    %v1735 = vld [vmem:[#allocation8 + $0x2a20] sm:$0xff]
    %v1736 = vld [vmem:[#allocation8 + $0x2a28] sm:$0xff]
    %v1737 = vld [vmem:[#allocation8 + $0x2a30] sm:$0xff]
    %v1738 = vld [vmem:[#allocation8 + $0x2a38] sm:$0xff]
    %v1739 = vld [vmem:[#allocation8 + $0x2a40] sm:$0xff]
    %v1740 = vld [vmem:[#allocation8 + $0x2a48] sm:$0xff]
    %v1741 = vld [vmem:[#allocation8 + $0x2a50] sm:$0xff]
    %v1742 = vld [vmem:[#allocation8 + $0x2a58] sm:$0xff]
    %v1743 = vld [vmem:[#allocation8 + $0x2a60] sm:$0xff]
    %v1744 = vld [vmem:[#allocation8 + $0x2a68] sm:$0xff]
    %v1745 = vld [vmem:[#allocation8 + $0x2a70] sm:$0xff]
    %v1746 = vld [vmem:[#allocation8 + $0x2a78] sm:$0xff]
    %v1747 = vld [vmem:[#allocation8 + $0x2a80] sm:$0xff]
    %v1748 = vld [vmem:[#allocation8 + $0x2a88] sm:$0xff]
    %v1749 = vld [vmem:[#allocation8 + $0x2a90] sm:$0xff]
    %v1750 = vld [vmem:[#allocation8 + $0x2a98] sm:$0xff]
    %v1751 = vld [vmem:[#allocation8 + $0x2aa0] sm:$0xff]
    %v1752 = vld [vmem:[#allocation8 + $0x2aa8] sm:$0xff]
    %v1753 = vld [vmem:[#allocation8 + $0x2ab0] sm:$0xff]
    %v1754 = vld [vmem:[#allocation8 + $0x2ab8] sm:$0xff]
    %v1755 = vld [vmem:[#allocation8 + $0x2ac0] sm:$0xff]
    %v1756 = vld [vmem:[#allocation8 + $0x2ac8] sm:$0xff]
    %v1757 = vld [vmem:[#allocation8 + $0x2ad0] sm:$0xff]
    %v1758 = vld [vmem:[#allocation8 + $0x2ad8] sm:$0xff]
    %v1759 = vld [vmem:[#allocation8 + $0x2ae0] sm:$0xff]
    %v1760 = vld [vmem:[#allocation8 + $0x2ae8] sm:$0xff]
    %v1761 = vld [vmem:[#allocation8 + $0x2af0] sm:$0xff]
    %v1762 = vld [vmem:[#allocation8 + $0x2af8] sm:$0xff]
    %v1763 = vld [vmem:[#allocation8 + $0x2b00] sm:$0xff]
    %v1764 = vld [vmem:[#allocation8 + $0x2b08] sm:$0xff]
    %v1765 = vld [vmem:[#allocation8 + $0x2b10] sm:$0xff]
    %v1766 = vld [vmem:[#allocation8 + $0x2b18] sm:$0xff]
    %v1767 = vld [vmem:[#allocation8 + $0x2b20] sm:$0xff]
    %v1768 = vld [vmem:[#allocation8 + $0x2b28] sm:$0xff]
    %v1769 = vld [vmem:[#allocation8 + $0x2b30] sm:$0xff]
    %v1770 = vld [vmem:[#allocation8 + $0x2b38] sm:$0xff]
    %v1771 = vld [vmem:[#allocation8 + $0x2b40] sm:$0xff]
    %v1772 = vld [vmem:[#allocation8 + $0x2b48] sm:$0xff]
    %v1773 = vld [vmem:[#allocation8 + $0x2b50] sm:$0xff]
    %v1774 = vld [vmem:[#allocation8 + $0x2b58] sm:$0xff]
    %v1775 = vld [vmem:[#allocation8 + $0x2b60] sm:$0xff]
    %v1776 = vld [vmem:[#allocation8 + $0x2b68] sm:$0xff]
    %v1777 = vld [vmem:[#allocation8 + $0x2b70] sm:$0xff]
    %v1778 = vld [vmem:[#allocation8 + $0x2b78] sm:$0xff]
    %v1779 = vld [vmem:[#allocation8 + $0x2b80] sm:$0xff]
    %v1780 = vld [vmem:[#allocation8 + $0x2b88] sm:$0xff]
    %v1781 = vld [vmem:[#allocation8 + $0x2b90] sm:$0xff]
    %v1782 = vld [vmem:[#allocation8 + $0x2b98] sm:$0xff]
    %v1783 = vld [vmem:[#allocation8 + $0x2ba0] sm:$0xff]
    %v1784 = vld [vmem:[#allocation8 + $0x2ba8] sm:$0xff]
    %v1785 = vld [vmem:[#allocation8 + $0x2bb0] sm:$0xff]
    %v1786 = vld [vmem:[#allocation8 + $0x2bb8] sm:$0xff]
    %v1787 = vld [vmem:[#allocation8 + $0x2bc0] sm:$0xff]
    %v1788 = vld [vmem:[#allocation8 + $0x2bc8] sm:$0xff]
    %v1789 = vld [vmem:[#allocation8 + $0x2bd0] sm:$0xff]
    %v1790 = vld [vmem:[#allocation8 + $0x2bd8] sm:$0xff]
    %v1791 = vld [vmem:[#allocation8 + $0x2be0] sm:$0xff]
    %v1792 = vld [vmem:[#allocation8 + $0x2be8] sm:$0xff]
    %v1793 = vld [vmem:[#allocation8 + $0x2bf0] sm:$0xff]
    %v1794 = vld [vmem:[#allocation8 + $0x2bf8] sm:$0xff]
    %v1795 = vld [vmem:[#allocation8 + $0x2c00] sm:$0xff]
    %v1796 = vld [vmem:[#allocation8 + $0x2c08] sm:$0xff]
    %v1797 = vld [vmem:[#allocation8 + $0x2c10] sm:$0xff]
    %v1798 = vld [vmem:[#allocation8 + $0x2c18] sm:$0xff]
    %v1799 = vld [vmem:[#allocation8 + $0x2c20] sm:$0xff]
    %v1800 = vld [vmem:[#allocation8 + $0x2c28] sm:$0xff]
    %v1801 = vld [vmem:[#allocation8 + $0x2c30] sm:$0xff]
    %v1802 = vld [vmem:[#allocation8 + $0x2c38] sm:$0xff]
    %v1803 = vld [vmem:[#allocation8 + $0x2c40] sm:$0xff]
    %v1804 = vld [vmem:[#allocation8 + $0x2c48] sm:$0xff]
    %v1805 = vld [vmem:[#allocation8 + $0x2c50] sm:$0xff]
    %v1806 = vld [vmem:[#allocation8 + $0x2c58] sm:$0xff]
    %v1807 = vld [vmem:[#allocation8 + $0x2c60] sm:$0xff]
    %v1808 = vld [vmem:[#allocation8 + $0x2c68] sm:$0xff]
    %v1809 = vld [vmem:[#allocation8 + $0x2c70] sm:$0xff]
    %v1810 = vld [vmem:[#allocation8 + $0x2c78] sm:$0xff]
    %v1811 = vld [vmem:[#allocation8 + $0x2c80] sm:$0xff]
    %v1812 = vld [vmem:[#allocation8 + $0x2c88] sm:$0xff]
    %v1813 = vld [vmem:[#allocation8 + $0x2c90] sm:$0xff]
    %v1814 = vld [vmem:[#allocation8 + $0x2c98] sm:$0xff]
    %v1815 = vld [vmem:[#allocation8 + $0x2ca0] sm:$0xff]
    %v1816 = vld [vmem:[#allocation8 + $0x2ca8] sm:$0xff]
    %v1817 = vld [vmem:[#allocation8 + $0x2cb0] sm:$0xff]
    %v1818 = vld [vmem:[#allocation8 + $0x2cb8] sm:$0xff]
    %v1819 = vld [vmem:[#allocation8 + $0x2cc0] sm:$0xff]
    %v1820 = vld [vmem:[#allocation8 + $0x2cc8] sm:$0xff]
    %v1821 = vld [vmem:[#allocation8 + $0x2cd0] sm:$0xff]
    %v1822 = vld [vmem:[#allocation8 + $0x2cd8] sm:$0xff]
    %v1823 = vld [vmem:[#allocation8 + $0x2ce0] sm:$0xff]
    %v1824 = vld [vmem:[#allocation8 + $0x2ce8] sm:$0xff]
    %v1825 = vld [vmem:[#allocation8 + $0x2cf0] sm:$0xff]
    %v1826 = vld [vmem:[#allocation8 + $0x2cf8] sm:$0xff]
    %v1827 = vld [vmem:[#allocation8 + $0x2d00] sm:$0xff]
    %v1828 = vld [vmem:[#allocation8 + $0x2d08] sm:$0xff]
    %v1829 = vld [vmem:[#allocation8 + $0x2d10] sm:$0xff]
    %v1830 = vld [vmem:[#allocation8 + $0x2d18] sm:$0xff]
    %v1831 = vld [vmem:[#allocation8 + $0x2d20] sm:$0xff]
    %v1832 = vld [vmem:[#allocation8 + $0x2d28] sm:$0xff]
    %v1833 = vld [vmem:[#allocation8 + $0x2d30] sm:$0xff]
    %v1834 = vld [vmem:[#allocation8 + $0x2d38] sm:$0xff]
    %v1835 = vld [vmem:[#allocation8 + $0x2d40] sm:$0xff]
    %v1836 = vld [vmem:[#allocation8 + $0x2d48] sm:$0xff]
    %v1837 = vld [vmem:[#allocation8 + $0x2d50] sm:$0xff]
    %v1838 = vld [vmem:[#allocation8 + $0x2d58] sm:$0xff]
    %v1839 = vld [vmem:[#allocation8 + $0x2d60] sm:$0xff]
    %v1840 = vld [vmem:[#allocation8 + $0x2d68] sm:$0xff]
    %v1841 = vld [vmem:[#allocation8 + $0x2d70] sm:$0xff]
    %v1842 = vld [vmem:[#allocation8 + $0x2d78] sm:$0xff]
    %v1843 = vld [vmem:[#allocation8 + $0x2d80] sm:$0xff]
    %v1844 = vld [vmem:[#allocation8 + $0x2d88] sm:$0xff]
    %v1845 = vld [vmem:[#allocation8 + $0x2d90] sm:$0xff]
    %v1846 = vld [vmem:[#allocation8 + $0x2d98] sm:$0xff]
    %v1847 = vld [vmem:[#allocation8 + $0x2da0] sm:$0xff]
    %v1848 = vld [vmem:[#allocation8 + $0x2da8] sm:$0xff]
    %v1849 = vld [vmem:[#allocation8 + $0x2db0] sm:$0xff]
    %v1850 = vld [vmem:[#allocation8 + $0x2db8] sm:$0xff]
    %v1851 = vld [vmem:[#allocation8 + $0x2dc0] sm:$0xff]
    %v1852 = vld [vmem:[#allocation8 + $0x2dc8] sm:$0xff]
    %v1853 = vld [vmem:[#allocation8 + $0x2dd0] sm:$0xff]
    %v1854 = vld [vmem:[#allocation8 + $0x2dd8] sm:$0xff]
    %v1855 = vld [vmem:[#allocation8 + $0x2de0] sm:$0xff]
    %v1856 = vld [vmem:[#allocation8 + $0x2de8] sm:$0xff]
    %v1857 = vld [vmem:[#allocation8 + $0x2df0] sm:$0xff]
    %v1858 = vld [vmem:[#allocation8 + $0x2df8] sm:$0xff]
    %v1859 = vld [vmem:[#allocation8 + $0x2e00] sm:$0xff]
    %v1860 = vld [vmem:[#allocation8 + $0x2e08] sm:$0xff]
    %v1861 = vld [vmem:[#allocation8 + $0x2e10] sm:$0xff]
    %v1862 = vld [vmem:[#allocation8 + $0x2e18] sm:$0xff]
    %v1863 = vld [vmem:[#allocation8 + $0x2e20] sm:$0xff]
    %v1864 = vld [vmem:[#allocation8 + $0x2e28] sm:$0xff]
    %v1865 = vld [vmem:[#allocation8 + $0x2e30] sm:$0xff]
    %v1866 = vld [vmem:[#allocation8 + $0x2e38] sm:$0xff]
    %v1867 = vld [vmem:[#allocation8 + $0x2e40] sm:$0xff]
    %v1868 = vld [vmem:[#allocation8 + $0x2e48] sm:$0xff]
    %v1869 = vld [vmem:[#allocation8 + $0x2e50] sm:$0xff]
    %v1870 = vld [vmem:[#allocation8 + $0x2e58] sm:$0xff]
    %v1871 = vld [vmem:[#allocation8 + $0x2e60] sm:$0xff]
    %v1872 = vld [vmem:[#allocation8 + $0x2e68] sm:$0xff]
    %v1873 = vld [vmem:[#allocation8 + $0x2e70] sm:$0xff]
    %v1874 = vld [vmem:[#allocation8 + $0x2e78] sm:$0xff]
    %v1875 = vld [vmem:[#allocation8 + $0x2e80] sm:$0xff]
    %v1876 = vld [vmem:[#allocation8 + $0x2e88] sm:$0xff]
    %v1877 = vld [vmem:[#allocation8 + $0x2e90] sm:$0xff]
    %v1878 = vld [vmem:[#allocation8 + $0x2e98] sm:$0xff]
    %v1879 = vld [vmem:[#allocation8 + $0x2ea0] sm:$0xff]
    %v1880 = vld [vmem:[#allocation8 + $0x2ea8] sm:$0xff]
    %v1881 = vld [vmem:[#allocation8 + $0x2eb0] sm:$0xff]
    %v1882 = vld [vmem:[#allocation8 + $0x2eb8] sm:$0xff]
    %v1883 = vld [vmem:[#allocation8 + $0x2ec0] sm:$0xff]
    %v1884 = vld [vmem:[#allocation8 + $0x2ec8] sm:$0xff]
    %v1885 = vld [vmem:[#allocation8 + $0x2ed0] sm:$0xff]
    %v1886 = vld [vmem:[#allocation8 + $0x2ed8] sm:$0xff]
    %v1887 = vld [vmem:[#allocation8 + $0x2ee0] sm:$0xff]
    %v1888 = vld [vmem:[#allocation8 + $0x2ee8] sm:$0xff]
    %v1889 = vld [vmem:[#allocation8 + $0x2ef0] sm:$0xff]
    %v1890 = vld [vmem:[#allocation8 + $0x2ef8] sm:$0xff]
    %v1891 = vld [vmem:[#allocation8 + $0x2f00] sm:$0xff]
    %v1892 = vld [vmem:[#allocation8 + $0x2f08] sm:$0xff]
    %v1893 = vld [vmem:[#allocation8 + $0x2f10] sm:$0xff]
    %v1894 = vld [vmem:[#allocation8 + $0x2f18] sm:$0xff]
    %v1895 = vld [vmem:[#allocation8 + $0x2f20] sm:$0xff]
    %v1896 = vld [vmem:[#allocation8 + $0x2f28] sm:$0xff]
    %v1897 = vld [vmem:[#allocation8 + $0x2f30] sm:$0xff]
    %v1898 = vld [vmem:[#allocation8 + $0x2f38] sm:$0xff]
    %v1899 = vld [vmem:[#allocation8 + $0x2f40] sm:$0xff]
    %v1900 = vld [vmem:[#allocation8 + $0x2f48] sm:$0xff]
    %v1901 = vld [vmem:[#allocation8 + $0x2f50] sm:$0xff]
    %v1902 = vld [vmem:[#allocation8 + $0x2f58] sm:$0xff]
    %v1903 = vld [vmem:[#allocation8 + $0x2f60] sm:$0xff]
    %v1904 = vld [vmem:[#allocation8 + $0x2f68] sm:$0xff]
    %v1905 = vld [vmem:[#allocation8 + $0x2f70] sm:$0xff]
    %v1906 = vld [vmem:[#allocation8 + $0x2f78] sm:$0xff]
    %v1907 = vld [vmem:[#allocation8 + $0x2f80] sm:$0xff]
    %v1908 = vld [vmem:[#allocation8 + $0x2f88] sm:$0xff]
    %v1909 = vld [vmem:[#allocation8 + $0x2f90] sm:$0xff]
    %v1910 = vld [vmem:[#allocation8 + $0x2f98] sm:$0xff]
    %v1911 = vld [vmem:[#allocation8 + $0x2fa0] sm:$0xff]
    %v1912 = vld [vmem:[#allocation8 + $0x2fa8] sm:$0xff]
    %v1913 = vld [vmem:[#allocation8 + $0x2fb0] sm:$0xff]
    %v1914 = vld [vmem:[#allocation8 + $0x2fb8] sm:$0xff]
    %v1915 = vld [vmem:[#allocation8 + $0x2fc0] sm:$0xff]
    %v1916 = vld [vmem:[#allocation8 + $0x2fc8] sm:$0xff]
    %v1917 = vld [vmem:[#allocation8 + $0x2fd0] sm:$0xff]
    %v1918 = vld [vmem:[#allocation8 + $0x2fd8] sm:$0xff]
    %v1919 = vld [vmem:[#allocation8 + $0x2fe0] sm:$0xff]
    %v1920 = vld [vmem:[#allocation8 + $0x2fe8] sm:$0xff]
    %v1921 = vld [vmem:[#allocation8 + $0x2ff0] sm:$0xff]
    %v1922 = vld [vmem:[#allocation8 + $0x2ff8] sm:$0xff]
    %v1923 = vld [vmem:[#allocation8 + $0x3000] sm:$0xff]
    %v1924 = vld [vmem:[#allocation8 + $0x3008] sm:$0xff]
    %v1925 = vld [vmem:[#allocation8 + $0x3010] sm:$0xff]
    %v1926 = vld [vmem:[#allocation8 + $0x3018] sm:$0xff]
    %v1927 = vld [vmem:[#allocation8 + $0x3020] sm:$0xff]
    %v1928 = vld [vmem:[#allocation8 + $0x3028] sm:$0xff]
    %v1929 = vld [vmem:[#allocation8 + $0x3030] sm:$0xff]
    %v1930 = vld [vmem:[#allocation8 + $0x3038] sm:$0xff]
    %v1931 = vld [vmem:[#allocation8 + $0x3040] sm:$0xff]
    %v1932 = vld [vmem:[#allocation8 + $0x3048] sm:$0xff]
    %v1933 = vld [vmem:[#allocation8 + $0x3050] sm:$0xff]
    %v1934 = vld [vmem:[#allocation8 + $0x3058] sm:$0xff]
    %v1935 = vld [vmem:[#allocation8 + $0x3060] sm:$0xff]
    %v1936 = vld [vmem:[#allocation8 + $0x3068] sm:$0xff]
    %v1937 = vld [vmem:[#allocation8 + $0x3070] sm:$0xff]
    %v1938 = vld [vmem:[#allocation8 + $0x3078] sm:$0xff]
    %v1939 = vld [vmem:[#allocation8 + $0x3080] sm:$0xff]
    %v1940 = vld [vmem:[#allocation8 + $0x3088] sm:$0xff]
    %v1941 = vld [vmem:[#allocation8 + $0x3090] sm:$0xff]
    %v1942 = vld [vmem:[#allocation8 + $0x3098] sm:$0xff]
    %v1943 = vld [vmem:[#allocation8 + $0x30a0] sm:$0xff]
    %v1944 = vld [vmem:[#allocation8 + $0x30a8] sm:$0xff]
    %v1945 = vld [vmem:[#allocation8 + $0x30b0] sm:$0xff]
    %v1946 = vld [vmem:[#allocation8 + $0x30b8] sm:$0xff]
    %v1947 = vld [vmem:[#allocation8 + $0x30c0] sm:$0xff]
    %v1948 = vld [vmem:[#allocation8 + $0x30c8] sm:$0xff]
    %v1949 = vld [vmem:[#allocation8 + $0x30d0] sm:$0xff]
    %v1950 = vld [vmem:[#allocation8 + $0x30d8] sm:$0xff]
    %v1951 = vld [vmem:[#allocation8 + $0x30e0] sm:$0xff]
    %v1952 = vld [vmem:[#allocation8 + $0x30e8] sm:$0xff]
    %v1953 = vld [vmem:[#allocation8 + $0x30f0] sm:$0xff]
    %v1954 = vld [vmem:[#allocation8 + $0x30f8] sm:$0xff]
    %v1955 = vld [vmem:[#allocation8 + $0x3100] sm:$0xff]
    %v1956 = vld [vmem:[#allocation8 + $0x3108] sm:$0xff]
    %v1957 = vld [vmem:[#allocation8 + $0x3110] sm:$0xff]
    %v1958 = vld [vmem:[#allocation8 + $0x3118] sm:$0xff]
    %v1959 = vld [vmem:[#allocation8 + $0x3120] sm:$0xff]
    %v1960 = vld [vmem:[#allocation8 + $0x3128] sm:$0xff]
    %v1961 = vld [vmem:[#allocation8 + $0x3130] sm:$0xff]
    %v1962 = vld [vmem:[#allocation8 + $0x3138] sm:$0xff]
    %v1963 = vld [vmem:[#allocation8 + $0x3140] sm:$0xff]
    %v1964 = vld [vmem:[#allocation8 + $0x3148] sm:$0xff]
    %v1965 = vld [vmem:[#allocation8 + $0x3150] sm:$0xff]
    %v1966 = vld [vmem:[#allocation8 + $0x3158] sm:$0xff]
    %v1967 = vld [vmem:[#allocation8 + $0x3160] sm:$0xff]
    %v1968 = vld [vmem:[#allocation8 + $0x3168] sm:$0xff]
    %v1969 = vld [vmem:[#allocation8 + $0x3170] sm:$0xff]
    %v1970 = vld [vmem:[#allocation8 + $0x3178] sm:$0xff]
    %v1971 = vld [vmem:[#allocation8 + $0x3180] sm:$0xff]
    %v1972 = vld [vmem:[#allocation8 + $0x3188] sm:$0xff]
    %v1973 = vld [vmem:[#allocation8 + $0x3190] sm:$0xff]
    %v1974 = vld [vmem:[#allocation8 + $0x3198] sm:$0xff]
    %v1975 = vld [vmem:[#allocation8 + $0x31a0] sm:$0xff]
    %v1976 = vld [vmem:[#allocation8 + $0x31a8] sm:$0xff]
    %v1977 = vld [vmem:[#allocation8 + $0x31b0] sm:$0xff]
    %v1978 = vld [vmem:[#allocation8 + $0x31b8] sm:$0xff]
    %v1979 = vld [vmem:[#allocation8 + $0x31c0] sm:$0xff]
    %v1980 = vld [vmem:[#allocation8 + $0x31c8] sm:$0xff]
    %v1981 = vld [vmem:[#allocation8 + $0x31d0] sm:$0xff]
    %v1982 = vld [vmem:[#allocation8 + $0x31d8] sm:$0xff]
    %v1983 = vld [vmem:[#allocation8 + $0x31e0] sm:$0xff]
    %v1984 = vld [vmem:[#allocation8 + $0x31e8] sm:$0xff]
    %v1985 = vld [vmem:[#allocation8 + $0x31f0] sm:$0xff]
    %v1986 = vld [vmem:[#allocation8 + $0x31f8] sm:$0xff]
    %v1987 = vld [vmem:[#allocation8 + $0x3200] sm:$0xff]
    %v1988 = vld [vmem:[#allocation8 + $0x3208] sm:$0xff]
    %v1989 = vld [vmem:[#allocation8 + $0x3210] sm:$0xff]
    %v1990 = vld [vmem:[#allocation8 + $0x3218] sm:$0xff]
    %v1991 = vld [vmem:[#allocation8 + $0x3220] sm:$0xff]
    %v1992 = vld [vmem:[#allocation8 + $0x3228] sm:$0xff]
    %v1993 = vld [vmem:[#allocation8 + $0x3230] sm:$0xff]
    %v1994 = vld [vmem:[#allocation8 + $0x3238] sm:$0xff]
    %v1995 = vld [vmem:[#allocation8 + $0x3240] sm:$0xff]
    %v1996 = vld [vmem:[#allocation8 + $0x3248] sm:$0xff]
    %v1997 = vld [vmem:[#allocation8 + $0x3250] sm:$0xff]
    %v1998 = vld [vmem:[#allocation8 + $0x3258] sm:$0xff]
    %v1999 = vld [vmem:[#allocation8 + $0x3260] sm:$0xff]
    %v2000 = vld [vmem:[#allocation8 + $0x3268] sm:$0xff]
    %v2001 = vld [vmem:[#allocation8 + $0x3270] sm:$0xff]
    %v2002 = vld [vmem:[#allocation8 + $0x3278] sm:$0xff]
    %v2003 = vld [vmem:[#allocation8 + $0x3280] sm:$0xff]
    %v2004 = vld [vmem:[#allocation8 + $0x3288] sm:$0xff]
    %v2005 = vld [vmem:[#allocation8 + $0x3290] sm:$0xff]
    %v2006 = vld [vmem:[#allocation8 + $0x3298] sm:$0xff]
    %v2007 = vld [vmem:[#allocation8 + $0x32a0] sm:$0xff]
    %v2008 = vld [vmem:[#allocation8 + $0x32a8] sm:$0xff]
    %v2009 = vld [vmem:[#allocation8 + $0x32b0] sm:$0xff]
    %v2010 = vld [vmem:[#allocation8 + $0x32b8] sm:$0xff]
    %v2011 = vld [vmem:[#allocation8 + $0x32c0] sm:$0xff]
    %v2012 = vld [vmem:[#allocation8 + $0x32c8] sm:$0xff]
    %v2013 = vld [vmem:[#allocation8 + $0x32d0] sm:$0xff]
    %v2014 = vld [vmem:[#allocation8 + $0x32d8] sm:$0xff]
    %v2015 = vld [vmem:[#allocation8 + $0x32e0] sm:$0xff]
    %v2016 = vld [vmem:[#allocation8 + $0x32e8] sm:$0xff]
    %v2017 = vld [vmem:[#allocation8 + $0x32f0] sm:$0xff]
    %v2018 = vld [vmem:[#allocation8 + $0x32f8] sm:$0xff]
    %v2019 = vld [vmem:[#allocation8 + $0x3300] sm:$0xff]
    %v2020 = vld [vmem:[#allocation8 + $0x3308] sm:$0xff]
    %v2021 = vld [vmem:[#allocation8 + $0x3310] sm:$0xff]
    %v2022 = vld [vmem:[#allocation8 + $0x3318] sm:$0xff]
    %v2023 = vld [vmem:[#allocation8 + $0x3320] sm:$0xff]
    %v2024 = vld [vmem:[#allocation8 + $0x3328] sm:$0xff]
    %v2025 = vld [vmem:[#allocation8 + $0x3330] sm:$0xff]
    %v2026 = vld [vmem:[#allocation8 + $0x3338] sm:$0xff]
    %v2027 = vld [vmem:[#allocation8 + $0x3340] sm:$0xff]
    %v2028 = vld [vmem:[#allocation8 + $0x3348] sm:$0xff]
    %v2029 = vld [vmem:[#allocation8 + $0x3350] sm:$0xff]
    %v2030 = vld [vmem:[#allocation8 + $0x3358] sm:$0xff]
    %v2031 = vld [vmem:[#allocation8 + $0x3360] sm:$0xff]
    %v2032 = vld [vmem:[#allocation8 + $0x3368] sm:$0xff]
    %v2033 = vld [vmem:[#allocation8 + $0x3370] sm:$0xff]
    %v2034 = vld [vmem:[#allocation8 + $0x3378] sm:$0xff]
    %v2035 = vld [vmem:[#allocation8 + $0x3380] sm:$0xff]
    %v2036 = vld [vmem:[#allocation8 + $0x3388] sm:$0xff]
    %v2037 = vld [vmem:[#allocation8 + $0x3390] sm:$0xff]
    %v2038 = vld [vmem:[#allocation8 + $0x3398] sm:$0xff]
    %v2039 = vld [vmem:[#allocation8 + $0x33a0] sm:$0xff]
    %v2040 = vld [vmem:[#allocation8 + $0x33a8] sm:$0xff]
    %v2041 = vld [vmem:[#allocation8 + $0x33b0] sm:$0xff]
    %v2042 = vld [vmem:[#allocation8 + $0x33b8] sm:$0xff]
    %v2043 = vld [vmem:[#allocation8 + $0x33c0] sm:$0xff]
    %v2044 = vld [vmem:[#allocation8 + $0x33c8] sm:$0xff]
    %v2045 = vld [vmem:[#allocation8 + $0x33d0] sm:$0xff]
    %v2046 = vld [vmem:[#allocation8 + $0x33d8] sm:$0xff]
    %v2047 = vld [vmem:[#allocation8 + $0x33e0] sm:$0xff]
    %v2048 = vld [vmem:[#allocation8 + $0x33e8] sm:$0xff]
    %v2049 = vld [vmem:[#allocation8 + $0x33f0] sm:$0xff]
    %v2050 = vld [vmem:[#allocation8 + $0x33f8] sm:$0xff]
    %v2051 = vld [vmem:[#allocation8 + $0x3400] sm:$0xff]
    %v2052 = vld [vmem:[#allocation8 + $0x3408] sm:$0xff]
    %v2053 = vld [vmem:[#allocation8 + $0x3410] sm:$0xff]
    %v2054 = vld [vmem:[#allocation8 + $0x3418] sm:$0xff]
    %v2055 = vld [vmem:[#allocation8 + $0x3420] sm:$0xff]
    %v2056 = vld [vmem:[#allocation8 + $0x3428] sm:$0xff]
    %v2057 = vld [vmem:[#allocation8 + $0x3430] sm:$0xff]
    %v2058 = vld [vmem:[#allocation8 + $0x3438] sm:$0xff]
    %v2059 = vld [vmem:[#allocation8 + $0x3440] sm:$0xff]
    %v2060 = vld [vmem:[#allocation8 + $0x3448] sm:$0xff]
    %v2061 = vld [vmem:[#allocation8 + $0x3450] sm:$0xff]
    %v2062 = vld [vmem:[#allocation8 + $0x3458] sm:$0xff]
    %v2063 = vld [vmem:[#allocation8 + $0x3460] sm:$0xff]
    %v2064 = vld [vmem:[#allocation8 + $0x3468] sm:$0xff]
    %v2065 = vld [vmem:[#allocation8 + $0x3470] sm:$0xff]
    %v2066 = vld [vmem:[#allocation8 + $0x3478] sm:$0xff]
    %v2067 = vld [vmem:[#allocation8 + $0x3480] sm:$0xff]
    %v2068 = vld [vmem:[#allocation8 + $0x3488] sm:$0xff]
    %v2069 = vld [vmem:[#allocation8 + $0x3490] sm:$0xff]
    %v2070 = vld [vmem:[#allocation8 + $0x3498] sm:$0xff]
    %v2071 = vld [vmem:[#allocation8 + $0x34a0] sm:$0xff]
    %v2072 = vld [vmem:[#allocation8 + $0x34a8] sm:$0xff]
    %v2073 = vld [vmem:[#allocation8 + $0x34b0] sm:$0xff]
    %v2074 = vld [vmem:[#allocation8 + $0x34b8] sm:$0xff]
    %v2075 = vld [vmem:[#allocation8 + $0x34c0] sm:$0xff]
    %v2076 = vld [vmem:[#allocation8 + $0x34c8] sm:$0xff]
    %v2077 = vld [vmem:[#allocation8 + $0x34d0] sm:$0xff]
    %v2078 = vld [vmem:[#allocation8 + $0x34d8] sm:$0xff]
    %v2079 = vld [vmem:[#allocation8 + $0x34e0] sm:$0xff]
    %v2080 = vld [vmem:[#allocation8 + $0x34e8] sm:$0xff]
    %v2081 = vld [vmem:[#allocation8 + $0x34f0] sm:$0xff]
    %v2082 = vld [vmem:[#allocation8 + $0x34f8] sm:$0xff]
    %v2083 = vld [vmem:[#allocation8 + $0x3500] sm:$0xff]
    %v2084 = vld [vmem:[#allocation8 + $0x3508] sm:$0xff]
    %v2085 = vld [vmem:[#allocation8 + $0x3510] sm:$0xff]
    %v2086 = vld [vmem:[#allocation8 + $0x3518] sm:$0xff]
    %v2087 = vld [vmem:[#allocation8 + $0x3520] sm:$0xff]
    %v2088 = vld [vmem:[#allocation8 + $0x3528] sm:$0xff]
    %v2089 = vld [vmem:[#allocation8 + $0x3530] sm:$0xff]
    %v2090 = vld [vmem:[#allocation8 + $0x3538] sm:$0xff]
    %v2091 = vld [vmem:[#allocation8 + $0x3540] sm:$0xff]
    %v2092 = vld [vmem:[#allocation8 + $0x3548] sm:$0xff]
    %v2093 = vld [vmem:[#allocation8 + $0x3550] sm:$0xff]
    %v2094 = vld [vmem:[#allocation8 + $0x3558] sm:$0xff]
    %v2095 = vld [vmem:[#allocation8 + $0x3560] sm:$0xff]
    %v2096 = vld [vmem:[#allocation8 + $0x3568] sm:$0xff]
    %v2097 = vld [vmem:[#allocation8 + $0x3570] sm:$0xff]
    %v2098 = vld [vmem:[#allocation8 + $0x3578] sm:$0xff]
    %v2099 = vld [vmem:[#allocation8 + $0x3580] sm:$0xff]
    %v2100 = vld [vmem:[#allocation8 + $0x3588] sm:$0xff]
    %v2101 = vld [vmem:[#allocation8 + $0x3590] sm:$0xff]
    %v2102 = vld [vmem:[#allocation8 + $0x3598] sm:$0xff]
    %v2103 = vld [vmem:[#allocation8 + $0x35a0] sm:$0xff]
    %v2104 = vld [vmem:[#allocation8 + $0x35a8] sm:$0xff]
    %v2105 = vld [vmem:[#allocation8 + $0x35b0] sm:$0xff]
    %v2106 = vld [vmem:[#allocation8 + $0x35b8] sm:$0xff]
    %v2107 = vld [vmem:[#allocation8 + $0x35c0] sm:$0xff]
    %v2108 = vld [vmem:[#allocation8 + $0x35c8] sm:$0xff]
    %v2109 = vld [vmem:[#allocation8 + $0x35d0] sm:$0xff]
    %v2110 = vld [vmem:[#allocation8 + $0x35d8] sm:$0xff]
    %v2111 = vld [vmem:[#allocation8 + $0x35e0] sm:$0xff]
    %v2112 = vld [vmem:[#allocation8 + $0x35e8] sm:$0xff]
    %v2113 = vld [vmem:[#allocation8 + $0x35f0] sm:$0xff]
    %v2114 = vld [vmem:[#allocation8 + $0x35f8] sm:$0xff]
    %v2115 = vld [vmem:[#allocation8 + $0x3600] sm:$0xff]
    %v2116 = vld [vmem:[#allocation8 + $0x3608] sm:$0xff]
    %v2117 = vld [vmem:[#allocation8 + $0x3610] sm:$0xff]
    %v2118 = vld [vmem:[#allocation8 + $0x3618] sm:$0xff]
    %v2119 = vld [vmem:[#allocation8 + $0x3620] sm:$0xff]
    %v2120 = vld [vmem:[#allocation8 + $0x3628] sm:$0xff]
    %v2121 = vld [vmem:[#allocation8 + $0x3630] sm:$0xff]
    %v2122 = vld [vmem:[#allocation8 + $0x3638] sm:$0xff]
    %v2123 = vld [vmem:[#allocation8 + $0x3640] sm:$0xff]
    %v2124 = vld [vmem:[#allocation8 + $0x3648] sm:$0xff]
    %v2125 = vld [vmem:[#allocation8 + $0x3650] sm:$0xff]
    %v2126 = vld [vmem:[#allocation8 + $0x3658] sm:$0xff]
    %v2127 = vld [vmem:[#allocation8 + $0x3660] sm:$0xff]
    %v2128 = vld [vmem:[#allocation8 + $0x3668] sm:$0xff]
    %v2129 = vld [vmem:[#allocation8 + $0x3670] sm:$0xff]
    %v2130 = vld [vmem:[#allocation8 + $0x3678] sm:$0xff]
    %v2131 = vld [vmem:[#allocation8 + $0x3680] sm:$0xff]
    %v2132 = vld [vmem:[#allocation8 + $0x3688] sm:$0xff]
    %v2133 = vld [vmem:[#allocation8 + $0x3690] sm:$0xff]
    %v2134 = vld [vmem:[#allocation8 + $0x3698] sm:$0xff]
    %v2135 = vld [vmem:[#allocation8 + $0x36a0] sm:$0xff]
    %v2136 = vld [vmem:[#allocation8 + $0x36a8] sm:$0xff]
    %v2137 = vld [vmem:[#allocation8 + $0x36b0] sm:$0xff]
    %v2138 = vld [vmem:[#allocation8 + $0x36b8] sm:$0xff]
    %v2139 = vld [vmem:[#allocation8 + $0x36c0] sm:$0xff]
    %v2140 = vld [vmem:[#allocation8 + $0x36c8] sm:$0xff]
    %v2141 = vld [vmem:[#allocation8 + $0x36d0] sm:$0xff]
    %v2142 = vld [vmem:[#allocation8 + $0x36d8] sm:$0xff]
    %v2143 = vld [vmem:[#allocation8 + $0x36e0] sm:$0xff]
    %v2144 = vld [vmem:[#allocation8 + $0x36e8] sm:$0xff]
    %v2145 = vld [vmem:[#allocation8 + $0x36f0] sm:$0xff]
    %v2146 = vld [vmem:[#allocation8 + $0x36f8] sm:$0xff]
    %v2147 = vld [vmem:[#allocation8 + $0x3700] sm:$0xff]
    %v2148 = vld [vmem:[#allocation8 + $0x3708] sm:$0xff]
    %v2149 = vld [vmem:[#allocation8 + $0x3710] sm:$0xff]
    %v2150 = vld [vmem:[#allocation8 + $0x3718] sm:$0xff]
    %v2151 = vld [vmem:[#allocation8 + $0x3720] sm:$0xff]
    %v2152 = vld [vmem:[#allocation8 + $0x3728] sm:$0xff]
    %v2153 = vld [vmem:[#allocation8 + $0x3730] sm:$0xff]
    %v2154 = vld [vmem:[#allocation8 + $0x3738] sm:$0xff]
    %v2155 = vld [vmem:[#allocation8 + $0x3740] sm:$0xff]
    %v2156 = vld [vmem:[#allocation8 + $0x3748] sm:$0xff]
    %v2157 = vld [vmem:[#allocation8 + $0x3750] sm:$0xff]
    %v2158 = vld [vmem:[#allocation8 + $0x3758] sm:$0xff]
    %v2159 = vld [vmem:[#allocation8 + $0x3760] sm:$0xff]
    %v2160 = vld [vmem:[#allocation8 + $0x3768] sm:$0xff]
    %v2161 = vld [vmem:[#allocation8 + $0x3770] sm:$0xff]
    %v2162 = vld [vmem:[#allocation8 + $0x3778] sm:$0xff]
    %v2163 = vld [vmem:[#allocation8 + $0x3780] sm:$0xff]
    %v2164 = vld [vmem:[#allocation8 + $0x3788] sm:$0xff]
    %v2165 = vld [vmem:[#allocation8 + $0x3790] sm:$0xff]
    %v2166 = vld [vmem:[#allocation8 + $0x3798] sm:$0xff]
    %v2167 = vld [vmem:[#allocation8 + $0x37a0] sm:$0xff]
    %v2168 = vld [vmem:[#allocation8 + $0x37a8] sm:$0xff]
    %v2169 = vld [vmem:[#allocation8 + $0x37b0] sm:$0xff]
    %v2170 = vld [vmem:[#allocation8 + $0x37b8] sm:$0xff]
    %v2171 = vld [vmem:[#allocation8 + $0x37c0] sm:$0xff]
    %v2172 = vld [vmem:[#allocation8 + $0x37c8] sm:$0xff]
    %v2173 = vld [vmem:[#allocation8 + $0x37d0] sm:$0xff]
    %v2174 = vld [vmem:[#allocation8 + $0x37d8] sm:$0xff]
    %v2175 = vld [vmem:[#allocation8 + $0x37e0] sm:$0xff]
    %v2176 = vld [vmem:[#allocation8 + $0x37e8] sm:$0xff]
    %v2177 = vld [vmem:[#allocation8 + $0x37f0] sm:$0xff]
    %v2178 = vld [vmem:[#allocation8 + $0x37f8] sm:$0xff]
    %v2179 = vld [vmem:[#allocation8 + $0x3800] sm:$0xff]
    %v2180 = vld [vmem:[#allocation8 + $0x3808] sm:$0xff]
    %v2181 = vld [vmem:[#allocation8 + $0x3810] sm:$0xff]
    %v2182 = vld [vmem:[#allocation8 + $0x3818] sm:$0xff]
    %v2183 = vld [vmem:[#allocation8 + $0x3820] sm:$0xff]
    %v2184 = vld [vmem:[#allocation8 + $0x3828] sm:$0xff]
    %v2185 = vld [vmem:[#allocation8 + $0x3830] sm:$0xff]
    %v2186 = vld [vmem:[#allocation8 + $0x3838] sm:$0xff]
    %v2187 = vld [vmem:[#allocation8 + $0x3840] sm:$0xff]
    %v2188 = vld [vmem:[#allocation8 + $0x3848] sm:$0xff]
    %v2189 = vld [vmem:[#allocation8 + $0x3850] sm:$0xff]
    %v2190 = vld [vmem:[#allocation8 + $0x3858] sm:$0xff]
    %v2191 = vld [vmem:[#allocation8 + $0x3860] sm:$0xff]
    %v2192 = vld [vmem:[#allocation8 + $0x3868] sm:$0xff]
    %v2193 = vld [vmem:[#allocation8 + $0x3870] sm:$0xff]
    %v2194 = vld [vmem:[#allocation8 + $0x3878] sm:$0xff]
    %v2195 = vld [vmem:[#allocation8 + $0x3880] sm:$0xff]
    %v2196 = vld [vmem:[#allocation8 + $0x3888] sm:$0xff]
    %v2197 = vld [vmem:[#allocation8 + $0x3890] sm:$0xff]
    %v2198 = vld [vmem:[#allocation8 + $0x3898] sm:$0xff]
    %v2199 = vld [vmem:[#allocation8 + $0x38a0] sm:$0xff]
    %v2200 = vld [vmem:[#allocation8 + $0x38a8] sm:$0xff]
    %v2201 = vld [vmem:[#allocation8 + $0x38b0] sm:$0xff]
    %v2202 = vld [vmem:[#allocation8 + $0x38b8] sm:$0xff]
    %v2203 = vld [vmem:[#allocation8 + $0x38c0] sm:$0xff]
    %v2204 = vld [vmem:[#allocation8 + $0x38c8] sm:$0xff]
    %v2205 = vld [vmem:[#allocation8 + $0x38d0] sm:$0xff]
    %v2206 = vld [vmem:[#allocation8 + $0x38d8] sm:$0xff]
    %v2207 = vld [vmem:[#allocation8 + $0x38e0] sm:$0xff]
    %v2208 = vld [vmem:[#allocation8 + $0x38e8] sm:$0xff]
    %v2209 = vld [vmem:[#allocation8 + $0x38f0] sm:$0xff]
    %v2210 = vld [vmem:[#allocation8 + $0x38f8] sm:$0xff]
    %v2211 = vld [vmem:[#allocation8 + $0x3900] sm:$0xff]
    %v2212 = vld [vmem:[#allocation8 + $0x3908] sm:$0xff]
    %v2213 = vld [vmem:[#allocation8 + $0x3910] sm:$0xff]
    %v2214 = vld [vmem:[#allocation8 + $0x3918] sm:$0xff]
    %v2215 = vld [vmem:[#allocation8 + $0x3920] sm:$0xff]
    %v2216 = vld [vmem:[#allocation8 + $0x3928] sm:$0xff]
    %v2217 = vld [vmem:[#allocation8 + $0x3930] sm:$0xff]
    %v2218 = vld [vmem:[#allocation8 + $0x3938] sm:$0xff]
    %v2219 = vld [vmem:[#allocation8 + $0x3940] sm:$0xff]
    %v2220 = vld [vmem:[#allocation8 + $0x3948] sm:$0xff]
    %v2221 = vld [vmem:[#allocation8 + $0x3950] sm:$0xff]
    %v2222 = vld [vmem:[#allocation8 + $0x3958] sm:$0xff]
    %v2223 = vld [vmem:[#allocation8 + $0x3960] sm:$0xff]
    %v2224 = vld [vmem:[#allocation8 + $0x3968] sm:$0xff]
    %v2225 = vld [vmem:[#allocation8 + $0x3970] sm:$0xff]
    %v2226 = vld [vmem:[#allocation8 + $0x3978] sm:$0xff]
    %v2227 = vld [vmem:[#allocation8 + $0x3980] sm:$0xff]
    %v2228 = vld [vmem:[#allocation8 + $0x3988] sm:$0xff]
    %v2229 = vld [vmem:[#allocation8 + $0x3990] sm:$0xff]
    %v2230 = vld [vmem:[#allocation8 + $0x3998] sm:$0xff]
    %v2231 = vld [vmem:[#allocation8 + $0x39a0] sm:$0xff]
    %v2232 = vld [vmem:[#allocation8 + $0x39a8] sm:$0xff]
    %v2233 = vld [vmem:[#allocation8 + $0x39b0] sm:$0xff]
    %v2234 = vld [vmem:[#allocation8 + $0x39b8] sm:$0xff]
    %v2235 = vld [vmem:[#allocation8 + $0x39c0] sm:$0xff]
    %v2236 = vld [vmem:[#allocation8 + $0x39c8] sm:$0xff]
    %v2237 = vld [vmem:[#allocation8 + $0x39d0] sm:$0xff]
    %v2238 = vld [vmem:[#allocation8 + $0x39d8] sm:$0xff]
    %v2239 = vld [vmem:[#allocation8 + $0x39e0] sm:$0xff]
    %v2240 = vld [vmem:[#allocation8 + $0x39e8] sm:$0xff]
    %v2241 = vld [vmem:[#allocation8 + $0x39f0] sm:$0xff]
    %v2242 = vld [vmem:[#allocation8 + $0x39f8] sm:$0xff]
    %v2243 = vld [vmem:[#allocation8 + $0x3a00] sm:$0xff]
    %v2244 = vld [vmem:[#allocation8 + $0x3a08] sm:$0xff]
    %v2245 = vld [vmem:[#allocation8 + $0x3a10] sm:$0xff]
    %v2246 = vld [vmem:[#allocation8 + $0x3a18] sm:$0xff]
    %v2247 = vld [vmem:[#allocation8 + $0x3a20] sm:$0xff]
    %v2248 = vld [vmem:[#allocation8 + $0x3a28] sm:$0xff]
    %v2249 = vld [vmem:[#allocation8 + $0x3a30] sm:$0xff]
    %v2250 = vld [vmem:[#allocation8 + $0x3a38] sm:$0xff]
    %v2251 = vld [vmem:[#allocation8 + $0x3a40] sm:$0xff]
    %v2252 = vld [vmem:[#allocation8 + $0x3a48] sm:$0xff]
    %v2253 = vld [vmem:[#allocation8 + $0x3a50] sm:$0xff]
    %v2254 = vld [vmem:[#allocation8 + $0x3a58] sm:$0xff]
    %v2255 = vld [vmem:[#allocation8 + $0x3a60] sm:$0xff]
    %v2256 = vld [vmem:[#allocation8 + $0x3a68] sm:$0xff]
    %v2257 = vld [vmem:[#allocation8 + $0x3a70] sm:$0xff]
    %v2258 = vld [vmem:[#allocation8 + $0x3a78] sm:$0xff]
    %v2259 = vld [vmem:[#allocation8 + $0x3a80] sm:$0xff]
    %v2260 = vld [vmem:[#allocation8 + $0x3a88] sm:$0xff]
    %v2261 = vld [vmem:[#allocation8 + $0x3a90] sm:$0xff]
    %v2262 = vld [vmem:[#allocation8 + $0x3a98] sm:$0xff]
    %v2263 = vld [vmem:[#allocation8 + $0x3aa0] sm:$0xff]
    %v2264 = vld [vmem:[#allocation8 + $0x3aa8] sm:$0xff]
    %v2265 = vld [vmem:[#allocation8 + $0x3ab0] sm:$0xff]
    %v2266 = vld [vmem:[#allocation8 + $0x3ab8] sm:$0xff]
    %v2267 = vld [vmem:[#allocation8 + $0x3ac0] sm:$0xff]
    %v2268 = vld [vmem:[#allocation8 + $0x3ac8] sm:$0xff]
    %v2269 = vld [vmem:[#allocation8 + $0x3ad0] sm:$0xff]
    %v2270 = vld [vmem:[#allocation8 + $0x3ad8] sm:$0xff]
    %v2271 = vld [vmem:[#allocation8 + $0x3ae0] sm:$0xff]
    %v2272 = vld [vmem:[#allocation8 + $0x3ae8] sm:$0xff]
    %v2273 = vld [vmem:[#allocation8 + $0x3af0] sm:$0xff]
    %v2274 = vld [vmem:[#allocation8 + $0x3af8] sm:$0xff]
    %v2275 = vld [vmem:[#allocation8 + $0x3b00] sm:$0xff]
    %v2276 = vld [vmem:[#allocation8 + $0x3b08] sm:$0xff]
    %v2277 = vld [vmem:[#allocation8 + $0x3b10] sm:$0xff]
    %v2278 = vld [vmem:[#allocation8 + $0x3b18] sm:$0xff]
    %v2279 = vld [vmem:[#allocation8 + $0x3b20] sm:$0xff]
    %v2280 = vld [vmem:[#allocation8 + $0x3b28] sm:$0xff]
    %v2281 = vld [vmem:[#allocation8 + $0x3b30] sm:$0xff]
    %v2282 = vld [vmem:[#allocation8 + $0x3b38] sm:$0xff]
    %v2283 = vld [vmem:[#allocation8 + $0x3b40] sm:$0xff]
    %v2284 = vld [vmem:[#allocation8 + $0x3b48] sm:$0xff]
    %v2285 = vld [vmem:[#allocation8 + $0x3b50] sm:$0xff]
    %v2286 = vld [vmem:[#allocation8 + $0x3b58] sm:$0xff]
    %v2287 = vld [vmem:[#allocation8 + $0x3b60] sm:$0xff]
    %v2288 = vld [vmem:[#allocation8 + $0x3b68] sm:$0xff]
    %v2289 = vld [vmem:[#allocation8 + $0x3b70] sm:$0xff]
    %v2290 = vld [vmem:[#allocation8 + $0x3b78] sm:$0xff]
    %v2291 = vld [vmem:[#allocation8 + $0x3b80] sm:$0xff]
    %v2292 = vld [vmem:[#allocation8 + $0x3b88] sm:$0xff]
    %v2293 = vld [vmem:[#allocation8 + $0x3b90] sm:$0xff]
    %v2294 = vld [vmem:[#allocation8 + $0x3b98] sm:$0xff]
    %v2295 = vld [vmem:[#allocation8 + $0x3ba0] sm:$0xff]
    %v2296 = vld [vmem:[#allocation8 + $0x3ba8] sm:$0xff]
    %v2297 = vld [vmem:[#allocation8 + $0x3bb0] sm:$0xff]
    %v2298 = vld [vmem:[#allocation8 + $0x3bb8] sm:$0xff]
    %v2299 = vld [vmem:[#allocation8 + $0x3bc0] sm:$0xff]
    %v2300 = vld [vmem:[#allocation8 + $0x3bc8] sm:$0xff]
    %v2301 = vld [vmem:[#allocation8 + $0x3bd0] sm:$0xff]
    %v2302 = vld [vmem:[#allocation8 + $0x3bd8] sm:$0xff]
    %v2303 = vld [vmem:[#allocation8 + $0x3be0] sm:$0xff]
    %v2304 = vld [vmem:[#allocation8 + $0x3be8] sm:$0xff]
    %v2305 = vld [vmem:[#allocation8 + $0x3bf0] sm:$0xff]
    %v2306 = vld [vmem:[#allocation8 + $0x3bf8] sm:$0xff]
    %v2307 = vld [vmem:[#allocation8 + $0x3c00] sm:$0xff]
    %v2308 = vld [vmem:[#allocation8 + $0x3c08] sm:$0xff]
    %v2309 = vld [vmem:[#allocation8 + $0x3c10] sm:$0xff]
    %v2310 = vld [vmem:[#allocation8 + $0x3c18] sm:$0xff]
    %v2311 = vld [vmem:[#allocation8 + $0x3c20] sm:$0xff]
    %v2312 = vld [vmem:[#allocation8 + $0x3c28] sm:$0xff]
    %v2313 = vld [vmem:[#allocation8 + $0x3c30] sm:$0xff]
    %v2314 = vld [vmem:[#allocation8 + $0x3c38] sm:$0xff]
    %v2315 = vld [vmem:[#allocation8 + $0x3c40] sm:$0xff]
    %v2316 = vld [vmem:[#allocation8 + $0x3c48] sm:$0xff]
    %v2317 = vld [vmem:[#allocation8 + $0x3c50] sm:$0xff]
    %v2318 = vld [vmem:[#allocation8 + $0x3c58] sm:$0xff]
    %v2319 = vld [vmem:[#allocation8 + $0x3c60] sm:$0xff]
    %v2320 = vld [vmem:[#allocation8 + $0x3c68] sm:$0xff]
    %v2321 = vld [vmem:[#allocation8 + $0x3c70] sm:$0xff]
    %v2322 = vld [vmem:[#allocation8 + $0x3c78] sm:$0xff]
    %v2323 = vld [vmem:[#allocation8 + $0x3c80] sm:$0xff]
    %v2324 = vld [vmem:[#allocation8 + $0x3c88] sm:$0xff]
    %v2325 = vld [vmem:[#allocation8 + $0x3c90] sm:$0xff]
    %v2326 = vld [vmem:[#allocation8 + $0x3c98] sm:$0xff]
    %v2327 = vld [vmem:[#allocation8 + $0x3ca0] sm:$0xff]
    %v2328 = vld [vmem:[#allocation8 + $0x3ca8] sm:$0xff]
    %v2329 = vld [vmem:[#allocation8 + $0x3cb0] sm:$0xff]
    %v2330 = vld [vmem:[#allocation8 + $0x3cb8] sm:$0xff]
    %v2331 = vld [vmem:[#allocation8 + $0x3cc0] sm:$0xff]
    %v2332 = vld [vmem:[#allocation8 + $0x3cc8] sm:$0xff]
    %v2333 = vld [vmem:[#allocation8 + $0x3cd0] sm:$0xff]
    %v2334 = vld [vmem:[#allocation8 + $0x3cd8] sm:$0xff]
    %v2335 = vld [vmem:[#allocation8 + $0x3ce0] sm:$0xff]
    %v2336 = vld [vmem:[#allocation8 + $0x3ce8] sm:$0xff]
    %v2337 = vld [vmem:[#allocation8 + $0x3cf0] sm:$0xff]
    %v2338 = vld [vmem:[#allocation8 + $0x3cf8] sm:$0xff]
    %v2339 = vld [vmem:[#allocation8 + $0x3d00] sm:$0xff]
    %v2340 = vld [vmem:[#allocation8 + $0x3d08] sm:$0xff]
    %v2341 = vld [vmem:[#allocation8 + $0x3d10] sm:$0xff]
    %v2342 = vld [vmem:[#allocation8 + $0x3d18] sm:$0xff]
    %v2343 = vld [vmem:[#allocation8 + $0x3d20] sm:$0xff]
    %v2344 = vld [vmem:[#allocation8 + $0x3d28] sm:$0xff]
    %v2345 = vld [vmem:[#allocation8 + $0x3d30] sm:$0xff]
    %v2346 = vld [vmem:[#allocation8 + $0x3d38] sm:$0xff]
    %v2347 = vld [vmem:[#allocation8 + $0x3d40] sm:$0xff]
    %v2348 = vld [vmem:[#allocation8 + $0x3d48] sm:$0xff]
    %v2349 = vld [vmem:[#allocation8 + $0x3d50] sm:$0xff]
    %v2350 = vld [vmem:[#allocation8 + $0x3d58] sm:$0xff]
    %v2351 = vld [vmem:[#allocation8 + $0x3d60] sm:$0xff]
    %v2352 = vld [vmem:[#allocation8 + $0x3d68] sm:$0xff]
    %v2353 = vld [vmem:[#allocation8 + $0x3d70] sm:$0xff]
    %v2354 = vld [vmem:[#allocation8 + $0x3d78] sm:$0xff]
    %v2355 = vld [vmem:[#allocation8 + $0x3d80] sm:$0xff]
    %v2356 = vld [vmem:[#allocation8 + $0x3d88] sm:$0xff]
    %v2357 = vld [vmem:[#allocation8 + $0x3d90] sm:$0xff]
    %v2358 = vld [vmem:[#allocation8 + $0x3d98] sm:$0xff]
    %v2359 = vld [vmem:[#allocation8 + $0x3da0] sm:$0xff]
    %v2360 = vld [vmem:[#allocation8 + $0x3da8] sm:$0xff]
    %v2361 = vld [vmem:[#allocation8 + $0x3db0] sm:$0xff]
    %v2362 = vld [vmem:[#allocation8 + $0x3db8] sm:$0xff]
    %v2363 = vld [vmem:[#allocation8 + $0x3dc0] sm:$0xff]
    %v2364 = vld [vmem:[#allocation8 + $0x3dc8] sm:$0xff]
    %v2365 = vld [vmem:[#allocation8 + $0x3dd0] sm:$0xff]
    %v2366 = vld [vmem:[#allocation8 + $0x3dd8] sm:$0xff]
    %v2367 = vld [vmem:[#allocation8 + $0x3de0] sm:$0xff]
    %v2368 = vld [vmem:[#allocation8 + $0x3de8] sm:$0xff]
    %v2369 = vld [vmem:[#allocation8 + $0x3df0] sm:$0xff]
    %v2370 = vld [vmem:[#allocation8 + $0x3df8] sm:$0xff]
    %v2371 = vld [vmem:[#allocation8 + $0x3e00] sm:$0xff]
    %v2372 = vld [vmem:[#allocation8 + $0x3e08] sm:$0xff]
    %v2373 = vld [vmem:[#allocation8 + $0x3e10] sm:$0xff]
    %v2374 = vld [vmem:[#allocation8 + $0x3e18] sm:$0xff]
    %v2375 = vld [vmem:[#allocation8 + $0x3e20] sm:$0xff]
    %v2376 = vld [vmem:[#allocation8 + $0x3e28] sm:$0xff]
    %v2377 = vld [vmem:[#allocation8 + $0x3e30] sm:$0xff]
    %v2378 = vld [vmem:[#allocation8 + $0x3e38] sm:$0xff]
    %v2379 = vld [vmem:[#allocation8 + $0x3e40] sm:$0xff]
    %v2380 = vld [vmem:[#allocation8 + $0x3e48] sm:$0xff]
    %v2381 = vld [vmem:[#allocation8 + $0x3e50] sm:$0xff]
    %v2382 = vld [vmem:[#allocation8 + $0x3e58] sm:$0xff]
    %v2383 = vld [vmem:[#allocation8 + $0x3e60] sm:$0xff]
    %v2384 = vld [vmem:[#allocation8 + $0x3e68] sm:$0xff]
    %v2385 = vld [vmem:[#allocation8 + $0x3e70] sm:$0xff]
    %v2386 = vld [vmem:[#allocation8 + $0x3e78] sm:$0xff]
    %v2387 = vld [vmem:[#allocation8 + $0x3e80] sm:$0xff]
    %v2388 = vld [vmem:[#allocation8 + $0x3e88] sm:$0xff]
    %v2389 = vld [vmem:[#allocation8 + $0x3e90] sm:$0xff]
    %v2390 = vld [vmem:[#allocation8 + $0x3e98] sm:$0xff]
    %v2391 = vld [vmem:[#allocation8 + $0x3ea0] sm:$0xff]
    %v2392 = vld [vmem:[#allocation8 + $0x3ea8] sm:$0xff]
    %v2393 = vld [vmem:[#allocation8 + $0x3eb0] sm:$0xff]
    %v2394 = vld [vmem:[#allocation8 + $0x3eb8] sm:$0xff]
    %v2395 = vld [vmem:[#allocation8 + $0x3ec0] sm:$0xff]
    %v2396 = vld [vmem:[#allocation8 + $0x3ec8] sm:$0xff]
    %v2397 = vld [vmem:[#allocation8 + $0x3ed0] sm:$0xff]
    %v2398 = vld [vmem:[#allocation8 + $0x3ed8] sm:$0xff]
    %v2399 = vld [vmem:[#allocation8 + $0x3ee0] sm:$0xff]
    %v2400 = vld [vmem:[#allocation8 + $0x3ee8] sm:$0xff]
    %v2401 = vld [vmem:[#allocation8 + $0x3ef0] sm:$0xff]
    %v2402 = vld [vmem:[#allocation8 + $0x3ef8] sm:$0xff]
    %v2403 = vld [vmem:[#allocation8 + $0x3f00] sm:$0xff]
    %v2404 = vld [vmem:[#allocation8 + $0x3f08] sm:$0xff]
    %v2405 = vld [vmem:[#allocation8 + $0x3f10] sm:$0xff]
    %v2406 = vld [vmem:[#allocation8 + $0x3f18] sm:$0xff]
    %v2407 = vld [vmem:[#allocation8 + $0x3f20] sm:$0xff]
    %v2408 = vld [vmem:[#allocation8 + $0x3f28] sm:$0xff]
    %v2409 = vld [vmem:[#allocation8 + $0x3f30] sm:$0xff]
    %v2410 = vld [vmem:[#allocation8 + $0x3f38] sm:$0xff]
    %v2411 = vld [vmem:[#allocation8 + $0x3f40] sm:$0xff]
    %v2412 = vld [vmem:[#allocation8 + $0x3f48] sm:$0xff]
    %v2413 = vld [vmem:[#allocation8 + $0x3f50] sm:$0xff]
    %v2414 = vld [vmem:[#allocation8 + $0x3f58] sm:$0xff]
    %v2415 = vld [vmem:[#allocation8 + $0x3f60] sm:$0xff]
    %v2416 = vld [vmem:[#allocation8 + $0x3f68] sm:$0xff]
    %v2417 = vld [vmem:[#allocation8 + $0x3f70] sm:$0xff]
    %v2418 = vld [vmem:[#allocation8 + $0x3f78] sm:$0xff]
    %v2419 = vld [vmem:[#allocation8 + $0x3f80] sm:$0xff]
    %v2420 = vld [vmem:[#allocation8 + $0x3f88] sm:$0xff]
    %v2421 = vld [vmem:[#allocation8 + $0x3f90] sm:$0xff]
    %v2422 = vld [vmem:[#allocation8 + $0x3f98] sm:$0xff]
    %v2423 = vld [vmem:[#allocation8 + $0x3fa0] sm:$0xff]
    %v2424 = vld [vmem:[#allocation8 + $0x3fa8] sm:$0xff]
    %v2425 = vld [vmem:[#allocation8 + $0x3fb0] sm:$0xff]
    %v2426 = vld [vmem:[#allocation8 + $0x3fb8] sm:$0xff]
    %v2427 = vld [vmem:[#allocation8 + $0x3fc0] sm:$0xff]
    %v2428 = vld [vmem:[#allocation8 + $0x3fc8] sm:$0xff]
    %v2429 = vld [vmem:[#allocation8 + $0x3fd0] sm:$0xff]
    %v2430 = vld [vmem:[#allocation8 + $0x3fd8] sm:$0xff]
    %v2431 = vld [vmem:[#allocation8 + $0x3fe0] sm:$0xff]
    %v2432 = vld [vmem:[#allocation8 + $0x3fe8] sm:$0xff]
    %v2433 = vld [vmem:[#allocation8 + $0x3ff0] sm:$0xff]
    %v2434 = vld [vmem:[#allocation8 + $0x3ff8] sm:$0xff]
    %v2435 = vld [vmem:[#allocation8 + $0x4000] sm:$0xff]
    %v2436 = vld [vmem:[#allocation8 + $0x4008] sm:$0xff]
    %v2437 = vld [vmem:[#allocation8 + $0x4010] sm:$0xff]
    %v2438 = vld [vmem:[#allocation8 + $0x4018] sm:$0xff]
    %v2439 = vld [vmem:[#allocation8 + $0x4020] sm:$0xff]
    %v2440 = vld [vmem:[#allocation8 + $0x4028] sm:$0xff]
    %v2441 = vld [vmem:[#allocation8 + $0x4030] sm:$0xff]
    %v2442 = vld [vmem:[#allocation8 + $0x4038] sm:$0xff]
    %v2443 = vld [vmem:[#allocation8 + $0x4040] sm:$0xff]
    %v2444 = vld [vmem:[#allocation8 + $0x4048] sm:$0xff]
    %v2445 = vld [vmem:[#allocation8 + $0x4050] sm:$0xff]
    %v2446 = vld [vmem:[#allocation8 + $0x4058] sm:$0xff]
    %v2447 = vld [vmem:[#allocation8 + $0x4060] sm:$0xff]
    %v2448 = vld [vmem:[#allocation8 + $0x4068] sm:$0xff]
    %v2449 = vld [vmem:[#allocation8 + $0x4070] sm:$0xff]
    %v2450 = vld [vmem:[#allocation8 + $0x4078] sm:$0xff]
    %v2451 = vld [vmem:[#allocation8 + $0x4080] sm:$0xff]
    %v2452 = vld [vmem:[#allocation8 + $0x4088] sm:$0xff]
    %v2453 = vld [vmem:[#allocation8 + $0x4090] sm:$0xff]
    %v2454 = vld [vmem:[#allocation8 + $0x4098] sm:$0xff]
    %v2455 = vld [vmem:[#allocation8 + $0x40a0] sm:$0xff]
    %v2456 = vld [vmem:[#allocation8 + $0x40a8] sm:$0xff]
    %v2457 = vld [vmem:[#allocation8 + $0x40b0] sm:$0xff]
    %v2458 = vld [vmem:[#allocation8 + $0x40b8] sm:$0xff]
    %v2459 = vld [vmem:[#allocation8 + $0x40c0] sm:$0xff]
    %v2460 = vld [vmem:[#allocation8 + $0x40c8] sm:$0xff]
    %v2461 = vld [vmem:[#allocation8 + $0x40d0] sm:$0xff]
    %v2462 = vld [vmem:[#allocation8 + $0x40d8] sm:$0xff]
    %v2463 = vld [vmem:[#allocation8 + $0x40e0] sm:$0xff]
    %v2464 = vld [vmem:[#allocation8 + $0x40e8] sm:$0xff]
    %v2465 = vld [vmem:[#allocation8 + $0x40f0] sm:$0xff]
    %v2466 = vld [vmem:[#allocation8 + $0x40f8] sm:$0xff]
    %v2467 = vld [vmem:[#allocation10] sm:$0xff]
    %v2468 = vld [vmem:[#allocation10 + $0x8] sm:$0xff]
    %v2471 = vperm.slane %v2467, 0
    %v2472 = vperm.slane %v2467, 1
    %v2473 = vperm.slane %v2467, 2
    %v2474 = vperm.slane %v2467, 3
    %v2475 = vperm.slane %v2467, 4
    %v2476 = vperm.slane %v2467, 5
    %v2477 = vperm.slane %v2467, 6
    %v2478 = vperm.slane %v2467, 7
    %v2479 = vperm.slane %v2468, 0
    %v2480 = vperm.slane %v2468, 1
    %v2481 = vperm.slane %v2468, 2
    %v2482 = vperm.slane %v2468, 3
    %v2483 = vperm.slane %v2468, 4
    %v2484 = vperm.slane %v2468, 5
    %v2485 = vperm.slane %v2468, 6
    %v2486 = vperm.slane %v2468, 7
    %vm2503 = vcmask 130048
    %v2505 = vsel %vm2503, %v377, 0
    %v2508 = vsel %vm2503, %v386, 0
    %2510 = vmatpush.msra.mxu0 %v627
    %2511 = vmatpush.msra.mxu0 %v611
    %2512 = vmatpush.msra.mxu0 %v595
    %2513 = vmatpush.msra.mxu0 %v579
    %2514 = vmatpush.msra.mxu0 %v563
    %2515 = vmatpush.msra.mxu0 %v547
    %2516 = vmatpush.msra.mxu0 %v531
    %2517 = vmatpush.msra.mxu0 %v515
    %2518 = vmatpush.msra.mxu0 %v499
    %2519 = vmatpush.msra.mxu0 %v483
    %2520 = vmatpush.msra.mxu0 %v467
    %2521 = vmatpush.msra.mxu0 %v451
    %2522 = vmatpush.msra.mxu0 %v435
    %2523 = vmatpush.msra.mxu0 %v419
    %2524 = vmatpush.msra.mxu0 %v403
    %2525 = vmatpush.msra.mxu0 %v387
    %2526 = vmatmul.f32.gmra.mxu0 %v369
    %v2527 = vpop.f32.mrf.mxu0
    %v2528 = vadd.f32 %v2471, %v2527
    %2529 = vmatmul.f32.gmra.mxu0 %v378
    %v2530 = vpop.f32.mrf.mxu0
    %v2531 = vadd.f32 %v2471, %v2530
    %2532 = vdwg.mxu0
    %2533 = vmatpush.msra.mxu0 %v883
    %2534 = vmatpush.msra.mxu0 %v867
    %2535 = vmatpush.msra.mxu0 %v851
    %2536 = vmatpush.msra.mxu0 %v835
    %2537 = vmatpush.msra.mxu0 %v819
    %2538 = vmatpush.msra.mxu0 %v803
    %2539 = vmatpush.msra.mxu0 %v787
    %2540 = vmatpush.msra.mxu0 %v771
    %2541 = vmatpush.msra.mxu0 %v755
    %2542 = vmatpush.msra.mxu0 %v739
    %2543 = vmatpush.msra.mxu0 %v723
    %2544 = vmatpush.msra.mxu0 %v707
    %2545 = vmatpush.msra.mxu0 %v691
    %2546 = vmatpush.msra.mxu0 %v675
    %2547 = vmatpush.msra.mxu0 %v659
    %2548 = vmatpush.msra.mxu0 %v643
    %2549 = vmatmul.f32.gmra.mxu0 %v370
    %v2550 = vpop.f32.mrf.mxu0
    %v2551 = vadd.f32 %v2528, %v2550
    %2552 = vmatmul.f32.gmra.mxu0 %v379
    %v2553 = vpop.f32.mrf.mxu0
    %v2554 = vadd.f32 %v2531, %v2553
    %2555 = vdwg.mxu0
    %2556 = vmatpush.msra.mxu0 %v1139
    %2557 = vmatpush.msra.mxu0 %v1123
    %2558 = vmatpush.msra.mxu0 %v1107
    %2559 = vmatpush.msra.mxu0 %v1091
    %2560 = vmatpush.msra.mxu0 %v1075
    %2561 = vmatpush.msra.mxu0 %v1059
    %2562 = vmatpush.msra.mxu0 %v1043
    %2563 = vmatpush.msra.mxu0 %v1027
    %2564 = vmatpush.msra.mxu0 %v1011
    %2565 = vmatpush.msra.mxu0 %v995
    %2566 = vmatpush.msra.mxu0 %v979
    %2567 = vmatpush.msra.mxu0 %v963
    %2568 = vmatpush.msra.mxu0 %v947
    %2569 = vmatpush.msra.mxu0 %v931
    %2570 = vmatpush.msra.mxu0 %v915
    %2571 = vmatpush.msra.mxu0 %v899
    %2572 = vmatmul.f32.gmra.mxu0 %v371
    %v2573 = vpop.f32.mrf.mxu0
    %v2574 = vadd.f32 %v2551, %v2573
    %2575 = vmatmul.f32.gmra.mxu0 %v380
    %v2576 = vpop.f32.mrf.mxu0
    %v2577 = vadd.f32 %v2554, %v2576
    %2578 = vdwg.mxu0
    %2579 = vmatpush.msra.mxu0 %v1395
    %2580 = vmatpush.msra.mxu0 %v1379
    %2581 = vmatpush.msra.mxu0 %v1363
    %2582 = vmatpush.msra.mxu0 %v1347
    %2583 = vmatpush.msra.mxu0 %v1331
    %2584 = vmatpush.msra.mxu0 %v1315
    %2585 = vmatpush.msra.mxu0 %v1299
    %2586 = vmatpush.msra.mxu0 %v1283
    %2587 = vmatpush.msra.mxu0 %v1267
    %2588 = vmatpush.msra.mxu0 %v1251
    %2589 = vmatpush.msra.mxu0 %v1235
    %2590 = vmatpush.msra.mxu0 %v1219
    %2591 = vmatpush.msra.mxu0 %v1203
    %2592 = vmatpush.msra.mxu0 %v1187
    %2593 = vmatpush.msra.mxu0 %v1171
    %2594 = vmatpush.msra.mxu0 %v1155
    %2595 = vmatmul.f32.gmra.mxu0 %v372
    %v2596 = vpop.f32.mrf.mxu0
    %v2597 = vadd.f32 %v2574, %v2596
    %2598 = vmatmul.f32.gmra.mxu0 %v381
    %v2599 = vpop.f32.mrf.mxu0
    %v2600 = vadd.f32 %v2577, %v2599
    %2601 = vdwg.mxu0
    %2602 = vmatpush.msra.mxu0 %v1651
    %2603 = vmatpush.msra.mxu0 %v1635
    %2604 = vmatpush.msra.mxu0 %v1619
    %2605 = vmatpush.msra.mxu0 %v1603
    %2606 = vmatpush.msra.mxu0 %v1587
    %2607 = vmatpush.msra.mxu0 %v1571
    %2608 = vmatpush.msra.mxu0 %v1555
    %2609 = vmatpush.msra.mxu0 %v1539
    %2610 = vmatpush.msra.mxu0 %v1523
    %2611 = vmatpush.msra.mxu0 %v1507
    %2612 = vmatpush.msra.mxu0 %v1491
    %2613 = vmatpush.msra.mxu0 %v1475
    %2614 = vmatpush.msra.mxu0 %v1459
    %2615 = vmatpush.msra.mxu0 %v1443
    %2616 = vmatpush.msra.mxu0 %v1427
    %2617 = vmatpush.msra.mxu0 %v1411
    %2618 = vmatmul.f32.gmra.mxu0 %v373
    %v2619 = vpop.f32.mrf.mxu0
    %v2620 = vadd.f32 %v2597, %v2619
    %2621 = vmatmul.f32.gmra.mxu0 %v382
    %v2622 = vpop.f32.mrf.mxu0
    %v2623 = vadd.f32 %v2600, %v2622
    %2624 = vdwg.mxu0
    %2625 = vmatpush.msra.mxu0 %v1907
    %2626 = vmatpush.msra.mxu0 %v1891
    %2627 = vmatpush.msra.mxu0 %v1875
    %2628 = vmatpush.msra.mxu0 %v1859
    %2629 = vmatpush.msra.mxu0 %v1843
    %2630 = vmatpush.msra.mxu0 %v1827
    %2631 = vmatpush.msra.mxu0 %v1811
    %2632 = vmatpush.msra.mxu0 %v1795
    %2633 = vmatpush.msra.mxu0 %v1779
    %2634 = vmatpush.msra.mxu0 %v1763
    %2635 = vmatpush.msra.mxu0 %v1747
    %2636 = vmatpush.msra.mxu0 %v1731
    %2637 = vmatpush.msra.mxu0 %v1715
    %2638 = vmatpush.msra.mxu0 %v1699
    %2639 = vmatpush.msra.mxu0 %v1683
    %2640 = vmatpush.msra.mxu0 %v1667
    %2641 = vmatmul.f32.gmra.mxu0 %v374
    %v2642 = vpop.f32.mrf.mxu0
    %v2643 = vadd.f32 %v2620, %v2642
    %2644 = vmatmul.f32.gmra.mxu0 %v383
    %v2645 = vpop.f32.mrf.mxu0
    %v2646 = vadd.f32 %v2623, %v2645
    %2647 = vdwg.mxu0
    %2648 = vmatpush.msra.mxu0 %v2163
    %2649 = vmatpush.msra.mxu0 %v2147
    %2650 = vmatpush.msra.mxu0 %v2131
    %2651 = vmatpush.msra.mxu0 %v2115
    %2652 = vmatpush.msra.mxu0 %v2099
    %2653 = vmatpush.msra.mxu0 %v2083
    %2654 = vmatpush.msra.mxu0 %v2067
    %2655 = vmatpush.msra.mxu0 %v2051
    %2656 = vmatpush.msra.mxu0 %v2035
    %2657 = vmatpush.msra.mxu0 %v2019
    %2658 = vmatpush.msra.mxu0 %v2003
    %2659 = vmatpush.msra.mxu0 %v1987
    %2660 = vmatpush.msra.mxu0 %v1971
    %2661 = vmatpush.msra.mxu0 %v1955
    %2662 = vmatpush.msra.mxu0 %v1939
    %2663 = vmatpush.msra.mxu0 %v1923
    %2664 = vmatmul.f32.gmra.mxu0 %v375
    %v2665 = vpop.f32.mrf.mxu0
    %v2666 = vadd.f32 %v2643, %v2665
    %2667 = vmatmul.f32.gmra.mxu0 %v384
    %v2668 = vpop.f32.mrf.mxu0
    %v2669 = vadd.f32 %v2646, %v2668
    %2670 = vdwg.mxu0
    %2671 = vmatpush.msra.mxu0 %v2419
    %2672 = vmatpush.msra.mxu0 %v2403
    %2673 = vmatpush.msra.mxu0 %v2387
    %2674 = vmatpush.msra.mxu0 %v2371
    %2675 = vmatpush.msra.mxu0 %v2355
    %2676 = vmatpush.msra.mxu0 %v2339
    %2677 = vmatpush.msra.mxu0 %v2323
    %2678 = vmatpush.msra.mxu0 %v2307
    %2679 = vmatpush.msra.mxu0 %v2291
    %2680 = vmatpush.msra.mxu0 %v2275
    %2681 = vmatpush.msra.mxu0 %v2259
    %2682 = vmatpush.msra.mxu0 %v2243
    %2683 = vmatpush.msra.mxu0 %v2227
    %2684 = vmatpush.msra.mxu0 %v2211
    %2685 = vmatpush.msra.mxu0 %v2195
    %2686 = vmatpush.msra.mxu0 %v2179
    %2687 = vmatmul.f32.gmra.mxu0 %v376
    %v2688 = vpop.f32.mrf.mxu0
    %v2689 = vadd.f32 %v2666, %v2688
    %2690 = vmatmul.f32.gmra.mxu0 %v385
    %v2691 = vpop.f32.mrf.mxu0
    %v2692 = vadd.f32 %v2669, %v2691
    %2693 = vdwg.mxu0
    %2694 = vmatpush.msra.mxu0 0.0
    %2695 = vmatpush.msra.mxu0 0.0
    %2696 = vmatpush.msra.mxu0 0.0
    %2697 = vmatpush.msra.mxu0 0.0
    %2698 = vmatpush.msra.mxu0 0.0
    %2699 = vmatpush.msra.mxu0 0.0
    %2700 = vmatpush.msra.mxu0 0.0
    %2701 = vmatpush.msra.mxu0 0.0
    %2702 = vmatpush.msra.mxu0 0.0
    %2703 = vmatpush.msra.mxu0 0.0
    %2704 = vmatpush.msra.mxu0 0.0
    %2705 = vmatpush.msra.mxu0 0.0
    %2706 = vmatpush.msra.mxu0 0.0
    %2707 = vmatpush.msra.mxu0 0.0
    %2708 = vmatpush.msra.mxu0 %v2451
    %2709 = vmatpush.msra.mxu0 %v2435
    %2710 = vmatmul.f32.gmra.mxu0 %v2505
    %v2711 = vpop.f32.mrf.mxu0
    %v2712 = vadd.f32 %v2689, %v2711
    %2713 = vmatmul.f32.gmra.mxu0 %v2508
    %v2714 = vpop.f32.mrf.mxu0
    %v2715 = vadd.f32 %v2692, %v2714
    %2716 = vdwg.mxu0
    %2717 = vmatpush.msra.mxu0 %v628
    %2718 = vmatpush.msra.mxu0 %v612
    %2719 = vmatpush.msra.mxu0 %v596
    %2720 = vmatpush.msra.mxu0 %v580
    %2721 = vmatpush.msra.mxu0 %v564
    %2722 = vmatpush.msra.mxu0 %v548
    %2723 = vmatpush.msra.mxu0 %v532
    %2724 = vmatpush.msra.mxu0 %v516
    %2725 = vmatpush.msra.mxu0 %v500
    %2726 = vmatpush.msra.mxu0 %v484
    %2727 = vmatpush.msra.mxu0 %v468
    %2728 = vmatpush.msra.mxu0 %v452
    %2729 = vmatpush.msra.mxu0 %v436
    %2730 = vmatpush.msra.mxu0 %v420
    %2731 = vmatpush.msra.mxu0 %v404
    %2732 = vmatpush.msra.mxu0 %v388
    %2733 = vmatmul.f32.gmra.mxu0 %v369
    %v2734 = vpop.f32.mrf.mxu0
    %v2735 = vadd.f32 %v2472, %v2734
    %2736 = vmatmul.f32.gmra.mxu0 %v378
    %v2737 = vpop.f32.mrf.mxu0
    %v2738 = vadd.f32 %v2472, %v2737
    %2739 = vdwg.mxu0
    %2740 = vmatpush.msra.mxu0 %v884
    %2741 = vmatpush.msra.mxu0 %v868
    %2742 = vmatpush.msra.mxu0 %v852
    %2743 = vmatpush.msra.mxu0 %v836
    %2744 = vmatpush.msra.mxu0 %v820
    %2745 = vmatpush.msra.mxu0 %v804
    %2746 = vmatpush.msra.mxu0 %v788
    %2747 = vmatpush.msra.mxu0 %v772
    %2748 = vmatpush.msra.mxu0 %v756
    %2749 = vmatpush.msra.mxu0 %v740
    %2750 = vmatpush.msra.mxu0 %v724
    %2751 = vmatpush.msra.mxu0 %v708
    %2752 = vmatpush.msra.mxu0 %v692
    %2753 = vmatpush.msra.mxu0 %v676
    %2754 = vmatpush.msra.mxu0 %v660
    %2755 = vmatpush.msra.mxu0 %v644
    %2756 = vmatmul.f32.gmra.mxu0 %v370
    %v2757 = vpop.f32.mrf.mxu0
    %v2758 = vadd.f32 %v2735, %v2757
    %2759 = vmatmul.f32.gmra.mxu0 %v379
    %v2760 = vpop.f32.mrf.mxu0
    %v2761 = vadd.f32 %v2738, %v2760
    %2762 = vdwg.mxu0
    %2763 = vmatpush.msra.mxu0 %v1140
    %2764 = vmatpush.msra.mxu0 %v1124
    %2765 = vmatpush.msra.mxu0 %v1108
    %2766 = vmatpush.msra.mxu0 %v1092
    %2767 = vmatpush.msra.mxu0 %v1076
    %2768 = vmatpush.msra.mxu0 %v1060
    %2769 = vmatpush.msra.mxu0 %v1044
    %2770 = vmatpush.msra.mxu0 %v1028
    %2771 = vmatpush.msra.mxu0 %v1012
    %2772 = vmatpush.msra.mxu0 %v996
    %2773 = vmatpush.msra.mxu0 %v980
    %2774 = vmatpush.msra.mxu0 %v964
    %2775 = vmatpush.msra.mxu0 %v948
    %2776 = vmatpush.msra.mxu0 %v932
    %2777 = vmatpush.msra.mxu0 %v916
    %2778 = vmatpush.msra.mxu0 %v900
    %2779 = vmatmul.f32.gmra.mxu0 %v371
    %v2780 = vpop.f32.mrf.mxu0
    %v2781 = vadd.f32 %v2758, %v2780
    %2782 = vmatmul.f32.gmra.mxu0 %v380
    %v2783 = vpop.f32.mrf.mxu0
    %v2784 = vadd.f32 %v2761, %v2783
    %2785 = vdwg.mxu0
    %2786 = vmatpush.msra.mxu0 %v1396
    %2787 = vmatpush.msra.mxu0 %v1380
    %2788 = vmatpush.msra.mxu0 %v1364
    %2789 = vmatpush.msra.mxu0 %v1348
    %2790 = vmatpush.msra.mxu0 %v1332
    %2791 = vmatpush.msra.mxu0 %v1316
    %2792 = vmatpush.msra.mxu0 %v1300
    %2793 = vmatpush.msra.mxu0 %v1284
    %2794 = vmatpush.msra.mxu0 %v1268
    %2795 = vmatpush.msra.mxu0 %v1252
    %2796 = vmatpush.msra.mxu0 %v1236
    %2797 = vmatpush.msra.mxu0 %v1220
    %2798 = vmatpush.msra.mxu0 %v1204
    %2799 = vmatpush.msra.mxu0 %v1188
    %2800 = vmatpush.msra.mxu0 %v1172
    %2801 = vmatpush.msra.mxu0 %v1156
    %2802 = vmatmul.f32.gmra.mxu0 %v372
    %v2803 = vpop.f32.mrf.mxu0
    %v2804 = vadd.f32 %v2781, %v2803
    %2805 = vmatmul.f32.gmra.mxu0 %v381
    %v2806 = vpop.f32.mrf.mxu0
    %v2807 = vadd.f32 %v2784, %v2806
    %2808 = vdwg.mxu0
    %2809 = vmatpush.msra.mxu0 %v1652
    %2810 = vmatpush.msra.mxu0 %v1636
    %2811 = vmatpush.msra.mxu0 %v1620
    %2812 = vmatpush.msra.mxu0 %v1604
    %2813 = vmatpush.msra.mxu0 %v1588
    %2814 = vmatpush.msra.mxu0 %v1572
    %2815 = vmatpush.msra.mxu0 %v1556
    %2816 = vmatpush.msra.mxu0 %v1540
    %2817 = vmatpush.msra.mxu0 %v1524
    %2818 = vmatpush.msra.mxu0 %v1508
    %2819 = vmatpush.msra.mxu0 %v1492
    %2820 = vmatpush.msra.mxu0 %v1476
    %2821 = vmatpush.msra.mxu0 %v1460
    %2822 = vmatpush.msra.mxu0 %v1444
    %2823 = vmatpush.msra.mxu0 %v1428
    %2824 = vmatpush.msra.mxu0 %v1412
    %2825 = vmatmul.f32.gmra.mxu0 %v373
    %v2826 = vpop.f32.mrf.mxu0
    %v2827 = vadd.f32 %v2804, %v2826
    %2828 = vmatmul.f32.gmra.mxu0 %v382
    %v2829 = vpop.f32.mrf.mxu0
    %v2830 = vadd.f32 %v2807, %v2829
    %2831 = vdwg.mxu0
    %2832 = vmatpush.msra.mxu0 %v1908
    %2833 = vmatpush.msra.mxu0 %v1892
    %2834 = vmatpush.msra.mxu0 %v1876
    %2835 = vmatpush.msra.mxu0 %v1860
    %2836 = vmatpush.msra.mxu0 %v1844
    %2837 = vmatpush.msra.mxu0 %v1828
    %2838 = vmatpush.msra.mxu0 %v1812
    %2839 = vmatpush.msra.mxu0 %v1796
    %2840 = vmatpush.msra.mxu0 %v1780
    %2841 = vmatpush.msra.mxu0 %v1764
    %2842 = vmatpush.msra.mxu0 %v1748
    %2843 = vmatpush.msra.mxu0 %v1732
    %2844 = vmatpush.msra.mxu0 %v1716
    %2845 = vmatpush.msra.mxu0 %v1700
    %2846 = vmatpush.msra.mxu0 %v1684
    %2847 = vmatpush.msra.mxu0 %v1668
    %2848 = vmatmul.f32.gmra.mxu0 %v374
    %v2849 = vpop.f32.mrf.mxu0
    %v2850 = vadd.f32 %v2827, %v2849
    %2851 = vmatmul.f32.gmra.mxu0 %v383
    %v2852 = vpop.f32.mrf.mxu0
    %v2853 = vadd.f32 %v2830, %v2852
    %2854 = vdwg.mxu0
    %2855 = vmatpush.msra.mxu0 %v2164
    %2856 = vmatpush.msra.mxu0 %v2148
    %2857 = vmatpush.msra.mxu0 %v2132
    %2858 = vmatpush.msra.mxu0 %v2116
    %2859 = vmatpush.msra.mxu0 %v2100
    %2860 = vmatpush.msra.mxu0 %v2084
    %2861 = vmatpush.msra.mxu0 %v2068
    %2862 = vmatpush.msra.mxu0 %v2052
    %2863 = vmatpush.msra.mxu0 %v2036
    %2864 = vmatpush.msra.mxu0 %v2020
    %2865 = vmatpush.msra.mxu0 %v2004
    %2866 = vmatpush.msra.mxu0 %v1988
    %2867 = vmatpush.msra.mxu0 %v1972
    %2868 = vmatpush.msra.mxu0 %v1956
    %2869 = vmatpush.msra.mxu0 %v1940
    %2870 = vmatpush.msra.mxu0 %v1924
    %2871 = vmatmul.f32.gmra.mxu0 %v375
    %v2872 = vpop.f32.mrf.mxu0
    %v2873 = vadd.f32 %v2850, %v2872
    %2874 = vmatmul.f32.gmra.mxu0 %v384
    %v2875 = vpop.f32.mrf.mxu0
    %v2876 = vadd.f32 %v2853, %v2875
    %2877 = vdwg.mxu0
    %2878 = vmatpush.msra.mxu0 %v2420
    %2879 = vmatpush.msra.mxu0 %v2404
    %2880 = vmatpush.msra.mxu0 %v2388
    %2881 = vmatpush.msra.mxu0 %v2372
    %2882 = vmatpush.msra.mxu0 %v2356
    %2883 = vmatpush.msra.mxu0 %v2340
    %2884 = vmatpush.msra.mxu0 %v2324
    %2885 = vmatpush.msra.mxu0 %v2308
    %2886 = vmatpush.msra.mxu0 %v2292
    %2887 = vmatpush.msra.mxu0 %v2276
    %2888 = vmatpush.msra.mxu0 %v2260
    %2889 = vmatpush.msra.mxu0 %v2244
    %2890 = vmatpush.msra.mxu0 %v2228
    %2891 = vmatpush.msra.mxu0 %v2212
    %2892 = vmatpush.msra.mxu0 %v2196
    %2893 = vmatpush.msra.mxu0 %v2180
    %2894 = vmatmul.f32.gmra.mxu0 %v376
    %v2895 = vpop.f32.mrf.mxu0
    %v2896 = vadd.f32 %v2873, %v2895
    %2897 = vmatmul.f32.gmra.mxu0 %v385
    %v2898 = vpop.f32.mrf.mxu0
    %v2899 = vadd.f32 %v2876, %v2898
    %2900 = vdwg.mxu0
    %2901 = vmatpush.msra.mxu0 0.0
    %2902 = vmatpush.msra.mxu0 0.0
    %2903 = vmatpush.msra.mxu0 0.0
    %2904 = vmatpush.msra.mxu0 0.0
    %2905 = vmatpush.msra.mxu0 0.0
    %2906 = vmatpush.msra.mxu0 0.0
    %2907 = vmatpush.msra.mxu0 0.0
    %2908 = vmatpush.msra.mxu0 0.0
    %2909 = vmatpush.msra.mxu0 0.0
    %2910 = vmatpush.msra.mxu0 0.0
    %2911 = vmatpush.msra.mxu0 0.0
    %2912 = vmatpush.msra.mxu0 0.0
    %2913 = vmatpush.msra.mxu0 0.0
    %2914 = vmatpush.msra.mxu0 0.0
    %2915 = vmatpush.msra.mxu0 %v2452
    %2916 = vmatpush.msra.mxu0 %v2436
    %2917 = vmatmul.f32.gmra.mxu0 %v2505
    %v2918 = vpop.f32.mrf.mxu0
    %v2919 = vadd.f32 %v2896, %v2918
    %2920 = vmatmul.f32.gmra.mxu0 %v2508
    %v2921 = vpop.f32.mrf.mxu0
    %v2922 = vadd.f32 %v2899, %v2921
    %2923 = vdwg.mxu0
    %2924 = vmatpush.msra.mxu0 %v629
    %2925 = vmatpush.msra.mxu0 %v613
    %2926 = vmatpush.msra.mxu0 %v597
    %2927 = vmatpush.msra.mxu0 %v581
    %2928 = vmatpush.msra.mxu0 %v565
    %2929 = vmatpush.msra.mxu0 %v549
    %2930 = vmatpush.msra.mxu0 %v533
    %2931 = vmatpush.msra.mxu0 %v517
    %2932 = vmatpush.msra.mxu0 %v501
    %2933 = vmatpush.msra.mxu0 %v485
    %2934 = vmatpush.msra.mxu0 %v469
    %2935 = vmatpush.msra.mxu0 %v453
    %2936 = vmatpush.msra.mxu0 %v437
    %2937 = vmatpush.msra.mxu0 %v421
    %2938 = vmatpush.msra.mxu0 %v405
    %2939 = vmatpush.msra.mxu0 %v389
    %2940 = vmatmul.f32.gmra.mxu0 %v369
    %v2941 = vpop.f32.mrf.mxu0
    %v2942 = vadd.f32 %v2473, %v2941
    %2943 = vmatmul.f32.gmra.mxu0 %v378
    %v2944 = vpop.f32.mrf.mxu0
    %v2945 = vadd.f32 %v2473, %v2944
    %2946 = vdwg.mxu0
    %2947 = vmatpush.msra.mxu0 %v885
    %2948 = vmatpush.msra.mxu0 %v869
    %2949 = vmatpush.msra.mxu0 %v853
    %2950 = vmatpush.msra.mxu0 %v837
    %2951 = vmatpush.msra.mxu0 %v821
    %2952 = vmatpush.msra.mxu0 %v805
    %2953 = vmatpush.msra.mxu0 %v789
    %2954 = vmatpush.msra.mxu0 %v773
    %2955 = vmatpush.msra.mxu0 %v757
    %2956 = vmatpush.msra.mxu0 %v741
    %2957 = vmatpush.msra.mxu0 %v725
    %2958 = vmatpush.msra.mxu0 %v709
    %2959 = vmatpush.msra.mxu0 %v693
    %2960 = vmatpush.msra.mxu0 %v677
    %2961 = vmatpush.msra.mxu0 %v661
    %2962 = vmatpush.msra.mxu0 %v645
    %2963 = vmatmul.f32.gmra.mxu0 %v370
    %v2964 = vpop.f32.mrf.mxu0
    %v2965 = vadd.f32 %v2942, %v2964
    %2966 = vmatmul.f32.gmra.mxu0 %v379
    %v2967 = vpop.f32.mrf.mxu0
    %v2968 = vadd.f32 %v2945, %v2967
    %2969 = vdwg.mxu0
    %2970 = vmatpush.msra.mxu0 %v1141
    %2971 = vmatpush.msra.mxu0 %v1125
    %2972 = vmatpush.msra.mxu0 %v1109
    %2973 = vmatpush.msra.mxu0 %v1093
    %2974 = vmatpush.msra.mxu0 %v1077
    %2975 = vmatpush.msra.mxu0 %v1061
    %2976 = vmatpush.msra.mxu0 %v1045
    %2977 = vmatpush.msra.mxu0 %v1029
    %2978 = vmatpush.msra.mxu0 %v1013
    %2979 = vmatpush.msra.mxu0 %v997
    %2980 = vmatpush.msra.mxu0 %v981
    %2981 = vmatpush.msra.mxu0 %v965
    %2982 = vmatpush.msra.mxu0 %v949
    %2983 = vmatpush.msra.mxu0 %v933
    %2984 = vmatpush.msra.mxu0 %v917
    %2985 = vmatpush.msra.mxu0 %v901
    %2986 = vmatmul.f32.gmra.mxu0 %v371
    %v2987 = vpop.f32.mrf.mxu0
    %v2988 = vadd.f32 %v2965, %v2987
    %2989 = vmatmul.f32.gmra.mxu0 %v380
    %v2990 = vpop.f32.mrf.mxu0
    %v2991 = vadd.f32 %v2968, %v2990
    %2992 = vdwg.mxu0
    %2993 = vmatpush.msra.mxu0 %v1397
    %2994 = vmatpush.msra.mxu0 %v1381
    %2995 = vmatpush.msra.mxu0 %v1365
    %2996 = vmatpush.msra.mxu0 %v1349
    %2997 = vmatpush.msra.mxu0 %v1333
    %2998 = vmatpush.msra.mxu0 %v1317
    %2999 = vmatpush.msra.mxu0 %v1301
    %3000 = vmatpush.msra.mxu0 %v1285
    %3001 = vmatpush.msra.mxu0 %v1269
    %3002 = vmatpush.msra.mxu0 %v1253
    %3003 = vmatpush.msra.mxu0 %v1237
    %3004 = vmatpush.msra.mxu0 %v1221
    %3005 = vmatpush.msra.mxu0 %v1205
    %3006 = vmatpush.msra.mxu0 %v1189
    %3007 = vmatpush.msra.mxu0 %v1173
    %3008 = vmatpush.msra.mxu0 %v1157
    %3009 = vmatmul.f32.gmra.mxu0 %v372
    %v3010 = vpop.f32.mrf.mxu0
    %v3011 = vadd.f32 %v2988, %v3010
    %3012 = vmatmul.f32.gmra.mxu0 %v381
    %v3013 = vpop.f32.mrf.mxu0
    %v3014 = vadd.f32 %v2991, %v3013
    %3015 = vdwg.mxu0
    %3016 = vmatpush.msra.mxu0 %v1653
    %3017 = vmatpush.msra.mxu0 %v1637
    %3018 = vmatpush.msra.mxu0 %v1621
    %3019 = vmatpush.msra.mxu0 %v1605
    %3020 = vmatpush.msra.mxu0 %v1589
    %3021 = vmatpush.msra.mxu0 %v1573
    %3022 = vmatpush.msra.mxu0 %v1557
    %3023 = vmatpush.msra.mxu0 %v1541
    %3024 = vmatpush.msra.mxu0 %v1525
    %3025 = vmatpush.msra.mxu0 %v1509
    %3026 = vmatpush.msra.mxu0 %v1493
    %3027 = vmatpush.msra.mxu0 %v1477
    %3028 = vmatpush.msra.mxu0 %v1461
    %3029 = vmatpush.msra.mxu0 %v1445
    %3030 = vmatpush.msra.mxu0 %v1429
    %3031 = vmatpush.msra.mxu0 %v1413
    %3032 = vmatmul.f32.gmra.mxu0 %v373
    %v3033 = vpop.f32.mrf.mxu0
    %v3034 = vadd.f32 %v3011, %v3033
    %3035 = vmatmul.f32.gmra.mxu0 %v382
    %v3036 = vpop.f32.mrf.mxu0
    %v3037 = vadd.f32 %v3014, %v3036
    %3038 = vdwg.mxu0
    %3039 = vmatpush.msra.mxu0 %v1909
    %3040 = vmatpush.msra.mxu0 %v1893
    %3041 = vmatpush.msra.mxu0 %v1877
    %3042 = vmatpush.msra.mxu0 %v1861
    %3043 = vmatpush.msra.mxu0 %v1845
    %3044 = vmatpush.msra.mxu0 %v1829
    %3045 = vmatpush.msra.mxu0 %v1813
    %3046 = vmatpush.msra.mxu0 %v1797
    %3047 = vmatpush.msra.mxu0 %v1781
    %3048 = vmatpush.msra.mxu0 %v1765
    %3049 = vmatpush.msra.mxu0 %v1749
    %3050 = vmatpush.msra.mxu0 %v1733
    %3051 = vmatpush.msra.mxu0 %v1717
    %3052 = vmatpush.msra.mxu0 %v1701
    %3053 = vmatpush.msra.mxu0 %v1685
    %3054 = vmatpush.msra.mxu0 %v1669
    %3055 = vmatmul.f32.gmra.mxu0 %v374
    %v3056 = vpop.f32.mrf.mxu0
    %v3057 = vadd.f32 %v3034, %v3056
    %3058 = vmatmul.f32.gmra.mxu0 %v383
    %v3059 = vpop.f32.mrf.mxu0
    %v3060 = vadd.f32 %v3037, %v3059
    %3061 = vdwg.mxu0
    %3062 = vmatpush.msra.mxu0 %v2165
    %3063 = vmatpush.msra.mxu0 %v2149
    %3064 = vmatpush.msra.mxu0 %v2133
    %3065 = vmatpush.msra.mxu0 %v2117
    %3066 = vmatpush.msra.mxu0 %v2101
    %3067 = vmatpush.msra.mxu0 %v2085
    %3068 = vmatpush.msra.mxu0 %v2069
    %3069 = vmatpush.msra.mxu0 %v2053
    %3070 = vmatpush.msra.mxu0 %v2037
    %3071 = vmatpush.msra.mxu0 %v2021
    %3072 = vmatpush.msra.mxu0 %v2005
    %3073 = vmatpush.msra.mxu0 %v1989
    %3074 = vmatpush.msra.mxu0 %v1973
    %3075 = vmatpush.msra.mxu0 %v1957
    %3076 = vmatpush.msra.mxu0 %v1941
    %3077 = vmatpush.msra.mxu0 %v1925
    %3078 = vmatmul.f32.gmra.mxu0 %v375
    %v3079 = vpop.f32.mrf.mxu0
    %v3080 = vadd.f32 %v3057, %v3079
    %3081 = vmatmul.f32.gmra.mxu0 %v384
    %v3082 = vpop.f32.mrf.mxu0
    %v3083 = vadd.f32 %v3060, %v3082
    %3084 = vdwg.mxu0
    %3085 = vmatpush.msra.mxu0 %v2421
    %3086 = vmatpush.msra.mxu0 %v2405
    %3087 = vmatpush.msra.mxu0 %v2389
    %3088 = vmatpush.msra.mxu0 %v2373
    %3089 = vmatpush.msra.mxu0 %v2357
    %3090 = vmatpush.msra.mxu0 %v2341
    %3091 = vmatpush.msra.mxu0 %v2325
    %3092 = vmatpush.msra.mxu0 %v2309
    %3093 = vmatpush.msra.mxu0 %v2293
    %3094 = vmatpush.msra.mxu0 %v2277
    %3095 = vmatpush.msra.mxu0 %v2261
    %3096 = vmatpush.msra.mxu0 %v2245
    %3097 = vmatpush.msra.mxu0 %v2229
    %3098 = vmatpush.msra.mxu0 %v2213
    %3099 = vmatpush.msra.mxu0 %v2197
    %3100 = vmatpush.msra.mxu0 %v2181
    %3101 = vmatmul.f32.gmra.mxu0 %v376
    %v3102 = vpop.f32.mrf.mxu0
    %v3103 = vadd.f32 %v3080, %v3102
    %3104 = vmatmul.f32.gmra.mxu0 %v385
    %v3105 = vpop.f32.mrf.mxu0
    %v3106 = vadd.f32 %v3083, %v3105
    %3107 = vdwg.mxu0
    %3108 = vmatpush.msra.mxu0 0.0
    %3109 = vmatpush.msra.mxu0 0.0
    %3110 = vmatpush.msra.mxu0 0.0
    %3111 = vmatpush.msra.mxu0 0.0
    %3112 = vmatpush.msra.mxu0 0.0
    %3113 = vmatpush.msra.mxu0 0.0
    %3114 = vmatpush.msra.mxu0 0.0
    %3115 = vmatpush.msra.mxu0 0.0
    %3116 = vmatpush.msra.mxu0 0.0
    %3117 = vmatpush.msra.mxu0 0.0
    %3118 = vmatpush.msra.mxu0 0.0
    %3119 = vmatpush.msra.mxu0 0.0
    %3120 = vmatpush.msra.mxu0 0.0
    %3121 = vmatpush.msra.mxu0 0.0
    %3122 = vmatpush.msra.mxu0 %v2453
    %3123 = vmatpush.msra.mxu0 %v2437
    %3124 = vmatmul.f32.gmra.mxu0 %v2505
    %v3125 = vpop.f32.mrf.mxu0
    %v3126 = vadd.f32 %v3103, %v3125
    %3127 = vmatmul.f32.gmra.mxu0 %v2508
    %v3128 = vpop.f32.mrf.mxu0
    %v3129 = vadd.f32 %v3106, %v3128
    %3130 = vdwg.mxu0
    %3131 = vmatpush.msra.mxu0 %v630
    %3132 = vmatpush.msra.mxu0 %v614
    %3133 = vmatpush.msra.mxu0 %v598
    %3134 = vmatpush.msra.mxu0 %v582
    %3135 = vmatpush.msra.mxu0 %v566
    %3136 = vmatpush.msra.mxu0 %v550
    %3137 = vmatpush.msra.mxu0 %v534
    %3138 = vmatpush.msra.mxu0 %v518
    %3139 = vmatpush.msra.mxu0 %v502
    %3140 = vmatpush.msra.mxu0 %v486
    %3141 = vmatpush.msra.mxu0 %v470
    %3142 = vmatpush.msra.mxu0 %v454
    %3143 = vmatpush.msra.mxu0 %v438
    %3144 = vmatpush.msra.mxu0 %v422
    %3145 = vmatpush.msra.mxu0 %v406
    %3146 = vmatpush.msra.mxu0 %v390
    %3147 = vmatmul.f32.gmra.mxu0 %v369
    %v3148 = vpop.f32.mrf.mxu0
    %v3149 = vadd.f32 %v2474, %v3148
    %3150 = vmatmul.f32.gmra.mxu0 %v378
    %v3151 = vpop.f32.mrf.mxu0
    %v3152 = vadd.f32 %v2474, %v3151
    %3153 = vdwg.mxu0
    %3154 = vmatpush.msra.mxu0 %v886
    %3155 = vmatpush.msra.mxu0 %v870
    %3156 = vmatpush.msra.mxu0 %v854
    %3157 = vmatpush.msra.mxu0 %v838
    %3158 = vmatpush.msra.mxu0 %v822
    %3159 = vmatpush.msra.mxu0 %v806
    %3160 = vmatpush.msra.mxu0 %v790
    %3161 = vmatpush.msra.mxu0 %v774
    %3162 = vmatpush.msra.mxu0 %v758
    %3163 = vmatpush.msra.mxu0 %v742
    %3164 = vmatpush.msra.mxu0 %v726
    %3165 = vmatpush.msra.mxu0 %v710
    %3166 = vmatpush.msra.mxu0 %v694
    %3167 = vmatpush.msra.mxu0 %v678
    %3168 = vmatpush.msra.mxu0 %v662
    %3169 = vmatpush.msra.mxu0 %v646
    %3170 = vmatmul.f32.gmra.mxu0 %v370
    %v3171 = vpop.f32.mrf.mxu0
    %v3172 = vadd.f32 %v3149, %v3171
    %3173 = vmatmul.f32.gmra.mxu0 %v379
    %v3174 = vpop.f32.mrf.mxu0
    %v3175 = vadd.f32 %v3152, %v3174
    %3176 = vdwg.mxu0
    %3177 = vmatpush.msra.mxu0 %v1142
    %3178 = vmatpush.msra.mxu0 %v1126
    %3179 = vmatpush.msra.mxu0 %v1110
    %3180 = vmatpush.msra.mxu0 %v1094
    %3181 = vmatpush.msra.mxu0 %v1078
    %3182 = vmatpush.msra.mxu0 %v1062
    %3183 = vmatpush.msra.mxu0 %v1046
    %3184 = vmatpush.msra.mxu0 %v1030
    %3185 = vmatpush.msra.mxu0 %v1014
    %3186 = vmatpush.msra.mxu0 %v998
    %3187 = vmatpush.msra.mxu0 %v982
    %3188 = vmatpush.msra.mxu0 %v966
    %3189 = vmatpush.msra.mxu0 %v950
    %3190 = vmatpush.msra.mxu0 %v934
    %3191 = vmatpush.msra.mxu0 %v918
    %3192 = vmatpush.msra.mxu0 %v902
    %3193 = vmatmul.f32.gmra.mxu0 %v371
    %v3194 = vpop.f32.mrf.mxu0
    %v3195 = vadd.f32 %v3172, %v3194
    %3196 = vmatmul.f32.gmra.mxu0 %v380
    %v3197 = vpop.f32.mrf.mxu0
    %v3198 = vadd.f32 %v3175, %v3197
    %3199 = vdwg.mxu0
    %3200 = vmatpush.msra.mxu0 %v1398
    %3201 = vmatpush.msra.mxu0 %v1382
    %3202 = vmatpush.msra.mxu0 %v1366
    %3203 = vmatpush.msra.mxu0 %v1350
    %3204 = vmatpush.msra.mxu0 %v1334
    %3205 = vmatpush.msra.mxu0 %v1318
    %3206 = vmatpush.msra.mxu0 %v1302
    %3207 = vmatpush.msra.mxu0 %v1286
    %3208 = vmatpush.msra.mxu0 %v1270
    %3209 = vmatpush.msra.mxu0 %v1254
    %3210 = vmatpush.msra.mxu0 %v1238
    %3211 = vmatpush.msra.mxu0 %v1222
    %3212 = vmatpush.msra.mxu0 %v1206
    %3213 = vmatpush.msra.mxu0 %v1190
    %3214 = vmatpush.msra.mxu0 %v1174
    %3215 = vmatpush.msra.mxu0 %v1158
    %3216 = vmatmul.f32.gmra.mxu0 %v372
    %v3217 = vpop.f32.mrf.mxu0
    %v3218 = vadd.f32 %v3195, %v3217
    %3219 = vmatmul.f32.gmra.mxu0 %v381
    %v3220 = vpop.f32.mrf.mxu0
    %v3221 = vadd.f32 %v3198, %v3220
    %3222 = vdwg.mxu0
    %3223 = vmatpush.msra.mxu0 %v1654
    %3224 = vmatpush.msra.mxu0 %v1638
    %3225 = vmatpush.msra.mxu0 %v1622
    %3226 = vmatpush.msra.mxu0 %v1606
    %3227 = vmatpush.msra.mxu0 %v1590
    %3228 = vmatpush.msra.mxu0 %v1574
    %3229 = vmatpush.msra.mxu0 %v1558
    %3230 = vmatpush.msra.mxu0 %v1542
    %3231 = vmatpush.msra.mxu0 %v1526
    %3232 = vmatpush.msra.mxu0 %v1510
    %3233 = vmatpush.msra.mxu0 %v1494
    %3234 = vmatpush.msra.mxu0 %v1478
    %3235 = vmatpush.msra.mxu0 %v1462
    %3236 = vmatpush.msra.mxu0 %v1446
    %3237 = vmatpush.msra.mxu0 %v1430
    %3238 = vmatpush.msra.mxu0 %v1414
    %3239 = vmatmul.f32.gmra.mxu0 %v373
    %v3240 = vpop.f32.mrf.mxu0
    %v3241 = vadd.f32 %v3218, %v3240
    %3242 = vmatmul.f32.gmra.mxu0 %v382
    %v3243 = vpop.f32.mrf.mxu0
    %v3244 = vadd.f32 %v3221, %v3243
    %3245 = vdwg.mxu0
    %3246 = vmatpush.msra.mxu0 %v1910
    %3247 = vmatpush.msra.mxu0 %v1894
    %3248 = vmatpush.msra.mxu0 %v1878
    %3249 = vmatpush.msra.mxu0 %v1862
    %3250 = vmatpush.msra.mxu0 %v1846
    %3251 = vmatpush.msra.mxu0 %v1830
    %3252 = vmatpush.msra.mxu0 %v1814
    %3253 = vmatpush.msra.mxu0 %v1798
    %3254 = vmatpush.msra.mxu0 %v1782
    %3255 = vmatpush.msra.mxu0 %v1766
    %3256 = vmatpush.msra.mxu0 %v1750
    %3257 = vmatpush.msra.mxu0 %v1734
    %3258 = vmatpush.msra.mxu0 %v1718
    %3259 = vmatpush.msra.mxu0 %v1702
    %3260 = vmatpush.msra.mxu0 %v1686
    %3261 = vmatpush.msra.mxu0 %v1670
    %3262 = vmatmul.f32.gmra.mxu0 %v374
    %v3263 = vpop.f32.mrf.mxu0
    %v3264 = vadd.f32 %v3241, %v3263
    %3265 = vmatmul.f32.gmra.mxu0 %v383
    %v3266 = vpop.f32.mrf.mxu0
    %v3267 = vadd.f32 %v3244, %v3266
    %3268 = vdwg.mxu0
    %3269 = vmatpush.msra.mxu0 %v2166
    %3270 = vmatpush.msra.mxu0 %v2150
    %3271 = vmatpush.msra.mxu0 %v2134
    %3272 = vmatpush.msra.mxu0 %v2118
    %3273 = vmatpush.msra.mxu0 %v2102
    %3274 = vmatpush.msra.mxu0 %v2086
    %3275 = vmatpush.msra.mxu0 %v2070
    %3276 = vmatpush.msra.mxu0 %v2054
    %3277 = vmatpush.msra.mxu0 %v2038
    %3278 = vmatpush.msra.mxu0 %v2022
    %3279 = vmatpush.msra.mxu0 %v2006
    %3280 = vmatpush.msra.mxu0 %v1990
    %3281 = vmatpush.msra.mxu0 %v1974
    %3282 = vmatpush.msra.mxu0 %v1958
    %3283 = vmatpush.msra.mxu0 %v1942
    %3284 = vmatpush.msra.mxu0 %v1926
    %3285 = vmatmul.f32.gmra.mxu0 %v375
    %v3286 = vpop.f32.mrf.mxu0
    %v3287 = vadd.f32 %v3264, %v3286
    %3288 = vmatmul.f32.gmra.mxu0 %v384
    %v3289 = vpop.f32.mrf.mxu0
    %v3290 = vadd.f32 %v3267, %v3289
    %3291 = vdwg.mxu0
    %3292 = vmatpush.msra.mxu0 %v2422
    %3293 = vmatpush.msra.mxu0 %v2406
    %3294 = vmatpush.msra.mxu0 %v2390
    %3295 = vmatpush.msra.mxu0 %v2374
    %3296 = vmatpush.msra.mxu0 %v2358
    %3297 = vmatpush.msra.mxu0 %v2342
    %3298 = vmatpush.msra.mxu0 %v2326
    %3299 = vmatpush.msra.mxu0 %v2310
    %3300 = vmatpush.msra.mxu0 %v2294
    %3301 = vmatpush.msra.mxu0 %v2278
    %3302 = vmatpush.msra.mxu0 %v2262
    %3303 = vmatpush.msra.mxu0 %v2246
    %3304 = vmatpush.msra.mxu0 %v2230
    %3305 = vmatpush.msra.mxu0 %v2214
    %3306 = vmatpush.msra.mxu0 %v2198
    %3307 = vmatpush.msra.mxu0 %v2182
    %3308 = vmatmul.f32.gmra.mxu0 %v376
    %v3309 = vpop.f32.mrf.mxu0
    %v3310 = vadd.f32 %v3287, %v3309
    %3311 = vmatmul.f32.gmra.mxu0 %v385
    %v3312 = vpop.f32.mrf.mxu0
    %v3313 = vadd.f32 %v3290, %v3312
    %3314 = vdwg.mxu0
    %3315 = vmatpush.msra.mxu0 0.0
    %3316 = vmatpush.msra.mxu0 0.0
    %3317 = vmatpush.msra.mxu0 0.0
    %3318 = vmatpush.msra.mxu0 0.0
    %3319 = vmatpush.msra.mxu0 0.0
    %3320 = vmatpush.msra.mxu0 0.0
    %3321 = vmatpush.msra.mxu0 0.0
    %3322 = vmatpush.msra.mxu0 0.0
    %3323 = vmatpush.msra.mxu0 0.0
    %3324 = vmatpush.msra.mxu0 0.0
    %3325 = vmatpush.msra.mxu0 0.0
    %3326 = vmatpush.msra.mxu0 0.0
    %3327 = vmatpush.msra.mxu0 0.0
    %3328 = vmatpush.msra.mxu0 0.0
    %3329 = vmatpush.msra.mxu0 %v2454
    %3330 = vmatpush.msra.mxu0 %v2438
    %3331 = vmatmul.f32.gmra.mxu0 %v2505
    %v3332 = vpop.f32.mrf.mxu0
    %v3333 = vadd.f32 %v3310, %v3332
    %3334 = vmatmul.f32.gmra.mxu0 %v2508
    %v3335 = vpop.f32.mrf.mxu0
    %v3336 = vadd.f32 %v3313, %v3335
    %3337 = vdwg.mxu0
    %3338 = vmatpush.msra.mxu0 %v631
    %3339 = vmatpush.msra.mxu0 %v615
    %3340 = vmatpush.msra.mxu0 %v599
    %3341 = vmatpush.msra.mxu0 %v583
    %3342 = vmatpush.msra.mxu0 %v567
    %3343 = vmatpush.msra.mxu0 %v551
    %3344 = vmatpush.msra.mxu0 %v535
    %3345 = vmatpush.msra.mxu0 %v519
    %3346 = vmatpush.msra.mxu0 %v503
    %3347 = vmatpush.msra.mxu0 %v487
    %3348 = vmatpush.msra.mxu0 %v471
    %3349 = vmatpush.msra.mxu0 %v455
    %3350 = vmatpush.msra.mxu0 %v439
    %3351 = vmatpush.msra.mxu0 %v423
    %3352 = vmatpush.msra.mxu0 %v407
    %3353 = vmatpush.msra.mxu0 %v391
    %3354 = vmatmul.f32.gmra.mxu0 %v369
    %v3355 = vpop.f32.mrf.mxu0
    %v3356 = vadd.f32 %v2475, %v3355
    %3357 = vmatmul.f32.gmra.mxu0 %v378
    %v3358 = vpop.f32.mrf.mxu0
    %v3359 = vadd.f32 %v2475, %v3358
    %3360 = vdwg.mxu0
    %3361 = vmatpush.msra.mxu0 %v887
    %3362 = vmatpush.msra.mxu0 %v871
    %3363 = vmatpush.msra.mxu0 %v855
    %3364 = vmatpush.msra.mxu0 %v839
    %3365 = vmatpush.msra.mxu0 %v823
    %3366 = vmatpush.msra.mxu0 %v807
    %3367 = vmatpush.msra.mxu0 %v791
    %3368 = vmatpush.msra.mxu0 %v775
    %3369 = vmatpush.msra.mxu0 %v759
    %3370 = vmatpush.msra.mxu0 %v743
    %3371 = vmatpush.msra.mxu0 %v727
    %3372 = vmatpush.msra.mxu0 %v711
    %3373 = vmatpush.msra.mxu0 %v695
    %3374 = vmatpush.msra.mxu0 %v679
    %3375 = vmatpush.msra.mxu0 %v663
    %3376 = vmatpush.msra.mxu0 %v647
    %3377 = vmatmul.f32.gmra.mxu0 %v370
    %v3378 = vpop.f32.mrf.mxu0
    %v3379 = vadd.f32 %v3356, %v3378
    %3380 = vmatmul.f32.gmra.mxu0 %v379
    %v3381 = vpop.f32.mrf.mxu0
    %v3382 = vadd.f32 %v3359, %v3381
    %3383 = vdwg.mxu0
    %3384 = vmatpush.msra.mxu0 %v1143
    %3385 = vmatpush.msra.mxu0 %v1127
    %3386 = vmatpush.msra.mxu0 %v1111
    %3387 = vmatpush.msra.mxu0 %v1095
    %3388 = vmatpush.msra.mxu0 %v1079
    %3389 = vmatpush.msra.mxu0 %v1063
    %3390 = vmatpush.msra.mxu0 %v1047
    %3391 = vmatpush.msra.mxu0 %v1031
    %3392 = vmatpush.msra.mxu0 %v1015
    %3393 = vmatpush.msra.mxu0 %v999
    %3394 = vmatpush.msra.mxu0 %v983
    %3395 = vmatpush.msra.mxu0 %v967
    %3396 = vmatpush.msra.mxu0 %v951
    %3397 = vmatpush.msra.mxu0 %v935
    %3398 = vmatpush.msra.mxu0 %v919
    %3399 = vmatpush.msra.mxu0 %v903
    %3400 = vmatmul.f32.gmra.mxu0 %v371
    %v3401 = vpop.f32.mrf.mxu0
    %v3402 = vadd.f32 %v3379, %v3401
    %3403 = vmatmul.f32.gmra.mxu0 %v380
    %v3404 = vpop.f32.mrf.mxu0
    %v3405 = vadd.f32 %v3382, %v3404
    %3406 = vdwg.mxu0
    %3407 = vmatpush.msra.mxu0 %v1399
    %3408 = vmatpush.msra.mxu0 %v1383
    %3409 = vmatpush.msra.mxu0 %v1367
    %3410 = vmatpush.msra.mxu0 %v1351
    %3411 = vmatpush.msra.mxu0 %v1335
    %3412 = vmatpush.msra.mxu0 %v1319
    %3413 = vmatpush.msra.mxu0 %v1303
    %3414 = vmatpush.msra.mxu0 %v1287
    %3415 = vmatpush.msra.mxu0 %v1271
    %3416 = vmatpush.msra.mxu0 %v1255
    %3417 = vmatpush.msra.mxu0 %v1239
    %3418 = vmatpush.msra.mxu0 %v1223
    %3419 = vmatpush.msra.mxu0 %v1207
    %3420 = vmatpush.msra.mxu0 %v1191
    %3421 = vmatpush.msra.mxu0 %v1175
    %3422 = vmatpush.msra.mxu0 %v1159
    %3423 = vmatmul.f32.gmra.mxu0 %v372
    %v3424 = vpop.f32.mrf.mxu0
    %v3425 = vadd.f32 %v3402, %v3424
    %3426 = vmatmul.f32.gmra.mxu0 %v381
    %v3427 = vpop.f32.mrf.mxu0
    %v3428 = vadd.f32 %v3405, %v3427
    %3429 = vdwg.mxu0
    %3430 = vmatpush.msra.mxu0 %v1655
    %3431 = vmatpush.msra.mxu0 %v1639
    %3432 = vmatpush.msra.mxu0 %v1623
    %3433 = vmatpush.msra.mxu0 %v1607
    %3434 = vmatpush.msra.mxu0 %v1591
    %3435 = vmatpush.msra.mxu0 %v1575
    %3436 = vmatpush.msra.mxu0 %v1559
    %3437 = vmatpush.msra.mxu0 %v1543
    %3438 = vmatpush.msra.mxu0 %v1527
    %3439 = vmatpush.msra.mxu0 %v1511
    %3440 = vmatpush.msra.mxu0 %v1495
    %3441 = vmatpush.msra.mxu0 %v1479
    %3442 = vmatpush.msra.mxu0 %v1463
    %3443 = vmatpush.msra.mxu0 %v1447
    %3444 = vmatpush.msra.mxu0 %v1431
    %3445 = vmatpush.msra.mxu0 %v1415
    %3446 = vmatmul.f32.gmra.mxu0 %v373
    %v3447 = vpop.f32.mrf.mxu0
    %v3448 = vadd.f32 %v3425, %v3447
    %3449 = vmatmul.f32.gmra.mxu0 %v382
    %v3450 = vpop.f32.mrf.mxu0
    %v3451 = vadd.f32 %v3428, %v3450
    %3452 = vdwg.mxu0
    %3453 = vmatpush.msra.mxu0 %v1911
    %3454 = vmatpush.msra.mxu0 %v1895
    %3455 = vmatpush.msra.mxu0 %v1879
    %3456 = vmatpush.msra.mxu0 %v1863
    %3457 = vmatpush.msra.mxu0 %v1847
    %3458 = vmatpush.msra.mxu0 %v1831
    %3459 = vmatpush.msra.mxu0 %v1815
    %3460 = vmatpush.msra.mxu0 %v1799
    %3461 = vmatpush.msra.mxu0 %v1783
    %3462 = vmatpush.msra.mxu0 %v1767
    %3463 = vmatpush.msra.mxu0 %v1751
    %3464 = vmatpush.msra.mxu0 %v1735
    %3465 = vmatpush.msra.mxu0 %v1719
    %3466 = vmatpush.msra.mxu0 %v1703
    %3467 = vmatpush.msra.mxu0 %v1687
    %3468 = vmatpush.msra.mxu0 %v1671
    %3469 = vmatmul.f32.gmra.mxu0 %v374
    %v3470 = vpop.f32.mrf.mxu0
    %v3471 = vadd.f32 %v3448, %v3470
    %3472 = vmatmul.f32.gmra.mxu0 %v383
    %v3473 = vpop.f32.mrf.mxu0
    %v3474 = vadd.f32 %v3451, %v3473
    %3475 = vdwg.mxu0
    %3476 = vmatpush.msra.mxu0 %v2167
    %3477 = vmatpush.msra.mxu0 %v2151
    %3478 = vmatpush.msra.mxu0 %v2135
    %3479 = vmatpush.msra.mxu0 %v2119
    %3480 = vmatpush.msra.mxu0 %v2103
    %3481 = vmatpush.msra.mxu0 %v2087
    %3482 = vmatpush.msra.mxu0 %v2071
    %3483 = vmatpush.msra.mxu0 %v2055
    %3484 = vmatpush.msra.mxu0 %v2039
    %3485 = vmatpush.msra.mxu0 %v2023
    %3486 = vmatpush.msra.mxu0 %v2007
    %3487 = vmatpush.msra.mxu0 %v1991
    %3488 = vmatpush.msra.mxu0 %v1975
    %3489 = vmatpush.msra.mxu0 %v1959
    %3490 = vmatpush.msra.mxu0 %v1943
    %3491 = vmatpush.msra.mxu0 %v1927
    %3492 = vmatmul.f32.gmra.mxu0 %v375
    %v3493 = vpop.f32.mrf.mxu0
    %v3494 = vadd.f32 %v3471, %v3493
    %3495 = vmatmul.f32.gmra.mxu0 %v384
    %v3496 = vpop.f32.mrf.mxu0
    %v3497 = vadd.f32 %v3474, %v3496
    %3498 = vdwg.mxu0
    %3499 = vmatpush.msra.mxu0 %v2423
    %3500 = vmatpush.msra.mxu0 %v2407
    %3501 = vmatpush.msra.mxu0 %v2391
    %3502 = vmatpush.msra.mxu0 %v2375
    %3503 = vmatpush.msra.mxu0 %v2359
    %3504 = vmatpush.msra.mxu0 %v2343
    %3505 = vmatpush.msra.mxu0 %v2327
    %3506 = vmatpush.msra.mxu0 %v2311
    %3507 = vmatpush.msra.mxu0 %v2295
    %3508 = vmatpush.msra.mxu0 %v2279
    %3509 = vmatpush.msra.mxu0 %v2263
    %3510 = vmatpush.msra.mxu0 %v2247
    %3511 = vmatpush.msra.mxu0 %v2231
    %3512 = vmatpush.msra.mxu0 %v2215
    %3513 = vmatpush.msra.mxu0 %v2199
    %3514 = vmatpush.msra.mxu0 %v2183
    %3515 = vmatmul.f32.gmra.mxu0 %v376
    %v3516 = vpop.f32.mrf.mxu0
    %v3517 = vadd.f32 %v3494, %v3516
    %3518 = vmatmul.f32.gmra.mxu0 %v385
    %v3519 = vpop.f32.mrf.mxu0
    %v3520 = vadd.f32 %v3497, %v3519
    %3521 = vdwg.mxu0
    %3522 = vmatpush.msra.mxu0 0.0
    %3523 = vmatpush.msra.mxu0 0.0
    %3524 = vmatpush.msra.mxu0 0.0
    %3525 = vmatpush.msra.mxu0 0.0
    %3526 = vmatpush.msra.mxu0 0.0
    %3527 = vmatpush.msra.mxu0 0.0
    %3528 = vmatpush.msra.mxu0 0.0
    %3529 = vmatpush.msra.mxu0 0.0
    %3530 = vmatpush.msra.mxu0 0.0
    %3531 = vmatpush.msra.mxu0 0.0
    %3532 = vmatpush.msra.mxu0 0.0
    %3533 = vmatpush.msra.mxu0 0.0
    %3534 = vmatpush.msra.mxu0 0.0
    %3535 = vmatpush.msra.mxu0 0.0
    %3536 = vmatpush.msra.mxu0 %v2455
    %3537 = vmatpush.msra.mxu0 %v2439
    %3538 = vmatmul.f32.gmra.mxu0 %v2505
    %v3539 = vpop.f32.mrf.mxu0
    %v3540 = vadd.f32 %v3517, %v3539
    %3541 = vmatmul.f32.gmra.mxu0 %v2508
    %v3542 = vpop.f32.mrf.mxu0
    %v3543 = vadd.f32 %v3520, %v3542
    %3544 = vdwg.mxu0
    %3545 = vmatpush.msra.mxu0 %v632
    %3546 = vmatpush.msra.mxu0 %v616
    %3547 = vmatpush.msra.mxu0 %v600
    %3548 = vmatpush.msra.mxu0 %v584
    %3549 = vmatpush.msra.mxu0 %v568
    %3550 = vmatpush.msra.mxu0 %v552
    %3551 = vmatpush.msra.mxu0 %v536
    %3552 = vmatpush.msra.mxu0 %v520
    %3553 = vmatpush.msra.mxu0 %v504
    %3554 = vmatpush.msra.mxu0 %v488
    %3555 = vmatpush.msra.mxu0 %v472
    %3556 = vmatpush.msra.mxu0 %v456
    %3557 = vmatpush.msra.mxu0 %v440
    %3558 = vmatpush.msra.mxu0 %v424
    %3559 = vmatpush.msra.mxu0 %v408
    %3560 = vmatpush.msra.mxu0 %v392
    %3561 = vmatmul.f32.gmra.mxu0 %v369
    %v3562 = vpop.f32.mrf.mxu0
    %v3563 = vadd.f32 %v2476, %v3562
    %3564 = vmatmul.f32.gmra.mxu0 %v378
    %v3565 = vpop.f32.mrf.mxu0
    %v3566 = vadd.f32 %v2476, %v3565
    %3567 = vdwg.mxu0
    %3568 = vmatpush.msra.mxu0 %v888
    %3569 = vmatpush.msra.mxu0 %v872
    %3570 = vmatpush.msra.mxu0 %v856
    %3571 = vmatpush.msra.mxu0 %v840
    %3572 = vmatpush.msra.mxu0 %v824
    %3573 = vmatpush.msra.mxu0 %v808
    %3574 = vmatpush.msra.mxu0 %v792
    %3575 = vmatpush.msra.mxu0 %v776
    %3576 = vmatpush.msra.mxu0 %v760
    %3577 = vmatpush.msra.mxu0 %v744
    %3578 = vmatpush.msra.mxu0 %v728
    %3579 = vmatpush.msra.mxu0 %v712
    %3580 = vmatpush.msra.mxu0 %v696
    %3581 = vmatpush.msra.mxu0 %v680
    %3582 = vmatpush.msra.mxu0 %v664
    %3583 = vmatpush.msra.mxu0 %v648
    %3584 = vmatmul.f32.gmra.mxu0 %v370
    %v3585 = vpop.f32.mrf.mxu0
    %v3586 = vadd.f32 %v3563, %v3585
    %3587 = vmatmul.f32.gmra.mxu0 %v379
    %v3588 = vpop.f32.mrf.mxu0
    %v3589 = vadd.f32 %v3566, %v3588
    %3590 = vdwg.mxu0
    %3591 = vmatpush.msra.mxu0 %v1144
    %3592 = vmatpush.msra.mxu0 %v1128
    %3593 = vmatpush.msra.mxu0 %v1112
    %3594 = vmatpush.msra.mxu0 %v1096
    %3595 = vmatpush.msra.mxu0 %v1080
    %3596 = vmatpush.msra.mxu0 %v1064
    %3597 = vmatpush.msra.mxu0 %v1048
    %3598 = vmatpush.msra.mxu0 %v1032
    %3599 = vmatpush.msra.mxu0 %v1016
    %3600 = vmatpush.msra.mxu0 %v1000
    %3601 = vmatpush.msra.mxu0 %v984
    %3602 = vmatpush.msra.mxu0 %v968
    %3603 = vmatpush.msra.mxu0 %v952
    %3604 = vmatpush.msra.mxu0 %v936
    %3605 = vmatpush.msra.mxu0 %v920
    %3606 = vmatpush.msra.mxu0 %v904
    %3607 = vmatmul.f32.gmra.mxu0 %v371
    %v3608 = vpop.f32.mrf.mxu0
    %v3609 = vadd.f32 %v3586, %v3608
    %3610 = vmatmul.f32.gmra.mxu0 %v380
    %v3611 = vpop.f32.mrf.mxu0
    %v3612 = vadd.f32 %v3589, %v3611
    %3613 = vdwg.mxu0
    %3614 = vmatpush.msra.mxu0 %v1400
    %3615 = vmatpush.msra.mxu0 %v1384
    %3616 = vmatpush.msra.mxu0 %v1368
    %3617 = vmatpush.msra.mxu0 %v1352
    %3618 = vmatpush.msra.mxu0 %v1336
    %3619 = vmatpush.msra.mxu0 %v1320
    %3620 = vmatpush.msra.mxu0 %v1304
    %3621 = vmatpush.msra.mxu0 %v1288
    %3622 = vmatpush.msra.mxu0 %v1272
    %3623 = vmatpush.msra.mxu0 %v1256
    %3624 = vmatpush.msra.mxu0 %v1240
    %3625 = vmatpush.msra.mxu0 %v1224
    %3626 = vmatpush.msra.mxu0 %v1208
    %3627 = vmatpush.msra.mxu0 %v1192
    %3628 = vmatpush.msra.mxu0 %v1176
    %3629 = vmatpush.msra.mxu0 %v1160
    %3630 = vmatmul.f32.gmra.mxu0 %v372
    %v3631 = vpop.f32.mrf.mxu0
    %v3632 = vadd.f32 %v3609, %v3631
    %3633 = vmatmul.f32.gmra.mxu0 %v381
    %v3634 = vpop.f32.mrf.mxu0
    %v3635 = vadd.f32 %v3612, %v3634
    %3636 = vdwg.mxu0
    %3637 = vmatpush.msra.mxu0 %v1656
    %3638 = vmatpush.msra.mxu0 %v1640
    %3639 = vmatpush.msra.mxu0 %v1624
    %3640 = vmatpush.msra.mxu0 %v1608
    %3641 = vmatpush.msra.mxu0 %v1592
    %3642 = vmatpush.msra.mxu0 %v1576
    %3643 = vmatpush.msra.mxu0 %v1560
    %3644 = vmatpush.msra.mxu0 %v1544
    %3645 = vmatpush.msra.mxu0 %v1528
    %3646 = vmatpush.msra.mxu0 %v1512
    %3647 = vmatpush.msra.mxu0 %v1496
    %3648 = vmatpush.msra.mxu0 %v1480
    %3649 = vmatpush.msra.mxu0 %v1464
    %3650 = vmatpush.msra.mxu0 %v1448
    %3651 = vmatpush.msra.mxu0 %v1432
    %3652 = vmatpush.msra.mxu0 %v1416
    %3653 = vmatmul.f32.gmra.mxu0 %v373
    %v3654 = vpop.f32.mrf.mxu0
    %v3655 = vadd.f32 %v3632, %v3654
    %3656 = vmatmul.f32.gmra.mxu0 %v382
    %v3657 = vpop.f32.mrf.mxu0
    %v3658 = vadd.f32 %v3635, %v3657
    %3659 = vdwg.mxu0
    %3660 = vmatpush.msra.mxu0 %v1912
    %3661 = vmatpush.msra.mxu0 %v1896
    %3662 = vmatpush.msra.mxu0 %v1880
    %3663 = vmatpush.msra.mxu0 %v1864
    %3664 = vmatpush.msra.mxu0 %v1848
    %3665 = vmatpush.msra.mxu0 %v1832
    %3666 = vmatpush.msra.mxu0 %v1816
    %3667 = vmatpush.msra.mxu0 %v1800
    %3668 = vmatpush.msra.mxu0 %v1784
    %3669 = vmatpush.msra.mxu0 %v1768
    %3670 = vmatpush.msra.mxu0 %v1752
    %3671 = vmatpush.msra.mxu0 %v1736
    %3672 = vmatpush.msra.mxu0 %v1720
    %3673 = vmatpush.msra.mxu0 %v1704
    %3674 = vmatpush.msra.mxu0 %v1688
    %3675 = vmatpush.msra.mxu0 %v1672
    %3676 = vmatmul.f32.gmra.mxu0 %v374
    %v3677 = vpop.f32.mrf.mxu0
    %v3678 = vadd.f32 %v3655, %v3677
    %3679 = vmatmul.f32.gmra.mxu0 %v383
    %v3680 = vpop.f32.mrf.mxu0
    %v3681 = vadd.f32 %v3658, %v3680
    %3682 = vdwg.mxu0
    %3683 = vmatpush.msra.mxu0 %v2168
    %3684 = vmatpush.msra.mxu0 %v2152
    %3685 = vmatpush.msra.mxu0 %v2136
    %3686 = vmatpush.msra.mxu0 %v2120
    %3687 = vmatpush.msra.mxu0 %v2104
    %3688 = vmatpush.msra.mxu0 %v2088
    %3689 = vmatpush.msra.mxu0 %v2072
    %3690 = vmatpush.msra.mxu0 %v2056
    %3691 = vmatpush.msra.mxu0 %v2040
    %3692 = vmatpush.msra.mxu0 %v2024
    %3693 = vmatpush.msra.mxu0 %v2008
    %3694 = vmatpush.msra.mxu0 %v1992
    %3695 = vmatpush.msra.mxu0 %v1976
    %3696 = vmatpush.msra.mxu0 %v1960
    %3697 = vmatpush.msra.mxu0 %v1944
    %3698 = vmatpush.msra.mxu0 %v1928
    %3699 = vmatmul.f32.gmra.mxu0 %v375
    %v3700 = vpop.f32.mrf.mxu0
    %v3701 = vadd.f32 %v3678, %v3700
    %3702 = vmatmul.f32.gmra.mxu0 %v384
    %v3703 = vpop.f32.mrf.mxu0
    %v3704 = vadd.f32 %v3681, %v3703
    %3705 = vdwg.mxu0
    %3706 = vmatpush.msra.mxu0 %v2424
    %3707 = vmatpush.msra.mxu0 %v2408
    %3708 = vmatpush.msra.mxu0 %v2392
    %3709 = vmatpush.msra.mxu0 %v2376
    %3710 = vmatpush.msra.mxu0 %v2360
    %3711 = vmatpush.msra.mxu0 %v2344
    %3712 = vmatpush.msra.mxu0 %v2328
    %3713 = vmatpush.msra.mxu0 %v2312
    %3714 = vmatpush.msra.mxu0 %v2296
    %3715 = vmatpush.msra.mxu0 %v2280
    %3716 = vmatpush.msra.mxu0 %v2264
    %3717 = vmatpush.msra.mxu0 %v2248
    %3718 = vmatpush.msra.mxu0 %v2232
    %3719 = vmatpush.msra.mxu0 %v2216
    %3720 = vmatpush.msra.mxu0 %v2200
    %3721 = vmatpush.msra.mxu0 %v2184
    %3722 = vmatmul.f32.gmra.mxu0 %v376
    %v3723 = vpop.f32.mrf.mxu0
    %v3724 = vadd.f32 %v3701, %v3723
    %3725 = vmatmul.f32.gmra.mxu0 %v385
    %v3726 = vpop.f32.mrf.mxu0
    %v3727 = vadd.f32 %v3704, %v3726
    %3728 = vdwg.mxu0
    %3729 = vmatpush.msra.mxu0 0.0
    %3730 = vmatpush.msra.mxu0 0.0
    %3731 = vmatpush.msra.mxu0 0.0
    %3732 = vmatpush.msra.mxu0 0.0
    %3733 = vmatpush.msra.mxu0 0.0
    %3734 = vmatpush.msra.mxu0 0.0
    %3735 = vmatpush.msra.mxu0 0.0
    %3736 = vmatpush.msra.mxu0 0.0
    %3737 = vmatpush.msra.mxu0 0.0
    %3738 = vmatpush.msra.mxu0 0.0
    %3739 = vmatpush.msra.mxu0 0.0
    %3740 = vmatpush.msra.mxu0 0.0
    %3741 = vmatpush.msra.mxu0 0.0
    %3742 = vmatpush.msra.mxu0 0.0
    %3743 = vmatpush.msra.mxu0 %v2456
    %3744 = vmatpush.msra.mxu0 %v2440
    %3745 = vmatmul.f32.gmra.mxu0 %v2505
    %v3746 = vpop.f32.mrf.mxu0
    %v3747 = vadd.f32 %v3724, %v3746
    %3748 = vmatmul.f32.gmra.mxu0 %v2508
    %v3749 = vpop.f32.mrf.mxu0
    %v3750 = vadd.f32 %v3727, %v3749
    %3751 = vdwg.mxu0
    %3752 = vmatpush.msra.mxu0 %v633
    %3753 = vmatpush.msra.mxu0 %v617
    %3754 = vmatpush.msra.mxu0 %v601
    %3755 = vmatpush.msra.mxu0 %v585
    %3756 = vmatpush.msra.mxu0 %v569
    %3757 = vmatpush.msra.mxu0 %v553
    %3758 = vmatpush.msra.mxu0 %v537
    %3759 = vmatpush.msra.mxu0 %v521
    %3760 = vmatpush.msra.mxu0 %v505
    %3761 = vmatpush.msra.mxu0 %v489
    %3762 = vmatpush.msra.mxu0 %v473
    %3763 = vmatpush.msra.mxu0 %v457
    %3764 = vmatpush.msra.mxu0 %v441
    %3765 = vmatpush.msra.mxu0 %v425
    %3766 = vmatpush.msra.mxu0 %v409
    %3767 = vmatpush.msra.mxu0 %v393
    %3768 = vmatmul.f32.gmra.mxu0 %v369
    %v3769 = vpop.f32.mrf.mxu0
    %v3770 = vadd.f32 %v2477, %v3769
    %3771 = vmatmul.f32.gmra.mxu0 %v378
    %v3772 = vpop.f32.mrf.mxu0
    %v3773 = vadd.f32 %v2477, %v3772
    %3774 = vdwg.mxu0
    %3775 = vmatpush.msra.mxu0 %v889
    %3776 = vmatpush.msra.mxu0 %v873
    %3777 = vmatpush.msra.mxu0 %v857
    %3778 = vmatpush.msra.mxu0 %v841
    %3779 = vmatpush.msra.mxu0 %v825
    %3780 = vmatpush.msra.mxu0 %v809
    %3781 = vmatpush.msra.mxu0 %v793
    %3782 = vmatpush.msra.mxu0 %v777
    %3783 = vmatpush.msra.mxu0 %v761
    %3784 = vmatpush.msra.mxu0 %v745
    %3785 = vmatpush.msra.mxu0 %v729
    %3786 = vmatpush.msra.mxu0 %v713
    %3787 = vmatpush.msra.mxu0 %v697
    %3788 = vmatpush.msra.mxu0 %v681
    %3789 = vmatpush.msra.mxu0 %v665
    %3790 = vmatpush.msra.mxu0 %v649
    %3791 = vmatmul.f32.gmra.mxu0 %v370
    %v3792 = vpop.f32.mrf.mxu0
    %v3793 = vadd.f32 %v3770, %v3792
    %3794 = vmatmul.f32.gmra.mxu0 %v379
    %v3795 = vpop.f32.mrf.mxu0
    %v3796 = vadd.f32 %v3773, %v3795
    %3797 = vdwg.mxu0
    %3798 = vmatpush.msra.mxu0 %v1145
    %3799 = vmatpush.msra.mxu0 %v1129
    %3800 = vmatpush.msra.mxu0 %v1113
    %3801 = vmatpush.msra.mxu0 %v1097
    %3802 = vmatpush.msra.mxu0 %v1081
    %3803 = vmatpush.msra.mxu0 %v1065
    %3804 = vmatpush.msra.mxu0 %v1049
    %3805 = vmatpush.msra.mxu0 %v1033
    %3806 = vmatpush.msra.mxu0 %v1017
    %3807 = vmatpush.msra.mxu0 %v1001
    %3808 = vmatpush.msra.mxu0 %v985
    %3809 = vmatpush.msra.mxu0 %v969
    %3810 = vmatpush.msra.mxu0 %v953
    %3811 = vmatpush.msra.mxu0 %v937
    %3812 = vmatpush.msra.mxu0 %v921
    %3813 = vmatpush.msra.mxu0 %v905
    %3814 = vmatmul.f32.gmra.mxu0 %v371
    %v3815 = vpop.f32.mrf.mxu0
    %v3816 = vadd.f32 %v3793, %v3815
    %3817 = vmatmul.f32.gmra.mxu0 %v380
    %v3818 = vpop.f32.mrf.mxu0
    %v3819 = vadd.f32 %v3796, %v3818
    %3820 = vdwg.mxu0
    %3821 = vmatpush.msra.mxu0 %v1401
    %3822 = vmatpush.msra.mxu0 %v1385
    %3823 = vmatpush.msra.mxu0 %v1369
    %3824 = vmatpush.msra.mxu0 %v1353
    %3825 = vmatpush.msra.mxu0 %v1337
    %3826 = vmatpush.msra.mxu0 %v1321
    %3827 = vmatpush.msra.mxu0 %v1305
    %3828 = vmatpush.msra.mxu0 %v1289
    %3829 = vmatpush.msra.mxu0 %v1273
    %3830 = vmatpush.msra.mxu0 %v1257
    %3831 = vmatpush.msra.mxu0 %v1241
    %3832 = vmatpush.msra.mxu0 %v1225
    %3833 = vmatpush.msra.mxu0 %v1209
    %3834 = vmatpush.msra.mxu0 %v1193
    %3835 = vmatpush.msra.mxu0 %v1177
    %3836 = vmatpush.msra.mxu0 %v1161
    %3837 = vmatmul.f32.gmra.mxu0 %v372
    %v3838 = vpop.f32.mrf.mxu0
    %v3839 = vadd.f32 %v3816, %v3838
    %3840 = vmatmul.f32.gmra.mxu0 %v381
    %v3841 = vpop.f32.mrf.mxu0
    %v3842 = vadd.f32 %v3819, %v3841
    %3843 = vdwg.mxu0
    %3844 = vmatpush.msra.mxu0 %v1657
    %3845 = vmatpush.msra.mxu0 %v1641
    %3846 = vmatpush.msra.mxu0 %v1625
    %3847 = vmatpush.msra.mxu0 %v1609
    %3848 = vmatpush.msra.mxu0 %v1593
    %3849 = vmatpush.msra.mxu0 %v1577
    %3850 = vmatpush.msra.mxu0 %v1561
    %3851 = vmatpush.msra.mxu0 %v1545
    %3852 = vmatpush.msra.mxu0 %v1529
    %3853 = vmatpush.msra.mxu0 %v1513
    %3854 = vmatpush.msra.mxu0 %v1497
    %3855 = vmatpush.msra.mxu0 %v1481
    %3856 = vmatpush.msra.mxu0 %v1465
    %3857 = vmatpush.msra.mxu0 %v1449
    %3858 = vmatpush.msra.mxu0 %v1433
    %3859 = vmatpush.msra.mxu0 %v1417
    %3860 = vmatmul.f32.gmra.mxu0 %v373
    %v3861 = vpop.f32.mrf.mxu0
    %v3862 = vadd.f32 %v3839, %v3861
    %3863 = vmatmul.f32.gmra.mxu0 %v382
    %v3864 = vpop.f32.mrf.mxu0
    %v3865 = vadd.f32 %v3842, %v3864
    %3866 = vdwg.mxu0
    %3867 = vmatpush.msra.mxu0 %v1913
    %3868 = vmatpush.msra.mxu0 %v1897
    %3869 = vmatpush.msra.mxu0 %v1881
    %3870 = vmatpush.msra.mxu0 %v1865
    %3871 = vmatpush.msra.mxu0 %v1849
    %3872 = vmatpush.msra.mxu0 %v1833
    %3873 = vmatpush.msra.mxu0 %v1817
    %3874 = vmatpush.msra.mxu0 %v1801
    %3875 = vmatpush.msra.mxu0 %v1785
    %3876 = vmatpush.msra.mxu0 %v1769
    %3877 = vmatpush.msra.mxu0 %v1753
    %3878 = vmatpush.msra.mxu0 %v1737
    %3879 = vmatpush.msra.mxu0 %v1721
    %3880 = vmatpush.msra.mxu0 %v1705
    %3881 = vmatpush.msra.mxu0 %v1689
    %3882 = vmatpush.msra.mxu0 %v1673
    %3883 = vmatmul.f32.gmra.mxu0 %v374
    %v3884 = vpop.f32.mrf.mxu0
    %v3885 = vadd.f32 %v3862, %v3884
    %3886 = vmatmul.f32.gmra.mxu0 %v383
    %v3887 = vpop.f32.mrf.mxu0
    %v3888 = vadd.f32 %v3865, %v3887
    %3889 = vdwg.mxu0
    %3890 = vmatpush.msra.mxu0 %v2169
    %3891 = vmatpush.msra.mxu0 %v2153
    %3892 = vmatpush.msra.mxu0 %v2137
    %3893 = vmatpush.msra.mxu0 %v2121
    %3894 = vmatpush.msra.mxu0 %v2105
    %3895 = vmatpush.msra.mxu0 %v2089
    %3896 = vmatpush.msra.mxu0 %v2073
    %3897 = vmatpush.msra.mxu0 %v2057
    %3898 = vmatpush.msra.mxu0 %v2041
    %3899 = vmatpush.msra.mxu0 %v2025
    %3900 = vmatpush.msra.mxu0 %v2009
    %3901 = vmatpush.msra.mxu0 %v1993
    %3902 = vmatpush.msra.mxu0 %v1977
    %3903 = vmatpush.msra.mxu0 %v1961
    %3904 = vmatpush.msra.mxu0 %v1945
    %3905 = vmatpush.msra.mxu0 %v1929
    %3906 = vmatmul.f32.gmra.mxu0 %v375
    %v3907 = vpop.f32.mrf.mxu0
    %v3908 = vadd.f32 %v3885, %v3907
    %3909 = vmatmul.f32.gmra.mxu0 %v384
    %v3910 = vpop.f32.mrf.mxu0
    %v3911 = vadd.f32 %v3888, %v3910
    %3912 = vdwg.mxu0
    %3913 = vmatpush.msra.mxu0 %v2425
    %3914 = vmatpush.msra.mxu0 %v2409
    %3915 = vmatpush.msra.mxu0 %v2393
    %3916 = vmatpush.msra.mxu0 %v2377
    %3917 = vmatpush.msra.mxu0 %v2361
    %3918 = vmatpush.msra.mxu0 %v2345
    %3919 = vmatpush.msra.mxu0 %v2329
    %3920 = vmatpush.msra.mxu0 %v2313
    %3921 = vmatpush.msra.mxu0 %v2297
    %3922 = vmatpush.msra.mxu0 %v2281
    %3923 = vmatpush.msra.mxu0 %v2265
    %3924 = vmatpush.msra.mxu0 %v2249
    %3925 = vmatpush.msra.mxu0 %v2233
    %3926 = vmatpush.msra.mxu0 %v2217
    %3927 = vmatpush.msra.mxu0 %v2201
    %3928 = vmatpush.msra.mxu0 %v2185
    %3929 = vmatmul.f32.gmra.mxu0 %v376
    %v3930 = vpop.f32.mrf.mxu0
    %v3931 = vadd.f32 %v3908, %v3930
    %3932 = vmatmul.f32.gmra.mxu0 %v385
    %v3933 = vpop.f32.mrf.mxu0
    %v3934 = vadd.f32 %v3911, %v3933
    %3935 = vdwg.mxu0
    %3936 = vmatpush.msra.mxu0 0.0
    %3937 = vmatpush.msra.mxu0 0.0
    %3938 = vmatpush.msra.mxu0 0.0
    %3939 = vmatpush.msra.mxu0 0.0
    %3940 = vmatpush.msra.mxu0 0.0
    %3941 = vmatpush.msra.mxu0 0.0
    %3942 = vmatpush.msra.mxu0 0.0
    %3943 = vmatpush.msra.mxu0 0.0
    %3944 = vmatpush.msra.mxu0 0.0
    %3945 = vmatpush.msra.mxu0 0.0
    %3946 = vmatpush.msra.mxu0 0.0
    %3947 = vmatpush.msra.mxu0 0.0
    %3948 = vmatpush.msra.mxu0 0.0
    %3949 = vmatpush.msra.mxu0 0.0
    %3950 = vmatpush.msra.mxu0 %v2457
    %3951 = vmatpush.msra.mxu0 %v2441
    %3952 = vmatmul.f32.gmra.mxu0 %v2505
    %v3953 = vpop.f32.mrf.mxu0
    %v3954 = vadd.f32 %v3931, %v3953
    %3955 = vmatmul.f32.gmra.mxu0 %v2508
    %v3956 = vpop.f32.mrf.mxu0
    %v3957 = vadd.f32 %v3934, %v3956
    %3958 = vdwg.mxu0
    %3959 = vmatpush.msra.mxu0 %v634
    %3960 = vmatpush.msra.mxu0 %v618
    %3961 = vmatpush.msra.mxu0 %v602
    %3962 = vmatpush.msra.mxu0 %v586
    %3963 = vmatpush.msra.mxu0 %v570
    %3964 = vmatpush.msra.mxu0 %v554
    %3965 = vmatpush.msra.mxu0 %v538
    %3966 = vmatpush.msra.mxu0 %v522
    %3967 = vmatpush.msra.mxu0 %v506
    %3968 = vmatpush.msra.mxu0 %v490
    %3969 = vmatpush.msra.mxu0 %v474
    %3970 = vmatpush.msra.mxu0 %v458
    %3971 = vmatpush.msra.mxu0 %v442
    %3972 = vmatpush.msra.mxu0 %v426
    %3973 = vmatpush.msra.mxu0 %v410
    %3974 = vmatpush.msra.mxu0 %v394
    %3975 = vmatmul.f32.gmra.mxu0 %v369
    %v3976 = vpop.f32.mrf.mxu0
    %v3977 = vadd.f32 %v2478, %v3976
    %3978 = vmatmul.f32.gmra.mxu0 %v378
    %v3979 = vpop.f32.mrf.mxu0
    %v3980 = vadd.f32 %v2478, %v3979
    %3981 = vdwg.mxu0
    %3982 = vmatpush.msra.mxu0 %v890
    %3983 = vmatpush.msra.mxu0 %v874
    %3984 = vmatpush.msra.mxu0 %v858
    %3985 = vmatpush.msra.mxu0 %v842
    %3986 = vmatpush.msra.mxu0 %v826
    %3987 = vmatpush.msra.mxu0 %v810
    %3988 = vmatpush.msra.mxu0 %v794
    %3989 = vmatpush.msra.mxu0 %v778
    %3990 = vmatpush.msra.mxu0 %v762
    %3991 = vmatpush.msra.mxu0 %v746
    %3992 = vmatpush.msra.mxu0 %v730
    %3993 = vmatpush.msra.mxu0 %v714
    %3994 = vmatpush.msra.mxu0 %v698
    %3995 = vmatpush.msra.mxu0 %v682
    %3996 = vmatpush.msra.mxu0 %v666
    %3997 = vmatpush.msra.mxu0 %v650
    %3998 = vmatmul.f32.gmra.mxu0 %v370
    %v3999 = vpop.f32.mrf.mxu0
    %v4000 = vadd.f32 %v3977, %v3999
    %4001 = vmatmul.f32.gmra.mxu0 %v379
    %v4002 = vpop.f32.mrf.mxu0
    %v4003 = vadd.f32 %v3980, %v4002
    %4004 = vdwg.mxu0
    %4005 = vmatpush.msra.mxu0 %v1146
    %4006 = vmatpush.msra.mxu0 %v1130
    %4007 = vmatpush.msra.mxu0 %v1114
    %4008 = vmatpush.msra.mxu0 %v1098
    %4009 = vmatpush.msra.mxu0 %v1082
    %4010 = vmatpush.msra.mxu0 %v1066
    %4011 = vmatpush.msra.mxu0 %v1050
    %4012 = vmatpush.msra.mxu0 %v1034
    %4013 = vmatpush.msra.mxu0 %v1018
    %4014 = vmatpush.msra.mxu0 %v1002
    %4015 = vmatpush.msra.mxu0 %v986
    %4016 = vmatpush.msra.mxu0 %v970
    %4017 = vmatpush.msra.mxu0 %v954
    %4018 = vmatpush.msra.mxu0 %v938
    %4019 = vmatpush.msra.mxu0 %v922
    %4020 = vmatpush.msra.mxu0 %v906
    %4021 = vmatmul.f32.gmra.mxu0 %v371
    %v4022 = vpop.f32.mrf.mxu0
    %v4023 = vadd.f32 %v4000, %v4022
    %4024 = vmatmul.f32.gmra.mxu0 %v380
    %v4025 = vpop.f32.mrf.mxu0
    %v4026 = vadd.f32 %v4003, %v4025
    %4027 = vdwg.mxu0
    %4028 = vmatpush.msra.mxu0 %v1402
    %4029 = vmatpush.msra.mxu0 %v1386
    %4030 = vmatpush.msra.mxu0 %v1370
    %4031 = vmatpush.msra.mxu0 %v1354
    %4032 = vmatpush.msra.mxu0 %v1338
    %4033 = vmatpush.msra.mxu0 %v1322
    %4034 = vmatpush.msra.mxu0 %v1306
    %4035 = vmatpush.msra.mxu0 %v1290
    %4036 = vmatpush.msra.mxu0 %v1274
    %4037 = vmatpush.msra.mxu0 %v1258
    %4038 = vmatpush.msra.mxu0 %v1242
    %4039 = vmatpush.msra.mxu0 %v1226
    %4040 = vmatpush.msra.mxu0 %v1210
    %4041 = vmatpush.msra.mxu0 %v1194
    %4042 = vmatpush.msra.mxu0 %v1178
    %4043 = vmatpush.msra.mxu0 %v1162
    %4044 = vmatmul.f32.gmra.mxu0 %v372
    %v4045 = vpop.f32.mrf.mxu0
    %v4046 = vadd.f32 %v4023, %v4045
    %4047 = vmatmul.f32.gmra.mxu0 %v381
    %v4048 = vpop.f32.mrf.mxu0
    %v4049 = vadd.f32 %v4026, %v4048
    %4050 = vdwg.mxu0
    %4051 = vmatpush.msra.mxu0 %v1658
    %4052 = vmatpush.msra.mxu0 %v1642
    %4053 = vmatpush.msra.mxu0 %v1626
    %4054 = vmatpush.msra.mxu0 %v1610
    %4055 = vmatpush.msra.mxu0 %v1594
    %4056 = vmatpush.msra.mxu0 %v1578
    %4057 = vmatpush.msra.mxu0 %v1562
    %4058 = vmatpush.msra.mxu0 %v1546
    %4059 = vmatpush.msra.mxu0 %v1530
    %4060 = vmatpush.msra.mxu0 %v1514
    %4061 = vmatpush.msra.mxu0 %v1498
    %4062 = vmatpush.msra.mxu0 %v1482
    %4063 = vmatpush.msra.mxu0 %v1466
    %4064 = vmatpush.msra.mxu0 %v1450
    %4065 = vmatpush.msra.mxu0 %v1434
    %4066 = vmatpush.msra.mxu0 %v1418
    %4067 = vmatmul.f32.gmra.mxu0 %v373
    %v4068 = vpop.f32.mrf.mxu0
    %v4069 = vadd.f32 %v4046, %v4068
    %4070 = vmatmul.f32.gmra.mxu0 %v382
    %v4071 = vpop.f32.mrf.mxu0
    %v4072 = vadd.f32 %v4049, %v4071
    %4073 = vdwg.mxu0
    %4074 = vmatpush.msra.mxu0 %v1914
    %4075 = vmatpush.msra.mxu0 %v1898
    %4076 = vmatpush.msra.mxu0 %v1882
    %4077 = vmatpush.msra.mxu0 %v1866
    %4078 = vmatpush.msra.mxu0 %v1850
    %4079 = vmatpush.msra.mxu0 %v1834
    %4080 = vmatpush.msra.mxu0 %v1818
    %4081 = vmatpush.msra.mxu0 %v1802
    %4082 = vmatpush.msra.mxu0 %v1786
    %4083 = vmatpush.msra.mxu0 %v1770
    %4084 = vmatpush.msra.mxu0 %v1754
    %4085 = vmatpush.msra.mxu0 %v1738
    %4086 = vmatpush.msra.mxu0 %v1722
    %4087 = vmatpush.msra.mxu0 %v1706
    %4088 = vmatpush.msra.mxu0 %v1690
    %4089 = vmatpush.msra.mxu0 %v1674
    %4090 = vmatmul.f32.gmra.mxu0 %v374
    %v4091 = vpop.f32.mrf.mxu0
    %v4092 = vadd.f32 %v4069, %v4091
    %4093 = vmatmul.f32.gmra.mxu0 %v383
    %v4094 = vpop.f32.mrf.mxu0
    %v4095 = vadd.f32 %v4072, %v4094
    %4096 = vdwg.mxu0
    %4097 = vmatpush.msra.mxu0 %v2170
    %4098 = vmatpush.msra.mxu0 %v2154
    %4099 = vmatpush.msra.mxu0 %v2138
    %4100 = vmatpush.msra.mxu0 %v2122
    %4101 = vmatpush.msra.mxu0 %v2106
    %4102 = vmatpush.msra.mxu0 %v2090
    %4103 = vmatpush.msra.mxu0 %v2074
    %4104 = vmatpush.msra.mxu0 %v2058
    %4105 = vmatpush.msra.mxu0 %v2042
    %4106 = vmatpush.msra.mxu0 %v2026
    %4107 = vmatpush.msra.mxu0 %v2010
    %4108 = vmatpush.msra.mxu0 %v1994
    %4109 = vmatpush.msra.mxu0 %v1978
    %4110 = vmatpush.msra.mxu0 %v1962
    %4111 = vmatpush.msra.mxu0 %v1946
    %4112 = vmatpush.msra.mxu0 %v1930
    %4113 = vmatmul.f32.gmra.mxu0 %v375
    %v4114 = vpop.f32.mrf.mxu0
    %v4115 = vadd.f32 %v4092, %v4114
    %4116 = vmatmul.f32.gmra.mxu0 %v384
    %v4117 = vpop.f32.mrf.mxu0
    %v4118 = vadd.f32 %v4095, %v4117
    %4119 = vdwg.mxu0
    %4120 = vmatpush.msra.mxu0 %v2426
    %4121 = vmatpush.msra.mxu0 %v2410
    %4122 = vmatpush.msra.mxu0 %v2394
    %4123 = vmatpush.msra.mxu0 %v2378
    %4124 = vmatpush.msra.mxu0 %v2362
    %4125 = vmatpush.msra.mxu0 %v2346
    %4126 = vmatpush.msra.mxu0 %v2330
    %4127 = vmatpush.msra.mxu0 %v2314
    %4128 = vmatpush.msra.mxu0 %v2298
    %4129 = vmatpush.msra.mxu0 %v2282
    %4130 = vmatpush.msra.mxu0 %v2266
    %4131 = vmatpush.msra.mxu0 %v2250
    %4132 = vmatpush.msra.mxu0 %v2234
    %4133 = vmatpush.msra.mxu0 %v2218
    %4134 = vmatpush.msra.mxu0 %v2202
    %4135 = vmatpush.msra.mxu0 %v2186
    %4136 = vmatmul.f32.gmra.mxu0 %v376
    %v4137 = vpop.f32.mrf.mxu0
    %v4138 = vadd.f32 %v4115, %v4137
    %4139 = vmatmul.f32.gmra.mxu0 %v385
    %v4140 = vpop.f32.mrf.mxu0
    %v4141 = vadd.f32 %v4118, %v4140
    %4142 = vdwg.mxu0
    %4143 = vmatpush.msra.mxu0 0.0
    %4144 = vmatpush.msra.mxu0 0.0
    %4145 = vmatpush.msra.mxu0 0.0
    %4146 = vmatpush.msra.mxu0 0.0
    %4147 = vmatpush.msra.mxu0 0.0
    %4148 = vmatpush.msra.mxu0 0.0
    %4149 = vmatpush.msra.mxu0 0.0
    %4150 = vmatpush.msra.mxu0 0.0
    %4151 = vmatpush.msra.mxu0 0.0
    %4152 = vmatpush.msra.mxu0 0.0
    %4153 = vmatpush.msra.mxu0 0.0
    %4154 = vmatpush.msra.mxu0 0.0
    %4155 = vmatpush.msra.mxu0 0.0
    %4156 = vmatpush.msra.mxu0 0.0
    %4157 = vmatpush.msra.mxu0 %v2458
    %4158 = vmatpush.msra.mxu0 %v2442
    %4159 = vmatmul.f32.gmra.mxu0 %v2505
    %v4160 = vpop.f32.mrf.mxu0
    %v4161 = vadd.f32 %v4138, %v4160
    %4162 = vmatmul.f32.gmra.mxu0 %v2508
    %v4163 = vpop.f32.mrf.mxu0
    %v4164 = vadd.f32 %v4141, %v4163
    %4165 = vdwg.mxu0
    %4166 = vmatpush.msra.mxu0 %v635
    %4167 = vmatpush.msra.mxu0 %v619
    %4168 = vmatpush.msra.mxu0 %v603
    %4169 = vmatpush.msra.mxu0 %v587
    %4170 = vmatpush.msra.mxu0 %v571
    %4171 = vmatpush.msra.mxu0 %v555
    %4172 = vmatpush.msra.mxu0 %v539
    %4173 = vmatpush.msra.mxu0 %v523
    %4174 = vmatpush.msra.mxu0 %v507
    %4175 = vmatpush.msra.mxu0 %v491
    %4176 = vmatpush.msra.mxu0 %v475
    %4177 = vmatpush.msra.mxu0 %v459
    %4178 = vmatpush.msra.mxu0 %v443
    %4179 = vmatpush.msra.mxu0 %v427
    %4180 = vmatpush.msra.mxu0 %v411
    %4181 = vmatpush.msra.mxu0 %v395
    %4182 = vmatmul.f32.gmra.mxu0 %v369
    %v4183 = vpop.f32.mrf.mxu0
    %v4184 = vadd.f32 %v2479, %v4183
    %4185 = vmatmul.f32.gmra.mxu0 %v378
    %v4186 = vpop.f32.mrf.mxu0
    %v4187 = vadd.f32 %v2479, %v4186
    %4188 = vdwg.mxu0
    %4189 = vmatpush.msra.mxu0 %v891
    %4190 = vmatpush.msra.mxu0 %v875
    %4191 = vmatpush.msra.mxu0 %v859
    %4192 = vmatpush.msra.mxu0 %v843
    %4193 = vmatpush.msra.mxu0 %v827
    %4194 = vmatpush.msra.mxu0 %v811
    %4195 = vmatpush.msra.mxu0 %v795
    %4196 = vmatpush.msra.mxu0 %v779
    %4197 = vmatpush.msra.mxu0 %v763
    %4198 = vmatpush.msra.mxu0 %v747
    %4199 = vmatpush.msra.mxu0 %v731
    %4200 = vmatpush.msra.mxu0 %v715
    %4201 = vmatpush.msra.mxu0 %v699
    %4202 = vmatpush.msra.mxu0 %v683
    %4203 = vmatpush.msra.mxu0 %v667
    %4204 = vmatpush.msra.mxu0 %v651
    %4205 = vmatmul.f32.gmra.mxu0 %v370
    %v4206 = vpop.f32.mrf.mxu0
    %v4207 = vadd.f32 %v4184, %v4206
    %4208 = vmatmul.f32.gmra.mxu0 %v379
    %v4209 = vpop.f32.mrf.mxu0
    %v4210 = vadd.f32 %v4187, %v4209
    %4211 = vdwg.mxu0
    %4212 = vmatpush.msra.mxu0 %v1147
    %4213 = vmatpush.msra.mxu0 %v1131
    %4214 = vmatpush.msra.mxu0 %v1115
    %4215 = vmatpush.msra.mxu0 %v1099
    %4216 = vmatpush.msra.mxu0 %v1083
    %4217 = vmatpush.msra.mxu0 %v1067
    %4218 = vmatpush.msra.mxu0 %v1051
    %4219 = vmatpush.msra.mxu0 %v1035
    %4220 = vmatpush.msra.mxu0 %v1019
    %4221 = vmatpush.msra.mxu0 %v1003
    %4222 = vmatpush.msra.mxu0 %v987
    %4223 = vmatpush.msra.mxu0 %v971
    %4224 = vmatpush.msra.mxu0 %v955
    %4225 = vmatpush.msra.mxu0 %v939
    %4226 = vmatpush.msra.mxu0 %v923
    %4227 = vmatpush.msra.mxu0 %v907
    %4228 = vmatmul.f32.gmra.mxu0 %v371
    %v4229 = vpop.f32.mrf.mxu0
    %v4230 = vadd.f32 %v4207, %v4229
    %4231 = vmatmul.f32.gmra.mxu0 %v380
    %v4232 = vpop.f32.mrf.mxu0
    %v4233 = vadd.f32 %v4210, %v4232
    %4234 = vdwg.mxu0
    %4235 = vmatpush.msra.mxu0 %v1403
    %4236 = vmatpush.msra.mxu0 %v1387
    %4237 = vmatpush.msra.mxu0 %v1371
    %4238 = vmatpush.msra.mxu0 %v1355
    %4239 = vmatpush.msra.mxu0 %v1339
    %4240 = vmatpush.msra.mxu0 %v1323
    %4241 = vmatpush.msra.mxu0 %v1307
    %4242 = vmatpush.msra.mxu0 %v1291
    %4243 = vmatpush.msra.mxu0 %v1275
    %4244 = vmatpush.msra.mxu0 %v1259
    %4245 = vmatpush.msra.mxu0 %v1243
    %4246 = vmatpush.msra.mxu0 %v1227
    %4247 = vmatpush.msra.mxu0 %v1211
    %4248 = vmatpush.msra.mxu0 %v1195
    %4249 = vmatpush.msra.mxu0 %v1179
    %4250 = vmatpush.msra.mxu0 %v1163
    %4251 = vmatmul.f32.gmra.mxu0 %v372
    %v4252 = vpop.f32.mrf.mxu0
    %v4253 = vadd.f32 %v4230, %v4252
    %4254 = vmatmul.f32.gmra.mxu0 %v381
    %v4255 = vpop.f32.mrf.mxu0
    %v4256 = vadd.f32 %v4233, %v4255
    %4257 = vdwg.mxu0
    %4258 = vmatpush.msra.mxu0 %v1659
    %4259 = vmatpush.msra.mxu0 %v1643
    %4260 = vmatpush.msra.mxu0 %v1627
    %4261 = vmatpush.msra.mxu0 %v1611
    %4262 = vmatpush.msra.mxu0 %v1595
    %4263 = vmatpush.msra.mxu0 %v1579
    %4264 = vmatpush.msra.mxu0 %v1563
    %4265 = vmatpush.msra.mxu0 %v1547
    %4266 = vmatpush.msra.mxu0 %v1531
    %4267 = vmatpush.msra.mxu0 %v1515
    %4268 = vmatpush.msra.mxu0 %v1499
    %4269 = vmatpush.msra.mxu0 %v1483
    %4270 = vmatpush.msra.mxu0 %v1467
    %4271 = vmatpush.msra.mxu0 %v1451
    %4272 = vmatpush.msra.mxu0 %v1435
    %4273 = vmatpush.msra.mxu0 %v1419
    %4274 = vmatmul.f32.gmra.mxu0 %v373
    %v4275 = vpop.f32.mrf.mxu0
    %v4276 = vadd.f32 %v4253, %v4275
    %4277 = vmatmul.f32.gmra.mxu0 %v382
    %v4278 = vpop.f32.mrf.mxu0
    %v4279 = vadd.f32 %v4256, %v4278
    %4280 = vdwg.mxu0
    %4281 = vmatpush.msra.mxu0 %v1915
    %4282 = vmatpush.msra.mxu0 %v1899
    %4283 = vmatpush.msra.mxu0 %v1883
    %4284 = vmatpush.msra.mxu0 %v1867
    %4285 = vmatpush.msra.mxu0 %v1851
    %4286 = vmatpush.msra.mxu0 %v1835
    %4287 = vmatpush.msra.mxu0 %v1819
    %4288 = vmatpush.msra.mxu0 %v1803
    %4289 = vmatpush.msra.mxu0 %v1787
    %4290 = vmatpush.msra.mxu0 %v1771
    %4291 = vmatpush.msra.mxu0 %v1755
    %4292 = vmatpush.msra.mxu0 %v1739
    %4293 = vmatpush.msra.mxu0 %v1723
    %4294 = vmatpush.msra.mxu0 %v1707
    %4295 = vmatpush.msra.mxu0 %v1691
    %4296 = vmatpush.msra.mxu0 %v1675
    %4297 = vmatmul.f32.gmra.mxu0 %v374
    %v4298 = vpop.f32.mrf.mxu0
    %v4299 = vadd.f32 %v4276, %v4298
    %4300 = vmatmul.f32.gmra.mxu0 %v383
    %v4301 = vpop.f32.mrf.mxu0
    %v4302 = vadd.f32 %v4279, %v4301
    %4303 = vdwg.mxu0
    %4304 = vmatpush.msra.mxu0 %v2171
    %4305 = vmatpush.msra.mxu0 %v2155
    %4306 = vmatpush.msra.mxu0 %v2139
    %4307 = vmatpush.msra.mxu0 %v2123
    %4308 = vmatpush.msra.mxu0 %v2107
    %4309 = vmatpush.msra.mxu0 %v2091
    %4310 = vmatpush.msra.mxu0 %v2075
    %4311 = vmatpush.msra.mxu0 %v2059
    %4312 = vmatpush.msra.mxu0 %v2043
    %4313 = vmatpush.msra.mxu0 %v2027
    %4314 = vmatpush.msra.mxu0 %v2011
    %4315 = vmatpush.msra.mxu0 %v1995
    %4316 = vmatpush.msra.mxu0 %v1979
    %4317 = vmatpush.msra.mxu0 %v1963
    %4318 = vmatpush.msra.mxu0 %v1947
    %4319 = vmatpush.msra.mxu0 %v1931
    %4320 = vmatmul.f32.gmra.mxu0 %v375
    %v4321 = vpop.f32.mrf.mxu0
    %v4322 = vadd.f32 %v4299, %v4321
    %4323 = vmatmul.f32.gmra.mxu0 %v384
    %v4324 = vpop.f32.mrf.mxu0
    %v4325 = vadd.f32 %v4302, %v4324
    %4326 = vdwg.mxu0
    %4327 = vmatpush.msra.mxu0 %v2427
    %4328 = vmatpush.msra.mxu0 %v2411
    %4329 = vmatpush.msra.mxu0 %v2395
    %4330 = vmatpush.msra.mxu0 %v2379
    %4331 = vmatpush.msra.mxu0 %v2363
    %4332 = vmatpush.msra.mxu0 %v2347
    %4333 = vmatpush.msra.mxu0 %v2331
    %4334 = vmatpush.msra.mxu0 %v2315
    %4335 = vmatpush.msra.mxu0 %v2299
    %4336 = vmatpush.msra.mxu0 %v2283
    %4337 = vmatpush.msra.mxu0 %v2267
    %4338 = vmatpush.msra.mxu0 %v2251
    %4339 = vmatpush.msra.mxu0 %v2235
    %4340 = vmatpush.msra.mxu0 %v2219
    %4341 = vmatpush.msra.mxu0 %v2203
    %4342 = vmatpush.msra.mxu0 %v2187
    %4343 = vmatmul.f32.gmra.mxu0 %v376
    %v4344 = vpop.f32.mrf.mxu0
    %v4345 = vadd.f32 %v4322, %v4344
    %4346 = vmatmul.f32.gmra.mxu0 %v385
    %v4347 = vpop.f32.mrf.mxu0
    %v4348 = vadd.f32 %v4325, %v4347
    %4349 = vdwg.mxu0
    %4350 = vmatpush.msra.mxu0 0.0
    %4351 = vmatpush.msra.mxu0 0.0
    %4352 = vmatpush.msra.mxu0 0.0
    %4353 = vmatpush.msra.mxu0 0.0
    %4354 = vmatpush.msra.mxu0 0.0
    %4355 = vmatpush.msra.mxu0 0.0
    %4356 = vmatpush.msra.mxu0 0.0
    %4357 = vmatpush.msra.mxu0 0.0
    %4358 = vmatpush.msra.mxu0 0.0
    %4359 = vmatpush.msra.mxu0 0.0
    %4360 = vmatpush.msra.mxu0 0.0
    %4361 = vmatpush.msra.mxu0 0.0
    %4362 = vmatpush.msra.mxu0 0.0
    %4363 = vmatpush.msra.mxu0 0.0
    %4364 = vmatpush.msra.mxu0 %v2459
    %4365 = vmatpush.msra.mxu0 %v2443
    %4366 = vmatmul.f32.gmra.mxu0 %v2505
    %v4367 = vpop.f32.mrf.mxu0
    %v4368 = vadd.f32 %v4345, %v4367
    %4369 = vmatmul.f32.gmra.mxu0 %v2508
    %v4370 = vpop.f32.mrf.mxu0
    %v4371 = vadd.f32 %v4348, %v4370
    %4372 = vdwg.mxu0
    %4373 = vmatpush.msra.mxu0 %v636
    %4374 = vmatpush.msra.mxu0 %v620
    %4375 = vmatpush.msra.mxu0 %v604
    %4376 = vmatpush.msra.mxu0 %v588
    %4377 = vmatpush.msra.mxu0 %v572
    %4378 = vmatpush.msra.mxu0 %v556
    %4379 = vmatpush.msra.mxu0 %v540
    %4380 = vmatpush.msra.mxu0 %v524
    %4381 = vmatpush.msra.mxu0 %v508
    %4382 = vmatpush.msra.mxu0 %v492
    %4383 = vmatpush.msra.mxu0 %v476
    %4384 = vmatpush.msra.mxu0 %v460
    %4385 = vmatpush.msra.mxu0 %v444
    %4386 = vmatpush.msra.mxu0 %v428
    %4387 = vmatpush.msra.mxu0 %v412
    %4388 = vmatpush.msra.mxu0 %v396
    %4389 = vmatmul.f32.gmra.mxu0 %v369
    %v4390 = vpop.f32.mrf.mxu0
    %v4391 = vadd.f32 %v2480, %v4390
    %4392 = vmatmul.f32.gmra.mxu0 %v378
    %v4393 = vpop.f32.mrf.mxu0
    %v4394 = vadd.f32 %v2480, %v4393
    %4395 = vdwg.mxu0
    %4396 = vmatpush.msra.mxu0 %v892
    %4397 = vmatpush.msra.mxu0 %v876
    %4398 = vmatpush.msra.mxu0 %v860
    %4399 = vmatpush.msra.mxu0 %v844
    %4400 = vmatpush.msra.mxu0 %v828
    %4401 = vmatpush.msra.mxu0 %v812
    %4402 = vmatpush.msra.mxu0 %v796
    %4403 = vmatpush.msra.mxu0 %v780
    %4404 = vmatpush.msra.mxu0 %v764
    %4405 = vmatpush.msra.mxu0 %v748
    %4406 = vmatpush.msra.mxu0 %v732
    %4407 = vmatpush.msra.mxu0 %v716
    %4408 = vmatpush.msra.mxu0 %v700
    %4409 = vmatpush.msra.mxu0 %v684
    %4410 = vmatpush.msra.mxu0 %v668
    %4411 = vmatpush.msra.mxu0 %v652
    %4412 = vmatmul.f32.gmra.mxu0 %v370
    %v4413 = vpop.f32.mrf.mxu0
    %v4414 = vadd.f32 %v4391, %v4413
    %4415 = vmatmul.f32.gmra.mxu0 %v379
    %v4416 = vpop.f32.mrf.mxu0
    %v4417 = vadd.f32 %v4394, %v4416
    %4418 = vdwg.mxu0
    %4419 = vmatpush.msra.mxu0 %v1148
    %4420 = vmatpush.msra.mxu0 %v1132
    %4421 = vmatpush.msra.mxu0 %v1116
    %4422 = vmatpush.msra.mxu0 %v1100
    %4423 = vmatpush.msra.mxu0 %v1084
    %4424 = vmatpush.msra.mxu0 %v1068
    %4425 = vmatpush.msra.mxu0 %v1052
    %4426 = vmatpush.msra.mxu0 %v1036
    %4427 = vmatpush.msra.mxu0 %v1020
    %4428 = vmatpush.msra.mxu0 %v1004
    %4429 = vmatpush.msra.mxu0 %v988
    %4430 = vmatpush.msra.mxu0 %v972
    %4431 = vmatpush.msra.mxu0 %v956
    %4432 = vmatpush.msra.mxu0 %v940
    %4433 = vmatpush.msra.mxu0 %v924
    %4434 = vmatpush.msra.mxu0 %v908
    %4435 = vmatmul.f32.gmra.mxu0 %v371
    %v4436 = vpop.f32.mrf.mxu0
    %v4437 = vadd.f32 %v4414, %v4436
    %4438 = vmatmul.f32.gmra.mxu0 %v380
    %v4439 = vpop.f32.mrf.mxu0
    %v4440 = vadd.f32 %v4417, %v4439
    %4441 = vdwg.mxu0
    %4442 = vmatpush.msra.mxu0 %v1404
    %4443 = vmatpush.msra.mxu0 %v1388
    %4444 = vmatpush.msra.mxu0 %v1372
    %4445 = vmatpush.msra.mxu0 %v1356
    %4446 = vmatpush.msra.mxu0 %v1340
    %4447 = vmatpush.msra.mxu0 %v1324
    %4448 = vmatpush.msra.mxu0 %v1308
    %4449 = vmatpush.msra.mxu0 %v1292
    %4450 = vmatpush.msra.mxu0 %v1276
    %4451 = vmatpush.msra.mxu0 %v1260
    %4452 = vmatpush.msra.mxu0 %v1244
    %4453 = vmatpush.msra.mxu0 %v1228
    %4454 = vmatpush.msra.mxu0 %v1212
    %4455 = vmatpush.msra.mxu0 %v1196
    %4456 = vmatpush.msra.mxu0 %v1180
    %4457 = vmatpush.msra.mxu0 %v1164
    %4458 = vmatmul.f32.gmra.mxu0 %v372
    %v4459 = vpop.f32.mrf.mxu0
    %v4460 = vadd.f32 %v4437, %v4459
    %4461 = vmatmul.f32.gmra.mxu0 %v381
    %v4462 = vpop.f32.mrf.mxu0
    %v4463 = vadd.f32 %v4440, %v4462
    %4464 = vdwg.mxu0
    %4465 = vmatpush.msra.mxu0 %v1660
    %4466 = vmatpush.msra.mxu0 %v1644
    %4467 = vmatpush.msra.mxu0 %v1628
    %4468 = vmatpush.msra.mxu0 %v1612
    %4469 = vmatpush.msra.mxu0 %v1596
    %4470 = vmatpush.msra.mxu0 %v1580
    %4471 = vmatpush.msra.mxu0 %v1564
    %4472 = vmatpush.msra.mxu0 %v1548
    %4473 = vmatpush.msra.mxu0 %v1532
    %4474 = vmatpush.msra.mxu0 %v1516
    %4475 = vmatpush.msra.mxu0 %v1500
    %4476 = vmatpush.msra.mxu0 %v1484
    %4477 = vmatpush.msra.mxu0 %v1468
    %4478 = vmatpush.msra.mxu0 %v1452
    %4479 = vmatpush.msra.mxu0 %v1436
    %4480 = vmatpush.msra.mxu0 %v1420
    %4481 = vmatmul.f32.gmra.mxu0 %v373
    %v4482 = vpop.f32.mrf.mxu0
    %v4483 = vadd.f32 %v4460, %v4482
    %4484 = vmatmul.f32.gmra.mxu0 %v382
    %v4485 = vpop.f32.mrf.mxu0
    %v4486 = vadd.f32 %v4463, %v4485
    %4487 = vdwg.mxu0
    %4488 = vmatpush.msra.mxu0 %v1916
    %4489 = vmatpush.msra.mxu0 %v1900
    %4490 = vmatpush.msra.mxu0 %v1884
    %4491 = vmatpush.msra.mxu0 %v1868
    %4492 = vmatpush.msra.mxu0 %v1852
    %4493 = vmatpush.msra.mxu0 %v1836
    %4494 = vmatpush.msra.mxu0 %v1820
    %4495 = vmatpush.msra.mxu0 %v1804
    %4496 = vmatpush.msra.mxu0 %v1788
    %4497 = vmatpush.msra.mxu0 %v1772
    %4498 = vmatpush.msra.mxu0 %v1756
    %4499 = vmatpush.msra.mxu0 %v1740
    %4500 = vmatpush.msra.mxu0 %v1724
    %4501 = vmatpush.msra.mxu0 %v1708
    %4502 = vmatpush.msra.mxu0 %v1692
    %4503 = vmatpush.msra.mxu0 %v1676
    %4504 = vmatmul.f32.gmra.mxu0 %v374
    %v4505 = vpop.f32.mrf.mxu0
    %v4506 = vadd.f32 %v4483, %v4505
    %4507 = vmatmul.f32.gmra.mxu0 %v383
    %v4508 = vpop.f32.mrf.mxu0
    %v4509 = vadd.f32 %v4486, %v4508
    %4510 = vdwg.mxu0
    %4511 = vmatpush.msra.mxu0 %v2172
    %4512 = vmatpush.msra.mxu0 %v2156
    %4513 = vmatpush.msra.mxu0 %v2140
    %4514 = vmatpush.msra.mxu0 %v2124
    %4515 = vmatpush.msra.mxu0 %v2108
    %4516 = vmatpush.msra.mxu0 %v2092
    %4517 = vmatpush.msra.mxu0 %v2076
    %4518 = vmatpush.msra.mxu0 %v2060
    %4519 = vmatpush.msra.mxu0 %v2044
    %4520 = vmatpush.msra.mxu0 %v2028
    %4521 = vmatpush.msra.mxu0 %v2012
    %4522 = vmatpush.msra.mxu0 %v1996
    %4523 = vmatpush.msra.mxu0 %v1980
    %4524 = vmatpush.msra.mxu0 %v1964
    %4525 = vmatpush.msra.mxu0 %v1948
    %4526 = vmatpush.msra.mxu0 %v1932
    %4527 = vmatmul.f32.gmra.mxu0 %v375
    %v4528 = vpop.f32.mrf.mxu0
    %v4529 = vadd.f32 %v4506, %v4528
    %4530 = vmatmul.f32.gmra.mxu0 %v384
    %v4531 = vpop.f32.mrf.mxu0
    %v4532 = vadd.f32 %v4509, %v4531
    %4533 = vdwg.mxu0
    %4534 = vmatpush.msra.mxu0 %v2428
    %4535 = vmatpush.msra.mxu0 %v2412
    %4536 = vmatpush.msra.mxu0 %v2396
    %4537 = vmatpush.msra.mxu0 %v2380
    %4538 = vmatpush.msra.mxu0 %v2364
    %4539 = vmatpush.msra.mxu0 %v2348
    %4540 = vmatpush.msra.mxu0 %v2332
    %4541 = vmatpush.msra.mxu0 %v2316
    %4542 = vmatpush.msra.mxu0 %v2300
    %4543 = vmatpush.msra.mxu0 %v2284
    %4544 = vmatpush.msra.mxu0 %v2268
    %4545 = vmatpush.msra.mxu0 %v2252
    %4546 = vmatpush.msra.mxu0 %v2236
    %4547 = vmatpush.msra.mxu0 %v2220
    %4548 = vmatpush.msra.mxu0 %v2204
    %4549 = vmatpush.msra.mxu0 %v2188
    %4550 = vmatmul.f32.gmra.mxu0 %v376
    %v4551 = vpop.f32.mrf.mxu0
    %v4552 = vadd.f32 %v4529, %v4551
    %4553 = vmatmul.f32.gmra.mxu0 %v385
    %v4554 = vpop.f32.mrf.mxu0
    %v4555 = vadd.f32 %v4532, %v4554
    %4556 = vdwg.mxu0
    %4557 = vmatpush.msra.mxu0 0.0
    %4558 = vmatpush.msra.mxu0 0.0
    %4559 = vmatpush.msra.mxu0 0.0
    %4560 = vmatpush.msra.mxu0 0.0
    %4561 = vmatpush.msra.mxu0 0.0
    %4562 = vmatpush.msra.mxu0 0.0
    %4563 = vmatpush.msra.mxu0 0.0
    %4564 = vmatpush.msra.mxu0 0.0
    %4565 = vmatpush.msra.mxu0 0.0
    %4566 = vmatpush.msra.mxu0 0.0
    %4567 = vmatpush.msra.mxu0 0.0
    %4568 = vmatpush.msra.mxu0 0.0
    %4569 = vmatpush.msra.mxu0 0.0
    %4570 = vmatpush.msra.mxu0 0.0
    %4571 = vmatpush.msra.mxu0 %v2460
    %4572 = vmatpush.msra.mxu0 %v2444
    %4573 = vmatmul.f32.gmra.mxu0 %v2505
    %v4574 = vpop.f32.mrf.mxu0
    %v4575 = vadd.f32 %v4552, %v4574
    %4576 = vmatmul.f32.gmra.mxu0 %v2508
    %v4577 = vpop.f32.mrf.mxu0
    %v4578 = vadd.f32 %v4555, %v4577
    %4579 = vdwg.mxu0
    %4580 = vmatpush.msra.mxu0 %v637
    %4581 = vmatpush.msra.mxu0 %v621
    %4582 = vmatpush.msra.mxu0 %v605
    %4583 = vmatpush.msra.mxu0 %v589
    %4584 = vmatpush.msra.mxu0 %v573
    %4585 = vmatpush.msra.mxu0 %v557
    %4586 = vmatpush.msra.mxu0 %v541
    %4587 = vmatpush.msra.mxu0 %v525
    %4588 = vmatpush.msra.mxu0 %v509
    %4589 = vmatpush.msra.mxu0 %v493
    %4590 = vmatpush.msra.mxu0 %v477
    %4591 = vmatpush.msra.mxu0 %v461
    %4592 = vmatpush.msra.mxu0 %v445
    %4593 = vmatpush.msra.mxu0 %v429
    %4594 = vmatpush.msra.mxu0 %v413
    %4595 = vmatpush.msra.mxu0 %v397
    %4596 = vmatmul.f32.gmra.mxu0 %v369
    %v4597 = vpop.f32.mrf.mxu0
    %v4598 = vadd.f32 %v2481, %v4597
    %4599 = vmatmul.f32.gmra.mxu0 %v378
    %v4600 = vpop.f32.mrf.mxu0
    %v4601 = vadd.f32 %v2481, %v4600
    %4602 = vdwg.mxu0
    %4603 = vmatpush.msra.mxu0 %v893
    %4604 = vmatpush.msra.mxu0 %v877
    %4605 = vmatpush.msra.mxu0 %v861
    %4606 = vmatpush.msra.mxu0 %v845
    %4607 = vmatpush.msra.mxu0 %v829
    %4608 = vmatpush.msra.mxu0 %v813
    %4609 = vmatpush.msra.mxu0 %v797
    %4610 = vmatpush.msra.mxu0 %v781
    %4611 = vmatpush.msra.mxu0 %v765
    %4612 = vmatpush.msra.mxu0 %v749
    %4613 = vmatpush.msra.mxu0 %v733
    %4614 = vmatpush.msra.mxu0 %v717
    %4615 = vmatpush.msra.mxu0 %v701
    %4616 = vmatpush.msra.mxu0 %v685
    %4617 = vmatpush.msra.mxu0 %v669
    %4618 = vmatpush.msra.mxu0 %v653
    %4619 = vmatmul.f32.gmra.mxu0 %v370
    %v4620 = vpop.f32.mrf.mxu0
    %v4621 = vadd.f32 %v4598, %v4620
    %4622 = vmatmul.f32.gmra.mxu0 %v379
    %v4623 = vpop.f32.mrf.mxu0
    %v4624 = vadd.f32 %v4601, %v4623
    %4625 = vdwg.mxu0
    %4626 = vmatpush.msra.mxu0 %v1149
    %4627 = vmatpush.msra.mxu0 %v1133
    %4628 = vmatpush.msra.mxu0 %v1117
    %4629 = vmatpush.msra.mxu0 %v1101
    %4630 = vmatpush.msra.mxu0 %v1085
    %4631 = vmatpush.msra.mxu0 %v1069
    %4632 = vmatpush.msra.mxu0 %v1053
    %4633 = vmatpush.msra.mxu0 %v1037
    %4634 = vmatpush.msra.mxu0 %v1021
    %4635 = vmatpush.msra.mxu0 %v1005
    %4636 = vmatpush.msra.mxu0 %v989
    %4637 = vmatpush.msra.mxu0 %v973
    %4638 = vmatpush.msra.mxu0 %v957
    %4639 = vmatpush.msra.mxu0 %v941
    %4640 = vmatpush.msra.mxu0 %v925
    %4641 = vmatpush.msra.mxu0 %v909
    %4642 = vmatmul.f32.gmra.mxu0 %v371
    %v4643 = vpop.f32.mrf.mxu0
    %v4644 = vadd.f32 %v4621, %v4643
    %4645 = vmatmul.f32.gmra.mxu0 %v380
    %v4646 = vpop.f32.mrf.mxu0
    %v4647 = vadd.f32 %v4624, %v4646
    %4648 = vdwg.mxu0
    %4649 = vmatpush.msra.mxu0 %v1405
    %4650 = vmatpush.msra.mxu0 %v1389
    %4651 = vmatpush.msra.mxu0 %v1373
    %4652 = vmatpush.msra.mxu0 %v1357
    %4653 = vmatpush.msra.mxu0 %v1341
    %4654 = vmatpush.msra.mxu0 %v1325
    %4655 = vmatpush.msra.mxu0 %v1309
    %4656 = vmatpush.msra.mxu0 %v1293
    %4657 = vmatpush.msra.mxu0 %v1277
    %4658 = vmatpush.msra.mxu0 %v1261
    %4659 = vmatpush.msra.mxu0 %v1245
    %4660 = vmatpush.msra.mxu0 %v1229
    %4661 = vmatpush.msra.mxu0 %v1213
    %4662 = vmatpush.msra.mxu0 %v1197
    %4663 = vmatpush.msra.mxu0 %v1181
    %4664 = vmatpush.msra.mxu0 %v1165
    %4665 = vmatmul.f32.gmra.mxu0 %v372
    %v4666 = vpop.f32.mrf.mxu0
    %v4667 = vadd.f32 %v4644, %v4666
    %4668 = vmatmul.f32.gmra.mxu0 %v381
    %v4669 = vpop.f32.mrf.mxu0
    %v4670 = vadd.f32 %v4647, %v4669
    %4671 = vdwg.mxu0
    %4672 = vmatpush.msra.mxu0 %v1661
    %4673 = vmatpush.msra.mxu0 %v1645
    %4674 = vmatpush.msra.mxu0 %v1629
    %4675 = vmatpush.msra.mxu0 %v1613
    %4676 = vmatpush.msra.mxu0 %v1597
    %4677 = vmatpush.msra.mxu0 %v1581
    %4678 = vmatpush.msra.mxu0 %v1565
    %4679 = vmatpush.msra.mxu0 %v1549
    %4680 = vmatpush.msra.mxu0 %v1533
    %4681 = vmatpush.msra.mxu0 %v1517
    %4682 = vmatpush.msra.mxu0 %v1501
    %4683 = vmatpush.msra.mxu0 %v1485
    %4684 = vmatpush.msra.mxu0 %v1469
    %4685 = vmatpush.msra.mxu0 %v1453
    %4686 = vmatpush.msra.mxu0 %v1437
    %4687 = vmatpush.msra.mxu0 %v1421
    %4688 = vmatmul.f32.gmra.mxu0 %v373
    %v4689 = vpop.f32.mrf.mxu0
    %v4690 = vadd.f32 %v4667, %v4689
    %4691 = vmatmul.f32.gmra.mxu0 %v382
    %v4692 = vpop.f32.mrf.mxu0
    %v4693 = vadd.f32 %v4670, %v4692
    %4694 = vdwg.mxu0
    %4695 = vmatpush.msra.mxu0 %v1917
    %4696 = vmatpush.msra.mxu0 %v1901
    %4697 = vmatpush.msra.mxu0 %v1885
    %4698 = vmatpush.msra.mxu0 %v1869
    %4699 = vmatpush.msra.mxu0 %v1853
    %4700 = vmatpush.msra.mxu0 %v1837
    %4701 = vmatpush.msra.mxu0 %v1821
    %4702 = vmatpush.msra.mxu0 %v1805
    %4703 = vmatpush.msra.mxu0 %v1789
    %4704 = vmatpush.msra.mxu0 %v1773
    %4705 = vmatpush.msra.mxu0 %v1757
    %4706 = vmatpush.msra.mxu0 %v1741
    %4707 = vmatpush.msra.mxu0 %v1725
    %4708 = vmatpush.msra.mxu0 %v1709
    %4709 = vmatpush.msra.mxu0 %v1693
    %4710 = vmatpush.msra.mxu0 %v1677
    %4711 = vmatmul.f32.gmra.mxu0 %v374
    %v4712 = vpop.f32.mrf.mxu0
    %v4713 = vadd.f32 %v4690, %v4712
    %4714 = vmatmul.f32.gmra.mxu0 %v383
    %v4715 = vpop.f32.mrf.mxu0
    %v4716 = vadd.f32 %v4693, %v4715
    %4717 = vdwg.mxu0
    %4718 = vmatpush.msra.mxu0 %v2173
    %4719 = vmatpush.msra.mxu0 %v2157
    %4720 = vmatpush.msra.mxu0 %v2141
    %4721 = vmatpush.msra.mxu0 %v2125
    %4722 = vmatpush.msra.mxu0 %v2109
    %4723 = vmatpush.msra.mxu0 %v2093
    %4724 = vmatpush.msra.mxu0 %v2077
    %4725 = vmatpush.msra.mxu0 %v2061
    %4726 = vmatpush.msra.mxu0 %v2045
    %4727 = vmatpush.msra.mxu0 %v2029
    %4728 = vmatpush.msra.mxu0 %v2013
    %4729 = vmatpush.msra.mxu0 %v1997
    %4730 = vmatpush.msra.mxu0 %v1981
    %4731 = vmatpush.msra.mxu0 %v1965
    %4732 = vmatpush.msra.mxu0 %v1949
    %4733 = vmatpush.msra.mxu0 %v1933
    %4734 = vmatmul.f32.gmra.mxu0 %v375
    %v4735 = vpop.f32.mrf.mxu0
    %v4736 = vadd.f32 %v4713, %v4735
    %4737 = vmatmul.f32.gmra.mxu0 %v384
    %v4738 = vpop.f32.mrf.mxu0
    %v4739 = vadd.f32 %v4716, %v4738
    %4740 = vdwg.mxu0
    %4741 = vmatpush.msra.mxu0 %v2429
    %4742 = vmatpush.msra.mxu0 %v2413
    %4743 = vmatpush.msra.mxu0 %v2397
    %4744 = vmatpush.msra.mxu0 %v2381
    %4745 = vmatpush.msra.mxu0 %v2365
    %4746 = vmatpush.msra.mxu0 %v2349
    %4747 = vmatpush.msra.mxu0 %v2333
    %4748 = vmatpush.msra.mxu0 %v2317
    %4749 = vmatpush.msra.mxu0 %v2301
    %4750 = vmatpush.msra.mxu0 %v2285
    %4751 = vmatpush.msra.mxu0 %v2269
    %4752 = vmatpush.msra.mxu0 %v2253
    %4753 = vmatpush.msra.mxu0 %v2237
    %4754 = vmatpush.msra.mxu0 %v2221
    %4755 = vmatpush.msra.mxu0 %v2205
    %4756 = vmatpush.msra.mxu0 %v2189
    %4757 = vmatmul.f32.gmra.mxu0 %v376
    %v4758 = vpop.f32.mrf.mxu0
    %v4759 = vadd.f32 %v4736, %v4758
    %4760 = vmatmul.f32.gmra.mxu0 %v385
    %v4761 = vpop.f32.mrf.mxu0
    %v4762 = vadd.f32 %v4739, %v4761
    %4763 = vdwg.mxu0
    %4764 = vmatpush.msra.mxu0 0.0
    %4765 = vmatpush.msra.mxu0 0.0
    %4766 = vmatpush.msra.mxu0 0.0
    %4767 = vmatpush.msra.mxu0 0.0
    %4768 = vmatpush.msra.mxu0 0.0
    %4769 = vmatpush.msra.mxu0 0.0
    %4770 = vmatpush.msra.mxu0 0.0
    %4771 = vmatpush.msra.mxu0 0.0
    %4772 = vmatpush.msra.mxu0 0.0
    %4773 = vmatpush.msra.mxu0 0.0
    %4774 = vmatpush.msra.mxu0 0.0
    %4775 = vmatpush.msra.mxu0 0.0
    %4776 = vmatpush.msra.mxu0 0.0
    %4777 = vmatpush.msra.mxu0 0.0
    %4778 = vmatpush.msra.mxu0 %v2461
    %4779 = vmatpush.msra.mxu0 %v2445
    %4780 = vmatmul.f32.gmra.mxu0 %v2505
    %v4781 = vpop.f32.mrf.mxu0
    %v4782 = vadd.f32 %v4759, %v4781
    %4783 = vmatmul.f32.gmra.mxu0 %v2508
    %v4784 = vpop.f32.mrf.mxu0
    %v4785 = vadd.f32 %v4762, %v4784
    %4786 = vdwg.mxu0
    %4787 = vmatpush.msra.mxu0 %v638
    %4788 = vmatpush.msra.mxu0 %v622
    %4789 = vmatpush.msra.mxu0 %v606
    %4790 = vmatpush.msra.mxu0 %v590
    %4791 = vmatpush.msra.mxu0 %v574
    %4792 = vmatpush.msra.mxu0 %v558
    %4793 = vmatpush.msra.mxu0 %v542
    %4794 = vmatpush.msra.mxu0 %v526
    %4795 = vmatpush.msra.mxu0 %v510
    %4796 = vmatpush.msra.mxu0 %v494
    %4797 = vmatpush.msra.mxu0 %v478
    %4798 = vmatpush.msra.mxu0 %v462
    %4799 = vmatpush.msra.mxu0 %v446
    %4800 = vmatpush.msra.mxu0 %v430
    %4801 = vmatpush.msra.mxu0 %v414
    %4802 = vmatpush.msra.mxu0 %v398
    %4803 = vmatmul.f32.gmra.mxu0 %v369
    %v4804 = vpop.f32.mrf.mxu0
    %v4805 = vadd.f32 %v2482, %v4804
    %4806 = vmatmul.f32.gmra.mxu0 %v378
    %v4807 = vpop.f32.mrf.mxu0
    %v4808 = vadd.f32 %v2482, %v4807
    %4809 = vdwg.mxu0
    %4810 = vmatpush.msra.mxu0 %v894
    %4811 = vmatpush.msra.mxu0 %v878
    %4812 = vmatpush.msra.mxu0 %v862
    %4813 = vmatpush.msra.mxu0 %v846
    %4814 = vmatpush.msra.mxu0 %v830
    %4815 = vmatpush.msra.mxu0 %v814
    %4816 = vmatpush.msra.mxu0 %v798
    %4817 = vmatpush.msra.mxu0 %v782
    %4818 = vmatpush.msra.mxu0 %v766
    %4819 = vmatpush.msra.mxu0 %v750
    %4820 = vmatpush.msra.mxu0 %v734
    %4821 = vmatpush.msra.mxu0 %v718
    %4822 = vmatpush.msra.mxu0 %v702
    %4823 = vmatpush.msra.mxu0 %v686
    %4824 = vmatpush.msra.mxu0 %v670
    %4825 = vmatpush.msra.mxu0 %v654
    %4826 = vmatmul.f32.gmra.mxu0 %v370
    %v4827 = vpop.f32.mrf.mxu0
    %v4828 = vadd.f32 %v4805, %v4827
    %4829 = vmatmul.f32.gmra.mxu0 %v379
    %v4830 = vpop.f32.mrf.mxu0
    %v4831 = vadd.f32 %v4808, %v4830
    %4832 = vdwg.mxu0
    %4833 = vmatpush.msra.mxu0 %v1150
    %4834 = vmatpush.msra.mxu0 %v1134
    %4835 = vmatpush.msra.mxu0 %v1118
    %4836 = vmatpush.msra.mxu0 %v1102
    %4837 = vmatpush.msra.mxu0 %v1086
    %4838 = vmatpush.msra.mxu0 %v1070
    %4839 = vmatpush.msra.mxu0 %v1054
    %4840 = vmatpush.msra.mxu0 %v1038
    %4841 = vmatpush.msra.mxu0 %v1022
    %4842 = vmatpush.msra.mxu0 %v1006
    %4843 = vmatpush.msra.mxu0 %v990
    %4844 = vmatpush.msra.mxu0 %v974
    %4845 = vmatpush.msra.mxu0 %v958
    %4846 = vmatpush.msra.mxu0 %v942
    %4847 = vmatpush.msra.mxu0 %v926
    %4848 = vmatpush.msra.mxu0 %v910
    %4849 = vmatmul.f32.gmra.mxu0 %v371
    %v4850 = vpop.f32.mrf.mxu0
    %v4851 = vadd.f32 %v4828, %v4850
    %4852 = vmatmul.f32.gmra.mxu0 %v380
    %v4853 = vpop.f32.mrf.mxu0
    %v4854 = vadd.f32 %v4831, %v4853
    %4855 = vdwg.mxu0
    %4856 = vmatpush.msra.mxu0 %v1406
    %4857 = vmatpush.msra.mxu0 %v1390
    %4858 = vmatpush.msra.mxu0 %v1374
    %4859 = vmatpush.msra.mxu0 %v1358
    %4860 = vmatpush.msra.mxu0 %v1342
    %4861 = vmatpush.msra.mxu0 %v1326
    %4862 = vmatpush.msra.mxu0 %v1310
    %4863 = vmatpush.msra.mxu0 %v1294
    %4864 = vmatpush.msra.mxu0 %v1278
    %4865 = vmatpush.msra.mxu0 %v1262
    %4866 = vmatpush.msra.mxu0 %v1246
    %4867 = vmatpush.msra.mxu0 %v1230
    %4868 = vmatpush.msra.mxu0 %v1214
    %4869 = vmatpush.msra.mxu0 %v1198
    %4870 = vmatpush.msra.mxu0 %v1182
    %4871 = vmatpush.msra.mxu0 %v1166
    %4872 = vmatmul.f32.gmra.mxu0 %v372
    %v4873 = vpop.f32.mrf.mxu0
    %v4874 = vadd.f32 %v4851, %v4873
    %4875 = vmatmul.f32.gmra.mxu0 %v381
    %v4876 = vpop.f32.mrf.mxu0
    %v4877 = vadd.f32 %v4854, %v4876
    %4878 = vdwg.mxu0
    %4879 = vmatpush.msra.mxu0 %v1662
    %4880 = vmatpush.msra.mxu0 %v1646
    %4881 = vmatpush.msra.mxu0 %v1630
    %4882 = vmatpush.msra.mxu0 %v1614
    %4883 = vmatpush.msra.mxu0 %v1598
    %4884 = vmatpush.msra.mxu0 %v1582
    %4885 = vmatpush.msra.mxu0 %v1566
    %4886 = vmatpush.msra.mxu0 %v1550
    %4887 = vmatpush.msra.mxu0 %v1534
    %4888 = vmatpush.msra.mxu0 %v1518
    %4889 = vmatpush.msra.mxu0 %v1502
    %4890 = vmatpush.msra.mxu0 %v1486
    %4891 = vmatpush.msra.mxu0 %v1470
    %4892 = vmatpush.msra.mxu0 %v1454
    %4893 = vmatpush.msra.mxu0 %v1438
    %4894 = vmatpush.msra.mxu0 %v1422
    %4895 = vmatmul.f32.gmra.mxu0 %v373
    %v4896 = vpop.f32.mrf.mxu0
    %v4897 = vadd.f32 %v4874, %v4896
    %4898 = vmatmul.f32.gmra.mxu0 %v382
    %v4899 = vpop.f32.mrf.mxu0
    %v4900 = vadd.f32 %v4877, %v4899
    %4901 = vdwg.mxu0
    %4902 = vmatpush.msra.mxu0 %v1918
    %4903 = vmatpush.msra.mxu0 %v1902
    %4904 = vmatpush.msra.mxu0 %v1886
    %4905 = vmatpush.msra.mxu0 %v1870
    %4906 = vmatpush.msra.mxu0 %v1854
    %4907 = vmatpush.msra.mxu0 %v1838
    %4908 = vmatpush.msra.mxu0 %v1822
    %4909 = vmatpush.msra.mxu0 %v1806
    %4910 = vmatpush.msra.mxu0 %v1790
    %4911 = vmatpush.msra.mxu0 %v1774
    %4912 = vmatpush.msra.mxu0 %v1758
    %4913 = vmatpush.msra.mxu0 %v1742
    %4914 = vmatpush.msra.mxu0 %v1726
    %4915 = vmatpush.msra.mxu0 %v1710
    %4916 = vmatpush.msra.mxu0 %v1694
    %4917 = vmatpush.msra.mxu0 %v1678
    %4918 = vmatmul.f32.gmra.mxu0 %v374
    %v4919 = vpop.f32.mrf.mxu0
    %v4920 = vadd.f32 %v4897, %v4919
    %4921 = vmatmul.f32.gmra.mxu0 %v383
    %v4922 = vpop.f32.mrf.mxu0
    %v4923 = vadd.f32 %v4900, %v4922
    %4924 = vdwg.mxu0
    %4925 = vmatpush.msra.mxu0 %v2174
    %4926 = vmatpush.msra.mxu0 %v2158
    %4927 = vmatpush.msra.mxu0 %v2142
    %4928 = vmatpush.msra.mxu0 %v2126
    %4929 = vmatpush.msra.mxu0 %v2110
    %4930 = vmatpush.msra.mxu0 %v2094
    %4931 = vmatpush.msra.mxu0 %v2078
    %4932 = vmatpush.msra.mxu0 %v2062
    %4933 = vmatpush.msra.mxu0 %v2046
    %4934 = vmatpush.msra.mxu0 %v2030
    %4935 = vmatpush.msra.mxu0 %v2014
    %4936 = vmatpush.msra.mxu0 %v1998
    %4937 = vmatpush.msra.mxu0 %v1982
    %4938 = vmatpush.msra.mxu0 %v1966
    %4939 = vmatpush.msra.mxu0 %v1950
    %4940 = vmatpush.msra.mxu0 %v1934
    %4941 = vmatmul.f32.gmra.mxu0 %v375
    %v4942 = vpop.f32.mrf.mxu0
    %v4943 = vadd.f32 %v4920, %v4942
    %4944 = vmatmul.f32.gmra.mxu0 %v384
    %v4945 = vpop.f32.mrf.mxu0
    %v4946 = vadd.f32 %v4923, %v4945
    %4947 = vdwg.mxu0
    %4948 = vmatpush.msra.mxu0 %v2430
    %4949 = vmatpush.msra.mxu0 %v2414
    %4950 = vmatpush.msra.mxu0 %v2398
    %4951 = vmatpush.msra.mxu0 %v2382
    %4952 = vmatpush.msra.mxu0 %v2366
    %4953 = vmatpush.msra.mxu0 %v2350
    %4954 = vmatpush.msra.mxu0 %v2334
    %4955 = vmatpush.msra.mxu0 %v2318
    %4956 = vmatpush.msra.mxu0 %v2302
    %4957 = vmatpush.msra.mxu0 %v2286
    %4958 = vmatpush.msra.mxu0 %v2270
    %4959 = vmatpush.msra.mxu0 %v2254
    %4960 = vmatpush.msra.mxu0 %v2238
    %4961 = vmatpush.msra.mxu0 %v2222
    %4962 = vmatpush.msra.mxu0 %v2206
    %4963 = vmatpush.msra.mxu0 %v2190
    %4964 = vmatmul.f32.gmra.mxu0 %v376
    %v4965 = vpop.f32.mrf.mxu0
    %v4966 = vadd.f32 %v4943, %v4965
    %4967 = vmatmul.f32.gmra.mxu0 %v385
    %v4968 = vpop.f32.mrf.mxu0
    %v4969 = vadd.f32 %v4946, %v4968
    %4970 = vdwg.mxu0
    %4971 = vmatpush.msra.mxu0 0.0
    %4972 = vmatpush.msra.mxu0 0.0
    %4973 = vmatpush.msra.mxu0 0.0
    %4974 = vmatpush.msra.mxu0 0.0
    %4975 = vmatpush.msra.mxu0 0.0
    %4976 = vmatpush.msra.mxu0 0.0
    %4977 = vmatpush.msra.mxu0 0.0
    %4978 = vmatpush.msra.mxu0 0.0
    %4979 = vmatpush.msra.mxu0 0.0
    %4980 = vmatpush.msra.mxu0 0.0
    %4981 = vmatpush.msra.mxu0 0.0
    %4982 = vmatpush.msra.mxu0 0.0
    %4983 = vmatpush.msra.mxu0 0.0
    %4984 = vmatpush.msra.mxu0 0.0
    %4985 = vmatpush.msra.mxu0 %v2462
    %4986 = vmatpush.msra.mxu0 %v2446
    %4987 = vmatmul.f32.gmra.mxu0 %v2505
    %v4988 = vpop.f32.mrf.mxu0
    %v4989 = vadd.f32 %v4966, %v4988
    %4990 = vmatmul.f32.gmra.mxu0 %v2508
    %v4991 = vpop.f32.mrf.mxu0
    %v4992 = vadd.f32 %v4969, %v4991
    %4993 = vdwg.mxu0
    %4994 = vmatpush.msra.mxu0 %v639
    %4995 = vmatpush.msra.mxu0 %v623
    %4996 = vmatpush.msra.mxu0 %v607
    %4997 = vmatpush.msra.mxu0 %v591
    %4998 = vmatpush.msra.mxu0 %v575
    %4999 = vmatpush.msra.mxu0 %v559
    %5000 = vmatpush.msra.mxu0 %v543
    %5001 = vmatpush.msra.mxu0 %v527
    %5002 = vmatpush.msra.mxu0 %v511
    %5003 = vmatpush.msra.mxu0 %v495
    %5004 = vmatpush.msra.mxu0 %v479
    %5005 = vmatpush.msra.mxu0 %v463
    %5006 = vmatpush.msra.mxu0 %v447
    %5007 = vmatpush.msra.mxu0 %v431
    %5008 = vmatpush.msra.mxu0 %v415
    %5009 = vmatpush.msra.mxu0 %v399
    %5010 = vmatmul.f32.gmra.mxu0 %v369
    %v5011 = vpop.f32.mrf.mxu0
    %v5012 = vadd.f32 %v2483, %v5011
    %5013 = vmatmul.f32.gmra.mxu0 %v378
    %v5014 = vpop.f32.mrf.mxu0
    %v5015 = vadd.f32 %v2483, %v5014
    %5016 = vdwg.mxu0
    %5017 = vmatpush.msra.mxu0 %v895
    %5018 = vmatpush.msra.mxu0 %v879
    %5019 = vmatpush.msra.mxu0 %v863
    %5020 = vmatpush.msra.mxu0 %v847
    %5021 = vmatpush.msra.mxu0 %v831
    %5022 = vmatpush.msra.mxu0 %v815
    %5023 = vmatpush.msra.mxu0 %v799
    %5024 = vmatpush.msra.mxu0 %v783
    %5025 = vmatpush.msra.mxu0 %v767
    %5026 = vmatpush.msra.mxu0 %v751
    %5027 = vmatpush.msra.mxu0 %v735
    %5028 = vmatpush.msra.mxu0 %v719
    %5029 = vmatpush.msra.mxu0 %v703
    %5030 = vmatpush.msra.mxu0 %v687
    %5031 = vmatpush.msra.mxu0 %v671
    %5032 = vmatpush.msra.mxu0 %v655
    %5033 = vmatmul.f32.gmra.mxu0 %v370
    %v5034 = vpop.f32.mrf.mxu0
    %v5035 = vadd.f32 %v5012, %v5034
    %5036 = vmatmul.f32.gmra.mxu0 %v379
    %v5037 = vpop.f32.mrf.mxu0
    %v5038 = vadd.f32 %v5015, %v5037
    %5039 = vdwg.mxu0
    %5040 = vmatpush.msra.mxu0 %v1151
    %5041 = vmatpush.msra.mxu0 %v1135
    %5042 = vmatpush.msra.mxu0 %v1119
    %5043 = vmatpush.msra.mxu0 %v1103
    %5044 = vmatpush.msra.mxu0 %v1087
    %5045 = vmatpush.msra.mxu0 %v1071
    %5046 = vmatpush.msra.mxu0 %v1055
    %5047 = vmatpush.msra.mxu0 %v1039
    %5048 = vmatpush.msra.mxu0 %v1023
    %5049 = vmatpush.msra.mxu0 %v1007
    %5050 = vmatpush.msra.mxu0 %v991
    %5051 = vmatpush.msra.mxu0 %v975
    %5052 = vmatpush.msra.mxu0 %v959
    %5053 = vmatpush.msra.mxu0 %v943
    %5054 = vmatpush.msra.mxu0 %v927
    %5055 = vmatpush.msra.mxu0 %v911
    %5056 = vmatmul.f32.gmra.mxu0 %v371
    %v5057 = vpop.f32.mrf.mxu0
    %v5058 = vadd.f32 %v5035, %v5057
    %5059 = vmatmul.f32.gmra.mxu0 %v380
    %v5060 = vpop.f32.mrf.mxu0
    %v5061 = vadd.f32 %v5038, %v5060
    %5062 = vdwg.mxu0
    %5063 = vmatpush.msra.mxu0 %v1407
    %5064 = vmatpush.msra.mxu0 %v1391
    %5065 = vmatpush.msra.mxu0 %v1375
    %5066 = vmatpush.msra.mxu0 %v1359
    %5067 = vmatpush.msra.mxu0 %v1343
    %5068 = vmatpush.msra.mxu0 %v1327
    %5069 = vmatpush.msra.mxu0 %v1311
    %5070 = vmatpush.msra.mxu0 %v1295
    %5071 = vmatpush.msra.mxu0 %v1279
    %5072 = vmatpush.msra.mxu0 %v1263
    %5073 = vmatpush.msra.mxu0 %v1247
    %5074 = vmatpush.msra.mxu0 %v1231
    %5075 = vmatpush.msra.mxu0 %v1215
    %5076 = vmatpush.msra.mxu0 %v1199
    %5077 = vmatpush.msra.mxu0 %v1183
    %5078 = vmatpush.msra.mxu0 %v1167
    %5079 = vmatmul.f32.gmra.mxu0 %v372
    %v5080 = vpop.f32.mrf.mxu0
    %v5081 = vadd.f32 %v5058, %v5080
    %5082 = vmatmul.f32.gmra.mxu0 %v381
    %v5083 = vpop.f32.mrf.mxu0
    %v5084 = vadd.f32 %v5061, %v5083
    %5085 = vdwg.mxu0
    %5086 = vmatpush.msra.mxu0 %v1663
    %5087 = vmatpush.msra.mxu0 %v1647
    %5088 = vmatpush.msra.mxu0 %v1631
    %5089 = vmatpush.msra.mxu0 %v1615
    %5090 = vmatpush.msra.mxu0 %v1599
    %5091 = vmatpush.msra.mxu0 %v1583
    %5092 = vmatpush.msra.mxu0 %v1567
    %5093 = vmatpush.msra.mxu0 %v1551
    %5094 = vmatpush.msra.mxu0 %v1535
    %5095 = vmatpush.msra.mxu0 %v1519
    %5096 = vmatpush.msra.mxu0 %v1503
    %5097 = vmatpush.msra.mxu0 %v1487
    %5098 = vmatpush.msra.mxu0 %v1471
    %5099 = vmatpush.msra.mxu0 %v1455
    %5100 = vmatpush.msra.mxu0 %v1439
    %5101 = vmatpush.msra.mxu0 %v1423
    %5102 = vmatmul.f32.gmra.mxu0 %v373
    %v5103 = vpop.f32.mrf.mxu0
    %v5104 = vadd.f32 %v5081, %v5103
    %5105 = vmatmul.f32.gmra.mxu0 %v382
    %v5106 = vpop.f32.mrf.mxu0
    %v5107 = vadd.f32 %v5084, %v5106
    %5108 = vdwg.mxu0
    %5109 = vmatpush.msra.mxu0 %v1919
    %5110 = vmatpush.msra.mxu0 %v1903
    %5111 = vmatpush.msra.mxu0 %v1887
    %5112 = vmatpush.msra.mxu0 %v1871
    %5113 = vmatpush.msra.mxu0 %v1855
    %5114 = vmatpush.msra.mxu0 %v1839
    %5115 = vmatpush.msra.mxu0 %v1823
    %5116 = vmatpush.msra.mxu0 %v1807
    %5117 = vmatpush.msra.mxu0 %v1791
    %5118 = vmatpush.msra.mxu0 %v1775
    %5119 = vmatpush.msra.mxu0 %v1759
    %5120 = vmatpush.msra.mxu0 %v1743
    %5121 = vmatpush.msra.mxu0 %v1727
    %5122 = vmatpush.msra.mxu0 %v1711
    %5123 = vmatpush.msra.mxu0 %v1695
    %5124 = vmatpush.msra.mxu0 %v1679
    %5125 = vmatmul.f32.gmra.mxu0 %v374
    %v5126 = vpop.f32.mrf.mxu0
    %v5127 = vadd.f32 %v5104, %v5126
    %5128 = vmatmul.f32.gmra.mxu0 %v383
    %v5129 = vpop.f32.mrf.mxu0
    %v5130 = vadd.f32 %v5107, %v5129
    %5131 = vdwg.mxu0
    %5132 = vmatpush.msra.mxu0 %v2175
    %5133 = vmatpush.msra.mxu0 %v2159
    %5134 = vmatpush.msra.mxu0 %v2143
    %5135 = vmatpush.msra.mxu0 %v2127
    %5136 = vmatpush.msra.mxu0 %v2111
    %5137 = vmatpush.msra.mxu0 %v2095
    %5138 = vmatpush.msra.mxu0 %v2079
    %5139 = vmatpush.msra.mxu0 %v2063
    %5140 = vmatpush.msra.mxu0 %v2047
    %5141 = vmatpush.msra.mxu0 %v2031
    %5142 = vmatpush.msra.mxu0 %v2015
    %5143 = vmatpush.msra.mxu0 %v1999
    %5144 = vmatpush.msra.mxu0 %v1983
    %5145 = vmatpush.msra.mxu0 %v1967
    %5146 = vmatpush.msra.mxu0 %v1951
    %5147 = vmatpush.msra.mxu0 %v1935
    %5148 = vmatmul.f32.gmra.mxu0 %v375
    %v5149 = vpop.f32.mrf.mxu0
    %v5150 = vadd.f32 %v5127, %v5149
    %5151 = vmatmul.f32.gmra.mxu0 %v384
    %v5152 = vpop.f32.mrf.mxu0
    %v5153 = vadd.f32 %v5130, %v5152
    %5154 = vdwg.mxu0
    %5155 = vmatpush.msra.mxu0 %v2431
    %5156 = vmatpush.msra.mxu0 %v2415
    %5157 = vmatpush.msra.mxu0 %v2399
    %5158 = vmatpush.msra.mxu0 %v2383
    %5159 = vmatpush.msra.mxu0 %v2367
    %5160 = vmatpush.msra.mxu0 %v2351
    %5161 = vmatpush.msra.mxu0 %v2335
    %5162 = vmatpush.msra.mxu0 %v2319
    %5163 = vmatpush.msra.mxu0 %v2303
    %5164 = vmatpush.msra.mxu0 %v2287
    %5165 = vmatpush.msra.mxu0 %v2271
    %5166 = vmatpush.msra.mxu0 %v2255
    %5167 = vmatpush.msra.mxu0 %v2239
    %5168 = vmatpush.msra.mxu0 %v2223
    %5169 = vmatpush.msra.mxu0 %v2207
    %5170 = vmatpush.msra.mxu0 %v2191
    %5171 = vmatmul.f32.gmra.mxu0 %v376
    %v5172 = vpop.f32.mrf.mxu0
    %v5173 = vadd.f32 %v5150, %v5172
    %5174 = vmatmul.f32.gmra.mxu0 %v385
    %v5175 = vpop.f32.mrf.mxu0
    %v5176 = vadd.f32 %v5153, %v5175
    %5177 = vdwg.mxu0
    %5178 = vmatpush.msra.mxu0 0.0
    %5179 = vmatpush.msra.mxu0 0.0
    %5180 = vmatpush.msra.mxu0 0.0
    %5181 = vmatpush.msra.mxu0 0.0
    %5182 = vmatpush.msra.mxu0 0.0
    %5183 = vmatpush.msra.mxu0 0.0
    %5184 = vmatpush.msra.mxu0 0.0
    %5185 = vmatpush.msra.mxu0 0.0
    %5186 = vmatpush.msra.mxu0 0.0
    %5187 = vmatpush.msra.mxu0 0.0
    %5188 = vmatpush.msra.mxu0 0.0
    %5189 = vmatpush.msra.mxu0 0.0
    %5190 = vmatpush.msra.mxu0 0.0
    %5191 = vmatpush.msra.mxu0 0.0
    %5192 = vmatpush.msra.mxu0 %v2463
    %5193 = vmatpush.msra.mxu0 %v2447
    %5194 = vmatmul.f32.gmra.mxu0 %v2505
    %v5195 = vpop.f32.mrf.mxu0
    %v5196 = vadd.f32 %v5173, %v5195
    %5197 = vmatmul.f32.gmra.mxu0 %v2508
    %v5198 = vpop.f32.mrf.mxu0
    %v5199 = vadd.f32 %v5176, %v5198
    %5200 = vdwg.mxu0
    %5201 = vmatpush.msra.mxu0 %v640
    %5202 = vmatpush.msra.mxu0 %v624
    %5203 = vmatpush.msra.mxu0 %v608
    %5204 = vmatpush.msra.mxu0 %v592
    %5205 = vmatpush.msra.mxu0 %v576
    %5206 = vmatpush.msra.mxu0 %v560
    %5207 = vmatpush.msra.mxu0 %v544
    %5208 = vmatpush.msra.mxu0 %v528
    %5209 = vmatpush.msra.mxu0 %v512
    %5210 = vmatpush.msra.mxu0 %v496
    %5211 = vmatpush.msra.mxu0 %v480
    %5212 = vmatpush.msra.mxu0 %v464
    %5213 = vmatpush.msra.mxu0 %v448
    %5214 = vmatpush.msra.mxu0 %v432
    %5215 = vmatpush.msra.mxu0 %v416
    %5216 = vmatpush.msra.mxu0 %v400
    %5217 = vmatmul.f32.gmra.mxu0 %v369
    %v5218 = vpop.f32.mrf.mxu0
    %v5219 = vadd.f32 %v2484, %v5218
    %5220 = vmatmul.f32.gmra.mxu0 %v378
    %v5221 = vpop.f32.mrf.mxu0
    %v5222 = vadd.f32 %v2484, %v5221
    %5223 = vdwg.mxu0
    %5224 = vmatpush.msra.mxu0 %v896
    %5225 = vmatpush.msra.mxu0 %v880
    %5226 = vmatpush.msra.mxu0 %v864
    %5227 = vmatpush.msra.mxu0 %v848
    %5228 = vmatpush.msra.mxu0 %v832
    %5229 = vmatpush.msra.mxu0 %v816
    %5230 = vmatpush.msra.mxu0 %v800
    %5231 = vmatpush.msra.mxu0 %v784
    %5232 = vmatpush.msra.mxu0 %v768
    %5233 = vmatpush.msra.mxu0 %v752
    %5234 = vmatpush.msra.mxu0 %v736
    %5235 = vmatpush.msra.mxu0 %v720
    %5236 = vmatpush.msra.mxu0 %v704
    %5237 = vmatpush.msra.mxu0 %v688
    %5238 = vmatpush.msra.mxu0 %v672
    %5239 = vmatpush.msra.mxu0 %v656
    %5240 = vmatmul.f32.gmra.mxu0 %v370
    %v5241 = vpop.f32.mrf.mxu0
    %v5242 = vadd.f32 %v5219, %v5241
    %5243 = vmatmul.f32.gmra.mxu0 %v379
    %v5244 = vpop.f32.mrf.mxu0
    %v5245 = vadd.f32 %v5222, %v5244
    %5246 = vdwg.mxu0
    %5247 = vmatpush.msra.mxu0 %v1152
    %5248 = vmatpush.msra.mxu0 %v1136
    %5249 = vmatpush.msra.mxu0 %v1120
    %5250 = vmatpush.msra.mxu0 %v1104
    %5251 = vmatpush.msra.mxu0 %v1088
    %5252 = vmatpush.msra.mxu0 %v1072
    %5253 = vmatpush.msra.mxu0 %v1056
    %5254 = vmatpush.msra.mxu0 %v1040
    %5255 = vmatpush.msra.mxu0 %v1024
    %5256 = vmatpush.msra.mxu0 %v1008
    %5257 = vmatpush.msra.mxu0 %v992
    %5258 = vmatpush.msra.mxu0 %v976
    %5259 = vmatpush.msra.mxu0 %v960
    %5260 = vmatpush.msra.mxu0 %v944
    %5261 = vmatpush.msra.mxu0 %v928
    %5262 = vmatpush.msra.mxu0 %v912
    %5263 = vmatmul.f32.gmra.mxu0 %v371
    %v5264 = vpop.f32.mrf.mxu0
    %v5265 = vadd.f32 %v5242, %v5264
    %5266 = vmatmul.f32.gmra.mxu0 %v380
    %v5267 = vpop.f32.mrf.mxu0
    %v5268 = vadd.f32 %v5245, %v5267
    %5269 = vdwg.mxu0
    %5270 = vmatpush.msra.mxu0 %v1408
    %5271 = vmatpush.msra.mxu0 %v1392
    %5272 = vmatpush.msra.mxu0 %v1376
    %5273 = vmatpush.msra.mxu0 %v1360
    %5274 = vmatpush.msra.mxu0 %v1344
    %5275 = vmatpush.msra.mxu0 %v1328
    %5276 = vmatpush.msra.mxu0 %v1312
    %5277 = vmatpush.msra.mxu0 %v1296
    %5278 = vmatpush.msra.mxu0 %v1280
    %5279 = vmatpush.msra.mxu0 %v1264
    %5280 = vmatpush.msra.mxu0 %v1248
    %5281 = vmatpush.msra.mxu0 %v1232
    %5282 = vmatpush.msra.mxu0 %v1216
    %5283 = vmatpush.msra.mxu0 %v1200
    %5284 = vmatpush.msra.mxu0 %v1184
    %5285 = vmatpush.msra.mxu0 %v1168
    %5286 = vmatmul.f32.gmra.mxu0 %v372
    %v5287 = vpop.f32.mrf.mxu0
    %v5288 = vadd.f32 %v5265, %v5287
    %5289 = vmatmul.f32.gmra.mxu0 %v381
    %v5290 = vpop.f32.mrf.mxu0
    %v5291 = vadd.f32 %v5268, %v5290
    %5292 = vdwg.mxu0
    %5293 = vmatpush.msra.mxu0 %v1664
    %5294 = vmatpush.msra.mxu0 %v1648
    %5295 = vmatpush.msra.mxu0 %v1632
    %5296 = vmatpush.msra.mxu0 %v1616
    %5297 = vmatpush.msra.mxu0 %v1600
    %5298 = vmatpush.msra.mxu0 %v1584
    %5299 = vmatpush.msra.mxu0 %v1568
    %5300 = vmatpush.msra.mxu0 %v1552
    %5301 = vmatpush.msra.mxu0 %v1536
    %5302 = vmatpush.msra.mxu0 %v1520
    %5303 = vmatpush.msra.mxu0 %v1504
    %5304 = vmatpush.msra.mxu0 %v1488
    %5305 = vmatpush.msra.mxu0 %v1472
    %5306 = vmatpush.msra.mxu0 %v1456
    %5307 = vmatpush.msra.mxu0 %v1440
    %5308 = vmatpush.msra.mxu0 %v1424
    %5309 = vmatmul.f32.gmra.mxu0 %v373
    %v5310 = vpop.f32.mrf.mxu0
    %v5311 = vadd.f32 %v5288, %v5310
    %5312 = vmatmul.f32.gmra.mxu0 %v382
    %v5313 = vpop.f32.mrf.mxu0
    %v5314 = vadd.f32 %v5291, %v5313
    %5315 = vdwg.mxu0
    %5316 = vmatpush.msra.mxu0 %v1920
    %5317 = vmatpush.msra.mxu0 %v1904
    %5318 = vmatpush.msra.mxu0 %v1888
    %5319 = vmatpush.msra.mxu0 %v1872
    %5320 = vmatpush.msra.mxu0 %v1856
    %5321 = vmatpush.msra.mxu0 %v1840
    %5322 = vmatpush.msra.mxu0 %v1824
    %5323 = vmatpush.msra.mxu0 %v1808
    %5324 = vmatpush.msra.mxu0 %v1792
    %5325 = vmatpush.msra.mxu0 %v1776
    %5326 = vmatpush.msra.mxu0 %v1760
    %5327 = vmatpush.msra.mxu0 %v1744
    %5328 = vmatpush.msra.mxu0 %v1728
    %5329 = vmatpush.msra.mxu0 %v1712
    %5330 = vmatpush.msra.mxu0 %v1696
    %5331 = vmatpush.msra.mxu0 %v1680
    %5332 = vmatmul.f32.gmra.mxu0 %v374
    %v5333 = vpop.f32.mrf.mxu0
    %v5334 = vadd.f32 %v5311, %v5333
    %5335 = vmatmul.f32.gmra.mxu0 %v383
    %v5336 = vpop.f32.mrf.mxu0
    %v5337 = vadd.f32 %v5314, %v5336
    %5338 = vdwg.mxu0
    %5339 = vmatpush.msra.mxu0 %v2176
    %5340 = vmatpush.msra.mxu0 %v2160
    %5341 = vmatpush.msra.mxu0 %v2144
    %5342 = vmatpush.msra.mxu0 %v2128
    %5343 = vmatpush.msra.mxu0 %v2112
    %5344 = vmatpush.msra.mxu0 %v2096
    %5345 = vmatpush.msra.mxu0 %v2080
    %5346 = vmatpush.msra.mxu0 %v2064
    %5347 = vmatpush.msra.mxu0 %v2048
    %5348 = vmatpush.msra.mxu0 %v2032
    %5349 = vmatpush.msra.mxu0 %v2016
    %5350 = vmatpush.msra.mxu0 %v2000
    %5351 = vmatpush.msra.mxu0 %v1984
    %5352 = vmatpush.msra.mxu0 %v1968
    %5353 = vmatpush.msra.mxu0 %v1952
    %5354 = vmatpush.msra.mxu0 %v1936
    %5355 = vmatmul.f32.gmra.mxu0 %v375
    %v5356 = vpop.f32.mrf.mxu0
    %v5357 = vadd.f32 %v5334, %v5356
    %5358 = vmatmul.f32.gmra.mxu0 %v384
    %v5359 = vpop.f32.mrf.mxu0
    %v5360 = vadd.f32 %v5337, %v5359
    %5361 = vdwg.mxu0
    %5362 = vmatpush.msra.mxu0 %v2432
    %5363 = vmatpush.msra.mxu0 %v2416
    %5364 = vmatpush.msra.mxu0 %v2400
    %5365 = vmatpush.msra.mxu0 %v2384
    %5366 = vmatpush.msra.mxu0 %v2368
    %5367 = vmatpush.msra.mxu0 %v2352
    %5368 = vmatpush.msra.mxu0 %v2336
    %5369 = vmatpush.msra.mxu0 %v2320
    %5370 = vmatpush.msra.mxu0 %v2304
    %5371 = vmatpush.msra.mxu0 %v2288
    %5372 = vmatpush.msra.mxu0 %v2272
    %5373 = vmatpush.msra.mxu0 %v2256
    %5374 = vmatpush.msra.mxu0 %v2240
    %5375 = vmatpush.msra.mxu0 %v2224
    %5376 = vmatpush.msra.mxu0 %v2208
    %5377 = vmatpush.msra.mxu0 %v2192
    %5378 = vmatmul.f32.gmra.mxu0 %v376
    %v5379 = vpop.f32.mrf.mxu0
    %v5380 = vadd.f32 %v5357, %v5379
    %5381 = vmatmul.f32.gmra.mxu0 %v385
    %v5382 = vpop.f32.mrf.mxu0
    %v5383 = vadd.f32 %v5360, %v5382
    %5384 = vdwg.mxu0
    %5385 = vmatpush.msra.mxu0 0.0
    %5386 = vmatpush.msra.mxu0 0.0
    %5387 = vmatpush.msra.mxu0 0.0
    %5388 = vmatpush.msra.mxu0 0.0
    %5389 = vmatpush.msra.mxu0 0.0
    %5390 = vmatpush.msra.mxu0 0.0
    %5391 = vmatpush.msra.mxu0 0.0
    %5392 = vmatpush.msra.mxu0 0.0
    %5393 = vmatpush.msra.mxu0 0.0
    %5394 = vmatpush.msra.mxu0 0.0
    %5395 = vmatpush.msra.mxu0 0.0
    %5396 = vmatpush.msra.mxu0 0.0
    %5397 = vmatpush.msra.mxu0 0.0
    %5398 = vmatpush.msra.mxu0 0.0
    %5399 = vmatpush.msra.mxu0 %v2464
    %5400 = vmatpush.msra.mxu0 %v2448
    %5401 = vmatmul.f32.gmra.mxu0 %v2505
    %v5402 = vpop.f32.mrf.mxu0
    %v5403 = vadd.f32 %v5380, %v5402
    %5404 = vmatmul.f32.gmra.mxu0 %v2508
    %v5405 = vpop.f32.mrf.mxu0
    %v5406 = vadd.f32 %v5383, %v5405
    %5407 = vdwg.mxu0
    %5408 = vmatpush.msra.mxu0 %v641
    %5409 = vmatpush.msra.mxu0 %v625
    %5410 = vmatpush.msra.mxu0 %v609
    %5411 = vmatpush.msra.mxu0 %v593
    %5412 = vmatpush.msra.mxu0 %v577
    %5413 = vmatpush.msra.mxu0 %v561
    %5414 = vmatpush.msra.mxu0 %v545
    %5415 = vmatpush.msra.mxu0 %v529
    %5416 = vmatpush.msra.mxu0 %v513
    %5417 = vmatpush.msra.mxu0 %v497
    %5418 = vmatpush.msra.mxu0 %v481
    %5419 = vmatpush.msra.mxu0 %v465
    %5420 = vmatpush.msra.mxu0 %v449
    %5421 = vmatpush.msra.mxu0 %v433
    %5422 = vmatpush.msra.mxu0 %v417
    %5423 = vmatpush.msra.mxu0 %v401
    %5424 = vmatmul.f32.gmra.mxu0 %v369
    %v5425 = vpop.f32.mrf.mxu0
    %v5426 = vadd.f32 %v2485, %v5425
    %5427 = vmatmul.f32.gmra.mxu0 %v378
    %v5428 = vpop.f32.mrf.mxu0
    %v5429 = vadd.f32 %v2485, %v5428
    %5430 = vdwg.mxu0
    %5431 = vmatpush.msra.mxu0 %v897
    %5432 = vmatpush.msra.mxu0 %v881
    %5433 = vmatpush.msra.mxu0 %v865
    %5434 = vmatpush.msra.mxu0 %v849
    %5435 = vmatpush.msra.mxu0 %v833
    %5436 = vmatpush.msra.mxu0 %v817
    %5437 = vmatpush.msra.mxu0 %v801
    %5438 = vmatpush.msra.mxu0 %v785
    %5439 = vmatpush.msra.mxu0 %v769
    %5440 = vmatpush.msra.mxu0 %v753
    %5441 = vmatpush.msra.mxu0 %v737
    %5442 = vmatpush.msra.mxu0 %v721
    %5443 = vmatpush.msra.mxu0 %v705
    %5444 = vmatpush.msra.mxu0 %v689
    %5445 = vmatpush.msra.mxu0 %v673
    %5446 = vmatpush.msra.mxu0 %v657
    %5447 = vmatmul.f32.gmra.mxu0 %v370
    %v5448 = vpop.f32.mrf.mxu0
    %v5449 = vadd.f32 %v5426, %v5448
    %5450 = vmatmul.f32.gmra.mxu0 %v379
    %v5451 = vpop.f32.mrf.mxu0
    %v5452 = vadd.f32 %v5429, %v5451
    %5453 = vdwg.mxu0
    %5454 = vmatpush.msra.mxu0 %v1153
    %5455 = vmatpush.msra.mxu0 %v1137
    %5456 = vmatpush.msra.mxu0 %v1121
    %5457 = vmatpush.msra.mxu0 %v1105
    %5458 = vmatpush.msra.mxu0 %v1089
    %5459 = vmatpush.msra.mxu0 %v1073
    %5460 = vmatpush.msra.mxu0 %v1057
    %5461 = vmatpush.msra.mxu0 %v1041
    %5462 = vmatpush.msra.mxu0 %v1025
    %5463 = vmatpush.msra.mxu0 %v1009
    %5464 = vmatpush.msra.mxu0 %v993
    %5465 = vmatpush.msra.mxu0 %v977
    %5466 = vmatpush.msra.mxu0 %v961
    %5467 = vmatpush.msra.mxu0 %v945
    %5468 = vmatpush.msra.mxu0 %v929
    %5469 = vmatpush.msra.mxu0 %v913
    %5470 = vmatmul.f32.gmra.mxu0 %v371
    %v5471 = vpop.f32.mrf.mxu0
    %v5472 = vadd.f32 %v5449, %v5471
    %5473 = vmatmul.f32.gmra.mxu0 %v380
    %v5474 = vpop.f32.mrf.mxu0
    %v5475 = vadd.f32 %v5452, %v5474
    %5476 = vdwg.mxu0
    %5477 = vmatpush.msra.mxu0 %v1409
    %5478 = vmatpush.msra.mxu0 %v1393
    %5479 = vmatpush.msra.mxu0 %v1377
    %5480 = vmatpush.msra.mxu0 %v1361
    %5481 = vmatpush.msra.mxu0 %v1345
    %5482 = vmatpush.msra.mxu0 %v1329
    %5483 = vmatpush.msra.mxu0 %v1313
    %5484 = vmatpush.msra.mxu0 %v1297
    %5485 = vmatpush.msra.mxu0 %v1281
    %5486 = vmatpush.msra.mxu0 %v1265
    %5487 = vmatpush.msra.mxu0 %v1249
    %5488 = vmatpush.msra.mxu0 %v1233
    %5489 = vmatpush.msra.mxu0 %v1217
    %5490 = vmatpush.msra.mxu0 %v1201
    %5491 = vmatpush.msra.mxu0 %v1185
    %5492 = vmatpush.msra.mxu0 %v1169
    %5493 = vmatmul.f32.gmra.mxu0 %v372
    %v5494 = vpop.f32.mrf.mxu0
    %v5495 = vadd.f32 %v5472, %v5494
    %5496 = vmatmul.f32.gmra.mxu0 %v381
    %v5497 = vpop.f32.mrf.mxu0
    %v5498 = vadd.f32 %v5475, %v5497
    %5499 = vdwg.mxu0
    %5500 = vmatpush.msra.mxu0 %v1665
    %5501 = vmatpush.msra.mxu0 %v1649
    %5502 = vmatpush.msra.mxu0 %v1633
    %5503 = vmatpush.msra.mxu0 %v1617
    %5504 = vmatpush.msra.mxu0 %v1601
    %5505 = vmatpush.msra.mxu0 %v1585
    %5506 = vmatpush.msra.mxu0 %v1569
    %5507 = vmatpush.msra.mxu0 %v1553
    %5508 = vmatpush.msra.mxu0 %v1537
    %5509 = vmatpush.msra.mxu0 %v1521
    %5510 = vmatpush.msra.mxu0 %v1505
    %5511 = vmatpush.msra.mxu0 %v1489
    %5512 = vmatpush.msra.mxu0 %v1473
    %5513 = vmatpush.msra.mxu0 %v1457
    %5514 = vmatpush.msra.mxu0 %v1441
    %5515 = vmatpush.msra.mxu0 %v1425
    %5516 = vmatmul.f32.gmra.mxu0 %v373
    %v5517 = vpop.f32.mrf.mxu0
    %v5518 = vadd.f32 %v5495, %v5517
    %5519 = vmatmul.f32.gmra.mxu0 %v382
    %v5520 = vpop.f32.mrf.mxu0
    %v5521 = vadd.f32 %v5498, %v5520
    %5522 = vdwg.mxu0
    %5523 = vmatpush.msra.mxu0 %v1921
    %5524 = vmatpush.msra.mxu0 %v1905
    %5525 = vmatpush.msra.mxu0 %v1889
    %5526 = vmatpush.msra.mxu0 %v1873
    %5527 = vmatpush.msra.mxu0 %v1857
    %5528 = vmatpush.msra.mxu0 %v1841
    %5529 = vmatpush.msra.mxu0 %v1825
    %5530 = vmatpush.msra.mxu0 %v1809
    %5531 = vmatpush.msra.mxu0 %v1793
    %5532 = vmatpush.msra.mxu0 %v1777
    %5533 = vmatpush.msra.mxu0 %v1761
    %5534 = vmatpush.msra.mxu0 %v1745
    %5535 = vmatpush.msra.mxu0 %v1729
    %5536 = vmatpush.msra.mxu0 %v1713
    %5537 = vmatpush.msra.mxu0 %v1697
    %5538 = vmatpush.msra.mxu0 %v1681
    %5539 = vmatmul.f32.gmra.mxu0 %v374
    %v5540 = vpop.f32.mrf.mxu0
    %v5541 = vadd.f32 %v5518, %v5540
    %5542 = vmatmul.f32.gmra.mxu0 %v383
    %v5543 = vpop.f32.mrf.mxu0
    %v5544 = vadd.f32 %v5521, %v5543
    %5545 = vdwg.mxu0
    %5546 = vmatpush.msra.mxu0 %v2177
    %5547 = vmatpush.msra.mxu0 %v2161
    %5548 = vmatpush.msra.mxu0 %v2145
    %5549 = vmatpush.msra.mxu0 %v2129
    %5550 = vmatpush.msra.mxu0 %v2113
    %5551 = vmatpush.msra.mxu0 %v2097
    %5552 = vmatpush.msra.mxu0 %v2081
    %5553 = vmatpush.msra.mxu0 %v2065
    %5554 = vmatpush.msra.mxu0 %v2049
    %5555 = vmatpush.msra.mxu0 %v2033
    %5556 = vmatpush.msra.mxu0 %v2017
    %5557 = vmatpush.msra.mxu0 %v2001
    %5558 = vmatpush.msra.mxu0 %v1985
    %5559 = vmatpush.msra.mxu0 %v1969
    %5560 = vmatpush.msra.mxu0 %v1953
    %5561 = vmatpush.msra.mxu0 %v1937
    %5562 = vmatmul.f32.gmra.mxu0 %v375
    %v5563 = vpop.f32.mrf.mxu0
    %v5564 = vadd.f32 %v5541, %v5563
    %5565 = vmatmul.f32.gmra.mxu0 %v384
    %v5566 = vpop.f32.mrf.mxu0
    %v5567 = vadd.f32 %v5544, %v5566
    %5568 = vdwg.mxu0
    %5569 = vmatpush.msra.mxu0 %v2433
    %5570 = vmatpush.msra.mxu0 %v2417
    %5571 = vmatpush.msra.mxu0 %v2401
    %5572 = vmatpush.msra.mxu0 %v2385
    %5573 = vmatpush.msra.mxu0 %v2369
    %5574 = vmatpush.msra.mxu0 %v2353
    %5575 = vmatpush.msra.mxu0 %v2337
    %5576 = vmatpush.msra.mxu0 %v2321
    %5577 = vmatpush.msra.mxu0 %v2305
    %5578 = vmatpush.msra.mxu0 %v2289
    %5579 = vmatpush.msra.mxu0 %v2273
    %5580 = vmatpush.msra.mxu0 %v2257
    %5581 = vmatpush.msra.mxu0 %v2241
    %5582 = vmatpush.msra.mxu0 %v2225
    %5583 = vmatpush.msra.mxu0 %v2209
    %5584 = vmatpush.msra.mxu0 %v2193
    %5585 = vmatmul.f32.gmra.mxu0 %v376
    %v5586 = vpop.f32.mrf.mxu0
    %v5587 = vadd.f32 %v5564, %v5586
    %5588 = vmatmul.f32.gmra.mxu0 %v385
    %v5589 = vpop.f32.mrf.mxu0
    %v5590 = vadd.f32 %v5567, %v5589
    %5591 = vdwg.mxu0
    %5592 = vmatpush.msra.mxu0 0.0
    %5593 = vmatpush.msra.mxu0 0.0
    %5594 = vmatpush.msra.mxu0 0.0
    %5595 = vmatpush.msra.mxu0 0.0
    %5596 = vmatpush.msra.mxu0 0.0
    %5597 = vmatpush.msra.mxu0 0.0
    %5598 = vmatpush.msra.mxu0 0.0
    %5599 = vmatpush.msra.mxu0 0.0
    %5600 = vmatpush.msra.mxu0 0.0
    %5601 = vmatpush.msra.mxu0 0.0
    %5602 = vmatpush.msra.mxu0 0.0
    %5603 = vmatpush.msra.mxu0 0.0
    %5604 = vmatpush.msra.mxu0 0.0
    %5605 = vmatpush.msra.mxu0 0.0
    %5606 = vmatpush.msra.mxu0 %v2465
    %5607 = vmatpush.msra.mxu0 %v2449
    %5608 = vmatmul.f32.gmra.mxu0 %v2505
    %v5609 = vpop.f32.mrf.mxu0
    %v5610 = vadd.f32 %v5587, %v5609
    %5611 = vmatmul.f32.gmra.mxu0 %v2508
    %v5612 = vpop.f32.mrf.mxu0
    %v5613 = vadd.f32 %v5590, %v5612
    %5614 = vdwg.mxu0
    %5615 = vmatpush.msra.mxu0 %v642
    %5616 = vmatpush.msra.mxu0 %v626
    %5617 = vmatpush.msra.mxu0 %v610
    %5618 = vmatpush.msra.mxu0 %v594
    %5619 = vmatpush.msra.mxu0 %v578
    %5620 = vmatpush.msra.mxu0 %v562
    %5621 = vmatpush.msra.mxu0 %v546
    %5622 = vmatpush.msra.mxu0 %v530
    %5623 = vmatpush.msra.mxu0 %v514
    %5624 = vmatpush.msra.mxu0 %v498
    %5625 = vmatpush.msra.mxu0 %v482
    %5626 = vmatpush.msra.mxu0 %v466
    %5627 = vmatpush.msra.mxu0 %v450
    %5628 = vmatpush.msra.mxu0 %v434
    %5629 = vmatpush.msra.mxu0 %v418
    %5630 = vmatpush.msra.mxu0 %v402
    %5631 = vmatmul.f32.gmra.mxu0 %v369
    %v5632 = vpop.f32.mrf.mxu0
    %v5633 = vadd.f32 %v2486, %v5632
    %5634 = vmatmul.f32.gmra.mxu0 %v378
    %v5635 = vpop.f32.mrf.mxu0
    %v5636 = vadd.f32 %v2486, %v5635
    %5637 = vdwg.mxu0
    %5638 = vmatpush.msra.mxu0 %v898
    %5639 = vmatpush.msra.mxu0 %v882
    %5640 = vmatpush.msra.mxu0 %v866
    %5641 = vmatpush.msra.mxu0 %v850
    %5642 = vmatpush.msra.mxu0 %v834
    %5643 = vmatpush.msra.mxu0 %v818
    %5644 = vmatpush.msra.mxu0 %v802
    %5645 = vmatpush.msra.mxu0 %v786
    %5646 = vmatpush.msra.mxu0 %v770
    %5647 = vmatpush.msra.mxu0 %v754
    %5648 = vmatpush.msra.mxu0 %v738
    %5649 = vmatpush.msra.mxu0 %v722
    %5650 = vmatpush.msra.mxu0 %v706
    %5651 = vmatpush.msra.mxu0 %v690
    %5652 = vmatpush.msra.mxu0 %v674
    %5653 = vmatpush.msra.mxu0 %v658
    %5654 = vmatmul.f32.gmra.mxu0 %v370
    %v5655 = vpop.f32.mrf.mxu0
    %v5656 = vadd.f32 %v5633, %v5655
    %5657 = vmatmul.f32.gmra.mxu0 %v379
    %v5658 = vpop.f32.mrf.mxu0
    %v5659 = vadd.f32 %v5636, %v5658
    %5660 = vdwg.mxu0
    %5661 = vmatpush.msra.mxu0 %v1154
    %5662 = vmatpush.msra.mxu0 %v1138
    %5663 = vmatpush.msra.mxu0 %v1122
    %5664 = vmatpush.msra.mxu0 %v1106
    %5665 = vmatpush.msra.mxu0 %v1090
    %5666 = vmatpush.msra.mxu0 %v1074
    %5667 = vmatpush.msra.mxu0 %v1058
    %5668 = vmatpush.msra.mxu0 %v1042
    %5669 = vmatpush.msra.mxu0 %v1026
    %5670 = vmatpush.msra.mxu0 %v1010
    %5671 = vmatpush.msra.mxu0 %v994
    %5672 = vmatpush.msra.mxu0 %v978
    %5673 = vmatpush.msra.mxu0 %v962
    %5674 = vmatpush.msra.mxu0 %v946
    %5675 = vmatpush.msra.mxu0 %v930
    %5676 = vmatpush.msra.mxu0 %v914
    %5677 = vmatmul.f32.gmra.mxu0 %v371
    %v5678 = vpop.f32.mrf.mxu0
    %v5679 = vadd.f32 %v5656, %v5678
    %5680 = vmatmul.f32.gmra.mxu0 %v380
    %v5681 = vpop.f32.mrf.mxu0
    %v5682 = vadd.f32 %v5659, %v5681
    %5683 = vdwg.mxu0
    %5684 = vmatpush.msra.mxu0 %v1410
    %5685 = vmatpush.msra.mxu0 %v1394
    %5686 = vmatpush.msra.mxu0 %v1378
    %5687 = vmatpush.msra.mxu0 %v1362
    %5688 = vmatpush.msra.mxu0 %v1346
    %5689 = vmatpush.msra.mxu0 %v1330
    %5690 = vmatpush.msra.mxu0 %v1314
    %5691 = vmatpush.msra.mxu0 %v1298
    %5692 = vmatpush.msra.mxu0 %v1282
    %5693 = vmatpush.msra.mxu0 %v1266
    %5694 = vmatpush.msra.mxu0 %v1250
    %5695 = vmatpush.msra.mxu0 %v1234
    %5696 = vmatpush.msra.mxu0 %v1218
    %5697 = vmatpush.msra.mxu0 %v1202
    %5698 = vmatpush.msra.mxu0 %v1186
    %5699 = vmatpush.msra.mxu0 %v1170
    %5700 = vmatmul.f32.gmra.mxu0 %v372
    %v5701 = vpop.f32.mrf.mxu0
    %v5702 = vadd.f32 %v5679, %v5701
    %5703 = vmatmul.f32.gmra.mxu0 %v381
    %v5704 = vpop.f32.mrf.mxu0
    %v5705 = vadd.f32 %v5682, %v5704
    %5706 = vdwg.mxu0
    %5707 = vmatpush.msra.mxu0 %v1666
    %5708 = vmatpush.msra.mxu0 %v1650
    %5709 = vmatpush.msra.mxu0 %v1634
    %5710 = vmatpush.msra.mxu0 %v1618
    %5711 = vmatpush.msra.mxu0 %v1602
    %5712 = vmatpush.msra.mxu0 %v1586
    %5713 = vmatpush.msra.mxu0 %v1570
    %5714 = vmatpush.msra.mxu0 %v1554
    %5715 = vmatpush.msra.mxu0 %v1538
    %5716 = vmatpush.msra.mxu0 %v1522
    %5717 = vmatpush.msra.mxu0 %v1506
    %5718 = vmatpush.msra.mxu0 %v1490
    %5719 = vmatpush.msra.mxu0 %v1474
    %5720 = vmatpush.msra.mxu0 %v1458
    %5721 = vmatpush.msra.mxu0 %v1442
    %5722 = vmatpush.msra.mxu0 %v1426
    %5723 = vmatmul.f32.gmra.mxu0 %v373
    %v5724 = vpop.f32.mrf.mxu0
    %v5725 = vadd.f32 %v5702, %v5724
    %5726 = vmatmul.f32.gmra.mxu0 %v382
    %v5727 = vpop.f32.mrf.mxu0
    %v5728 = vadd.f32 %v5705, %v5727
    %5729 = vdwg.mxu0
    %5730 = vmatpush.msra.mxu0 %v1922
    %5731 = vmatpush.msra.mxu0 %v1906
    %5732 = vmatpush.msra.mxu0 %v1890
    %5733 = vmatpush.msra.mxu0 %v1874
    %5734 = vmatpush.msra.mxu0 %v1858
    %5735 = vmatpush.msra.mxu0 %v1842
    %5736 = vmatpush.msra.mxu0 %v1826
    %5737 = vmatpush.msra.mxu0 %v1810
    %5738 = vmatpush.msra.mxu0 %v1794
    %5739 = vmatpush.msra.mxu0 %v1778
    %5740 = vmatpush.msra.mxu0 %v1762
    %5741 = vmatpush.msra.mxu0 %v1746
    %5742 = vmatpush.msra.mxu0 %v1730
    %5743 = vmatpush.msra.mxu0 %v1714
    %5744 = vmatpush.msra.mxu0 %v1698
    %5745 = vmatpush.msra.mxu0 %v1682
    %5746 = vmatmul.f32.gmra.mxu0 %v374
    %v5747 = vpop.f32.mrf.mxu0
    %v5748 = vadd.f32 %v5725, %v5747
    %5749 = vmatmul.f32.gmra.mxu0 %v383
    %v5750 = vpop.f32.mrf.mxu0
    %v5751 = vadd.f32 %v5728, %v5750
    %5752 = vdwg.mxu0
    %5753 = vmatpush.msra.mxu0 %v2178
    %5754 = vmatpush.msra.mxu0 %v2162
    %5755 = vmatpush.msra.mxu0 %v2146
    %5756 = vmatpush.msra.mxu0 %v2130
    %5757 = vmatpush.msra.mxu0 %v2114
    %5758 = vmatpush.msra.mxu0 %v2098
    %5759 = vmatpush.msra.mxu0 %v2082
    %5760 = vmatpush.msra.mxu0 %v2066
    %5761 = vmatpush.msra.mxu0 %v2050
    %5762 = vmatpush.msra.mxu0 %v2034
    %5763 = vmatpush.msra.mxu0 %v2018
    %5764 = vmatpush.msra.mxu0 %v2002
    %5765 = vmatpush.msra.mxu0 %v1986
    %5766 = vmatpush.msra.mxu0 %v1970
    %5767 = vmatpush.msra.mxu0 %v1954
    %5768 = vmatpush.msra.mxu0 %v1938
    %5769 = vmatmul.f32.gmra.mxu0 %v375
    %v5770 = vpop.f32.mrf.mxu0
    %v5771 = vadd.f32 %v5748, %v5770
    %5772 = vmatmul.f32.gmra.mxu0 %v384
    %v5773 = vpop.f32.mrf.mxu0
    %v5774 = vadd.f32 %v5751, %v5773
    %5775 = vdwg.mxu0
    %5776 = vmatpush.msra.mxu0 %v2434
    %5777 = vmatpush.msra.mxu0 %v2418
    %5778 = vmatpush.msra.mxu0 %v2402
    %5779 = vmatpush.msra.mxu0 %v2386
    %5780 = vmatpush.msra.mxu0 %v2370
    %5781 = vmatpush.msra.mxu0 %v2354
    %5782 = vmatpush.msra.mxu0 %v2338
    %5783 = vmatpush.msra.mxu0 %v2322
    %5784 = vmatpush.msra.mxu0 %v2306
    %5785 = vmatpush.msra.mxu0 %v2290
    %5786 = vmatpush.msra.mxu0 %v2274
    %5787 = vmatpush.msra.mxu0 %v2258
    %5788 = vmatpush.msra.mxu0 %v2242
    %5789 = vmatpush.msra.mxu0 %v2226
    %5790 = vmatpush.msra.mxu0 %v2210
    %5791 = vmatpush.msra.mxu0 %v2194
    %5792 = vmatmul.f32.gmra.mxu0 %v376
    %v5793 = vpop.f32.mrf.mxu0
    %v5794 = vadd.f32 %v5771, %v5793
    %5795 = vmatmul.f32.gmra.mxu0 %v385
    %v5796 = vpop.f32.mrf.mxu0
    %v5797 = vadd.f32 %v5774, %v5796
    %5798 = vdwg.mxu0
    %5799 = vmatpush.msra.mxu0 0.0
    %5800 = vmatpush.msra.mxu0 0.0
    %5801 = vmatpush.msra.mxu0 0.0
    %5802 = vmatpush.msra.mxu0 0.0
    %5803 = vmatpush.msra.mxu0 0.0
    %5804 = vmatpush.msra.mxu0 0.0
    %5805 = vmatpush.msra.mxu0 0.0
    %5806 = vmatpush.msra.mxu0 0.0
    %5807 = vmatpush.msra.mxu0 0.0
    %5808 = vmatpush.msra.mxu0 0.0
    %5809 = vmatpush.msra.mxu0 0.0
    %5810 = vmatpush.msra.mxu0 0.0
    %5811 = vmatpush.msra.mxu0 0.0
    %5812 = vmatpush.msra.mxu0 0.0
    %5813 = vmatpush.msra.mxu0 %v2466
    %5814 = vmatpush.msra.mxu0 %v2450
    %5815 = vmatmul.f32.gmra.mxu0 %v2505
    %v5816 = vpop.f32.mrf.mxu0
    %v5817 = vadd.f32 %v5794, %v5816
    %5818 = vmatmul.f32.gmra.mxu0 %v2508
    %v5819 = vpop.f32.mrf.mxu0
    %v5820 = vadd.f32 %v5797, %v5819
    %5821 = vdwg.mxu0
    %v5822 = vmax.f32 %v2712, 0.0
    %v5823 = vmax.f32 %v2919, 0.0
    %v5824 = vmax.f32 %v3126, 0.0
    %v5825 = vmax.f32 %v3333, 0.0
    %v5826 = vmax.f32 %v3540, 0.0
    %v5827 = vmax.f32 %v3747, 0.0
    %v5828 = vmax.f32 %v3954, 0.0
    %v5829 = vmax.f32 %v4161, 0.0
    %v5830 = vmax.f32 %v4368, 0.0
    %v5831 = vmax.f32 %v4575, 0.0
    %v5832 = vmax.f32 %v4782, 0.0
    %v5833 = vmax.f32 %v4989, 0.0
    %v5834 = vmax.f32 %v5196, 0.0
    %v5835 = vmax.f32 %v5403, 0.0
    %v5836 = vmax.f32 %v5610, 0.0
    %v5837 = vmax.f32 %v5817, 0.0
    %v5838 = vmax.f32 %v2715, 0.0
    %v5839 = vmax.f32 %v2922, 0.0
    %v5840 = vmax.f32 %v3129, 0.0
    %v5841 = vmax.f32 %v3336, 0.0
    %v5842 = vmax.f32 %v3543, 0.0
    %v5843 = vmax.f32 %v3750, 0.0
    %v5844 = vmax.f32 %v3957, 0.0
    %v5845 = vmax.f32 %v4164, 0.0
    %v5846 = vmax.f32 %v4371, 0.0
    %v5847 = vmax.f32 %v4578, 0.0
    %v5848 = vmax.f32 %v4785, 0.0
    %v5849 = vmax.f32 %v4992, 0.0
    %v5850 = vmax.f32 %v5199, 0.0
    %v5851 = vmax.f32 %v5406, 0.0
    %v5852 = vmax.f32 %v5613, 0.0
    %v5853 = vmax.f32 %v5820, 0.0
    %5854 = vst [vmem:[#allocation11] sm:$0xff] %v5822
    %5855 = vst [vmem:[#allocation11 + $0x8] sm:$0xff] %v5823
    %5856 = vst [vmem:[#allocation11 + $0x10] sm:$0xff] %v5824
    %5857 = vst [vmem:[#allocation11 + $0x18] sm:$0xff] %v5825
    %5858 = vst [vmem:[#allocation11 + $0x20] sm:$0xff] %v5826
    %5859 = vst [vmem:[#allocation11 + $0x28] sm:$0xff] %v5827
    %5860 = vst [vmem:[#allocation11 + $0x30] sm:$0xff] %v5828
    %5861 = vst [vmem:[#allocation11 + $0x38] sm:$0xff] %v5829
    %5862 = vst [vmem:[#allocation11 + $0x40] sm:$0xff] %v5830
    %5863 = vst [vmem:[#allocation11 + $0x48] sm:$0xff] %v5831
    %5864 = vst [vmem:[#allocation11 + $0x50] sm:$0xff] %v5832
    %5865 = vst [vmem:[#allocation11 + $0x58] sm:$0xff] %v5833
    %5866 = vst [vmem:[#allocation11 + $0x60] sm:$0xff] %v5834
    %5867 = vst [vmem:[#allocation11 + $0x68] sm:$0xff] %v5835
    %5868 = vst [vmem:[#allocation11 + $0x70] sm:$0xff] %v5836
    %5869 = vst [vmem:[#allocation11 + $0x78] sm:$0xff] %v5837
    %5870 = vst [vmem:[#allocation11 + $0x80] sm:$0xff] %v5838
    %5871 = vst [vmem:[#allocation11 + $0x88] sm:$0xff] %v5839
    %5872 = vst [vmem:[#allocation11 + $0x90] sm:$0xff] %v5840
    %5873 = vst [vmem:[#allocation11 + $0x98] sm:$0xff] %v5841
    %5874 = vst [vmem:[#allocation11 + $0xa0] sm:$0xff] %v5842
    %5875 = vst [vmem:[#allocation11 + $0xa8] sm:$0xff] %v5843
    %5876 = vst [vmem:[#allocation11 + $0xb0] sm:$0xff] %v5844
    %5877 = vst [vmem:[#allocation11 + $0xb8] sm:$0xff] %v5845
    %5878 = vst [vmem:[#allocation11 + $0xc0] sm:$0xff] %v5846
    %5879 = vst [vmem:[#allocation11 + $0xc8] sm:$0xff] %v5847
    %5880 = vst [vmem:[#allocation11 + $0xd0] sm:$0xff] %v5848
    %5881 = vst [vmem:[#allocation11 + $0xd8] sm:$0xff] %v5849
    %5882 = vst [vmem:[#allocation11 + $0xe0] sm:$0xff] %v5850
    %5883 = vst [vmem:[#allocation11 + $0xe8] sm:$0xff] %v5851
    %5884 = vst [vmem:[#allocation11 + $0xf0] sm:$0xff] %v5852
    %5885 = vst [vmem:[#allocation11 + $0xf8] sm:$0xff] %v5853
    // Predicated region
    $region42: #{tpu_custom_call.1} parent=1 // pred_check
      _
    $region43: #{tpu_custom_call.1} parent=1 // pred_check_branch
      %5887 = sbr.rel (0) target = $region45
    $region44: #{tpu_custom_call.1} parent=1 // pred_region
      %5889 = vsyncadd [#allocation4], 0
      %s5890 = sshll.u32 [#allocation11], 4
      %s5891 = int_to_ptr.vmem [resolvable:$true] %s5890
      %s5892 = sshll.u32 %s5, 4
      %s5893 = int_to_ptr.hbm [resolvable:$true] %s5892
      %5898 = dma.vmem_to_hbm [thread:$0]  %s5891, 4096, %s5893, [#allocation4], 2048, 2048, 128
    $region45: #{tpu_custom_call.1} parent=1 // pred_fallthru
      _
    // Predicated region
    $region46: #{tpu_custom_call.1} parent=1 // pred_check
      _
    $region47: #{tpu_custom_call.1} parent=1 // pred_check_branch
      %5900 = sbr.rel (0) target = $region49
    $region48: #{tpu_custom_call.1} parent=1 // pred_region
      %5902 = dma.done [#allocation4], 4096
    $region49: #{tpu_custom_call.1} parent=1 // pred_fallthru
      _
    %5903 = vsyncpa [#allocation3], 1
    %5904 = vsyncpa [#allocation6], 1
    %5905 = vsyncpa [#allocation9], 1
    %5906 = vsyncpa [#allocation4], 1

</llo_original>
